<compile_context>
chip_gen: v6e
topology: v6e:2x2x1
jax: 0.10.0
libtpu: 0.0.40
codegen_flags: <defaults>
</compile_context>

<pallas_src>
import functools

import jax
import jax.numpy as jnp
from jax.experimental import pallas as pl
from jax.experimental.pallas import tpu as pltpu

LANE = 128     # TPU lane width
SUBLANE = 8    # f32 sublane width


def _round_up(x, m):
    return (x + m - 1) // m * m


# ----------------------------------------------------------------------------
# Fully-fused kernel factory.
#
# Weight layout (built in build_kernel_weights):
#   Each gate k in {i,f,g,o} owns a 128-lane block; within a block, direction d
#   owns lanes [d*H, (d+1)*H), the rest is zero padding.  The recurrent state
#   h/c is a single (B_pad, 128) tile with direction d in lanes [d*H, (d+1)*H).
#   The per-step recurrence is one (B_pad,128) x (128, 512) matmul (block-diag
#   W_hh over both directions) followed by full-vreg gate math.
# ----------------------------------------------------------------------------
def make_fused_kernel(T, B_pad, num_layers, num_dirs, GW):
    G4 = 4 * GW
    bf16 = jnp.bfloat16
    f32 = jnp.float32

    def n_src(layer):
        return 1 if layer == 0 else num_dirs

    def kernel(*refs):
        # ---------------- unpack refs (must mirror wrapper arg order) --------
        idx = 0
        x_ref = refs[idx]; idx += 1
        w_in, biases, whh = [], [], []
        for layer in range(num_layers):
            w_d, b_d = [], []
            for _d in range(num_dirs):
                srcs = []
                for _s in range(n_src(layer)):
                    srcs.append(refs[idx]); idx += 1
                w_d.append(srcs)
                b_d.append(refs[idx]); idx += 1
            w_in.append(w_d); biases.append(b_d)
            whh.append(refs[idx]); idx += 1
        fcw = [refs[idx + s] for s in range(num_dirs)]; idx += num_dirs
        fcb = refs[idx]; idx += 1
        out_ref = refs[idx]; idx += 1
        xw_sc = []
        for _d in range(num_dirs):
            xw_sc.append([refs[idx], refs[idx + 1]]); idx += 2
        seq_sc = []
        for _d in range(num_dirs):
            seq_sc.append([refs[idx], refs[idx + 1]]); idx += 2

        # ---------------- LSTM stack -----------------------------------------
        for layer in range(num_layers):
            buf = layer % 2
            prev = 1 - buf

            # Hoisted input projection: one matmul per (direction, source),
            # off the serial critical path.  Sources are lane-aligned tiles.
            if layer == 0:
                srcs = [x_ref[...]]                                    # (T*B, E_pad) bf16
            else:
                srcs = [seq_sc[s][prev][...].reshape(T * B_pad, GW).astype(bf16)
                        for s in range(num_dirs)]
            for d in range(num_dirs):
                xw = jnp.dot(srcs[0], w_in[layer][d][0][...],
                             preferred_element_type=f32)
                for s in range(1, len(srcs)):
                    xw = xw + jnp.dot(srcs[s], w_in[layer][d][s][...],
                                      preferred_element_type=f32)
                xw = xw + biases[layer][d][...]
                xw_sc[d][buf][...] = xw.reshape(T, B_pad, G4)

            # Serial recurrence, fully unrolled.  Both directions advance in the
            # same step via the merged block-diagonal W_hh (one matmul / step).
            # TODO(synk): on v7x the two directions / batch tiles could also be
            # split across the two TensorCores via core_map or a "parallel" grid
            # axis; single-core here since v5e/v6e have one TC.
            h = jnp.zeros((B_pad, GW), f32)
            c = jnp.zeros((B_pad, GW), f32)
            for step in range(T):
                t_of = [step if d == 0 else T - 1 - step for d in range(num_dirs)]
                gates = xw_sc[0][buf][t_of[0]]                        # (B_pad, G4)
                for d in range(1, num_dirs):
                    gates = gates + xw_sc[d][buf][t_of[d]]
                gates = gates + jnp.dot(h.astype(bf16), whh[layer][...],
                                        preferred_element_type=f32)
                i_g = jax.nn.sigmoid(gates[:, 0:GW])                  # full-vreg slices
                f_g = jax.nn.sigmoid(gates[:, GW:2 * GW])
                g_g = jnp.tanh(gates[:, 2 * GW:3 * GW])
                o_g = jax.nn.sigmoid(gates[:, 3 * GW:4 * GW])
                c = f_g * c + i_g * g_g
                h = o_g * jnp.tanh(c)
                # Full (B_pad, GW) tile stores, off the recurrence critical path.
                for d in range(num_dirs):
                    seq_sc[d][buf][t_of[d]] = h

        # ---------------- fused Linear + Softmax epilogue ---------------------
        last = (num_layers - 1) % 2
        feats = [seq_sc[s][last][...].reshape(T * B_pad, GW).astype(bf16)
                 for s in range(num_dirs)]
        logits = jnp.dot(feats[0], fcw[0][...], preferred_element_type=f32)
        for s in range(1, num_dirs):
            logits = logits + jnp.dot(feats[s], fcw[s][...],
                                      preferred_element_type=f32)
        logits = logits + fcb[...]          # padded classes carry a -1e30 bias
        m = jnp.max(logits, axis=-1, keepdims=True)
        e = jnp.exp(logits - m)
        out_ref[...] = e / jnp.sum(e, axis=-1, keepdims=True)   # exact division

    return kernel


def run_fused_model(x_flat, weights, *, T, B_pad, num_layers, num_dirs, O_pad):
    GW = LANE
    G4 = 4 * GW
    kernel = make_fused_kernel(T, B_pad, num_layers, num_dirs, GW)
    args = [x_flat] + list(weights)
    vmem = pl.BlockSpec(memory_space=pltpu.MemorySpace.VMEM)

    scratch = []
    for _ in range(num_dirs):      # hoisted gate-input projections, ping-pong
        scratch += [pltpu.VMEM((T, B_pad, G4), jnp.float32)] * 2
    for _ in range(num_dirs):      # per-layer output sequence, ping-pong
        scratch += [pltpu.VMEM((T, B_pad, GW), jnp.float32)] * 2

    # TODO(synk): everything is resident in VMEM at these toy shapes (≈2 MiB);
    # for realistic POS-tagging sizes add a BlockSpec-pipelined batch grid (and
    # vmem_limit_bytes sized against v7x's 64 MiB physical VMEM).
    return pl.pallas_call(
        kernel,
        out_shape=jax.ShapeDtypeStruct((T * B_pad, O_pad), jnp.float32),
        in_specs=[vmem] * len(args),
        out_specs=vmem,
        scratch_shapes=scratch,
    )(*args)


# ----------------------------------------------------------------------------
# Kernel weight construction: pad / merge the per-direction LSTM weights into
# the lane-aligned, block-diagonal layout the kernel expects (bf16 operands).
# ----------------------------------------------------------------------------
def build_kernel_weights(params, E_pad, H, O, num_layers, num_dirs):
    GW = LANE
    G4 = 4 * GW
    O_pad = _round_up(O, LANE)
    bf16, f32 = jnp.bfloat16, jnp.float32
    assert num_dirs * H <= GW  # TODO(synk): tile gates over >1 lane block for larger H

    def place_cols(dst, w_t, d, row_off):
        # w_t: (rows, 4H).  Gate k goes to cols [k*GW + d*H, k*GW + (d+1)*H).
        rows = w_t.shape[0]
        for k in range(4):
            dst = dst.at[row_off:row_off + rows,
                         k * GW + d * H:k * GW + (d + 1) * H].set(
                             w_t[:, k * H:(k + 1) * H])
        return dst

    weights = []
    for layer in range(num_layers):
        for d in range(num_dirs):
            wih_t, _whh_t, bias = params["lstm"][layer][d]
            if layer == 0:
                w = jnp.zeros((E_pad, G4), f32)
                w = place_cols(w, wih_t, d, 0)
                weights.append(w.astype(bf16))
            else:
                for src in range(num_dirs):
                    w = jnp.zeros((GW, G4), f32)
                    w = place_cols(w, wih_t[src * H:(src + 1) * H, :], d, src * H)
                    weights.append(w.astype(bf16))
            b = jnp.zeros((1, G4), f32)
            for k in range(4):
                b = b.at[0, k * GW + d * H:k * GW + (d + 1) * H].set(
                    bias[0, k * H:(k + 1) * H])
            weights.append(b)
        # Merged block-diagonal recurrent weight: one matmul drives both dirs.
        wm = jnp.zeros((GW, G4), f32)
        for d in range(num_dirs):
            _wih_t, whh_t, _bias = params["lstm"][layer][d]
            wm = place_cols(wm, whh_t, d, d * H)
        weights.append(wm.astype(bf16))

    # Final Linear, lane-dense output (classes padded to 128).
    fc_w_t = params["fc_w_t"]                                  # (num_dirs*H, O)
    for src in range(num_dirs):
        w = jnp.zeros((GW, O_pad), f32)
        w = w.at[src * H:(src + 1) * H, 0:O].set(fc_w_t[src * H:(src + 1) * H, :])
        weights.append(w.astype(bf16))
    fb = jnp.full((1, O_pad), -1e30, f32)                      # exp(-1e30) == 0
    fb = fb.at[0, 0:O].set(params["fc_b"][0, :])
    weights.append(fb)
    return weights, O_pad


# ----------------------------------------------------------------------------
# Parameter construction (deterministic, mirrors the nn.Module __init__ shapes)
# ----------------------------------------------------------------------------
def init_params(key, vocab_size, input_size, hidden_size, output_size,
                num_layers, bidirectional):
    num_dirs = 2 if bidirectional else 1
    keys = jax.random.split(key, 2 + 4 * num_layers * num_dirs)
    kidx = 0

    def nxt():
        nonlocal kidx
        k = keys[kidx]
        kidx += 1
        return k

    params = {}
    # nn.Embedding.from_pretrained(vectors) -> fixed embedding table.
    params["embedding"] = 0.1 * jax.random.normal(
        nxt(), (vocab_size, input_size), jnp.float32)

    # nn.LSTM weights, gate order (i, f, g, o); stored pre-transposed.
    lstm = []
    scale = 1.0 / jnp.sqrt(hidden_size)
    for layer in range(num_layers):
        in_dim = input_size if layer == 0 else num_dirs * hidden_size
        dirs = []
        for _ in range(num_dirs):
            w_ih = scale * jax.random.normal(nxt(), (4 * hidden_size, in_dim), jnp.float32)
            w_hh = scale * jax.random.normal(nxt(), (4 * hidden_size, hidden_size), jnp.float32)
            b_ih = scale * jax.random.normal(nxt(), (4 * hidden_size,), jnp.float32)
            b_hh = scale * jax.random.normal(nxt(), (4 * hidden_size,), jnp.float32)
            dirs.append((
                jnp.asarray(w_ih.T),                        # (in_dim, 4H)
                jnp.asarray(w_hh.T),                        # (H, 4H)
                (b_ih + b_hh).reshape(1, 4 * hidden_size),  # (1, 4H)
            ))
        lstm.append(dirs)
    params["lstm"] = lstm

    # nn.Linear(num_dirs * hidden_size, output_size)
    fc_w = scale * jax.random.normal(
        nxt(), (output_size, num_dirs * hidden_size), jnp.float32)
    fc_b = scale * jax.random.normal(nxt(), (output_size,), jnp.float32)
    params["fc_w_t"] = jnp.asarray(fc_w.T)                  # (num_dirs*H, O)
    params["fc_b"] = fc_b.reshape(1, output_size)
    return params


# ----------------------------------------------------------------------------
# Full forward pass (eval mode).
# ----------------------------------------------------------------------------
def model_forward(params, tokens, *, hidden_size, num_layers, bidirectional):
    num_dirs = 2 if bidirectional else 1
    H = hidden_size
    B, T = tokens.shape
    O = params["fc_b"].shape[1]
    E = params["embedding"].shape[1]

    B_pad = _round_up(max(B, SUBLANE), SUBLANE)   # full-sublane tiles in kernel
    E_pad = _round_up(E, LANE)                    # full-lane layer-0 matmul

    # Embedding lookup (gather) + dropout(eval) = identity.
    # TODO(synk): the gather stays in XLA; a scalar-prefetch in-kernel gather is
    # possible but not worthwhile at these sizes.
    emb = jnp.take(params["embedding"], tokens, axis=0)              # (B, T, E)
    x = jnp.transpose(emb, (1, 0, 2))                                # (T, B, E)
    x = jnp.pad(x, ((0, 0), (0, B_pad - B), (0, E_pad - E)))
    x_flat = x.reshape(T * B_pad, E_pad).astype(jnp.bfloat16)        # bf16 matmul operand

    weights, O_pad = build_kernel_weights(params, E_pad, H, O, num_layers, num_dirs)

    probs_flat = run_fused_model(
        x_flat, weights, T=T, B_pad=B_pad, num_layers=num_layers,
        num_dirs=num_dirs, O_pad=O_pad)                              # (T*B_pad, O_pad)

    probs = probs_flat.reshape(T, B_pad, O_pad)[:, :B, :O]
    return jnp.transpose(probs, (1, 0, 2))                           # (B, T, O)


# ----------------------------------------------------------------------------
# Pure-JAX reference (for correctness checking only).  Matmul operands are cast
# to bf16 with f32 accumulation to mirror the kernel's MXU usage.
# ----------------------------------------------------------------------------
def reference_forward(params, tokens, *, hidden_size, num_layers, bidirectional):
    num_dirs = 2 if bidirectional else 1
    H = hidden_size
    bf16, f32 = jnp.bfloat16, jnp.float32
    emb = jnp.take(params["embedding"], tokens, axis=0)              # (B, T, E)
    B, T, _ = emb.shape
    seq = emb
    for layer in range(num_layers):
        outs_dirs = []
        for d in range(num_dirs):
            w_ih_t, w_hh_t, bias = params["lstm"][layer][d]
            wih_b = w_ih_t.astype(bf16)
            whh_b = w_hh_t.astype(bf16)
            h = jnp.zeros((B, H), f32)
            c = jnp.zeros((B, H), f32)
            ys = [None] * T
            order = range(T) if d == 0 else range(T - 1, -1, -1)
            for t in order:
                gates = (jnp.dot(seq[:, t, :].astype(bf16), wih_b,
                                 preferred_element_type=f32)
                         + jnp.dot(h.astype(bf16), whh_b,
                                   preferred_element_type=f32)
                         + bias)
                i = jax.nn.sigmoid(gates[:, :H])
                f = jax.nn.sigmoid(gates[:, H:2 * H])
                g = jnp.tanh(gates[:, 2 * H:3 * H])
                o = jax.nn.sigmoid(gates[:, 3 * H:])
                c = f * c + i * g
                h = o * jnp.tanh(c)
                ys[t] = h
            outs_dirs.append(jnp.stack(ys, axis=1))                  # (B, T, H)
        seq = jnp.concatenate(outs_dirs, axis=-1)
    logits = (jnp.dot(seq.astype(bf16), params["fc_w_t"].astype(bf16),
                      preferred_element_type=f32) + params["fc_b"])
    return jax.nn.softmax(logits, axis=-1)


if __name__ == "__main__":
    # Small shapes consistent with the module's forward.
    VOCAB = 32          # rows of `vectors`
    INPUT_SIZE = 16     # embedding dim
    HIDDEN_SIZE = 32
    OUTPUT_SIZE = 10
    NUM_LAYERS = 2
    BIDIRECTIONAL = True
    BATCH, SEQ = 2, 8

    key = jax.random.PRNGKey(0)
    k_params, k_tokens = jax.random.split(key)

    params = init_params(k_params, VOCAB, INPUT_SIZE, HIDDEN_SIZE,
                         OUTPUT_SIZE, NUM_LAYERS, BIDIRECTIONAL)
    tokens = jax.random.randint(k_tokens, (BATCH, SEQ), 0, VOCAB, dtype=jnp.int32)

    fwd = jax.jit(functools.partial(model_forward,
                                    hidden_size=HIDDEN_SIZE,
                                    num_layers=NUM_LAYERS,
                                    bidirectional=BIDIRECTIONAL))
    probs = jax.block_until_ready(fwd(params, tokens))

    assert probs.shape == (BATCH, SEQ, OUTPUT_SIZE)
    assert bool(jnp.all(jnp.isfinite(probs)))
    # Softmax rows sum to 1 (exact division; padded classes contribute exactly 0).
    assert bool(jnp.allclose(jnp.sum(probs, axis=-1), 1.0, atol=1e-4)), \
        float(jnp.max(jnp.abs(jnp.sum(probs, axis=-1) - 1.0)))

    # Cross-check against the pure-JAX reference forward pass.
    ref = jax.block_until_ready(
        jax.jit(functools.partial(reference_forward,
                                  hidden_size=HIDDEN_SIZE,
                                  num_layers=NUM_LAYERS,
                                  bidirectional=BIDIRECTIONAL))(params, tokens))
    assert bool(jnp.allclose(probs, ref, atol=2e-3)), float(jnp.max(jnp.abs(probs - ref)))

    print("KERNEL_OK")
</pallas_src>

<mosaic_0001>
module attributes {stable_mosaic.version = 11 : i64} {
  func.func @kernel(%arg0: memref<64x128xbf16, #tpu.memory_space<vmem>>, %arg1: memref<128x512xbf16, #tpu.memory_space<vmem>>, %arg2: memref<1x512xf32, #tpu.memory_space<vmem>>, %arg3: memref<128x512xbf16, #tpu.memory_space<vmem>>, %arg4: memref<1x512xf32, #tpu.memory_space<vmem>>, %arg5: memref<128x512xbf16, #tpu.memory_space<vmem>>, %arg6: memref<128x512xbf16, #tpu.memory_space<vmem>>, %arg7: memref<128x512xbf16, #tpu.memory_space<vmem>>, %arg8: memref<1x512xf32, #tpu.memory_space<vmem>>, %arg9: memref<128x512xbf16, #tpu.memory_space<vmem>>, %arg10: memref<128x512xbf16, #tpu.memory_space<vmem>>, %arg11: memref<1x512xf32, #tpu.memory_space<vmem>>, %arg12: memref<128x512xbf16, #tpu.memory_space<vmem>>, %arg13: memref<128x128xbf16, #tpu.memory_space<vmem>>, %arg14: memref<128x128xbf16, #tpu.memory_space<vmem>>, %arg15: memref<1x128xf32, #tpu.memory_space<vmem>>, %arg16: memref<64x128xf32, #tpu.memory_space<vmem>>, %arg17: memref<8x8x512xf32, #tpu.memory_space<vmem>>, %arg18: memref<8x8x512xf32, #tpu.memory_space<vmem>>, %arg19: memref<8x8x512xf32, #tpu.memory_space<vmem>>, %arg20: memref<8x8x512xf32, #tpu.memory_space<vmem>>, %arg21: memref<8x8x128xf32, #tpu.memory_space<vmem>>, %arg22: memref<8x8x128xf32, #tpu.memory_space<vmem>>, %arg23: memref<8x8x128xf32, #tpu.memory_space<vmem>>, %arg24: memref<8x8x128xf32, #tpu.memory_space<vmem>>) attributes {dimension_semantics = [], scalar_prefetch = 0 : i64, scratch_operands = 8 : i64, tpu.core_type = #tpu.core_type<tc>} {
    %c0 = arith.constant 0 : index
    %c0_0 = arith.constant 0 : index
    %0 = vector.load %arg0[%c0, %c0_0] : memref<64x128xbf16, #tpu.memory_space<vmem>>, vector<64x128xbf16>
    %c0_1 = arith.constant 0 : index
    %c0_2 = arith.constant 0 : index
    %1 = vector.load %arg1[%c0_1, %c0_2] : memref<128x512xbf16, #tpu.memory_space<vmem>>, vector<128x512xbf16>
    %cst = arith.constant dense<0.000000e+00> : vector<64x512xf32>
    %2 = tpu.matmul %0, %1, %cst {dimension_numbers = #tpu.dot_dimension_numbers<[1], [0], [0], [1], [0, 0, 1, 1], [], []>} : vector<64x128xbf16>, vector<128x512xbf16>, vector<64x512xf32> -> vector<64x512xf32>
    %c0_3 = arith.constant 0 : index
    %c0_4 = arith.constant 0 : index
    %3 = vector.load %arg2[%c0_3, %c0_4] : memref<1x512xf32, #tpu.memory_space<vmem>>, vector<1x512xf32>
    %4 = vector.broadcast %3 : vector<1x512xf32> to vector<64x512xf32>
    %5 = arith.addf %2, %4 : vector<64x512xf32>
    %6 = vector.shape_cast %5 : vector<64x512xf32> to vector<8x8x512xf32>
    %c0_5 = arith.constant 0 : index
    %c0_6 = arith.constant 0 : index
    %c0_7 = arith.constant 0 : index
    %7 = vector.load %arg17[%c0_5, %c0_6, %c0_7] : memref<8x8x512xf32, #tpu.memory_space<vmem>>, vector<8x8x512xf32>
    tpu.vector_store %arg17[%c0_5, %c0_6, %c0_7], %6 {strides = array<i32>} : memref<8x8x512xf32, #tpu.memory_space<vmem>>, vector<8x8x512xf32>,
    %c0_8 = arith.constant 0 : index
    %c0_9 = arith.constant 0 : index
    %8 = vector.load %arg3[%c0_8, %c0_9] : memref<128x512xbf16, #tpu.memory_space<vmem>>, vector<128x512xbf16>
    %cst_10 = arith.constant dense<0.000000e+00> : vector<64x512xf32>
    %9 = tpu.matmul %0, %8, %cst_10 {dimension_numbers = #tpu.dot_dimension_numbers<[1], [0], [0], [1], [0, 0, 1, 1], [], []>} : vector<64x128xbf16>, vector<128x512xbf16>, vector<64x512xf32> -> vector<64x512xf32>
    %c0_11 = arith.constant 0 : index
    %c0_12 = arith.constant 0 : index
    %10 = vector.load %arg4[%c0_11, %c0_12] : memref<1x512xf32, #tpu.memory_space<vmem>>, vector<1x512xf32>
    %11 = vector.broadcast %10 : vector<1x512xf32> to vector<64x512xf32>
    %12 = arith.addf %9, %11 : vector<64x512xf32>
    %13 = vector.shape_cast %12 : vector<64x512xf32> to vector<8x8x512xf32>
    %c0_13 = arith.constant 0 : index
    %c0_14 = arith.constant 0 : index
    %c0_15 = arith.constant 0 : index
    %14 = vector.load %arg19[%c0_13, %c0_14, %c0_15] : memref<8x8x512xf32, #tpu.memory_space<vmem>>, vector<8x8x512xf32>
    tpu.vector_store %arg19[%c0_13, %c0_14, %c0_15], %13 {strides = array<i32>} : memref<8x8x512xf32, #tpu.memory_space<vmem>>, vector<8x8x512xf32>,
    %cst_16 = arith.constant 0.000000e+00 : f32
    %15 = vector.broadcast %cst_16 : f32 to vector<8x128xf32>
    %cst_17 = arith.constant 0.000000e+00 : f32
    %16 = vector.broadcast %cst_17 : f32 to vector<8x128xf32>
    %c0_18 = arith.constant 0 : index
    %c0_19 = arith.constant 0 : index
    %c0_20 = arith.constant 0 : index
    %17 = vector.load %arg17[%c0_18, %c0_19, %c0_20] : memref<8x8x512xf32, #tpu.memory_space<vmem>>, vector<1x8x512xf32>
    %18 = vector.shape_cast %17 : vector<1x8x512xf32> to vector<8x512xf32>
    %c7 = arith.constant 7 : index
    %c0_21 = arith.constant 0 : index
    %c0_22 = arith.constant 0 : index
    %19 = vector.load %arg19[%c7, %c0_21, %c0_22] : memref<8x8x512xf32, #tpu.memory_space<vmem>>, vector<1x8x512xf32>
    %20 = vector.shape_cast %19 : vector<1x8x512xf32> to vector<8x512xf32>
    %21 = arith.addf %18, %20 : vector<8x512xf32>
    %22 = arith.truncf %15 : vector<8x128xf32> to vector<8x128xbf16>
    %c0_23 = arith.constant 0 : index
    %c0_24 = arith.constant 0 : index
    %23 = vector.load %arg5[%c0_23, %c0_24] : memref<128x512xbf16, #tpu.memory_space<vmem>>, vector<128x512xbf16>
    %cst_25 = arith.constant dense<0.000000e+00> : vector<8x512xf32>
    %24 = tpu.matmul %22, %23, %cst_25 {dimension_numbers = #tpu.dot_dimension_numbers<[1], [0], [0], [1], [0, 0, 1, 1], [], []>} : vector<8x128xbf16>, vector<128x512xbf16>, vector<8x512xf32> -> vector<8x512xf32>
    %25 = arith.addf %21, %24 : vector<8x512xf32>
    %26 = vector.extract_strided_slice %25 {offsets = [0, 0], sizes = [8, 128], strides = [1, 1]} : vector<8x512xf32> to vector<8x128xf32>
    %27 = arith.negf %26 : vector<8x128xf32>
    %28 = math.exp %27 : vector<8x128xf32>
    %cst_26 = arith.constant 1.000000e+00 : f32
    %29 = vector.broadcast %cst_26 : f32 to vector<8x128xf32>
    %30 = arith.addf %29, %28 : vector<8x128xf32>
    %31 = arith.divf %29, %30 : vector<8x128xf32>
    %32 = vector.extract_strided_slice %25 {offsets = [0, 128], sizes = [8, 128], strides = [1, 1]} : vector<8x512xf32> to vector<8x128xf32>
    %33 = arith.negf %32 : vector<8x128xf32>
    %34 = math.exp %33 : vector<8x128xf32>
    %cst_27 = arith.constant 1.000000e+00 : f32
    %35 = vector.broadcast %cst_27 : f32 to vector<8x128xf32>
    %36 = arith.addf %35, %34 : vector<8x128xf32>
    %37 = arith.divf %35, %36 : vector<8x128xf32>
    %38 = vector.extract_strided_slice %25 {offsets = [0, 256], sizes = [8, 128], strides = [1, 1]} : vector<8x512xf32> to vector<8x128xf32>
    %39 = math.tanh %38 : vector<8x128xf32>
    %40 = vector.extract_strided_slice %25 {offsets = [0, 384], sizes = [8, 128], strides = [1, 1]} : vector<8x512xf32> to vector<8x128xf32>
    %41 = arith.negf %40 : vector<8x128xf32>
    %42 = math.exp %41 : vector<8x128xf32>
    %cst_28 = arith.constant 1.000000e+00 : f32
    %43 = vector.broadcast %cst_28 : f32 to vector<8x128xf32>
    %44 = arith.addf %43, %42 : vector<8x128xf32>
    %45 = arith.divf %43, %44 : vector<8x128xf32>
    %46 = arith.mulf %37, %16 : vector<8x128xf32>
    %47 = arith.mulf %31, %39 : vector<8x128xf32>
    %48 = arith.addf %46, %47 : vector<8x128xf32>
    %49 = math.tanh %48 : vector<8x128xf32>
    %50 = arith.mulf %45, %49 : vector<8x128xf32>
    %c0_29 = arith.constant 0 : index
    %c0_30 = arith.constant 0 : index
    %c0_31 = arith.constant 0 : index
    %51 = vector.load %arg21[%c0_29, %c0_30, %c0_31] : memref<8x8x128xf32, #tpu.memory_space<vmem>>, vector<1x8x128xf32>
    %52 = vector.shape_cast %51 : vector<1x8x128xf32> to vector<8x128xf32>
    %53 = vector.shape_cast %50 : vector<8x128xf32> to vector<1x8x128xf32>
    tpu.vector_store %arg21[%c0_29, %c0_30, %c0_31], %53 {strides = array<i32>} : memref<8x8x128xf32, #tpu.memory_space<vmem>>, vector<1x8x128xf32>,
    %c7_32 = arith.constant 7 : index
    %c0_33 = arith.constant 0 : index
    %c0_34 = arith.constant 0 : index
    %54 = vector.load %arg23[%c7_32, %c0_33, %c0_34] : memref<8x8x128xf32, #tpu.memory_space<vmem>>, vector<1x8x128xf32>
    %55 = vector.shape_cast %54 : vector<1x8x128xf32> to vector<8x128xf32>
    %56 = vector.shape_cast %50 : vector<8x128xf32> to vector<1x8x128xf32>
    tpu.vector_store %arg23[%c7_32, %c0_33, %c0_34], %56 {strides = array<i32>} : memref<8x8x128xf32, #tpu.memory_space<vmem>>, vector<1x8x128xf32>,
    %c1 = arith.constant 1 : index
    %c0_35 = arith.constant 0 : index
    %c0_36 = arith.constant 0 : index
    %57 = vector.load %arg17[%c1, %c0_35, %c0_36] : memref<8x8x512xf32, #tpu.memory_space<vmem>>, vector<1x8x512xf32>
    %58 = vector.shape_cast %57 : vector<1x8x512xf32> to vector<8x512xf32>
    %c6 = arith.constant 6 : index
    %c0_37 = arith.constant 0 : index
    %c0_38 = arith.constant 0 : index
    %59 = vector.load %arg19[%c6, %c0_37, %c0_38] : memref<8x8x512xf32, #tpu.memory_space<vmem>>, vector<1x8x512xf32>
    %60 = vector.shape_cast %59 : vector<1x8x512xf32> to vector<8x512xf32>
    %61 = arith.addf %58, %60 : vector<8x512xf32>
    %62 = arith.truncf %50 : vector<8x128xf32> to vector<8x128xbf16>
    %c0_39 = arith.constant 0 : index
    %c0_40 = arith.constant 0 : index
    %63 = vector.load %arg5[%c0_39, %c0_40] : memref<128x512xbf16, #tpu.memory_space<vmem>>, vector<128x512xbf16>
    %cst_41 = arith.constant dense<0.000000e+00> : vector<8x512xf32>
    %64 = tpu.matmul %62, %63, %cst_41 {dimension_numbers = #tpu.dot_dimension_numbers<[1], [0], [0], [1], [0, 0, 1, 1], [], []>} : vector<8x128xbf16>, vector<128x512xbf16>, vector<8x512xf32> -> vector<8x512xf32>
    %65 = arith.addf %61, %64 : vector<8x512xf32>
    %66 = vector.extract_strided_slice %65 {offsets = [0, 0], sizes = [8, 128], strides = [1, 1]} : vector<8x512xf32> to vector<8x128xf32>
    %67 = arith.negf %66 : vector<8x128xf32>
    %68 = math.exp %67 : vector<8x128xf32>
    %cst_42 = arith.constant 1.000000e+00 : f32
    %69 = vector.broadcast %cst_42 : f32 to vector<8x128xf32>
    %70 = arith.addf %69, %68 : vector<8x128xf32>
    %71 = arith.divf %69, %70 : vector<8x128xf32>
    %72 = vector.extract_strided_slice %65 {offsets = [0, 128], sizes = [8, 128], strides = [1, 1]} : vector<8x512xf32> to vector<8x128xf32>
    %73 = arith.negf %72 : vector<8x128xf32>
    %74 = math.exp %73 : vector<8x128xf32>
    %cst_43 = arith.constant 1.000000e+00 : f32
    %75 = vector.broadcast %cst_43 : f32 to vector<8x128xf32>
    %76 = arith.addf %75, %74 : vector<8x128xf32>
    %77 = arith.divf %75, %76 : vector<8x128xf32>
    %78 = vector.extract_strided_slice %65 {offsets = [0, 256], sizes = [8, 128], strides = [1, 1]} : vector<8x512xf32> to vector<8x128xf32>
    %79 = math.tanh %78 : vector<8x128xf32>
    %80 = vector.extract_strided_slice %65 {offsets = [0, 384], sizes = [8, 128], strides = [1, 1]} : vector<8x512xf32> to vector<8x128xf32>
    %81 = arith.negf %80 : vector<8x128xf32>
    %82 = math.exp %81 : vector<8x128xf32>
    %cst_44 = arith.constant 1.000000e+00 : f32
    %83 = vector.broadcast %cst_44 : f32 to vector<8x128xf32>
    %84 = arith.addf %83, %82 : vector<8x128xf32>
    %85 = arith.divf %83, %84 : vector<8x128xf32>
    %86 = arith.mulf %77, %48 : vector<8x128xf32>
    %87 = arith.mulf %71, %79 : vector<8x128xf32>
    %88 = arith.addf %86, %87 : vector<8x128xf32>
    %89 = math.tanh %88 : vector<8x128xf32>
    %90 = arith.mulf %85, %89 : vector<8x128xf32>
    %c1_45 = arith.constant 1 : index
    %c0_46 = arith.constant 0 : index
    %c0_47 = arith.constant 0 : index
    %91 = vector.load %arg21[%c1_45, %c0_46, %c0_47] : memref<8x8x128xf32, #tpu.memory_space<vmem>>, vector<1x8x128xf32>
    %92 = vector.shape_cast %91 : vector<1x8x128xf32> to vector<8x128xf32>
    %93 = vector.shape_cast %90 : vector<8x128xf32> to vector<1x8x128xf32>
    tpu.vector_store %arg21[%c1_45, %c0_46, %c0_47], %93 {strides = array<i32>} : memref<8x8x128xf32, #tpu.memory_space<vmem>>, vector<1x8x128xf32>,
    %c6_48 = arith.constant 6 : index
    %c0_49 = arith.constant 0 : index
    %c0_50 = arith.constant 0 : index
    %94 = vector.load %arg23[%c6_48, %c0_49, %c0_50] : memref<8x8x128xf32, #tpu.memory_space<vmem>>, vector<1x8x128xf32>
    %95 = vector.shape_cast %94 : vector<1x8x128xf32> to vector<8x128xf32>
    %96 = vector.shape_cast %90 : vector<8x128xf32> to vector<1x8x128xf32>
    tpu.vector_store %arg23[%c6_48, %c0_49, %c0_50], %96 {strides = array<i32>} : memref<8x8x128xf32, #tpu.memory_space<vmem>>, vector<1x8x128xf32>,
    %c2 = arith.constant 2 : index
    %c0_51 = arith.constant 0 : index
    %c0_52 = arith.constant 0 : index
    %97 = vector.load %arg17[%c2, %c0_51, %c0_52] : memref<8x8x512xf32, #tpu.memory_space<vmem>>, vector<1x8x512xf32>
    %98 = vector.shape_cast %97 : vector<1x8x512xf32> to vector<8x512xf32>
    %c5 = arith.constant 5 : index
    %c0_53 = arith.constant 0 : index
    %c0_54 = arith.constant 0 : index
    %99 = vector.load %arg19[%c5, %c0_53, %c0_54] : memref<8x8x512xf32, #tpu.memory_space<vmem>>, vector<1x8x512xf32>
    %100 = vector.shape_cast %99 : vector<1x8x512xf32> to vector<8x512xf32>
    %101 = arith.addf %98, %100 : vector<8x512xf32>
    %102 = arith.truncf %90 : vector<8x128xf32> to vector<8x128xbf16>
    %c0_55 = arith.constant 0 : index
    %c0_56 = arith.constant 0 : index
    %103 = vector.load %arg5[%c0_55, %c0_56] : memref<128x512xbf16, #tpu.memory_space<vmem>>, vector<128x512xbf16>
    %cst_57 = arith.constant dense<0.000000e+00> : vector<8x512xf32>
    %104 = tpu.matmul %102, %103, %cst_57 {dimension_numbers = #tpu.dot_dimension_numbers<[1], [0], [0], [1], [0, 0, 1, 1], [], []>} : vector<8x128xbf16>, vector<128x512xbf16>, vector<8x512xf32> -> vector<8x512xf32>
    %105 = arith.addf %101, %104 : vector<8x512xf32>
    %106 = vector.extract_strided_slice %105 {offsets = [0, 0], sizes = [8, 128], strides = [1, 1]} : vector<8x512xf32> to vector<8x128xf32>
    %107 = arith.negf %106 : vector<8x128xf32>
    %108 = math.exp %107 : vector<8x128xf32>
    %cst_58 = arith.constant 1.000000e+00 : f32
    %109 = vector.broadcast %cst_58 : f32 to vector<8x128xf32>
    %110 = arith.addf %109, %108 : vector<8x128xf32>
    %111 = arith.divf %109, %110 : vector<8x128xf32>
    %112 = vector.extract_strided_slice %105 {offsets = [0, 128], sizes = [8, 128], strides = [1, 1]} : vector<8x512xf32> to vector<8x128xf32>
    %113 = arith.negf %112 : vector<8x128xf32>
    %114 = math.exp %113 : vector<8x128xf32>
    %cst_59 = arith.constant 1.000000e+00 : f32
    %115 = vector.broadcast %cst_59 : f32 to vector<8x128xf32>
    %116 = arith.addf %115, %114 : vector<8x128xf32>
    %117 = arith.divf %115, %116 : vector<8x128xf32>
    %118 = vector.extract_strided_slice %105 {offsets = [0, 256], sizes = [8, 128], strides = [1, 1]} : vector<8x512xf32> to vector<8x128xf32>
    %119 = math.tanh %118 : vector<8x128xf32>
    %120 = vector.extract_strided_slice %105 {offsets = [0, 384], sizes = [8, 128], strides = [1, 1]} : vector<8x512xf32> to vector<8x128xf32>
    %121 = arith.negf %120 : vector<8x128xf32>
    %122 = math.exp %121 : vector<8x128xf32>
    %cst_60 = arith.constant 1.000000e+00 : f32
    %123 = vector.broadcast %cst_60 : f32 to vector<8x128xf32>
    %124 = arith.addf %123, %122 : vector<8x128xf32>
    %125 = arith.divf %123, %124 : vector<8x128xf32>
    %126 = arith.mulf %117, %88 : vector<8x128xf32>
    %127 = arith.mulf %111, %119 : vector<8x128xf32>
    %128 = arith.addf %126, %127 : vector<8x128xf32>
    %129 = math.tanh %128 : vector<8x128xf32>
    %130 = arith.mulf %125, %129 : vector<8x128xf32>
    %c2_61 = arith.constant 2 : index
    %c0_62 = arith.constant 0 : index
    %c0_63 = arith.constant 0 : index
    %131 = vector.load %arg21[%c2_61, %c0_62, %c0_63] : memref<8x8x128xf32, #tpu.memory_space<vmem>>, vector<1x8x128xf32>
    %132 = vector.shape_cast %131 : vector<1x8x128xf32> to vector<8x128xf32>
    %133 = vector.shape_cast %130 : vector<8x128xf32> to vector<1x8x128xf32>
    tpu.vector_store %arg21[%c2_61, %c0_62, %c0_63], %133 {strides = array<i32>} : memref<8x8x128xf32, #tpu.memory_space<vmem>>, vector<1x8x128xf32>,
    %c5_64 = arith.constant 5 : index
    %c0_65 = arith.constant 0 : index
    %c0_66 = arith.constant 0 : index
    %134 = vector.load %arg23[%c5_64, %c0_65, %c0_66] : memref<8x8x128xf32, #tpu.memory_space<vmem>>, vector<1x8x128xf32>
    %135 = vector.shape_cast %134 : vector<1x8x128xf32> to vector<8x128xf32>
    %136 = vector.shape_cast %130 : vector<8x128xf32> to vector<1x8x128xf32>
    tpu.vector_store %arg23[%c5_64, %c0_65, %c0_66], %136 {strides = array<i32>} : memref<8x8x128xf32, #tpu.memory_space<vmem>>, vector<1x8x128xf32>,
    %c3 = arith.constant 3 : index
    %c0_67 = arith.constant 0 : index
    %c0_68 = arith.constant 0 : index
    %137 = vector.load %arg17[%c3, %c0_67, %c0_68] : memref<8x8x512xf32, #tpu.memory_space<vmem>>, vector<1x8x512xf32>
    %138 = vector.shape_cast %137 : vector<1x8x512xf32> to vector<8x512xf32>
    %c4 = arith.constant 4 : index
    %c0_69 = arith.constant 0 : index
    %c0_70 = arith.constant 0 : index
    %139 = vector.load %arg19[%c4, %c0_69, %c0_70] : memref<8x8x512xf32, #tpu.memory_space<vmem>>, vector<1x8x512xf32>
    %140 = vector.shape_cast %139 : vector<1x8x512xf32> to vector<8x512xf32>
    %141 = arith.addf %138, %140 : vector<8x512xf32>
    %142 = arith.truncf %130 : vector<8x128xf32> to vector<8x128xbf16>
    %c0_71 = arith.constant 0 : index
    %c0_72 = arith.constant 0 : index
    %143 = vector.load %arg5[%c0_71, %c0_72] : memref<128x512xbf16, #tpu.memory_space<vmem>>, vector<128x512xbf16>
    %cst_73 = arith.constant dense<0.000000e+00> : vector<8x512xf32>
    %144 = tpu.matmul %142, %143, %cst_73 {dimension_numbers = #tpu.dot_dimension_numbers<[1], [0], [0], [1], [0, 0, 1, 1], [], []>} : vector<8x128xbf16>, vector<128x512xbf16>, vector<8x512xf32> -> vector<8x512xf32>
    %145 = arith.addf %141, %144 : vector<8x512xf32>
    %146 = vector.extract_strided_slice %145 {offsets = [0, 0], sizes = [8, 128], strides = [1, 1]} : vector<8x512xf32> to vector<8x128xf32>
    %147 = arith.negf %146 : vector<8x128xf32>
    %148 = math.exp %147 : vector<8x128xf32>
    %cst_74 = arith.constant 1.000000e+00 : f32
    %149 = vector.broadcast %cst_74 : f32 to vector<8x128xf32>
    %150 = arith.addf %149, %148 : vector<8x128xf32>
    %151 = arith.divf %149, %150 : vector<8x128xf32>
    %152 = vector.extract_strided_slice %145 {offsets = [0, 128], sizes = [8, 128], strides = [1, 1]} : vector<8x512xf32> to vector<8x128xf32>
    %153 = arith.negf %152 : vector<8x128xf32>
    %154 = math.exp %153 : vector<8x128xf32>
    %cst_75 = arith.constant 1.000000e+00 : f32
    %155 = vector.broadcast %cst_75 : f32 to vector<8x128xf32>
    %156 = arith.addf %155, %154 : vector<8x128xf32>
    %157 = arith.divf %155, %156 : vector<8x128xf32>
    %158 = vector.extract_strided_slice %145 {offsets = [0, 256], sizes = [8, 128], strides = [1, 1]} : vector<8x512xf32> to vector<8x128xf32>
    %159 = math.tanh %158 : vector<8x128xf32>
    %160 = vector.extract_strided_slice %145 {offsets = [0, 384], sizes = [8, 128], strides = [1, 1]} : vector<8x512xf32> to vector<8x128xf32>
    %161 = arith.negf %160 : vector<8x128xf32>
    %162 = math.exp %161 : vector<8x128xf32>
    %cst_76 = arith.constant 1.000000e+00 : f32
    %163 = vector.broadcast %cst_76 : f32 to vector<8x128xf32>
    %164 = arith.addf %163, %162 : vector<8x128xf32>
    %165 = arith.divf %163, %164 : vector<8x128xf32>
    %166 = arith.mulf %157, %128 : vector<8x128xf32>
    %167 = arith.mulf %151, %159 : vector<8x128xf32>
    %168 = arith.addf %166, %167 : vector<8x128xf32>
    %169 = math.tanh %168 : vector<8x128xf32>
    %170 = arith.mulf %165, %169 : vector<8x128xf32>
    %c3_77 = arith.constant 3 : index
    %c0_78 = arith.constant 0 : index
    %c0_79 = arith.constant 0 : index
    %171 = vector.load %arg21[%c3_77, %c0_78, %c0_79] : memref<8x8x128xf32, #tpu.memory_space<vmem>>, vector<1x8x128xf32>
    %172 = vector.shape_cast %171 : vector<1x8x128xf32> to vector<8x128xf32>
    %173 = vector.shape_cast %170 : vector<8x128xf32> to vector<1x8x128xf32>
    tpu.vector_store %arg21[%c3_77, %c0_78, %c0_79], %173 {strides = array<i32>} : memref<8x8x128xf32, #tpu.memory_space<vmem>>, vector<1x8x128xf32>,
    %c4_80 = arith.constant 4 : index
    %c0_81 = arith.constant 0 : index
    %c0_82 = arith.constant 0 : index
    %174 = vector.load %arg23[%c4_80, %c0_81, %c0_82] : memref<8x8x128xf32, #tpu.memory_space<vmem>>, vector<1x8x128xf32>
    %175 = vector.shape_cast %174 : vector<1x8x128xf32> to vector<8x128xf32>
    %176 = vector.shape_cast %170 : vector<8x128xf32> to vector<1x8x128xf32>
    tpu.vector_store %arg23[%c4_80, %c0_81, %c0_82], %176 {strides = array<i32>} : memref<8x8x128xf32, #tpu.memory_space<vmem>>, vector<1x8x128xf32>,
    %c4_83 = arith.constant 4 : index
    %c0_84 = arith.constant 0 : index
    %c0_85 = arith.constant 0 : index
    %177 = vector.load %arg17[%c4_83, %c0_84, %c0_85] : memref<8x8x512xf32, #tpu.memory_space<vmem>>, vector<1x8x512xf32>
    %178 = vector.shape_cast %177 : vector<1x8x512xf32> to vector<8x512xf32>
    %c3_86 = arith.constant 3 : index
    %c0_87 = arith.constant 0 : index
    %c0_88 = arith.constant 0 : index
    %179 = vector.load %arg19[%c3_86, %c0_87, %c0_88] : memref<8x8x512xf32, #tpu.memory_space<vmem>>, vector<1x8x512xf32>
    %180 = vector.shape_cast %179 : vector<1x8x512xf32> to vector<8x512xf32>
    %181 = arith.addf %178, %180 : vector<8x512xf32>
    %182 = arith.truncf %170 : vector<8x128xf32> to vector<8x128xbf16>
    %c0_89 = arith.constant 0 : index
    %c0_90 = arith.constant 0 : index
    %183 = vector.load %arg5[%c0_89, %c0_90] : memref<128x512xbf16, #tpu.memory_space<vmem>>, vector<128x512xbf16>
    %cst_91 = arith.constant dense<0.000000e+00> : vector<8x512xf32>
    %184 = tpu.matmul %182, %183, %cst_91 {dimension_numbers = #tpu.dot_dimension_numbers<[1], [0], [0], [1], [0, 0, 1, 1], [], []>} : vector<8x128xbf16>, vector<128x512xbf16>, vector<8x512xf32> -> vector<8x512xf32>
    %185 = arith.addf %181, %184 : vector<8x512xf32>
    %186 = vector.extract_strided_slice %185 {offsets = [0, 0], sizes = [8, 128], strides = [1, 1]} : vector<8x512xf32> to vector<8x128xf32>
    %187 = arith.negf %186 : vector<8x128xf32>
    %188 = math.exp %187 : vector<8x128xf32>
    %cst_92 = arith.constant 1.000000e+00 : f32
    %189 = vector.broadcast %cst_92 : f32 to vector<8x128xf32>
    %190 = arith.addf %189, %188 : vector<8x128xf32>
    %191 = arith.divf %189, %190 : vector<8x128xf32>
    %192 = vector.extract_strided_slice %185 {offsets = [0, 128], sizes = [8, 128], strides = [1, 1]} : vector<8x512xf32> to vector<8x128xf32>
    %193 = arith.negf %192 : vector<8x128xf32>
    %194 = math.exp %193 : vector<8x128xf32>
    %cst_93 = arith.constant 1.000000e+00 : f32
    %195 = vector.broadcast %cst_93 : f32 to vector<8x128xf32>
    %196 = arith.addf %195, %194 : vector<8x128xf32>
    %197 = arith.divf %195, %196 : vector<8x128xf32>
    %198 = vector.extract_strided_slice %185 {offsets = [0, 256], sizes = [8, 128], strides = [1, 1]} : vector<8x512xf32> to vector<8x128xf32>
    %199 = math.tanh %198 : vector<8x128xf32>
    %200 = vector.extract_strided_slice %185 {offsets = [0, 384], sizes = [8, 128], strides = [1, 1]} : vector<8x512xf32> to vector<8x128xf32>
    %201 = arith.negf %200 : vector<8x128xf32>
    %202 = math.exp %201 : vector<8x128xf32>
    %cst_94 = arith.constant 1.000000e+00 : f32
    %203 = vector.broadcast %cst_94 : f32 to vector<8x128xf32>
    %204 = arith.addf %203, %202 : vector<8x128xf32>
    %205 = arith.divf %203, %204 : vector<8x128xf32>
    %206 = arith.mulf %197, %168 : vector<8x128xf32>
    %207 = arith.mulf %191, %199 : vector<8x128xf32>
    %208 = arith.addf %206, %207 : vector<8x128xf32>
    %209 = math.tanh %208 : vector<8x128xf32>
    %210 = arith.mulf %205, %209 : vector<8x128xf32>
    %c4_95 = arith.constant 4 : index
    %c0_96 = arith.constant 0 : index
    %c0_97 = arith.constant 0 : index
    %211 = vector.load %arg21[%c4_95, %c0_96, %c0_97] : memref<8x8x128xf32, #tpu.memory_space<vmem>>, vector<1x8x128xf32>
    %212 = vector.shape_cast %211 : vector<1x8x128xf32> to vector<8x128xf32>
    %213 = vector.shape_cast %210 : vector<8x128xf32> to vector<1x8x128xf32>
    tpu.vector_store %arg21[%c4_95, %c0_96, %c0_97], %213 {strides = array<i32>} : memref<8x8x128xf32, #tpu.memory_space<vmem>>, vector<1x8x128xf32>,
    %c3_98 = arith.constant 3 : index
    %c0_99 = arith.constant 0 : index
    %c0_100 = arith.constant 0 : index
    %214 = vector.load %arg23[%c3_98, %c0_99, %c0_100] : memref<8x8x128xf32, #tpu.memory_space<vmem>>, vector<1x8x128xf32>
    %215 = vector.shape_cast %214 : vector<1x8x128xf32> to vector<8x128xf32>
    %216 = vector.shape_cast %210 : vector<8x128xf32> to vector<1x8x128xf32>
    tpu.vector_store %arg23[%c3_98, %c0_99, %c0_100], %216 {strides = array<i32>} : memref<8x8x128xf32, #tpu.memory_space<vmem>>, vector<1x8x128xf32>,
    %c5_101 = arith.constant 5 : index
    %c0_102 = arith.constant 0 : index
    %c0_103 = arith.constant 0 : index
    %217 = vector.load %arg17[%c5_101, %c0_102, %c0_103] : memref<8x8x512xf32, #tpu.memory_space<vmem>>, vector<1x8x512xf32>
    %218 = vector.shape_cast %217 : vector<1x8x512xf32> to vector<8x512xf32>
    %c2_104 = arith.constant 2 : index
    %c0_105 = arith.constant 0 : index
    %c0_106 = arith.constant 0 : index
    %219 = vector.load %arg19[%c2_104, %c0_105, %c0_106] : memref<8x8x512xf32, #tpu.memory_space<vmem>>, vector<1x8x512xf32>
    %220 = vector.shape_cast %219 : vector<1x8x512xf32> to vector<8x512xf32>
    %221 = arith.addf %218, %220 : vector<8x512xf32>
    %222 = arith.truncf %210 : vector<8x128xf32> to vector<8x128xbf16>
    %c0_107 = arith.constant 0 : index
    %c0_108 = arith.constant 0 : index
    %223 = vector.load %arg5[%c0_107, %c0_108] : memref<128x512xbf16, #tpu.memory_space<vmem>>, vector<128x512xbf16>
    %cst_109 = arith.constant dense<0.000000e+00> : vector<8x512xf32>
    %224 = tpu.matmul %222, %223, %cst_109 {dimension_numbers = #tpu.dot_dimension_numbers<[1], [0], [0], [1], [0, 0, 1, 1], [], []>} : vector<8x128xbf16>, vector<128x512xbf16>, vector<8x512xf32> -> vector<8x512xf32>
    %225 = arith.addf %221, %224 : vector<8x512xf32>
    %226 = vector.extract_strided_slice %225 {offsets = [0, 0], sizes = [8, 128], strides = [1, 1]} : vector<8x512xf32> to vector<8x128xf32>
    %227 = arith.negf %226 : vector<8x128xf32>
    %228 = math.exp %227 : vector<8x128xf32>
    %cst_110 = arith.constant 1.000000e+00 : f32
    %229 = vector.broadcast %cst_110 : f32 to vector<8x128xf32>
    %230 = arith.addf %229, %228 : vector<8x128xf32>
    %231 = arith.divf %229, %230 : vector<8x128xf32>
    %232 = vector.extract_strided_slice %225 {offsets = [0, 128], sizes = [8, 128], strides = [1, 1]} : vector<8x512xf32> to vector<8x128xf32>
    %233 = arith.negf %232 : vector<8x128xf32>
    %234 = math.exp %233 : vector<8x128xf32>
    %cst_111 = arith.constant 1.000000e+00 : f32
    %235 = vector.broadcast %cst_111 : f32 to vector<8x128xf32>
    %236 = arith.addf %235, %234 : vector<8x128xf32>
    %237 = arith.divf %235, %236 : vector<8x128xf32>
    %238 = vector.extract_strided_slice %225 {offsets = [0, 256], sizes = [8, 128], strides = [1, 1]} : vector<8x512xf32> to vector<8x128xf32>
    %239 = math.tanh %238 : vector<8x128xf32>
    %240 = vector.extract_strided_slice %225 {offsets = [0, 384], sizes = [8, 128], strides = [1, 1]} : vector<8x512xf32> to vector<8x128xf32>
    %241 = arith.negf %240 : vector<8x128xf32>
    %242 = math.exp %241 : vector<8x128xf32>
    %cst_112 = arith.constant 1.000000e+00 : f32
    %243 = vector.broadcast %cst_112 : f32 to vector<8x128xf32>
    %244 = arith.addf %243, %242 : vector<8x128xf32>
    %245 = arith.divf %243, %244 : vector<8x128xf32>
    %246 = arith.mulf %237, %208 : vector<8x128xf32>
    %247 = arith.mulf %231, %239 : vector<8x128xf32>
    %248 = arith.addf %246, %247 : vector<8x128xf32>
    %249 = math.tanh %248 : vector<8x128xf32>
    %250 = arith.mulf %245, %249 : vector<8x128xf32>
    %c5_113 = arith.constant 5 : index
    %c0_114 = arith.constant 0 : index
    %c0_115 = arith.constant 0 : index
    %251 = vector.load %arg21[%c5_113, %c0_114, %c0_115] : memref<8x8x128xf32, #tpu.memory_space<vmem>>, vector<1x8x128xf32>
    %252 = vector.shape_cast %251 : vector<1x8x128xf32> to vector<8x128xf32>
    %253 = vector.shape_cast %250 : vector<8x128xf32> to vector<1x8x128xf32>
    tpu.vector_store %arg21[%c5_113, %c0_114, %c0_115], %253 {strides = array<i32>} : memref<8x8x128xf32, #tpu.memory_space<vmem>>, vector<1x8x128xf32>,
    %c2_116 = arith.constant 2 : index
    %c0_117 = arith.constant 0 : index
    %c0_118 = arith.constant 0 : index
    %254 = vector.load %arg23[%c2_116, %c0_117, %c0_118] : memref<8x8x128xf32, #tpu.memory_space<vmem>>, vector<1x8x128xf32>
    %255 = vector.shape_cast %254 : vector<1x8x128xf32> to vector<8x128xf32>
    %256 = vector.shape_cast %250 : vector<8x128xf32> to vector<1x8x128xf32>
    tpu.vector_store %arg23[%c2_116, %c0_117, %c0_118], %256 {strides = array<i32>} : memref<8x8x128xf32, #tpu.memory_space<vmem>>, vector<1x8x128xf32>,
    %c6_119 = arith.constant 6 : index
    %c0_120 = arith.constant 0 : index
    %c0_121 = arith.constant 0 : index
    %257 = vector.load %arg17[%c6_119, %c0_120, %c0_121] : memref<8x8x512xf32, #tpu.memory_space<vmem>>, vector<1x8x512xf32>
    %258 = vector.shape_cast %257 : vector<1x8x512xf32> to vector<8x512xf32>
    %c1_122 = arith.constant 1 : index
    %c0_123 = arith.constant 0 : index
    %c0_124 = arith.constant 0 : index
    %259 = vector.load %arg19[%c1_122, %c0_123, %c0_124] : memref<8x8x512xf32, #tpu.memory_space<vmem>>, vector<1x8x512xf32>
    %260 = vector.shape_cast %259 : vector<1x8x512xf32> to vector<8x512xf32>
    %261 = arith.addf %258, %260 : vector<8x512xf32>
    %262 = arith.truncf %250 : vector<8x128xf32> to vector<8x128xbf16>
    %c0_125 = arith.constant 0 : index
    %c0_126 = arith.constant 0 : index
    %263 = vector.load %arg5[%c0_125, %c0_126] : memref<128x512xbf16, #tpu.memory_space<vmem>>, vector<128x512xbf16>
    %cst_127 = arith.constant dense<0.000000e+00> : vector<8x512xf32>
    %264 = tpu.matmul %262, %263, %cst_127 {dimension_numbers = #tpu.dot_dimension_numbers<[1], [0], [0], [1], [0, 0, 1, 1], [], []>} : vector<8x128xbf16>, vector<128x512xbf16>, vector<8x512xf32> -> vector<8x512xf32>
    %265 = arith.addf %261, %264 : vector<8x512xf32>
    %266 = vector.extract_strided_slice %265 {offsets = [0, 0], sizes = [8, 128], strides = [1, 1]} : vector<8x512xf32> to vector<8x128xf32>
    %267 = arith.negf %266 : vector<8x128xf32>
    %268 = math.exp %267 : vector<8x128xf32>
    %cst_128 = arith.constant 1.000000e+00 : f32
    %269 = vector.broadcast %cst_128 : f32 to vector<8x128xf32>
    %270 = arith.addf %269, %268 : vector<8x128xf32>
    %271 = arith.divf %269, %270 : vector<8x128xf32>
    %272 = vector.extract_strided_slice %265 {offsets = [0, 128], sizes = [8, 128], strides = [1, 1]} : vector<8x512xf32> to vector<8x128xf32>
    %273 = arith.negf %272 : vector<8x128xf32>
    %274 = math.exp %273 : vector<8x128xf32>
    %cst_129 = arith.constant 1.000000e+00 : f32
    %275 = vector.broadcast %cst_129 : f32 to vector<8x128xf32>
    %276 = arith.addf %275, %274 : vector<8x128xf32>
    %277 = arith.divf %275, %276 : vector<8x128xf32>
    %278 = vector.extract_strided_slice %265 {offsets = [0, 256], sizes = [8, 128], strides = [1, 1]} : vector<8x512xf32> to vector<8x128xf32>
    %279 = math.tanh %278 : vector<8x128xf32>
    %280 = vector.extract_strided_slice %265 {offsets = [0, 384], sizes = [8, 128], strides = [1, 1]} : vector<8x512xf32> to vector<8x128xf32>
    %281 = arith.negf %280 : vector<8x128xf32>
    %282 = math.exp %281 : vector<8x128xf32>
    %cst_130 = arith.constant 1.000000e+00 : f32
    %283 = vector.broadcast %cst_130 : f32 to vector<8x128xf32>
    %284 = arith.addf %283, %282 : vector<8x128xf32>
    %285 = arith.divf %283, %284 : vector<8x128xf32>
    %286 = arith.mulf %277, %248 : vector<8x128xf32>
    %287 = arith.mulf %271, %279 : vector<8x128xf32>
    %288 = arith.addf %286, %287 : vector<8x128xf32>
    %289 = math.tanh %288 : vector<8x128xf32>
    %290 = arith.mulf %285, %289 : vector<8x128xf32>
    %c6_131 = arith.constant 6 : index
    %c0_132 = arith.constant 0 : index
    %c0_133 = arith.constant 0 : index
    %291 = vector.load %arg21[%c6_131, %c0_132, %c0_133] : memref<8x8x128xf32, #tpu.memory_space<vmem>>, vector<1x8x128xf32>
    %292 = vector.shape_cast %291 : vector<1x8x128xf32> to vector<8x128xf32>
    %293 = vector.shape_cast %290 : vector<8x128xf32> to vector<1x8x128xf32>
    tpu.vector_store %arg21[%c6_131, %c0_132, %c0_133], %293 {strides = array<i32>} : memref<8x8x128xf32, #tpu.memory_space<vmem>>, vector<1x8x128xf32>,
    %c1_134 = arith.constant 1 : index
    %c0_135 = arith.constant 0 : index
    %c0_136 = arith.constant 0 : index
    %294 = vector.load %arg23[%c1_134, %c0_135, %c0_136] : memref<8x8x128xf32, #tpu.memory_space<vmem>>, vector<1x8x128xf32>
    %295 = vector.shape_cast %294 : vector<1x8x128xf32> to vector<8x128xf32>
    %296 = vector.shape_cast %290 : vector<8x128xf32> to vector<1x8x128xf32>
    tpu.vector_store %arg23[%c1_134, %c0_135, %c0_136], %296 {strides = array<i32>} : memref<8x8x128xf32, #tpu.memory_space<vmem>>, vector<1x8x128xf32>,
    %c7_137 = arith.constant 7 : index
    %c0_138 = arith.constant 0 : index
    %c0_139 = arith.constant 0 : index
    %297 = vector.load %arg17[%c7_137, %c0_138, %c0_139] : memref<8x8x512xf32, #tpu.memory_space<vmem>>, vector<1x8x512xf32>
    %298 = vector.shape_cast %297 : vector<1x8x512xf32> to vector<8x512xf32>
    %c0_140 = arith.constant 0 : index
    %c0_141 = arith.constant 0 : index
    %c0_142 = arith.constant 0 : index
    %299 = vector.load %arg19[%c0_140, %c0_141, %c0_142] : memref<8x8x512xf32, #tpu.memory_space<vmem>>, vector<1x8x512xf32>
    %300 = vector.shape_cast %299 : vector<1x8x512xf32> to vector<8x512xf32>
    %301 = arith.addf %298, %300 : vector<8x512xf32>
    %302 = arith.truncf %290 : vector<8x128xf32> to vector<8x128xbf16>
    %c0_143 = arith.constant 0 : index
    %c0_144 = arith.constant 0 : index
    %303 = vector.load %arg5[%c0_143, %c0_144] : memref<128x512xbf16, #tpu.memory_space<vmem>>, vector<128x512xbf16>
    %cst_145 = arith.constant dense<0.000000e+00> : vector<8x512xf32>
    %304 = tpu.matmul %302, %303, %cst_145 {dimension_numbers = #tpu.dot_dimension_numbers<[1], [0], [0], [1], [0, 0, 1, 1], [], []>} : vector<8x128xbf16>, vector<128x512xbf16>, vector<8x512xf32> -> vector<8x512xf32>
    %305 = arith.addf %301, %304 : vector<8x512xf32>
    %306 = vector.extract_strided_slice %305 {offsets = [0, 0], sizes = [8, 128], strides = [1, 1]} : vector<8x512xf32> to vector<8x128xf32>
    %307 = arith.negf %306 : vector<8x128xf32>
    %308 = math.exp %307 : vector<8x128xf32>
    %cst_146 = arith.constant 1.000000e+00 : f32
    %309 = vector.broadcast %cst_146 : f32 to vector<8x128xf32>
    %310 = arith.addf %309, %308 : vector<8x128xf32>
    %311 = arith.divf %309, %310 : vector<8x128xf32>
    %312 = vector.extract_strided_slice %305 {offsets = [0, 128], sizes = [8, 128], strides = [1, 1]} : vector<8x512xf32> to vector<8x128xf32>
    %313 = arith.negf %312 : vector<8x128xf32>
    %314 = math.exp %313 : vector<8x128xf32>
    %cst_147 = arith.constant 1.000000e+00 : f32
    %315 = vector.broadcast %cst_147 : f32 to vector<8x128xf32>
    %316 = arith.addf %315, %314 : vector<8x128xf32>
    %317 = arith.divf %315, %316 : vector<8x128xf32>
    %318 = vector.extract_strided_slice %305 {offsets = [0, 256], sizes = [8, 128], strides = [1, 1]} : vector<8x512xf32> to vector<8x128xf32>
    %319 = math.tanh %318 : vector<8x128xf32>
    %320 = vector.extract_strided_slice %305 {offsets = [0, 384], sizes = [8, 128], strides = [1, 1]} : vector<8x512xf32> to vector<8x128xf32>
    %321 = arith.negf %320 : vector<8x128xf32>
    %322 = math.exp %321 : vector<8x128xf32>
    %cst_148 = arith.constant 1.000000e+00 : f32
    %323 = vector.broadcast %cst_148 : f32 to vector<8x128xf32>
    %324 = arith.addf %323, %322 : vector<8x128xf32>
    %325 = arith.divf %323, %324 : vector<8x128xf32>
    %326 = arith.mulf %317, %288 : vector<8x128xf32>
    %327 = arith.mulf %311, %319 : vector<8x128xf32>
    %328 = arith.addf %326, %327 : vector<8x128xf32>
    %329 = math.tanh %328 : vector<8x128xf32>
    %330 = arith.mulf %325, %329 : vector<8x128xf32>
    %c7_149 = arith.constant 7 : index
    %c0_150 = arith.constant 0 : index
    %c0_151 = arith.constant 0 : index
    %331 = vector.load %arg21[%c7_149, %c0_150, %c0_151] : memref<8x8x128xf32, #tpu.memory_space<vmem>>, vector<1x8x128xf32>
    %332 = vector.shape_cast %331 : vector<1x8x128xf32> to vector<8x128xf32>
    %333 = vector.shape_cast %330 : vector<8x128xf32> to vector<1x8x128xf32>
    tpu.vector_store %arg21[%c7_149, %c0_150, %c0_151], %333 {strides = array<i32>} : memref<8x8x128xf32, #tpu.memory_space<vmem>>, vector<1x8x128xf32>,
    %c0_152 = arith.constant 0 : index
    %c0_153 = arith.constant 0 : index
    %c0_154 = arith.constant 0 : index
    %334 = vector.load %arg23[%c0_152, %c0_153, %c0_154] : memref<8x8x128xf32, #tpu.memory_space<vmem>>, vector<1x8x128xf32>
    %335 = vector.shape_cast %334 : vector<1x8x128xf32> to vector<8x128xf32>
    %336 = vector.shape_cast %330 : vector<8x128xf32> to vector<1x8x128xf32>
    tpu.vector_store %arg23[%c0_152, %c0_153, %c0_154], %336 {strides = array<i32>} : memref<8x8x128xf32, #tpu.memory_space<vmem>>, vector<1x8x128xf32>,
    %c0_155 = arith.constant 0 : index
    %c0_156 = arith.constant 0 : index
    %c0_157 = arith.constant 0 : index
    %337 = vector.load %arg21[%c0_155, %c0_156, %c0_157] : memref<8x8x128xf32, #tpu.memory_space<vmem>>, vector<8x8x128xf32>
    %338 = vector.shape_cast %337 : vector<8x8x128xf32> to vector<64x128xf32>
    %339 = arith.truncf %338 : vector<64x128xf32> to vector<64x128xbf16>
    %c0_158 = arith.constant 0 : index
    %c0_159 = arith.constant 0 : index
    %c0_160 = arith.constant 0 : index
    %340 = vector.load %arg23[%c0_158, %c0_159, %c0_160] : memref<8x8x128xf32, #tpu.memory_space<vmem>>, vector<8x8x128xf32>
    %341 = vector.shape_cast %340 : vector<8x8x128xf32> to vector<64x128xf32>
    %342 = arith.truncf %341 : vector<64x128xf32> to vector<64x128xbf16>
    %c0_161 = arith.constant 0 : index
    %c0_162 = arith.constant 0 : index
    %343 = vector.load %arg6[%c0_161, %c0_162] : memref<128x512xbf16, #tpu.memory_space<vmem>>, vector<128x512xbf16>
    %cst_163 = arith.constant dense<0.000000e+00> : vector<64x512xf32>
    %344 = tpu.matmul %339, %343, %cst_163 {dimension_numbers = #tpu.dot_dimension_numbers<[1], [0], [0], [1], [0, 0, 1, 1], [], []>} : vector<64x128xbf16>, vector<128x512xbf16>, vector<64x512xf32> -> vector<64x512xf32>
    %c0_164 = arith.constant 0 : index
    %c0_165 = arith.constant 0 : index
    %345 = vector.load %arg7[%c0_164, %c0_165] : memref<128x512xbf16, #tpu.memory_space<vmem>>, vector<128x512xbf16>
    %cst_166 = arith.constant dense<0.000000e+00> : vector<64x512xf32>
    %346 = tpu.matmul %342, %345, %cst_166 {dimension_numbers = #tpu.dot_dimension_numbers<[1], [0], [0], [1], [0, 0, 1, 1], [], []>} : vector<64x128xbf16>, vector<128x512xbf16>, vector<64x512xf32> -> vector<64x512xf32>
    %347 = arith.addf %344, %346 : vector<64x512xf32>
    %c0_167 = arith.constant 0 : index
    %c0_168 = arith.constant 0 : index
    %348 = vector.load %arg8[%c0_167, %c0_168] : memref<1x512xf32, #tpu.memory_space<vmem>>, vector<1x512xf32>
    %349 = vector.broadcast %348 : vector<1x512xf32> to vector<64x512xf32>
    %350 = arith.addf %347, %349 : vector<64x512xf32>
    %351 = vector.shape_cast %350 : vector<64x512xf32> to vector<8x8x512xf32>
    %c0_169 = arith.constant 0 : index
    %c0_170 = arith.constant 0 : index
    %c0_171 = arith.constant 0 : index
    %352 = vector.load %arg18[%c0_169, %c0_170, %c0_171] : memref<8x8x512xf32, #tpu.memory_space<vmem>>, vector<8x8x512xf32>
    tpu.vector_store %arg18[%c0_169, %c0_170, %c0_171], %351 {strides = array<i32>} : memref<8x8x512xf32, #tpu.memory_space<vmem>>, vector<8x8x512xf32>,
    %c0_172 = arith.constant 0 : index
    %c0_173 = arith.constant 0 : index
    %353 = vector.load %arg9[%c0_172, %c0_173] : memref<128x512xbf16, #tpu.memory_space<vmem>>, vector<128x512xbf16>
    %cst_174 = arith.constant dense<0.000000e+00> : vector<64x512xf32>
    %354 = tpu.matmul %339, %353, %cst_174 {dimension_numbers = #tpu.dot_dimension_numbers<[1], [0], [0], [1], [0, 0, 1, 1], [], []>} : vector<64x128xbf16>, vector<128x512xbf16>, vector<64x512xf32> -> vector<64x512xf32>
    %c0_175 = arith.constant 0 : index
    %c0_176 = arith.constant 0 : index
    %355 = vector.load %arg10[%c0_175, %c0_176] : memref<128x512xbf16, #tpu.memory_space<vmem>>, vector<128x512xbf16>
    %cst_177 = arith.constant dense<0.000000e+00> : vector<64x512xf32>
    %356 = tpu.matmul %342, %355, %cst_177 {dimension_numbers = #tpu.dot_dimension_numbers<[1], [0], [0], [1], [0, 0, 1, 1], [], []>} : vector<64x128xbf16>, vector<128x512xbf16>, vector<64x512xf32> -> vector<64x512xf32>
    %357 = arith.addf %354, %356 : vector<64x512xf32>
    %c0_178 = arith.constant 0 : index
    %c0_179 = arith.constant 0 : index
    %358 = vector.load %arg11[%c0_178, %c0_179] : memref<1x512xf32, #tpu.memory_space<vmem>>, vector<1x512xf32>
    %359 = vector.broadcast %358 : vector<1x512xf32> to vector<64x512xf32>
    %360 = arith.addf %357, %359 : vector<64x512xf32>
    %361 = vector.shape_cast %360 : vector<64x512xf32> to vector<8x8x512xf32>
    %c0_180 = arith.constant 0 : index
    %c0_181 = arith.constant 0 : index
    %c0_182 = arith.constant 0 : index
    %362 = vector.load %arg20[%c0_180, %c0_181, %c0_182] : memref<8x8x512xf32, #tpu.memory_space<vmem>>, vector<8x8x512xf32>
    tpu.vector_store %arg20[%c0_180, %c0_181, %c0_182], %361 {strides = array<i32>} : memref<8x8x512xf32, #tpu.memory_space<vmem>>, vector<8x8x512xf32>,
    %cst_183 = arith.constant 0.000000e+00 : f32
    %363 = vector.broadcast %cst_183 : f32 to vector<8x128xf32>
    %cst_184 = arith.constant 0.000000e+00 : f32
    %364 = vector.broadcast %cst_184 : f32 to vector<8x128xf32>
    %c0_185 = arith.constant 0 : index
    %c0_186 = arith.constant 0 : index
    %c0_187 = arith.constant 0 : index
    %365 = vector.load %arg18[%c0_185, %c0_186, %c0_187] : memref<8x8x512xf32, #tpu.memory_space<vmem>>, vector<1x8x512xf32>
    %366 = vector.shape_cast %365 : vector<1x8x512xf32> to vector<8x512xf32>
    %c7_188 = arith.constant 7 : index
    %c0_189 = arith.constant 0 : index
    %c0_190 = arith.constant 0 : index
    %367 = vector.load %arg20[%c7_188, %c0_189, %c0_190] : memref<8x8x512xf32, #tpu.memory_space<vmem>>, vector<1x8x512xf32>
    %368 = vector.shape_cast %367 : vector<1x8x512xf32> to vector<8x512xf32>
    %369 = arith.addf %366, %368 : vector<8x512xf32>
    %370 = arith.truncf %363 : vector<8x128xf32> to vector<8x128xbf16>
    %c0_191 = arith.constant 0 : index
    %c0_192 = arith.constant 0 : index
    %371 = vector.load %arg12[%c0_191, %c0_192] : memref<128x512xbf16, #tpu.memory_space<vmem>>, vector<128x512xbf16>
    %cst_193 = arith.constant dense<0.000000e+00> : vector<8x512xf32>
    %372 = tpu.matmul %370, %371, %cst_193 {dimension_numbers = #tpu.dot_dimension_numbers<[1], [0], [0], [1], [0, 0, 1, 1], [], []>} : vector<8x128xbf16>, vector<128x512xbf16>, vector<8x512xf32> -> vector<8x512xf32>
    %373 = arith.addf %369, %372 : vector<8x512xf32>
    %374 = vector.extract_strided_slice %373 {offsets = [0, 0], sizes = [8, 128], strides = [1, 1]} : vector<8x512xf32> to vector<8x128xf32>
    %375 = arith.negf %374 : vector<8x128xf32>
    %376 = math.exp %375 : vector<8x128xf32>
    %cst_194 = arith.constant 1.000000e+00 : f32
    %377 = vector.broadcast %cst_194 : f32 to vector<8x128xf32>
    %378 = arith.addf %377, %376 : vector<8x128xf32>
    %379 = arith.divf %377, %378 : vector<8x128xf32>
    %380 = vector.extract_strided_slice %373 {offsets = [0, 128], sizes = [8, 128], strides = [1, 1]} : vector<8x512xf32> to vector<8x128xf32>
    %381 = arith.negf %380 : vector<8x128xf32>
    %382 = math.exp %381 : vector<8x128xf32>
    %cst_195 = arith.constant 1.000000e+00 : f32
    %383 = vector.broadcast %cst_195 : f32 to vector<8x128xf32>
    %384 = arith.addf %383, %382 : vector<8x128xf32>
    %385 = arith.divf %383, %384 : vector<8x128xf32>
    %386 = vector.extract_strided_slice %373 {offsets = [0, 256], sizes = [8, 128], strides = [1, 1]} : vector<8x512xf32> to vector<8x128xf32>
    %387 = math.tanh %386 : vector<8x128xf32>
    %388 = vector.extract_strided_slice %373 {offsets = [0, 384], sizes = [8, 128], strides = [1, 1]} : vector<8x512xf32> to vector<8x128xf32>
    %389 = arith.negf %388 : vector<8x128xf32>
    %390 = math.exp %389 : vector<8x128xf32>
    %cst_196 = arith.constant 1.000000e+00 : f32
    %391 = vector.broadcast %cst_196 : f32 to vector<8x128xf32>
    %392 = arith.addf %391, %390 : vector<8x128xf32>
    %393 = arith.divf %391, %392 : vector<8x128xf32>
    %394 = arith.mulf %385, %364 : vector<8x128xf32>
    %395 = arith.mulf %379, %387 : vector<8x128xf32>
    %396 = arith.addf %394, %395 : vector<8x128xf32>
    %397 = math.tanh %396 : vector<8x128xf32>
    %398 = arith.mulf %393, %397 : vector<8x128xf32>
    %c0_197 = arith.constant 0 : index
    %c0_198 = arith.constant 0 : index
    %c0_199 = arith.constant 0 : index
    %399 = vector.load %arg22[%c0_197, %c0_198, %c0_199] : memref<8x8x128xf32, #tpu.memory_space<vmem>>, vector<1x8x128xf32>
    %400 = vector.shape_cast %399 : vector<1x8x128xf32> to vector<8x128xf32>
    %401 = vector.shape_cast %398 : vector<8x128xf32> to vector<1x8x128xf32>
    tpu.vector_store %arg22[%c0_197, %c0_198, %c0_199], %401 {strides = array<i32>} : memref<8x8x128xf32, #tpu.memory_space<vmem>>, vector<1x8x128xf32>,
    %c7_200 = arith.constant 7 : index
    %c0_201 = arith.constant 0 : index
    %c0_202 = arith.constant 0 : index
    %402 = vector.load %arg24[%c7_200, %c0_201, %c0_202] : memref<8x8x128xf32, #tpu.memory_space<vmem>>, vector<1x8x128xf32>
    %403 = vector.shape_cast %402 : vector<1x8x128xf32> to vector<8x128xf32>
    %404 = vector.shape_cast %398 : vector<8x128xf32> to vector<1x8x128xf32>
    tpu.vector_store %arg24[%c7_200, %c0_201, %c0_202], %404 {strides = array<i32>} : memref<8x8x128xf32, #tpu.memory_space<vmem>>, vector<1x8x128xf32>,
    %c1_203 = arith.constant 1 : index
    %c0_204 = arith.constant 0 : index
    %c0_205 = arith.constant 0 : index
    %405 = vector.load %arg18[%c1_203, %c0_204, %c0_205] : memref<8x8x512xf32, #tpu.memory_space<vmem>>, vector<1x8x512xf32>
    %406 = vector.shape_cast %405 : vector<1x8x512xf32> to vector<8x512xf32>
    %c6_206 = arith.constant 6 : index
    %c0_207 = arith.constant 0 : index
    %c0_208 = arith.constant 0 : index
    %407 = vector.load %arg20[%c6_206, %c0_207, %c0_208] : memref<8x8x512xf32, #tpu.memory_space<vmem>>, vector<1x8x512xf32>
    %408 = vector.shape_cast %407 : vector<1x8x512xf32> to vector<8x512xf32>
    %409 = arith.addf %406, %408 : vector<8x512xf32>
    %410 = arith.truncf %398 : vector<8x128xf32> to vector<8x128xbf16>
    %c0_209 = arith.constant 0 : index
    %c0_210 = arith.constant 0 : index
    %411 = vector.load %arg12[%c0_209, %c0_210] : memref<128x512xbf16, #tpu.memory_space<vmem>>, vector<128x512xbf16>
    %cst_211 = arith.constant dense<0.000000e+00> : vector<8x512xf32>
    %412 = tpu.matmul %410, %411, %cst_211 {dimension_numbers = #tpu.dot_dimension_numbers<[1], [0], [0], [1], [0, 0, 1, 1], [], []>} : vector<8x128xbf16>, vector<128x512xbf16>, vector<8x512xf32> -> vector<8x512xf32>
    %413 = arith.addf %409, %412 : vector<8x512xf32>
    %414 = vector.extract_strided_slice %413 {offsets = [0, 0], sizes = [8, 128], strides = [1, 1]} : vector<8x512xf32> to vector<8x128xf32>
    %415 = arith.negf %414 : vector<8x128xf32>
    %416 = math.exp %415 : vector<8x128xf32>
    %cst_212 = arith.constant 1.000000e+00 : f32
    %417 = vector.broadcast %cst_212 : f32 to vector<8x128xf32>
    %418 = arith.addf %417, %416 : vector<8x128xf32>
    %419 = arith.divf %417, %418 : vector<8x128xf32>
    %420 = vector.extract_strided_slice %413 {offsets = [0, 128], sizes = [8, 128], strides = [1, 1]} : vector<8x512xf32> to vector<8x128xf32>
    %421 = arith.negf %420 : vector<8x128xf32>
    %422 = math.exp %421 : vector<8x128xf32>
    %cst_213 = arith.constant 1.000000e+00 : f32
    %423 = vector.broadcast %cst_213 : f32 to vector<8x128xf32>
    %424 = arith.addf %423, %422 : vector<8x128xf32>
    %425 = arith.divf %423, %424 : vector<8x128xf32>
    %426 = vector.extract_strided_slice %413 {offsets = [0, 256], sizes = [8, 128], strides = [1, 1]} : vector<8x512xf32> to vector<8x128xf32>
    %427 = math.tanh %426 : vector<8x128xf32>
    %428 = vector.extract_strided_slice %413 {offsets = [0, 384], sizes = [8, 128], strides = [1, 1]} : vector<8x512xf32> to vector<8x128xf32>
    %429 = arith.negf %428 : vector<8x128xf32>
    %430 = math.exp %429 : vector<8x128xf32>
    %cst_214 = arith.constant 1.000000e+00 : f32
    %431 = vector.broadcast %cst_214 : f32 to vector<8x128xf32>
    %432 = arith.addf %431, %430 : vector<8x128xf32>
    %433 = arith.divf %431, %432 : vector<8x128xf32>
    %434 = arith.mulf %425, %396 : vector<8x128xf32>
    %435 = arith.mulf %419, %427 : vector<8x128xf32>
    %436 = arith.addf %434, %435 : vector<8x128xf32>
    %437 = math.tanh %436 : vector<8x128xf32>
    %438 = arith.mulf %433, %437 : vector<8x128xf32>
    %c1_215 = arith.constant 1 : index
    %c0_216 = arith.constant 0 : index
    %c0_217 = arith.constant 0 : index
    %439 = vector.load %arg22[%c1_215, %c0_216, %c0_217] : memref<8x8x128xf32, #tpu.memory_space<vmem>>, vector<1x8x128xf32>
    %440 = vector.shape_cast %439 : vector<1x8x128xf32> to vector<8x128xf32>
    %441 = vector.shape_cast %438 : vector<8x128xf32> to vector<1x8x128xf32>
    tpu.vector_store %arg22[%c1_215, %c0_216, %c0_217], %441 {strides = array<i32>} : memref<8x8x128xf32, #tpu.memory_space<vmem>>, vector<1x8x128xf32>,
    %c6_218 = arith.constant 6 : index
    %c0_219 = arith.constant 0 : index
    %c0_220 = arith.constant 0 : index
    %442 = vector.load %arg24[%c6_218, %c0_219, %c0_220] : memref<8x8x128xf32, #tpu.memory_space<vmem>>, vector<1x8x128xf32>
    %443 = vector.shape_cast %442 : vector<1x8x128xf32> to vector<8x128xf32>
    %444 = vector.shape_cast %438 : vector<8x128xf32> to vector<1x8x128xf32>
    tpu.vector_store %arg24[%c6_218, %c0_219, %c0_220], %444 {strides = array<i32>} : memref<8x8x128xf32, #tpu.memory_space<vmem>>, vector<1x8x128xf32>,
    %c2_221 = arith.constant 2 : index
    %c0_222 = arith.constant 0 : index
    %c0_223 = arith.constant 0 : index
    %445 = vector.load %arg18[%c2_221, %c0_222, %c0_223] : memref<8x8x512xf32, #tpu.memory_space<vmem>>, vector<1x8x512xf32>
    %446 = vector.shape_cast %445 : vector<1x8x512xf32> to vector<8x512xf32>
    %c5_224 = arith.constant 5 : index
    %c0_225 = arith.constant 0 : index
    %c0_226 = arith.constant 0 : index
    %447 = vector.load %arg20[%c5_224, %c0_225, %c0_226] : memref<8x8x512xf32, #tpu.memory_space<vmem>>, vector<1x8x512xf32>
    %448 = vector.shape_cast %447 : vector<1x8x512xf32> to vector<8x512xf32>
    %449 = arith.addf %446, %448 : vector<8x512xf32>
    %450 = arith.truncf %438 : vector<8x128xf32> to vector<8x128xbf16>
    %c0_227 = arith.constant 0 : index
    %c0_228 = arith.constant 0 : index
    %451 = vector.load %arg12[%c0_227, %c0_228] : memref<128x512xbf16, #tpu.memory_space<vmem>>, vector<128x512xbf16>
    %cst_229 = arith.constant dense<0.000000e+00> : vector<8x512xf32>
    %452 = tpu.matmul %450, %451, %cst_229 {dimension_numbers = #tpu.dot_dimension_numbers<[1], [0], [0], [1], [0, 0, 1, 1], [], []>} : vector<8x128xbf16>, vector<128x512xbf16>, vector<8x512xf32> -> vector<8x512xf32>
    %453 = arith.addf %449, %452 : vector<8x512xf32>
    %454 = vector.extract_strided_slice %453 {offsets = [0, 0], sizes = [8, 128], strides = [1, 1]} : vector<8x512xf32> to vector<8x128xf32>
    %455 = arith.negf %454 : vector<8x128xf32>
    %456 = math.exp %455 : vector<8x128xf32>
    %cst_230 = arith.constant 1.000000e+00 : f32
    %457 = vector.broadcast %cst_230 : f32 to vector<8x128xf32>
    %458 = arith.addf %457, %456 : vector<8x128xf32>
    %459 = arith.divf %457, %458 : vector<8x128xf32>
    %460 = vector.extract_strided_slice %453 {offsets = [0, 128], sizes = [8, 128], strides = [1, 1]} : vector<8x512xf32> to vector<8x128xf32>
    %461 = arith.negf %460 : vector<8x128xf32>
    %462 = math.exp %461 : vector<8x128xf32>
    %cst_231 = arith.constant 1.000000e+00 : f32
    %463 = vector.broadcast %cst_231 : f32 to vector<8x128xf32>
    %464 = arith.addf %463, %462 : vector<8x128xf32>
    %465 = arith.divf %463, %464 : vector<8x128xf32>
    %466 = vector.extract_strided_slice %453 {offsets = [0, 256], sizes = [8, 128], strides = [1, 1]} : vector<8x512xf32> to vector<8x128xf32>
    %467 = math.tanh %466 : vector<8x128xf32>
    %468 = vector.extract_strided_slice %453 {offsets = [0, 384], sizes = [8, 128], strides = [1, 1]} : vector<8x512xf32> to vector<8x128xf32>
    %469 = arith.negf %468 : vector<8x128xf32>
    %470 = math.exp %469 : vector<8x128xf32>
    %cst_232 = arith.constant 1.000000e+00 : f32
    %471 = vector.broadcast %cst_232 : f32 to vector<8x128xf32>
    %472 = arith.addf %471, %470 : vector<8x128xf32>
    %473 = arith.divf %471, %472 : vector<8x128xf32>
    %474 = arith.mulf %465, %436 : vector<8x128xf32>
    %475 = arith.mulf %459, %467 : vector<8x128xf32>
    %476 = arith.addf %474, %475 : vector<8x128xf32>
    %477 = math.tanh %476 : vector<8x128xf32>
    %478 = arith.mulf %473, %477 : vector<8x128xf32>
    %c2_233 = arith.constant 2 : index
    %c0_234 = arith.constant 0 : index
    %c0_235 = arith.constant 0 : index
    %479 = vector.load %arg22[%c2_233, %c0_234, %c0_235] : memref<8x8x128xf32, #tpu.memory_space<vmem>>, vector<1x8x128xf32>
    %480 = vector.shape_cast %479 : vector<1x8x128xf32> to vector<8x128xf32>
    %481 = vector.shape_cast %478 : vector<8x128xf32> to vector<1x8x128xf32>
    tpu.vector_store %arg22[%c2_233, %c0_234, %c0_235], %481 {strides = array<i32>} : memref<8x8x128xf32, #tpu.memory_space<vmem>>, vector<1x8x128xf32>,
    %c5_236 = arith.constant 5 : index
    %c0_237 = arith.constant 0 : index
    %c0_238 = arith.constant 0 : index
    %482 = vector.load %arg24[%c5_236, %c0_237, %c0_238] : memref<8x8x128xf32, #tpu.memory_space<vmem>>, vector<1x8x128xf32>
    %483 = vector.shape_cast %482 : vector<1x8x128xf32> to vector<8x128xf32>
    %484 = vector.shape_cast %478 : vector<8x128xf32> to vector<1x8x128xf32>
    tpu.vector_store %arg24[%c5_236, %c0_237, %c0_238], %484 {strides = array<i32>} : memref<8x8x128xf32, #tpu.memory_space<vmem>>, vector<1x8x128xf32>,
    %c3_239 = arith.constant 3 : index
    %c0_240 = arith.constant 0 : index
    %c0_241 = arith.constant 0 : index
    %485 = vector.load %arg18[%c3_239, %c0_240, %c0_241] : memref<8x8x512xf32, #tpu.memory_space<vmem>>, vector<1x8x512xf32>
    %486 = vector.shape_cast %485 : vector<1x8x512xf32> to vector<8x512xf32>
    %c4_242 = arith.constant 4 : index
    %c0_243 = arith.constant 0 : index
    %c0_244 = arith.constant 0 : index
    %487 = vector.load %arg20[%c4_242, %c0_243, %c0_244] : memref<8x8x512xf32, #tpu.memory_space<vmem>>, vector<1x8x512xf32>
    %488 = vector.shape_cast %487 : vector<1x8x512xf32> to vector<8x512xf32>
    %489 = arith.addf %486, %488 : vector<8x512xf32>
    %490 = arith.truncf %478 : vector<8x128xf32> to vector<8x128xbf16>
    %c0_245 = arith.constant 0 : index
    %c0_246 = arith.constant 0 : index
    %491 = vector.load %arg12[%c0_245, %c0_246] : memref<128x512xbf16, #tpu.memory_space<vmem>>, vector<128x512xbf16>
    %cst_247 = arith.constant dense<0.000000e+00> : vector<8x512xf32>
    %492 = tpu.matmul %490, %491, %cst_247 {dimension_numbers = #tpu.dot_dimension_numbers<[1], [0], [0], [1], [0, 0, 1, 1], [], []>} : vector<8x128xbf16>, vector<128x512xbf16>, vector<8x512xf32> -> vector<8x512xf32>
    %493 = arith.addf %489, %492 : vector<8x512xf32>
    %494 = vector.extract_strided_slice %493 {offsets = [0, 0], sizes = [8, 128], strides = [1, 1]} : vector<8x512xf32> to vector<8x128xf32>
    %495 = arith.negf %494 : vector<8x128xf32>
    %496 = math.exp %495 : vector<8x128xf32>
    %cst_248 = arith.constant 1.000000e+00 : f32
    %497 = vector.broadcast %cst_248 : f32 to vector<8x128xf32>
    %498 = arith.addf %497, %496 : vector<8x128xf32>
    %499 = arith.divf %497, %498 : vector<8x128xf32>
    %500 = vector.extract_strided_slice %493 {offsets = [0, 128], sizes = [8, 128], strides = [1, 1]} : vector<8x512xf32> to vector<8x128xf32>
    %501 = arith.negf %500 : vector<8x128xf32>
    %502 = math.exp %501 : vector<8x128xf32>
    %cst_249 = arith.constant 1.000000e+00 : f32
    %503 = vector.broadcast %cst_249 : f32 to vector<8x128xf32>
    %504 = arith.addf %503, %502 : vector<8x128xf32>
    %505 = arith.divf %503, %504 : vector<8x128xf32>
    %506 = vector.extract_strided_slice %493 {offsets = [0, 256], sizes = [8, 128], strides = [1, 1]} : vector<8x512xf32> to vector<8x128xf32>
    %507 = math.tanh %506 : vector<8x128xf32>
    %508 = vector.extract_strided_slice %493 {offsets = [0, 384], sizes = [8, 128], strides = [1, 1]} : vector<8x512xf32> to vector<8x128xf32>
    %509 = arith.negf %508 : vector<8x128xf32>
    %510 = math.exp %509 : vector<8x128xf32>
    %cst_250 = arith.constant 1.000000e+00 : f32
    %511 = vector.broadcast %cst_250 : f32 to vector<8x128xf32>
    %512 = arith.addf %511, %510 : vector<8x128xf32>
    %513 = arith.divf %511, %512 : vector<8x128xf32>
    %514 = arith.mulf %505, %476 : vector<8x128xf32>
    %515 = arith.mulf %499, %507 : vector<8x128xf32>
    %516 = arith.addf %514, %515 : vector<8x128xf32>
    %517 = math.tanh %516 : vector<8x128xf32>
    %518 = arith.mulf %513, %517 : vector<8x128xf32>
    %c3_251 = arith.constant 3 : index
    %c0_252 = arith.constant 0 : index
    %c0_253 = arith.constant 0 : index
    %519 = vector.load %arg22[%c3_251, %c0_252, %c0_253] : memref<8x8x128xf32, #tpu.memory_space<vmem>>, vector<1x8x128xf32>
    %520 = vector.shape_cast %519 : vector<1x8x128xf32> to vector<8x128xf32>
    %521 = vector.shape_cast %518 : vector<8x128xf32> to vector<1x8x128xf32>
    tpu.vector_store %arg22[%c3_251, %c0_252, %c0_253], %521 {strides = array<i32>} : memref<8x8x128xf32, #tpu.memory_space<vmem>>, vector<1x8x128xf32>,
    %c4_254 = arith.constant 4 : index
    %c0_255 = arith.constant 0 : index
    %c0_256 = arith.constant 0 : index
    %522 = vector.load %arg24[%c4_254, %c0_255, %c0_256] : memref<8x8x128xf32, #tpu.memory_space<vmem>>, vector<1x8x128xf32>
    %523 = vector.shape_cast %522 : vector<1x8x128xf32> to vector<8x128xf32>
    %524 = vector.shape_cast %518 : vector<8x128xf32> to vector<1x8x128xf32>
    tpu.vector_store %arg24[%c4_254, %c0_255, %c0_256], %524 {strides = array<i32>} : memref<8x8x128xf32, #tpu.memory_space<vmem>>, vector<1x8x128xf32>,
    %c4_257 = arith.constant 4 : index
    %c0_258 = arith.constant 0 : index
    %c0_259 = arith.constant 0 : index
    %525 = vector.load %arg18[%c4_257, %c0_258, %c0_259] : memref<8x8x512xf32, #tpu.memory_space<vmem>>, vector<1x8x512xf32>
    %526 = vector.shape_cast %525 : vector<1x8x512xf32> to vector<8x512xf32>
    %c3_260 = arith.constant 3 : index
    %c0_261 = arith.constant 0 : index
    %c0_262 = arith.constant 0 : index
    %527 = vector.load %arg20[%c3_260, %c0_261, %c0_262] : memref<8x8x512xf32, #tpu.memory_space<vmem>>, vector<1x8x512xf32>
    %528 = vector.shape_cast %527 : vector<1x8x512xf32> to vector<8x512xf32>
    %529 = arith.addf %526, %528 : vector<8x512xf32>
    %530 = arith.truncf %518 : vector<8x128xf32> to vector<8x128xbf16>
    %c0_263 = arith.constant 0 : index
    %c0_264 = arith.constant 0 : index
    %531 = vector.load %arg12[%c0_263, %c0_264] : memref<128x512xbf16, #tpu.memory_space<vmem>>, vector<128x512xbf16>
    %cst_265 = arith.constant dense<0.000000e+00> : vector<8x512xf32>
    %532 = tpu.matmul %530, %531, %cst_265 {dimension_numbers = #tpu.dot_dimension_numbers<[1], [0], [0], [1], [0, 0, 1, 1], [], []>} : vector<8x128xbf16>, vector<128x512xbf16>, vector<8x512xf32> -> vector<8x512xf32>
    %533 = arith.addf %529, %532 : vector<8x512xf32>
    %534 = vector.extract_strided_slice %533 {offsets = [0, 0], sizes = [8, 128], strides = [1, 1]} : vector<8x512xf32> to vector<8x128xf32>
    %535 = arith.negf %534 : vector<8x128xf32>
    %536 = math.exp %535 : vector<8x128xf32>
    %cst_266 = arith.constant 1.000000e+00 : f32
    %537 = vector.broadcast %cst_266 : f32 to vector<8x128xf32>
    %538 = arith.addf %537, %536 : vector<8x128xf32>
    %539 = arith.divf %537, %538 : vector<8x128xf32>
    %540 = vector.extract_strided_slice %533 {offsets = [0, 128], sizes = [8, 128], strides = [1, 1]} : vector<8x512xf32> to vector<8x128xf32>
    %541 = arith.negf %540 : vector<8x128xf32>
    %542 = math.exp %541 : vector<8x128xf32>
    %cst_267 = arith.constant 1.000000e+00 : f32
    %543 = vector.broadcast %cst_267 : f32 to vector<8x128xf32>
    %544 = arith.addf %543, %542 : vector<8x128xf32>
    %545 = arith.divf %543, %544 : vector<8x128xf32>
    %546 = vector.extract_strided_slice %533 {offsets = [0, 256], sizes = [8, 128], strides = [1, 1]} : vector<8x512xf32> to vector<8x128xf32>
    %547 = math.tanh %546 : vector<8x128xf32>
    %548 = vector.extract_strided_slice %533 {offsets = [0, 384], sizes = [8, 128], strides = [1, 1]} : vector<8x512xf32> to vector<8x128xf32>
    %549 = arith.negf %548 : vector<8x128xf32>
    %550 = math.exp %549 : vector<8x128xf32>
    %cst_268 = arith.constant 1.000000e+00 : f32
    %551 = vector.broadcast %cst_268 : f32 to vector<8x128xf32>
    %552 = arith.addf %551, %550 : vector<8x128xf32>
    %553 = arith.divf %551, %552 : vector<8x128xf32>
    %554 = arith.mulf %545, %516 : vector<8x128xf32>
    %555 = arith.mulf %539, %547 : vector<8x128xf32>
    %556 = arith.addf %554, %555 : vector<8x128xf32>
    %557 = math.tanh %556 : vector<8x128xf32>
    %558 = arith.mulf %553, %557 : vector<8x128xf32>
    %c4_269 = arith.constant 4 : index
    %c0_270 = arith.constant 0 : index
    %c0_271 = arith.constant 0 : index
    %559 = vector.load %arg22[%c4_269, %c0_270, %c0_271] : memref<8x8x128xf32, #tpu.memory_space<vmem>>, vector<1x8x128xf32>
    %560 = vector.shape_cast %559 : vector<1x8x128xf32> to vector<8x128xf32>
    %561 = vector.shape_cast %558 : vector<8x128xf32> to vector<1x8x128xf32>
    tpu.vector_store %arg22[%c4_269, %c0_270, %c0_271], %561 {strides = array<i32>} : memref<8x8x128xf32, #tpu.memory_space<vmem>>, vector<1x8x128xf32>,
    %c3_272 = arith.constant 3 : index
    %c0_273 = arith.constant 0 : index
    %c0_274 = arith.constant 0 : index
    %562 = vector.load %arg24[%c3_272, %c0_273, %c0_274] : memref<8x8x128xf32, #tpu.memory_space<vmem>>, vector<1x8x128xf32>
    %563 = vector.shape_cast %562 : vector<1x8x128xf32> to vector<8x128xf32>
    %564 = vector.shape_cast %558 : vector<8x128xf32> to vector<1x8x128xf32>
    tpu.vector_store %arg24[%c3_272, %c0_273, %c0_274], %564 {strides = array<i32>} : memref<8x8x128xf32, #tpu.memory_space<vmem>>, vector<1x8x128xf32>,
    %c5_275 = arith.constant 5 : index
    %c0_276 = arith.constant 0 : index
    %c0_277 = arith.constant 0 : index
    %565 = vector.load %arg18[%c5_275, %c0_276, %c0_277] : memref<8x8x512xf32, #tpu.memory_space<vmem>>, vector<1x8x512xf32>
    %566 = vector.shape_cast %565 : vector<1x8x512xf32> to vector<8x512xf32>
    %c2_278 = arith.constant 2 : index
    %c0_279 = arith.constant 0 : index
    %c0_280 = arith.constant 0 : index
    %567 = vector.load %arg20[%c2_278, %c0_279, %c0_280] : memref<8x8x512xf32, #tpu.memory_space<vmem>>, vector<1x8x512xf32>
    %568 = vector.shape_cast %567 : vector<1x8x512xf32> to vector<8x512xf32>
    %569 = arith.addf %566, %568 : vector<8x512xf32>
    %570 = arith.truncf %558 : vector<8x128xf32> to vector<8x128xbf16>
    %c0_281 = arith.constant 0 : index
    %c0_282 = arith.constant 0 : index
    %571 = vector.load %arg12[%c0_281, %c0_282] : memref<128x512xbf16, #tpu.memory_space<vmem>>, vector<128x512xbf16>
    %cst_283 = arith.constant dense<0.000000e+00> : vector<8x512xf32>
    %572 = tpu.matmul %570, %571, %cst_283 {dimension_numbers = #tpu.dot_dimension_numbers<[1], [0], [0], [1], [0, 0, 1, 1], [], []>} : vector<8x128xbf16>, vector<128x512xbf16>, vector<8x512xf32> -> vector<8x512xf32>
    %573 = arith.addf %569, %572 : vector<8x512xf32>
    %574 = vector.extract_strided_slice %573 {offsets = [0, 0], sizes = [8, 128], strides = [1, 1]} : vector<8x512xf32> to vector<8x128xf32>
    %575 = arith.negf %574 : vector<8x128xf32>
    %576 = math.exp %575 : vector<8x128xf32>
    %cst_284 = arith.constant 1.000000e+00 : f32
    %577 = vector.broadcast %cst_284 : f32 to vector<8x128xf32>
    %578 = arith.addf %577, %576 : vector<8x128xf32>
    %579 = arith.divf %577, %578 : vector<8x128xf32>
    %580 = vector.extract_strided_slice %573 {offsets = [0, 128], sizes = [8, 128], strides = [1, 1]} : vector<8x512xf32> to vector<8x128xf32>
    %581 = arith.negf %580 : vector<8x128xf32>
    %582 = math.exp %581 : vector<8x128xf32>
    %cst_285 = arith.constant 1.000000e+00 : f32
    %583 = vector.broadcast %cst_285 : f32 to vector<8x128xf32>
    %584 = arith.addf %583, %582 : vector<8x128xf32>
    %585 = arith.divf %583, %584 : vector<8x128xf32>
    %586 = vector.extract_strided_slice %573 {offsets = [0, 256], sizes = [8, 128], strides = [1, 1]} : vector<8x512xf32> to vector<8x128xf32>
    %587 = math.tanh %586 : vector<8x128xf32>
    %588 = vector.extract_strided_slice %573 {offsets = [0, 384], sizes = [8, 128], strides = [1, 1]} : vector<8x512xf32> to vector<8x128xf32>
    %589 = arith.negf %588 : vector<8x128xf32>
    %590 = math.exp %589 : vector<8x128xf32>
    %cst_286 = arith.constant 1.000000e+00 : f32
    %591 = vector.broadcast %cst_286 : f32 to vector<8x128xf32>
    %592 = arith.addf %591, %590 : vector<8x128xf32>
    %593 = arith.divf %591, %592 : vector<8x128xf32>
    %594 = arith.mulf %585, %556 : vector<8x128xf32>
    %595 = arith.mulf %579, %587 : vector<8x128xf32>
    %596 = arith.addf %594, %595 : vector<8x128xf32>
    %597 = math.tanh %596 : vector<8x128xf32>
    %598 = arith.mulf %593, %597 : vector<8x128xf32>
    %c5_287 = arith.constant 5 : index
    %c0_288 = arith.constant 0 : index
    %c0_289 = arith.constant 0 : index
    %599 = vector.load %arg22[%c5_287, %c0_288, %c0_289] : memref<8x8x128xf32, #tpu.memory_space<vmem>>, vector<1x8x128xf32>
    %600 = vector.shape_cast %599 : vector<1x8x128xf32> to vector<8x128xf32>
    %601 = vector.shape_cast %598 : vector<8x128xf32> to vector<1x8x128xf32>
    tpu.vector_store %arg22[%c5_287, %c0_288, %c0_289], %601 {strides = array<i32>} : memref<8x8x128xf32, #tpu.memory_space<vmem>>, vector<1x8x128xf32>,
    %c2_290 = arith.constant 2 : index
    %c0_291 = arith.constant 0 : index
    %c0_292 = arith.constant 0 : index
    %602 = vector.load %arg24[%c2_290, %c0_291, %c0_292] : memref<8x8x128xf32, #tpu.memory_space<vmem>>, vector<1x8x128xf32>
    %603 = vector.shape_cast %602 : vector<1x8x128xf32> to vector<8x128xf32>
    %604 = vector.shape_cast %598 : vector<8x128xf32> to vector<1x8x128xf32>
    tpu.vector_store %arg24[%c2_290, %c0_291, %c0_292], %604 {strides = array<i32>} : memref<8x8x128xf32, #tpu.memory_space<vmem>>, vector<1x8x128xf32>,
    %c6_293 = arith.constant 6 : index
    %c0_294 = arith.constant 0 : index
    %c0_295 = arith.constant 0 : index
    %605 = vector.load %arg18[%c6_293, %c0_294, %c0_295] : memref<8x8x512xf32, #tpu.memory_space<vmem>>, vector<1x8x512xf32>
    %606 = vector.shape_cast %605 : vector<1x8x512xf32> to vector<8x512xf32>
    %c1_296 = arith.constant 1 : index
    %c0_297 = arith.constant 0 : index
    %c0_298 = arith.constant 0 : index
    %607 = vector.load %arg20[%c1_296, %c0_297, %c0_298] : memref<8x8x512xf32, #tpu.memory_space<vmem>>, vector<1x8x512xf32>
    %608 = vector.shape_cast %607 : vector<1x8x512xf32> to vector<8x512xf32>
    %609 = arith.addf %606, %608 : vector<8x512xf32>
    %610 = arith.truncf %598 : vector<8x128xf32> to vector<8x128xbf16>
    %c0_299 = arith.constant 0 : index
    %c0_300 = arith.constant 0 : index
    %611 = vector.load %arg12[%c0_299, %c0_300] : memref<128x512xbf16, #tpu.memory_space<vmem>>, vector<128x512xbf16>
    %cst_301 = arith.constant dense<0.000000e+00> : vector<8x512xf32>
    %612 = tpu.matmul %610, %611, %cst_301 {dimension_numbers = #tpu.dot_dimension_numbers<[1], [0], [0], [1], [0, 0, 1, 1], [], []>} : vector<8x128xbf16>, vector<128x512xbf16>, vector<8x512xf32> -> vector<8x512xf32>
    %613 = arith.addf %609, %612 : vector<8x512xf32>
    %614 = vector.extract_strided_slice %613 {offsets = [0, 0], sizes = [8, 128], strides = [1, 1]} : vector<8x512xf32> to vector<8x128xf32>
    %615 = arith.negf %614 : vector<8x128xf32>
    %616 = math.exp %615 : vector<8x128xf32>
    %cst_302 = arith.constant 1.000000e+00 : f32
    %617 = vector.broadcast %cst_302 : f32 to vector<8x128xf32>
    %618 = arith.addf %617, %616 : vector<8x128xf32>
    %619 = arith.divf %617, %618 : vector<8x128xf32>
    %620 = vector.extract_strided_slice %613 {offsets = [0, 128], sizes = [8, 128], strides = [1, 1]} : vector<8x512xf32> to vector<8x128xf32>
    %621 = arith.negf %620 : vector<8x128xf32>
    %622 = math.exp %621 : vector<8x128xf32>
    %cst_303 = arith.constant 1.000000e+00 : f32
    %623 = vector.broadcast %cst_303 : f32 to vector<8x128xf32>
    %624 = arith.addf %623, %622 : vector<8x128xf32>
    %625 = arith.divf %623, %624 : vector<8x128xf32>
    %626 = vector.extract_strided_slice %613 {offsets = [0, 256], sizes = [8, 128], strides = [1, 1]} : vector<8x512xf32> to vector<8x128xf32>
    %627 = math.tanh %626 : vector<8x128xf32>
    %628 = vector.extract_strided_slice %613 {offsets = [0, 384], sizes = [8, 128], strides = [1, 1]} : vector<8x512xf32> to vector<8x128xf32>
    %629 = arith.negf %628 : vector<8x128xf32>
    %630 = math.exp %629 : vector<8x128xf32>
    %cst_304 = arith.constant 1.000000e+00 : f32
    %631 = vector.broadcast %cst_304 : f32 to vector<8x128xf32>
    %632 = arith.addf %631, %630 : vector<8x128xf32>
    %633 = arith.divf %631, %632 : vector<8x128xf32>
    %634 = arith.mulf %625, %596 : vector<8x128xf32>
    %635 = arith.mulf %619, %627 : vector<8x128xf32>
    %636 = arith.addf %634, %635 : vector<8x128xf32>
    %637 = math.tanh %636 : vector<8x128xf32>
    %638 = arith.mulf %633, %637 : vector<8x128xf32>
    %c6_305 = arith.constant 6 : index
    %c0_306 = arith.constant 0 : index
    %c0_307 = arith.constant 0 : index
    %639 = vector.load %arg22[%c6_305, %c0_306, %c0_307] : memref<8x8x128xf32, #tpu.memory_space<vmem>>, vector<1x8x128xf32>
    %640 = vector.shape_cast %639 : vector<1x8x128xf32> to vector<8x128xf32>
    %641 = vector.shape_cast %638 : vector<8x128xf32> to vector<1x8x128xf32>
    tpu.vector_store %arg22[%c6_305, %c0_306, %c0_307], %641 {strides = array<i32>} : memref<8x8x128xf32, #tpu.memory_space<vmem>>, vector<1x8x128xf32>,
    %c1_308 = arith.constant 1 : index
    %c0_309 = arith.constant 0 : index
    %c0_310 = arith.constant 0 : index
    %642 = vector.load %arg24[%c1_308, %c0_309, %c0_310] : memref<8x8x128xf32, #tpu.memory_space<vmem>>, vector<1x8x128xf32>
    %643 = vector.shape_cast %642 : vector<1x8x128xf32> to vector<8x128xf32>
    %644 = vector.shape_cast %638 : vector<8x128xf32> to vector<1x8x128xf32>
    tpu.vector_store %arg24[%c1_308, %c0_309, %c0_310], %644 {strides = array<i32>} : memref<8x8x128xf32, #tpu.memory_space<vmem>>, vector<1x8x128xf32>,
    %c7_311 = arith.constant 7 : index
    %c0_312 = arith.constant 0 : index
    %c0_313 = arith.constant 0 : index
    %645 = vector.load %arg18[%c7_311, %c0_312, %c0_313] : memref<8x8x512xf32, #tpu.memory_space<vmem>>, vector<1x8x512xf32>
    %646 = vector.shape_cast %645 : vector<1x8x512xf32> to vector<8x512xf32>
    %c0_314 = arith.constant 0 : index
    %c0_315 = arith.constant 0 : index
    %c0_316 = arith.constant 0 : index
    %647 = vector.load %arg20[%c0_314, %c0_315, %c0_316] : memref<8x8x512xf32, #tpu.memory_space<vmem>>, vector<1x8x512xf32>
    %648 = vector.shape_cast %647 : vector<1x8x512xf32> to vector<8x512xf32>
    %649 = arith.addf %646, %648 : vector<8x512xf32>
    %650 = arith.truncf %638 : vector<8x128xf32> to vector<8x128xbf16>
    %c0_317 = arith.constant 0 : index
    %c0_318 = arith.constant 0 : index
    %651 = vector.load %arg12[%c0_317, %c0_318] : memref<128x512xbf16, #tpu.memory_space<vmem>>, vector<128x512xbf16>
    %cst_319 = arith.constant dense<0.000000e+00> : vector<8x512xf32>
    %652 = tpu.matmul %650, %651, %cst_319 {dimension_numbers = #tpu.dot_dimension_numbers<[1], [0], [0], [1], [0, 0, 1, 1], [], []>} : vector<8x128xbf16>, vector<128x512xbf16>, vector<8x512xf32> -> vector<8x512xf32>
    %653 = arith.addf %649, %652 : vector<8x512xf32>
    %654 = vector.extract_strided_slice %653 {offsets = [0, 0], sizes = [8, 128], strides = [1, 1]} : vector<8x512xf32> to vector<8x128xf32>
    %655 = arith.negf %654 : vector<8x128xf32>
    %656 = math.exp %655 : vector<8x128xf32>
    %cst_320 = arith.constant 1.000000e+00 : f32
    %657 = vector.broadcast %cst_320 : f32 to vector<8x128xf32>
    %658 = arith.addf %657, %656 : vector<8x128xf32>
    %659 = arith.divf %657, %658 : vector<8x128xf32>
    %660 = vector.extract_strided_slice %653 {offsets = [0, 128], sizes = [8, 128], strides = [1, 1]} : vector<8x512xf32> to vector<8x128xf32>
    %661 = arith.negf %660 : vector<8x128xf32>
    %662 = math.exp %661 : vector<8x128xf32>
    %cst_321 = arith.constant 1.000000e+00 : f32
    %663 = vector.broadcast %cst_321 : f32 to vector<8x128xf32>
    %664 = arith.addf %663, %662 : vector<8x128xf32>
    %665 = arith.divf %663, %664 : vector<8x128xf32>
    %666 = vector.extract_strided_slice %653 {offsets = [0, 256], sizes = [8, 128], strides = [1, 1]} : vector<8x512xf32> to vector<8x128xf32>
    %667 = math.tanh %666 : vector<8x128xf32>
    %668 = vector.extract_strided_slice %653 {offsets = [0, 384], sizes = [8, 128], strides = [1, 1]} : vector<8x512xf32> to vector<8x128xf32>
    %669 = arith.negf %668 : vector<8x128xf32>
    %670 = math.exp %669 : vector<8x128xf32>
    %cst_322 = arith.constant 1.000000e+00 : f32
    %671 = vector.broadcast %cst_322 : f32 to vector<8x128xf32>
    %672 = arith.addf %671, %670 : vector<8x128xf32>
    %673 = arith.divf %671, %672 : vector<8x128xf32>
    %674 = arith.mulf %665, %636 : vector<8x128xf32>
    %675 = arith.mulf %659, %667 : vector<8x128xf32>
    %676 = arith.addf %674, %675 : vector<8x128xf32>
    %677 = math.tanh %676 : vector<8x128xf32>
    %678 = arith.mulf %673, %677 : vector<8x128xf32>
    %c7_323 = arith.constant 7 : index
    %c0_324 = arith.constant 0 : index
    %c0_325 = arith.constant 0 : index
    %679 = vector.load %arg22[%c7_323, %c0_324, %c0_325] : memref<8x8x128xf32, #tpu.memory_space<vmem>>, vector<1x8x128xf32>
    %680 = vector.shape_cast %679 : vector<1x8x128xf32> to vector<8x128xf32>
    %681 = vector.shape_cast %678 : vector<8x128xf32> to vector<1x8x128xf32>
    tpu.vector_store %arg22[%c7_323, %c0_324, %c0_325], %681 {strides = array<i32>} : memref<8x8x128xf32, #tpu.memory_space<vmem>>, vector<1x8x128xf32>,
    %c0_326 = arith.constant 0 : index
    %c0_327 = arith.constant 0 : index
    %c0_328 = arith.constant 0 : index
    %682 = vector.load %arg24[%c0_326, %c0_327, %c0_328] : memref<8x8x128xf32, #tpu.memory_space<vmem>>, vector<1x8x128xf32>
    %683 = vector.shape_cast %682 : vector<1x8x128xf32> to vector<8x128xf32>
    %684 = vector.shape_cast %678 : vector<8x128xf32> to vector<1x8x128xf32>
    tpu.vector_store %arg24[%c0_326, %c0_327, %c0_328], %684 {strides = array<i32>} : memref<8x8x128xf32, #tpu.memory_space<vmem>>, vector<1x8x128xf32>,
    %c0_329 = arith.constant 0 : index
    %c0_330 = arith.constant 0 : index
    %c0_331 = arith.constant 0 : index
    %685 = vector.load %arg22[%c0_329, %c0_330, %c0_331] : memref<8x8x128xf32, #tpu.memory_space<vmem>>, vector<8x8x128xf32>
    %686 = vector.shape_cast %685 : vector<8x8x128xf32> to vector<64x128xf32>
    %687 = arith.truncf %686 : vector<64x128xf32> to vector<64x128xbf16>
    %c0_332 = arith.constant 0 : index
    %c0_333 = arith.constant 0 : index
    %c0_334 = arith.constant 0 : index
    %688 = vector.load %arg24[%c0_332, %c0_333, %c0_334] : memref<8x8x128xf32, #tpu.memory_space<vmem>>, vector<8x8x128xf32>
    %689 = vector.shape_cast %688 : vector<8x8x128xf32> to vector<64x128xf32>
    %690 = arith.truncf %689 : vector<64x128xf32> to vector<64x128xbf16>
    %c0_335 = arith.constant 0 : index
    %c0_336 = arith.constant 0 : index
    %691 = vector.load %arg13[%c0_335, %c0_336] : memref<128x128xbf16, #tpu.memory_space<vmem>>, vector<128x128xbf16>
    %cst_337 = arith.constant dense<0.000000e+00> : vector<64x128xf32>
    %692 = tpu.matmul %687, %691, %cst_337 {dimension_numbers = #tpu.dot_dimension_numbers<[1], [0], [0], [1], [0, 0, 1, 1], [], []>} : vector<64x128xbf16>, vector<128x128xbf16>, vector<64x128xf32> -> vector<64x128xf32>
    %c0_338 = arith.constant 0 : index
    %c0_339 = arith.constant 0 : index
    %693 = vector.load %arg14[%c0_338, %c0_339] : memref<128x128xbf16, #tpu.memory_space<vmem>>, vector<128x128xbf16>
    %cst_340 = arith.constant dense<0.000000e+00> : vector<64x128xf32>
    %694 = tpu.matmul %690, %693, %cst_340 {dimension_numbers = #tpu.dot_dimension_numbers<[1], [0], [0], [1], [0, 0, 1, 1], [], []>} : vector<64x128xbf16>, vector<128x128xbf16>, vector<64x128xf32> -> vector<64x128xf32>
    %695 = arith.addf %692, %694 : vector<64x128xf32>
    %c0_341 = arith.constant 0 : index
    %c0_342 = arith.constant 0 : index
    %696 = vector.load %arg15[%c0_341, %c0_342] : memref<1x128xf32, #tpu.memory_space<vmem>>, vector<1x128xf32>
    %697 = vector.broadcast %696 : vector<1x128xf32> to vector<64x128xf32>
    %698 = arith.addf %695, %697 : vector<64x128xf32>
    %cst_343 = arith.constant dense<0xFF800000> : vector<64xf32>
    %699 = vector.multi_reduction <maximumf>, %698, %cst_343 [1] : vector<64x128xf32> to vector<64xf32>
    %700 = vector.shape_cast %699 : vector<64xf32> to vector<64x1xf32>
    %701 = vector.broadcast %700 : vector<64x1xf32> to vector<64x128xf32>
    %702 = arith.subf %698, %701 : vector<64x128xf32>
    %703 = math.exp %702 : vector<64x128xf32>
    %cst_344 = arith.constant dense<0.000000e+00> : vector<64xf32>
    %704 = vector.multi_reduction <add>, %703, %cst_344 [1] : vector<64x128xf32> to vector<64xf32>
    %705 = vector.shape_cast %704 : vector<64xf32> to vector<64x1xf32>
    %706 = vector.broadcast %705 : vector<64x1xf32> to vector<64x128xf32>
    %707 = arith.divf %703, %706 : vector<64x128xf32>
    %c0_345 = arith.constant 0 : index
    %c0_346 = arith.constant 0 : index
    %708 = vector.load %arg16[%c0_345, %c0_346] : memref<64x128xf32, #tpu.memory_space<vmem>>, vector<64x128xf32>
    tpu.vector_store %arg16[%c0_345, %c0_346], %707 {strides = array<i32>} : memref<64x128xf32, #tpu.memory_space<vmem>>, vector<64x128xf32>,
    return
  }
}

</mosaic_0001>

<llo_original>
// kernel: model_forward.1
$region0: #{model_forward.1}
  #allocation0 [shape = 'u32[]', space=smem, size = 0x4, offset = 0x4, fixed_abs, tag = 'smem constant byte address 0x4 - core index']
  #allocation1 [shape = 'u32[144,128]{1,0:T(1,128)}', space=vmem, size = 0x12000, scoped, tag = 'internal scratch']
  #allocation2 [shape = 'f32[8,8,512]{2,1,0:T(8,128)}', space=vmem, size = 0x20000, scoped, tag = 'scratch operand']
  #allocation3 [shape = 'f32[8,8,512]{2,1,0:T(8,128)}', space=vmem, size = 0x20000, scoped, tag = 'scratch operand']
  #allocation4 [shape = 'f32[8,8,512]{2,1,0:T(8,128)}', space=vmem, size = 0x20000, scoped, tag = 'scratch operand']
  #allocation5 [shape = 'f32[8,8,512]{2,1,0:T(8,128)}', space=vmem, size = 0x20000, scoped, tag = 'scratch operand']
  #allocation6 [shape = 'f32[8,8,128]{2,1,0:T(8,128)}', space=vmem, size = 0x8000, scoped, tag = 'scratch operand']
  #allocation7 [shape = 'f32[8,8,128]{2,1,0:T(8,128)}', space=vmem, size = 0x8000, scoped, tag = 'scratch operand']
  #allocation8 [shape = 'f32[8,8,128]{2,1,0:T(8,128)}', space=vmem, size = 0x8000, scoped, tag = 'scratch operand']
  #allocation9 [shape = 'f32[8,8,128]{2,1,0:T(8,128)}', space=vmem, size = 0x8000, scoped, tag = 'scratch operand']
  %s0 = inlined_call_operand.vmem [shape: bf16[64,128], index: 0, kind: input, shape index: {}]
  %s1 = inlined_call_operand.vmem [shape: bf16[128,512], index: 1, kind: input, shape index: {}]
  %s2 = inlined_call_operand.vmem [shape: f32[1,512], index: 2, kind: input, shape index: {}]
  %s3 = inlined_call_operand.vmem [shape: bf16[128,512], index: 3, kind: input, shape index: {}]
  %s4 = inlined_call_operand.vmem [shape: f32[1,512], index: 4, kind: input, shape index: {}]
  %s5 = inlined_call_operand.vmem [shape: bf16[128,512], index: 5, kind: input, shape index: {}]
  %s6 = inlined_call_operand.vmem [shape: bf16[128,512], index: 6, kind: input, shape index: {}]
  %s7 = inlined_call_operand.vmem [shape: bf16[128,512], index: 7, kind: input, shape index: {}]
  %s8 = inlined_call_operand.vmem [shape: f32[1,512], index: 8, kind: input, shape index: {}]
  %s9 = inlined_call_operand.vmem [shape: bf16[128,512], index: 9, kind: input, shape index: {}]
  %s10 = inlined_call_operand.vmem [shape: bf16[128,512], index: 10, kind: input, shape index: {}]
  %s11 = inlined_call_operand.vmem [shape: f32[1,512], index: 11, kind: input, shape index: {}]
  %s12 = inlined_call_operand.vmem [shape: bf16[128,512], index: 12, kind: input, shape index: {}]
  %s13 = inlined_call_operand.vmem [shape: bf16[128,128], index: 13, kind: input, shape index: {}]
  %s14 = inlined_call_operand.vmem [shape: bf16[128,128], index: 14, kind: input, shape index: {}]
  %s15 = inlined_call_operand.vmem [shape: f32[1,128], index: 15, kind: input, shape index: {}]
  %s16 = inlined_call_operand.vmem [shape: f32[64,128], index: 16, kind: output, shape index: {}]
  %s17 = sld [smem:[#allocation0]]
  $region74: #{model_forward.1} parent=0
    _
  %s19 = ssub.s32 1, %s17
  %s20 = scalar_select 0, %s19, %s17
  // Predicated region
  $region2: #{model_forward.1} parent=0 // pred_check
    _
  $region3: #{model_forward.1} parent=0 // pred_check_branch
    %22 = sbr.rel (0) target = $region5
  $region4: #{model_forward.1} parent=0 // pred_region
    _
  $region5: #{model_forward.1} parent=0 // pred_fallthru
    _
  // Predicated region
  $region6: #{model_forward.1} parent=0 // pred_check
    _
  $region7: #{model_forward.1} parent=0 // pred_check_branch
    %24 = sbr.rel (0) target = $region9
  $region8: #{model_forward.1} parent=0 // pred_region
    _
  $region9: #{model_forward.1} parent=0 // pred_fallthru
    _
  // Predicated region
  $region10: #{model_forward.1} parent=0 // pred_check
    _
  $region11: #{model_forward.1} parent=0 // pred_check_branch
    %26 = sbr.rel (0) target = $region13
  $region12: #{model_forward.1} parent=0 // pred_region
    _
  $region13: #{model_forward.1} parent=0 // pred_fallthru
    _
  // Predicated region
  $region14: #{model_forward.1} parent=0 // pred_check
    _
  $region15: #{model_forward.1} parent=0 // pred_check_branch
    %28 = sbr.rel (0) target = $region17
  $region16: #{model_forward.1} parent=0 // pred_region
    _
  $region17: #{model_forward.1} parent=0 // pred_fallthru
    _
  // Predicated region
  $region18: #{model_forward.1} parent=0 // pred_check
    _
  $region19: #{model_forward.1} parent=0 // pred_check_branch
    %30 = sbr.rel (0) target = $region21
  $region20: #{model_forward.1} parent=0 // pred_region
    _
  $region21: #{model_forward.1} parent=0 // pred_fallthru
    _
  // Predicated region
  $region22: #{model_forward.1} parent=0 // pred_check
    _
  $region23: #{model_forward.1} parent=0 // pred_check_branch
    %32 = sbr.rel (0) target = $region25
  $region24: #{model_forward.1} parent=0 // pred_region
    _
  $region25: #{model_forward.1} parent=0 // pred_fallthru
    _
  // Predicated region
  $region26: #{model_forward.1} parent=0 // pred_check
    _
  $region27: #{model_forward.1} parent=0 // pred_check_branch
    %34 = sbr.rel (0) target = $region29
  $region28: #{model_forward.1} parent=0 // pred_region
    _
  $region29: #{model_forward.1} parent=0 // pred_fallthru
    _
  // Predicated region
  $region30: #{model_forward.1} parent=0 // pred_check
    _
  $region31: #{model_forward.1} parent=0 // pred_check_branch
    %36 = sbr.rel (0) target = $region33
  $region32: #{model_forward.1} parent=0 // pred_region
    _
  $region33: #{model_forward.1} parent=0 // pred_fallthru
    _
  // Predicated region
  $region34: #{model_forward.1} parent=0 // pred_check
    _
  $region35: #{model_forward.1} parent=0 // pred_check_branch
    %38 = sbr.rel (0) target = $region37
  $region36: #{model_forward.1} parent=0 // pred_region
    _
  $region37: #{model_forward.1} parent=0 // pred_fallthru
    _
  // Predicated region
  $region38: #{model_forward.1} parent=0 // pred_check
    _
  $region39: #{model_forward.1} parent=0 // pred_check_branch
    %40 = sbr.rel (0) target = $region41
  $region40: #{model_forward.1} parent=0 // pred_region
    _
  $region41: #{model_forward.1} parent=0 // pred_fallthru
    _
  // Predicated region
  $region42: #{model_forward.1} parent=0 // pred_check
    _
  $region43: #{model_forward.1} parent=0 // pred_check_branch
    %42 = sbr.rel (0) target = $region45
  $region44: #{model_forward.1} parent=0 // pred_region
    _
  $region45: #{model_forward.1} parent=0 // pred_fallthru
    _
  // Predicated region
  $region46: #{model_forward.1} parent=0 // pred_check
    _
  $region47: #{model_forward.1} parent=0 // pred_check_branch
    %44 = sbr.rel (0) target = $region49
  $region48: #{model_forward.1} parent=0 // pred_region
    _
  $region49: #{model_forward.1} parent=0 // pred_fallthru
    _
  // Predicated region
  $region50: #{model_forward.1} parent=0 // pred_check
    _
  $region51: #{model_forward.1} parent=0 // pred_check_branch
    %46 = sbr.rel (0) target = $region53
  $region52: #{model_forward.1} parent=0 // pred_region
    _
  $region53: #{model_forward.1} parent=0 // pred_fallthru
    _
  // Predicated region
  $region54: #{model_forward.1} parent=0 // pred_check
    _
  $region55: #{model_forward.1} parent=0 // pred_check_branch
    %48 = sbr.rel (0) target = $region57
  $region56: #{model_forward.1} parent=0 // pred_region
    _
  $region57: #{model_forward.1} parent=0 // pred_fallthru
    _
  // Predicated region
  $region58: #{model_forward.1} parent=0 // pred_check
    _
  $region59: #{model_forward.1} parent=0 // pred_check_branch
    %50 = sbr.rel (0) target = $region61
  $region60: #{model_forward.1} parent=0 // pred_region
    _
  $region61: #{model_forward.1} parent=0 // pred_fallthru
    _
  // Predicated region
  $region62: #{model_forward.1} parent=0 // pred_check
    _
  $region63: #{model_forward.1} parent=0 // pred_check_branch
    %52 = sbr.rel (0) target = $region65
  $region64: #{model_forward.1} parent=0 // pred_region
    _
  $region65: #{model_forward.1} parent=0 // pred_fallthru
    _
  %v54 = vld [vmem:[%s0] sm:$0xf]
  %v55 = vld [vmem:[%s0 + $0x4] sm:$0xf]
  %v56 = vld [vmem:[%s0 + $0x8] sm:$0xf]
  %v57 = vld [vmem:[%s0 + $0xc] sm:$0xf]
  %v58 = vld [vmem:[%s0 + $0x10] sm:$0xf]
  %v59 = vld [vmem:[%s0 + $0x14] sm:$0xf]
  %v60 = vld [vmem:[%s0 + $0x18] sm:$0xf]
  %v61 = vld [vmem:[%s0 + $0x1c] sm:$0xf]
  %v62 = vld [vmem:[%s1] sm:$0xff]
  %v63 = vld [vmem:[%s1 + $0x8] sm:$0xff]
  %v64 = vld [vmem:[%s1 + $0x10] sm:$0xff]
  %v65 = vld [vmem:[%s1 + $0x18] sm:$0xff]
  %v66 = vld [vmem:[%s1 + $0x20] sm:$0xff]
  %v67 = vld [vmem:[%s1 + $0x28] sm:$0xff]
  %v68 = vld [vmem:[%s1 + $0x30] sm:$0xff]
  %v69 = vld [vmem:[%s1 + $0x38] sm:$0xff]
  %v70 = vld [vmem:[%s1 + $0x40] sm:$0xff]
  %v71 = vld [vmem:[%s1 + $0x48] sm:$0xff]
  %v72 = vld [vmem:[%s1 + $0x50] sm:$0xff]
  %v73 = vld [vmem:[%s1 + $0x58] sm:$0xff]
  %v74 = vld [vmem:[%s1 + $0x60] sm:$0xff]
  %v75 = vld [vmem:[%s1 + $0x68] sm:$0xff]
  %v76 = vld [vmem:[%s1 + $0x70] sm:$0xff]
  %v77 = vld [vmem:[%s1 + $0x78] sm:$0xff]
  %v78 = vld [vmem:[%s1 + $0x80] sm:$0xff]
  %v79 = vld [vmem:[%s1 + $0x88] sm:$0xff]
  %v80 = vld [vmem:[%s1 + $0x90] sm:$0xff]
  %v81 = vld [vmem:[%s1 + $0x98] sm:$0xff]
  %v82 = vld [vmem:[%s1 + $0xa0] sm:$0xff]
  %v83 = vld [vmem:[%s1 + $0xa8] sm:$0xff]
  %v84 = vld [vmem:[%s1 + $0xb0] sm:$0xff]
  %v85 = vld [vmem:[%s1 + $0xb8] sm:$0xff]
  %v86 = vld [vmem:[%s1 + $0xc0] sm:$0xff]
  %v87 = vld [vmem:[%s1 + $0xc8] sm:$0xff]
  %v88 = vld [vmem:[%s1 + $0xd0] sm:$0xff]
  %v89 = vld [vmem:[%s1 + $0xd8] sm:$0xff]
  %v90 = vld [vmem:[%s1 + $0xe0] sm:$0xff]
  %v91 = vld [vmem:[%s1 + $0xe8] sm:$0xff]
  %v92 = vld [vmem:[%s1 + $0xf0] sm:$0xff]
  %v93 = vld [vmem:[%s1 + $0xf8] sm:$0xff]
  %v94 = vld [vmem:[%s2] sm:$0xf]
  %v96 = vlaneseq
  %v97 = vshrl.u32 %v96, 7
  %v98 = vsub.s32 0, %v97
  %v99 = vrot.slane %v94, %v98
  %v100 = vlaneseq
  %v101 = vshrl.u32 %v100, 7
  %v102 = vsub.s32 1, %v101
  %v103 = vrot.slane %v94, %v102
  %v104 = vlaneseq
  %v105 = vshrl.u32 %v104, 7
  %v106 = vsub.s32 2, %v105
  %v107 = vrot.slane %v94, %v106
  %v108 = vlaneseq
  %v109 = vshrl.u32 %v108, 7
  %v110 = vsub.s32 3, %v109
  %v111 = vrot.slane %v94, %v110
  %v124 = vunpack.c.l.b16 %v54
  %v125 = vunpack.c.l.b16 %v55
  %v126 = vunpack.c.l.b16 %v56
  %v127 = vunpack.c.l.b16 %v57
  %v128 = vunpack.c.l.b16 %v58
  %v129 = vunpack.c.l.b16 %v59
  %v130 = vunpack.c.l.b16 %v60
  %v131 = vunpack.c.l.b16 %v61
  %v132 = vpack.c.b16 %v125, %v124
  %v133 = vpack.c.b16 %v127, %v126
  %v134 = vpack.c.b16 %v129, %v128
  %v135 = vpack.c.b16 %v131, %v130
  %v172 = vunpack.c.l.b16 %v62
  %v173 = vunpack.c.h.b16 %v62
  %v174 = vunpack.c.l.b16 %v63
  %v175 = vunpack.c.h.b16 %v63
  %v176 = vunpack.c.l.b16 %v64
  %v177 = vunpack.c.h.b16 %v64
  %v178 = vunpack.c.l.b16 %v65
  %v179 = vunpack.c.h.b16 %v65
  %v180 = vunpack.c.l.b16 %v66
  %v181 = vunpack.c.h.b16 %v66
  %v182 = vunpack.c.l.b16 %v67
  %v183 = vunpack.c.h.b16 %v67
  %v184 = vunpack.c.l.b16 %v68
  %v185 = vunpack.c.h.b16 %v68
  %v186 = vunpack.c.l.b16 %v69
  %v187 = vunpack.c.h.b16 %v69
  %v188 = vunpack.c.l.b16 %v70
  %v189 = vunpack.c.h.b16 %v70
  %v190 = vunpack.c.l.b16 %v71
  %v191 = vunpack.c.h.b16 %v71
  %v192 = vunpack.c.l.b16 %v72
  %v193 = vunpack.c.h.b16 %v72
  %v194 = vunpack.c.l.b16 %v73
  %v195 = vunpack.c.h.b16 %v73
  %v196 = vunpack.c.l.b16 %v74
  %v197 = vunpack.c.h.b16 %v74
  %v198 = vunpack.c.l.b16 %v75
  %v199 = vunpack.c.h.b16 %v75
  %v200 = vunpack.c.l.b16 %v76
  %v201 = vunpack.c.h.b16 %v76
  %v202 = vunpack.c.l.b16 %v77
  %v203 = vunpack.c.h.b16 %v77
  %v204 = vunpack.c.l.b16 %v78
  %v205 = vunpack.c.h.b16 %v78
  %v206 = vunpack.c.l.b16 %v79
  %v207 = vunpack.c.h.b16 %v79
  %v208 = vunpack.c.l.b16 %v80
  %v209 = vunpack.c.h.b16 %v80
  %v210 = vunpack.c.l.b16 %v81
  %v211 = vunpack.c.h.b16 %v81
  %v212 = vunpack.c.l.b16 %v82
  %v213 = vunpack.c.h.b16 %v82
  %v214 = vunpack.c.l.b16 %v83
  %v215 = vunpack.c.h.b16 %v83
  %v216 = vunpack.c.l.b16 %v84
  %v217 = vunpack.c.h.b16 %v84
  %v218 = vunpack.c.l.b16 %v85
  %v219 = vunpack.c.h.b16 %v85
  %v220 = vunpack.c.l.b16 %v86
  %v221 = vunpack.c.h.b16 %v86
  %v222 = vunpack.c.l.b16 %v87
  %v223 = vunpack.c.h.b16 %v87
  %v224 = vunpack.c.l.b16 %v88
  %v225 = vunpack.c.h.b16 %v88
  %v226 = vunpack.c.l.b16 %v89
  %v227 = vunpack.c.h.b16 %v89
  %v228 = vunpack.c.l.b16 %v90
  %v229 = vunpack.c.h.b16 %v90
  %v230 = vunpack.c.l.b16 %v91
  %v231 = vunpack.c.h.b16 %v91
  %v232 = vunpack.c.l.b16 %v92
  %v233 = vunpack.c.h.b16 %v92
  %v234 = vunpack.c.l.b16 %v93
  %v235 = vunpack.c.h.b16 %v93
  %v236 = vpack.c.b16 %v176, %v172
  %v237 = vpack.c.b16 %v177, %v173
  %v238 = vpack.c.b16 %v178, %v174
  %v239 = vpack.c.b16 %v179, %v175
  %v240 = vpack.c.b16 %v184, %v180
  %v241 = vpack.c.b16 %v185, %v181
  %v242 = vpack.c.b16 %v186, %v182
  %v243 = vpack.c.b16 %v187, %v183
  %v244 = vpack.c.b16 %v192, %v188
  %v245 = vpack.c.b16 %v193, %v189
  %v246 = vpack.c.b16 %v194, %v190
  %v247 = vpack.c.b16 %v195, %v191
  %v248 = vpack.c.b16 %v200, %v196
  %v249 = vpack.c.b16 %v201, %v197
  %v250 = vpack.c.b16 %v202, %v198
  %v251 = vpack.c.b16 %v203, %v199
  %v252 = vpack.c.b16 %v208, %v204
  %v253 = vpack.c.b16 %v209, %v205
  %v254 = vpack.c.b16 %v210, %v206
  %v255 = vpack.c.b16 %v211, %v207
  %v256 = vpack.c.b16 %v216, %v212
  %v257 = vpack.c.b16 %v217, %v213
  %v258 = vpack.c.b16 %v218, %v214
  %v259 = vpack.c.b16 %v219, %v215
  %v260 = vpack.c.b16 %v224, %v220
  %v261 = vpack.c.b16 %v225, %v221
  %v262 = vpack.c.b16 %v226, %v222
  %v263 = vpack.c.b16 %v227, %v223
  %v264 = vpack.c.b16 %v232, %v228
  %v265 = vpack.c.b16 %v233, %v229
  %v266 = vpack.c.b16 %v234, %v230
  %v267 = vpack.c.b16 %v235, %v231
  %300 = vmatprep.subr.bf16.mxu0 %v265
  %301 = vmatpush1.bf16.msra.mxu0 %v264
  %302 = vmatprep.subr.bf16.mxu0 %v261
  %303 = vmatpush1.bf16.msra.mxu0 %v260
  %304 = vmatprep.subr.bf16.mxu0 %v257
  %305 = vmatpush1.bf16.msra.mxu0 %v256
  %306 = vmatprep.subr.bf16.mxu0 %v253
  %307 = vmatpush1.bf16.msra.mxu0 %v252
  %308 = vmatprep.subr.bf16.mxu0 %v249
  %309 = vmatpush1.bf16.msra.mxu0 %v248
  %310 = vmatprep.subr.bf16.mxu0 %v245
  %311 = vmatpush1.bf16.msra.mxu0 %v244
  %312 = vmatprep.subr.bf16.mxu0 %v241
  %313 = vmatpush1.bf16.msra.mxu0 %v240
  %314 = vmatprep.subr.bf16.mxu0 %v237
  %315 = vmatpush1.bf16.msra.mxu0 %v236
  %316 = vmatprep.subr.bf16.mxu0 0
  %317 = vmatpush2.bf16.msra.mxu0 0
  %318 = vmatprep.subr.bf16.mxu0 0
  %319 = vmatpush2.bf16.msra.mxu0 0
  %320 = vmatprep.subr.bf16.mxu0 0
  %321 = vmatpush2.bf16.msra.mxu0 0
  %322 = vmatprep.subr.bf16.mxu0 0
  %323 = vmatpush2.bf16.msra.mxu0 0
  %324 = vmatprep.subr.bf16.mxu0 0
  %325 = vmatpush2.bf16.msra.mxu0 0
  %326 = vmatprep.subr.bf16.mxu0 0
  %327 = vmatpush2.bf16.msra.mxu0 0
  %328 = vmatprep.subr.bf16.mxu0 0
  %329 = vmatpush2.bf16.msra.mxu0 0
  %330 = vmatprep.subr.bf16.mxu0 0
  %331 = vmatpush2.bf16.msra.mxu0 0
  %332 = vmatprep.mubr.bf16.mxu0 0
  %333 = vmatmul.mubr.bf16.gmra.mxu0 %v132
  %v334 = vpop.f32.mrf.mxu0
  %v335 = vadd.f32 %v99, %v334
  %v336 = vpop.f32.mrf.mxu0
  %v337 = vadd.f32 %v103, %v336
  %v338 = vpop.f32.mrf.mxu0
  %v339 = vadd.f32 %v99, %v338
  %v340 = vpop.f32.mrf.mxu0
  %v341 = vadd.f32 %v103, %v340
  %342 = vmatprep.mubr.bf16.mxu0 0
  %343 = vmatmul.mubr.bf16.gmra.mxu0 %v133
  %v344 = vpop.f32.mrf.mxu0
  %v345 = vadd.f32 %v99, %v344
  %v346 = vpop.f32.mrf.mxu0
  %v347 = vadd.f32 %v103, %v346
  %v348 = vpop.f32.mrf.mxu0
  %v349 = vadd.f32 %v99, %v348
  %v350 = vpop.f32.mrf.mxu0
  %v351 = vadd.f32 %v103, %v350
  %352 = vmatprep.mubr.bf16.mxu0 0
  %353 = vmatmul.mubr.bf16.gmra.mxu0 %v134
  %v354 = vpop.f32.mrf.mxu0
  %v355 = vadd.f32 %v99, %v354
  %v356 = vpop.f32.mrf.mxu0
  %v357 = vadd.f32 %v103, %v356
  %v358 = vpop.f32.mrf.mxu0
  %v359 = vadd.f32 %v99, %v358
  %v360 = vpop.f32.mrf.mxu0
  %v361 = vadd.f32 %v103, %v360
  %362 = vmatprep.mubr.bf16.mxu0 0
  %363 = vmatmul.mubr.bf16.gmra.mxu0 %v135
  %v364 = vpop.f32.mrf.mxu0
  %v365 = vadd.f32 %v99, %v364
  %v366 = vpop.f32.mrf.mxu0
  %v367 = vadd.f32 %v103, %v366
  %v368 = vpop.f32.mrf.mxu0
  %v369 = vadd.f32 %v99, %v368
  %v370 = vpop.f32.mrf.mxu0
  %v371 = vadd.f32 %v103, %v370
  %372 = vdwg.mxu0
  %373 = vmatprep.subr.bf16.mxu0 %v267
  %374 = vmatpush1.bf16.msra.mxu0 %v266
  %375 = vmatprep.subr.bf16.mxu0 %v263
  %376 = vmatpush1.bf16.msra.mxu0 %v262
  %377 = vmatprep.subr.bf16.mxu0 %v259
  %378 = vmatpush1.bf16.msra.mxu0 %v258
  %379 = vmatprep.subr.bf16.mxu0 %v255
  %380 = vmatpush1.bf16.msra.mxu0 %v254
  %381 = vmatprep.subr.bf16.mxu0 %v251
  %382 = vmatpush1.bf16.msra.mxu0 %v250
  %383 = vmatprep.subr.bf16.mxu0 %v247
  %384 = vmatpush1.bf16.msra.mxu0 %v246
  %385 = vmatprep.subr.bf16.mxu0 %v243
  %386 = vmatpush1.bf16.msra.mxu0 %v242
  %387 = vmatprep.subr.bf16.mxu0 %v239
  %388 = vmatpush1.bf16.msra.mxu0 %v238
  %389 = vmatprep.subr.bf16.mxu0 0
  %390 = vmatpush2.bf16.msra.mxu0 0
  %391 = vmatprep.subr.bf16.mxu0 0
  %392 = vmatpush2.bf16.msra.mxu0 0
  %393 = vmatprep.subr.bf16.mxu0 0
  %394 = vmatpush2.bf16.msra.mxu0 0
  %395 = vmatprep.subr.bf16.mxu0 0
  %396 = vmatpush2.bf16.msra.mxu0 0
  %397 = vmatprep.subr.bf16.mxu0 0
  %398 = vmatpush2.bf16.msra.mxu0 0
  %399 = vmatprep.subr.bf16.mxu0 0
  %400 = vmatpush2.bf16.msra.mxu0 0
  %401 = vmatprep.subr.bf16.mxu0 0
  %402 = vmatpush2.bf16.msra.mxu0 0
  %403 = vmatprep.subr.bf16.mxu0 0
  %404 = vmatpush2.bf16.msra.mxu0 0
  %405 = vmatprep.mubr.bf16.mxu0 0
  %406 = vmatmul.mubr.bf16.gmra.mxu0 %v132
  %v407 = vpop.f32.mrf.mxu0
  %v408 = vadd.f32 %v107, %v407
  %v409 = vpop.f32.mrf.mxu0
  %v410 = vadd.f32 %v111, %v409
  %v411 = vpop.f32.mrf.mxu0
  %v412 = vadd.f32 %v107, %v411
  %v413 = vpop.f32.mrf.mxu0
  %v414 = vadd.f32 %v111, %v413
  %415 = vmatprep.mubr.bf16.mxu0 0
  %416 = vmatmul.mubr.bf16.gmra.mxu0 %v133
  %v417 = vpop.f32.mrf.mxu0
  %v418 = vadd.f32 %v107, %v417
  %v419 = vpop.f32.mrf.mxu0
  %v420 = vadd.f32 %v111, %v419
  %v421 = vpop.f32.mrf.mxu0
  %v422 = vadd.f32 %v107, %v421
  %v423 = vpop.f32.mrf.mxu0
  %v424 = vadd.f32 %v111, %v423
  %425 = vmatprep.mubr.bf16.mxu0 0
  %426 = vmatmul.mubr.bf16.gmra.mxu0 %v134
  %v427 = vpop.f32.mrf.mxu0
  %v428 = vadd.f32 %v107, %v427
  %v429 = vpop.f32.mrf.mxu0
  %v430 = vadd.f32 %v111, %v429
  %v431 = vpop.f32.mrf.mxu0
  %v432 = vadd.f32 %v107, %v431
  %v433 = vpop.f32.mrf.mxu0
  %v434 = vadd.f32 %v111, %v433
  %435 = vmatprep.mubr.bf16.mxu0 0
  %436 = vmatmul.mubr.bf16.gmra.mxu0 %v135
  %v437 = vpop.f32.mrf.mxu0
  %v438 = vadd.f32 %v107, %v437
  %v439 = vpop.f32.mrf.mxu0
  %v440 = vadd.f32 %v111, %v439
  %v441 = vpop.f32.mrf.mxu0
  %v442 = vadd.f32 %v107, %v441
  %v443 = vpop.f32.mrf.mxu0
  %v444 = vadd.f32 %v111, %v443
  %445 = vdwg.mxu0
  %446 = vst [vmem:[#allocation2] sm:$0xff] %v335
  %447 = vst [vmem:[#allocation2 + $0x8] sm:$0xff] %v337
  %448 = vst [vmem:[#allocation2 + $0x10] sm:$0xff] %v408
  %449 = vst [vmem:[#allocation2 + $0x18] sm:$0xff] %v410
  %450 = vst [vmem:[#allocation2 + $0x20] sm:$0xff] %v339
  %451 = vst [vmem:[#allocation2 + $0x28] sm:$0xff] %v341
  %452 = vst [vmem:[#allocation2 + $0x30] sm:$0xff] %v412
  %453 = vst [vmem:[#allocation2 + $0x38] sm:$0xff] %v414
  %454 = vst [vmem:[#allocation2 + $0x40] sm:$0xff] %v345
  %455 = vst [vmem:[#allocation2 + $0x48] sm:$0xff] %v347
  %456 = vst [vmem:[#allocation2 + $0x50] sm:$0xff] %v418
  %457 = vst [vmem:[#allocation2 + $0x58] sm:$0xff] %v420
  %458 = vst [vmem:[#allocation2 + $0x60] sm:$0xff] %v349
  %459 = vst [vmem:[#allocation2 + $0x68] sm:$0xff] %v351
  %460 = vst [vmem:[#allocation2 + $0x70] sm:$0xff] %v422
  %461 = vst [vmem:[#allocation2 + $0x78] sm:$0xff] %v424
  %462 = vst [vmem:[#allocation2 + $0x80] sm:$0xff] %v355
  %463 = vst [vmem:[#allocation2 + $0x88] sm:$0xff] %v357
  %464 = vst [vmem:[#allocation2 + $0x90] sm:$0xff] %v428
  %465 = vst [vmem:[#allocation2 + $0x98] sm:$0xff] %v430
  %466 = vst [vmem:[#allocation2 + $0xa0] sm:$0xff] %v359
  %467 = vst [vmem:[#allocation2 + $0xa8] sm:$0xff] %v361
  %468 = vst [vmem:[#allocation2 + $0xb0] sm:$0xff] %v432
  %469 = vst [vmem:[#allocation2 + $0xb8] sm:$0xff] %v434
  %470 = vst [vmem:[#allocation2 + $0xc0] sm:$0xff] %v365
  %471 = vst [vmem:[#allocation2 + $0xc8] sm:$0xff] %v367
  %472 = vst [vmem:[#allocation2 + $0xd0] sm:$0xff] %v438
  %473 = vst [vmem:[#allocation2 + $0xd8] sm:$0xff] %v440
  %474 = vst [vmem:[#allocation2 + $0xe0] sm:$0xff] %v369
  %475 = vst [vmem:[#allocation2 + $0xe8] sm:$0xff] %v371
  %476 = vst [vmem:[#allocation2 + $0xf0] sm:$0xff] %v442
  %477 = vst [vmem:[#allocation2 + $0xf8] sm:$0xff] %v444
  %v478 = vld [vmem:[%s3] sm:$0xff]
  %v479 = vld [vmem:[%s3 + $0x8] sm:$0xff]
  %v480 = vld [vmem:[%s3 + $0x10] sm:$0xff]
  %v481 = vld [vmem:[%s3 + $0x18] sm:$0xff]
  %v482 = vld [vmem:[%s3 + $0x20] sm:$0xff]
  %v483 = vld [vmem:[%s3 + $0x28] sm:$0xff]
  %v484 = vld [vmem:[%s3 + $0x30] sm:$0xff]
  %v485 = vld [vmem:[%s3 + $0x38] sm:$0xff]
  %v486 = vld [vmem:[%s3 + $0x40] sm:$0xff]
  %v487 = vld [vmem:[%s3 + $0x48] sm:$0xff]
  %v488 = vld [vmem:[%s3 + $0x50] sm:$0xff]
  %v489 = vld [vmem:[%s3 + $0x58] sm:$0xff]
  %v490 = vld [vmem:[%s3 + $0x60] sm:$0xff]
  %v491 = vld [vmem:[%s3 + $0x68] sm:$0xff]
  %v492 = vld [vmem:[%s3 + $0x70] sm:$0xff]
  %v493 = vld [vmem:[%s3 + $0x78] sm:$0xff]
  %v494 = vld [vmem:[%s3 + $0x80] sm:$0xff]
  %v495 = vld [vmem:[%s3 + $0x88] sm:$0xff]
  %v496 = vld [vmem:[%s3 + $0x90] sm:$0xff]
  %v497 = vld [vmem:[%s3 + $0x98] sm:$0xff]
  %v498 = vld [vmem:[%s3 + $0xa0] sm:$0xff]
  %v499 = vld [vmem:[%s3 + $0xa8] sm:$0xff]
  %v500 = vld [vmem:[%s3 + $0xb0] sm:$0xff]
  %v501 = vld [vmem:[%s3 + $0xb8] sm:$0xff]
  %v502 = vld [vmem:[%s3 + $0xc0] sm:$0xff]
  %v503 = vld [vmem:[%s3 + $0xc8] sm:$0xff]
  %v504 = vld [vmem:[%s3 + $0xd0] sm:$0xff]
  %v505 = vld [vmem:[%s3 + $0xd8] sm:$0xff]
  %v506 = vld [vmem:[%s3 + $0xe0] sm:$0xff]
  %v507 = vld [vmem:[%s3 + $0xe8] sm:$0xff]
  %v508 = vld [vmem:[%s3 + $0xf0] sm:$0xff]
  %v509 = vld [vmem:[%s3 + $0xf8] sm:$0xff]
  %v510 = vld [vmem:[%s4] sm:$0xf]
  %v512 = vlaneseq
  %v513 = vshrl.u32 %v512, 7
  %v514 = vsub.s32 0, %v513
  %v515 = vrot.slane %v510, %v514
  %v516 = vlaneseq
  %v517 = vshrl.u32 %v516, 7
  %v518 = vsub.s32 1, %v517
  %v519 = vrot.slane %v510, %v518
  %v520 = vlaneseq
  %v521 = vshrl.u32 %v520, 7
  %v522 = vsub.s32 2, %v521
  %v523 = vrot.slane %v510, %v522
  %v524 = vlaneseq
  %v525 = vshrl.u32 %v524, 7
  %v526 = vsub.s32 3, %v525
  %v527 = vrot.slane %v510, %v526
  %v564 = vunpack.c.l.b16 %v478
  %v565 = vunpack.c.h.b16 %v478
  %v566 = vunpack.c.l.b16 %v479
  %v567 = vunpack.c.h.b16 %v479
  %v568 = vunpack.c.l.b16 %v480
  %v569 = vunpack.c.h.b16 %v480
  %v570 = vunpack.c.l.b16 %v481
  %v571 = vunpack.c.h.b16 %v481
  %v572 = vunpack.c.l.b16 %v482
  %v573 = vunpack.c.h.b16 %v482
  %v574 = vunpack.c.l.b16 %v483
  %v575 = vunpack.c.h.b16 %v483
  %v576 = vunpack.c.l.b16 %v484
  %v577 = vunpack.c.h.b16 %v484
  %v578 = vunpack.c.l.b16 %v485
  %v579 = vunpack.c.h.b16 %v485
  %v580 = vunpack.c.l.b16 %v486
  %v581 = vunpack.c.h.b16 %v486
  %v582 = vunpack.c.l.b16 %v487
  %v583 = vunpack.c.h.b16 %v487
  %v584 = vunpack.c.l.b16 %v488
  %v585 = vunpack.c.h.b16 %v488
  %v586 = vunpack.c.l.b16 %v489
  %v587 = vunpack.c.h.b16 %v489
  %v588 = vunpack.c.l.b16 %v490
  %v589 = vunpack.c.h.b16 %v490
  %v590 = vunpack.c.l.b16 %v491
  %v591 = vunpack.c.h.b16 %v491
  %v592 = vunpack.c.l.b16 %v492
  %v593 = vunpack.c.h.b16 %v492
  %v594 = vunpack.c.l.b16 %v493
  %v595 = vunpack.c.h.b16 %v493
  %v596 = vunpack.c.l.b16 %v494
  %v597 = vunpack.c.h.b16 %v494
  %v598 = vunpack.c.l.b16 %v495
  %v599 = vunpack.c.h.b16 %v495
  %v600 = vunpack.c.l.b16 %v496
  %v601 = vunpack.c.h.b16 %v496
  %v602 = vunpack.c.l.b16 %v497
  %v603 = vunpack.c.h.b16 %v497
  %v604 = vunpack.c.l.b16 %v498
  %v605 = vunpack.c.h.b16 %v498
  %v606 = vunpack.c.l.b16 %v499
  %v607 = vunpack.c.h.b16 %v499
  %v608 = vunpack.c.l.b16 %v500
  %v609 = vunpack.c.h.b16 %v500
  %v610 = vunpack.c.l.b16 %v501
  %v611 = vunpack.c.h.b16 %v501
  %v612 = vunpack.c.l.b16 %v502
  %v613 = vunpack.c.h.b16 %v502
  %v614 = vunpack.c.l.b16 %v503
  %v615 = vunpack.c.h.b16 %v503
  %v616 = vunpack.c.l.b16 %v504
  %v617 = vunpack.c.h.b16 %v504
  %v618 = vunpack.c.l.b16 %v505
  %v619 = vunpack.c.h.b16 %v505
  %v620 = vunpack.c.l.b16 %v506
  %v621 = vunpack.c.h.b16 %v506
  %v622 = vunpack.c.l.b16 %v507
  %v623 = vunpack.c.h.b16 %v507
  %v624 = vunpack.c.l.b16 %v508
  %v625 = vunpack.c.h.b16 %v508
  %v626 = vunpack.c.l.b16 %v509
  %v627 = vunpack.c.h.b16 %v509
  %v628 = vpack.c.b16 %v568, %v564
  %v629 = vpack.c.b16 %v569, %v565
  %v630 = vpack.c.b16 %v570, %v566
  %v631 = vpack.c.b16 %v571, %v567
  %v632 = vpack.c.b16 %v576, %v572
  %v633 = vpack.c.b16 %v577, %v573
  %v634 = vpack.c.b16 %v578, %v574
  %v635 = vpack.c.b16 %v579, %v575
  %v636 = vpack.c.b16 %v584, %v580
  %v637 = vpack.c.b16 %v585, %v581
  %v638 = vpack.c.b16 %v586, %v582
  %v639 = vpack.c.b16 %v587, %v583
  %v640 = vpack.c.b16 %v592, %v588
  %v641 = vpack.c.b16 %v593, %v589
  %v642 = vpack.c.b16 %v594, %v590
  %v643 = vpack.c.b16 %v595, %v591
  %v644 = vpack.c.b16 %v600, %v596
  %v645 = vpack.c.b16 %v601, %v597
  %v646 = vpack.c.b16 %v602, %v598
  %v647 = vpack.c.b16 %v603, %v599
  %v648 = vpack.c.b16 %v608, %v604
  %v649 = vpack.c.b16 %v609, %v605
  %v650 = vpack.c.b16 %v610, %v606
  %v651 = vpack.c.b16 %v611, %v607
  %v652 = vpack.c.b16 %v616, %v612
  %v653 = vpack.c.b16 %v617, %v613
  %v654 = vpack.c.b16 %v618, %v614
  %v655 = vpack.c.b16 %v619, %v615
  %v656 = vpack.c.b16 %v624, %v620
  %v657 = vpack.c.b16 %v625, %v621
  %v658 = vpack.c.b16 %v626, %v622
  %v659 = vpack.c.b16 %v627, %v623
  %692 = vmatprep.subr.bf16.mxu0 %v657
  %693 = vmatpush1.bf16.msra.mxu0 %v656
  %694 = vmatprep.subr.bf16.mxu0 %v653
  %695 = vmatpush1.bf16.msra.mxu0 %v652
  %696 = vmatprep.subr.bf16.mxu0 %v649
  %697 = vmatpush1.bf16.msra.mxu0 %v648
  %698 = vmatprep.subr.bf16.mxu0 %v645
  %699 = vmatpush1.bf16.msra.mxu0 %v644
  %700 = vmatprep.subr.bf16.mxu0 %v641
  %701 = vmatpush1.bf16.msra.mxu0 %v640
  %702 = vmatprep.subr.bf16.mxu0 %v637
  %703 = vmatpush1.bf16.msra.mxu0 %v636
  %704 = vmatprep.subr.bf16.mxu0 %v633
  %705 = vmatpush1.bf16.msra.mxu0 %v632
  %706 = vmatprep.subr.bf16.mxu0 %v629
  %707 = vmatpush1.bf16.msra.mxu0 %v628
  %708 = vmatprep.subr.bf16.mxu0 0
  %709 = vmatpush2.bf16.msra.mxu0 0
  %710 = vmatprep.subr.bf16.mxu0 0
  %711 = vmatpush2.bf16.msra.mxu0 0
  %712 = vmatprep.subr.bf16.mxu0 0
  %713 = vmatpush2.bf16.msra.mxu0 0
  %714 = vmatprep.subr.bf16.mxu0 0
  %715 = vmatpush2.bf16.msra.mxu0 0
  %716 = vmatprep.subr.bf16.mxu0 0
  %717 = vmatpush2.bf16.msra.mxu0 0
  %718 = vmatprep.subr.bf16.mxu0 0
  %719 = vmatpush2.bf16.msra.mxu0 0
  %720 = vmatprep.subr.bf16.mxu0 0
  %721 = vmatpush2.bf16.msra.mxu0 0
  %722 = vmatprep.subr.bf16.mxu0 0
  %723 = vmatpush2.bf16.msra.mxu0 0
  %724 = vmatprep.mubr.bf16.mxu0 0
  %725 = vmatmul.mubr.bf16.gmra.mxu0 %v132
  %v726 = vpop.f32.mrf.mxu0
  %v727 = vadd.f32 %v515, %v726
  %v728 = vpop.f32.mrf.mxu0
  %v729 = vadd.f32 %v519, %v728
  %v730 = vpop.f32.mrf.mxu0
  %v731 = vadd.f32 %v515, %v730
  %v732 = vpop.f32.mrf.mxu0
  %v733 = vadd.f32 %v519, %v732
  %734 = vmatprep.mubr.bf16.mxu0 0
  %735 = vmatmul.mubr.bf16.gmra.mxu0 %v133
  %v736 = vpop.f32.mrf.mxu0
  %v737 = vadd.f32 %v515, %v736
  %v738 = vpop.f32.mrf.mxu0
  %v739 = vadd.f32 %v519, %v738
  %v740 = vpop.f32.mrf.mxu0
  %v741 = vadd.f32 %v515, %v740
  %v742 = vpop.f32.mrf.mxu0
  %v743 = vadd.f32 %v519, %v742
  %744 = vmatprep.mubr.bf16.mxu0 0
  %745 = vmatmul.mubr.bf16.gmra.mxu0 %v134
  %v746 = vpop.f32.mrf.mxu0
  %v747 = vadd.f32 %v515, %v746
  %v748 = vpop.f32.mrf.mxu0
  %v749 = vadd.f32 %v519, %v748
  %v750 = vpop.f32.mrf.mxu0
  %v751 = vadd.f32 %v515, %v750
  %v752 = vpop.f32.mrf.mxu0
  %v753 = vadd.f32 %v519, %v752
  %754 = vmatprep.mubr.bf16.mxu0 0
  %755 = vmatmul.mubr.bf16.gmra.mxu0 %v135
  %v756 = vpop.f32.mrf.mxu0
  %v757 = vadd.f32 %v515, %v756
  %v758 = vpop.f32.mrf.mxu0
  %v759 = vadd.f32 %v519, %v758
  %v760 = vpop.f32.mrf.mxu0
  %v761 = vadd.f32 %v515, %v760
  %v762 = vpop.f32.mrf.mxu0
  %v763 = vadd.f32 %v519, %v762
  %764 = vdwg.mxu0
  %765 = vmatprep.subr.bf16.mxu0 %v659
  %766 = vmatpush1.bf16.msra.mxu0 %v658
  %767 = vmatprep.subr.bf16.mxu0 %v655
  %768 = vmatpush1.bf16.msra.mxu0 %v654
  %769 = vmatprep.subr.bf16.mxu0 %v651
  %770 = vmatpush1.bf16.msra.mxu0 %v650
  %771 = vmatprep.subr.bf16.mxu0 %v647
  %772 = vmatpush1.bf16.msra.mxu0 %v646
  %773 = vmatprep.subr.bf16.mxu0 %v643
  %774 = vmatpush1.bf16.msra.mxu0 %v642
  %775 = vmatprep.subr.bf16.mxu0 %v639
  %776 = vmatpush1.bf16.msra.mxu0 %v638
  %777 = vmatprep.subr.bf16.mxu0 %v635
  %778 = vmatpush1.bf16.msra.mxu0 %v634
  %779 = vmatprep.subr.bf16.mxu0 %v631
  %780 = vmatpush1.bf16.msra.mxu0 %v630
  %781 = vmatprep.subr.bf16.mxu0 0
  %782 = vmatpush2.bf16.msra.mxu0 0
  %783 = vmatprep.subr.bf16.mxu0 0
  %784 = vmatpush2.bf16.msra.mxu0 0
  %785 = vmatprep.subr.bf16.mxu0 0
  %786 = vmatpush2.bf16.msra.mxu0 0
  %787 = vmatprep.subr.bf16.mxu0 0
  %788 = vmatpush2.bf16.msra.mxu0 0
  %789 = vmatprep.subr.bf16.mxu0 0
  %790 = vmatpush2.bf16.msra.mxu0 0
  %791 = vmatprep.subr.bf16.mxu0 0
  %792 = vmatpush2.bf16.msra.mxu0 0
  %793 = vmatprep.subr.bf16.mxu0 0
  %794 = vmatpush2.bf16.msra.mxu0 0
  %795 = vmatprep.subr.bf16.mxu0 0
  %796 = vmatpush2.bf16.msra.mxu0 0
  %797 = vmatprep.mubr.bf16.mxu0 0
  %798 = vmatmul.mubr.bf16.gmra.mxu0 %v132
  %v799 = vpop.f32.mrf.mxu0
  %v800 = vadd.f32 %v523, %v799
  %v801 = vpop.f32.mrf.mxu0
  %v802 = vadd.f32 %v527, %v801
  %v803 = vpop.f32.mrf.mxu0
  %v804 = vadd.f32 %v523, %v803
  %v805 = vpop.f32.mrf.mxu0
  %v806 = vadd.f32 %v527, %v805
  %807 = vmatprep.mubr.bf16.mxu0 0
  %808 = vmatmul.mubr.bf16.gmra.mxu0 %v133
  %v809 = vpop.f32.mrf.mxu0
  %v810 = vadd.f32 %v523, %v809
  %v811 = vpop.f32.mrf.mxu0
  %v812 = vadd.f32 %v527, %v811
  %v813 = vpop.f32.mrf.mxu0
  %v814 = vadd.f32 %v523, %v813
  %v815 = vpop.f32.mrf.mxu0
  %v816 = vadd.f32 %v527, %v815
  %817 = vmatprep.mubr.bf16.mxu0 0
  %818 = vmatmul.mubr.bf16.gmra.mxu0 %v134
  %v819 = vpop.f32.mrf.mxu0
  %v820 = vadd.f32 %v523, %v819
  %v821 = vpop.f32.mrf.mxu0
  %v822 = vadd.f32 %v527, %v821
  %v823 = vpop.f32.mrf.mxu0
  %v824 = vadd.f32 %v523, %v823
  %v825 = vpop.f32.mrf.mxu0
  %v826 = vadd.f32 %v527, %v825
  %827 = vmatprep.mubr.bf16.mxu0 0
  %828 = vmatmul.mubr.bf16.gmra.mxu0 %v135
  %v829 = vpop.f32.mrf.mxu0
  %v830 = vadd.f32 %v523, %v829
  %v831 = vpop.f32.mrf.mxu0
  %v832 = vadd.f32 %v527, %v831
  %v833 = vpop.f32.mrf.mxu0
  %v834 = vadd.f32 %v523, %v833
  %v835 = vpop.f32.mrf.mxu0
  %v836 = vadd.f32 %v527, %v835
  %837 = vdwg.mxu0
  %838 = vst [vmem:[#allocation4] sm:$0xff] %v727
  %839 = vst [vmem:[#allocation4 + $0x8] sm:$0xff] %v729
  %840 = vst [vmem:[#allocation4 + $0x10] sm:$0xff] %v800
  %841 = vst [vmem:[#allocation4 + $0x18] sm:$0xff] %v802
  %842 = vst [vmem:[#allocation4 + $0x20] sm:$0xff] %v731
  %843 = vst [vmem:[#allocation4 + $0x28] sm:$0xff] %v733
  %844 = vst [vmem:[#allocation4 + $0x30] sm:$0xff] %v804
  %845 = vst [vmem:[#allocation4 + $0x38] sm:$0xff] %v806
  %846 = vst [vmem:[#allocation4 + $0x40] sm:$0xff] %v737
  %847 = vst [vmem:[#allocation4 + $0x48] sm:$0xff] %v739
  %848 = vst [vmem:[#allocation4 + $0x50] sm:$0xff] %v810
  %849 = vst [vmem:[#allocation4 + $0x58] sm:$0xff] %v812
  %850 = vst [vmem:[#allocation4 + $0x60] sm:$0xff] %v741
  %851 = vst [vmem:[#allocation4 + $0x68] sm:$0xff] %v743
  %852 = vst [vmem:[#allocation4 + $0x70] sm:$0xff] %v814
  %853 = vst [vmem:[#allocation4 + $0x78] sm:$0xff] %v816
  %854 = vst [vmem:[#allocation4 + $0x80] sm:$0xff] %v747
  %855 = vst [vmem:[#allocation4 + $0x88] sm:$0xff] %v749
  %856 = vst [vmem:[#allocation4 + $0x90] sm:$0xff] %v820
  %857 = vst [vmem:[#allocation4 + $0x98] sm:$0xff] %v822
  %858 = vst [vmem:[#allocation4 + $0xa0] sm:$0xff] %v751
  %859 = vst [vmem:[#allocation4 + $0xa8] sm:$0xff] %v753
  %860 = vst [vmem:[#allocation4 + $0xb0] sm:$0xff] %v824
  %861 = vst [vmem:[#allocation4 + $0xb8] sm:$0xff] %v826
  %862 = vst [vmem:[#allocation4 + $0xc0] sm:$0xff] %v757
  %863 = vst [vmem:[#allocation4 + $0xc8] sm:$0xff] %v759
  %864 = vst [vmem:[#allocation4 + $0xd0] sm:$0xff] %v830
  %865 = vst [vmem:[#allocation4 + $0xd8] sm:$0xff] %v832
  %866 = vst [vmem:[#allocation4 + $0xe0] sm:$0xff] %v761
  %867 = vst [vmem:[#allocation4 + $0xe8] sm:$0xff] %v763
  %868 = vst [vmem:[#allocation4 + $0xf0] sm:$0xff] %v834
  %869 = vst [vmem:[#allocation4 + $0xf8] sm:$0xff] %v836
  %v870 = vld [vmem:[#allocation2] sm:$0xff]
  %v871 = vld [vmem:[#allocation2 + $0x8] sm:$0xff]
  %v872 = vld [vmem:[#allocation2 + $0x10] sm:$0xff]
  %v873 = vld [vmem:[#allocation2 + $0x18] sm:$0xff]
  %s874 = scalar_lea.vmem [#allocation4], 224
  %v875 = vld [vmem:[%s874] sm:$0xff]
  %v876 = vld [vmem:[%s874 + $0x8] sm:$0xff]
  %v877 = vld [vmem:[%s874 + $0x10] sm:$0xff]
  %v878 = vld [vmem:[%s874 + $0x18] sm:$0xff]
  %v879 = vadd.f32 %v870, %v875
  %v880 = vadd.f32 %v871, %v876
  %v881 = vadd.f32 %v872, %v877
  %v882 = vadd.f32 %v873, %v878
  %v883 = vld [vmem:[%s5] sm:$0xff]
  %v884 = vld [vmem:[%s5 + $0x8] sm:$0xff]
  %v885 = vld [vmem:[%s5 + $0x10] sm:$0xff]
  %v886 = vld [vmem:[%s5 + $0x18] sm:$0xff]
  %v887 = vld [vmem:[%s5 + $0x20] sm:$0xff]
  %v888 = vld [vmem:[%s5 + $0x28] sm:$0xff]
  %v889 = vld [vmem:[%s5 + $0x30] sm:$0xff]
  %v890 = vld [vmem:[%s5 + $0x38] sm:$0xff]
  %v891 = vld [vmem:[%s5 + $0x40] sm:$0xff]
  %v892 = vld [vmem:[%s5 + $0x48] sm:$0xff]
  %v893 = vld [vmem:[%s5 + $0x50] sm:$0xff]
  %v894 = vld [vmem:[%s5 + $0x58] sm:$0xff]
  %v895 = vld [vmem:[%s5 + $0x60] sm:$0xff]
  %v896 = vld [vmem:[%s5 + $0x68] sm:$0xff]
  %v897 = vld [vmem:[%s5 + $0x70] sm:$0xff]
  %v898 = vld [vmem:[%s5 + $0x78] sm:$0xff]
  %v899 = vld [vmem:[%s5 + $0x80] sm:$0xff]
  %v900 = vld [vmem:[%s5 + $0x88] sm:$0xff]
  %v901 = vld [vmem:[%s5 + $0x90] sm:$0xff]
  %v902 = vld [vmem:[%s5 + $0x98] sm:$0xff]
  %v903 = vld [vmem:[%s5 + $0xa0] sm:$0xff]
  %v904 = vld [vmem:[%s5 + $0xa8] sm:$0xff]
  %v905 = vld [vmem:[%s5 + $0xb0] sm:$0xff]
  %v906 = vld [vmem:[%s5 + $0xb8] sm:$0xff]
  %v907 = vld [vmem:[%s5 + $0xc0] sm:$0xff]
  %v908 = vld [vmem:[%s5 + $0xc8] sm:$0xff]
  %v909 = vld [vmem:[%s5 + $0xd0] sm:$0xff]
  %v910 = vld [vmem:[%s5 + $0xd8] sm:$0xff]
  %v911 = vld [vmem:[%s5 + $0xe0] sm:$0xff]
  %v912 = vld [vmem:[%s5 + $0xe8] sm:$0xff]
  %v913 = vld [vmem:[%s5 + $0xf0] sm:$0xff]
  %v914 = vld [vmem:[%s5 + $0xf8] sm:$0xff]
  %v947 = vunpack.c.l.b16 %v883
  %v948 = vunpack.c.h.b16 %v883
  %v949 = vunpack.c.l.b16 %v884
  %v950 = vunpack.c.h.b16 %v884
  %v951 = vunpack.c.l.b16 %v885
  %v952 = vunpack.c.h.b16 %v885
  %v953 = vunpack.c.l.b16 %v886
  %v954 = vunpack.c.h.b16 %v886
  %v955 = vunpack.c.l.b16 %v887
  %v956 = vunpack.c.h.b16 %v887
  %v957 = vunpack.c.l.b16 %v888
  %v958 = vunpack.c.h.b16 %v888
  %v959 = vunpack.c.l.b16 %v889
  %v960 = vunpack.c.h.b16 %v889
  %v961 = vunpack.c.l.b16 %v890
  %v962 = vunpack.c.h.b16 %v890
  %v963 = vunpack.c.l.b16 %v891
  %v964 = vunpack.c.h.b16 %v891
  %v965 = vunpack.c.l.b16 %v892
  %v966 = vunpack.c.h.b16 %v892
  %v967 = vunpack.c.l.b16 %v893
  %v968 = vunpack.c.h.b16 %v893
  %v969 = vunpack.c.l.b16 %v894
  %v970 = vunpack.c.h.b16 %v894
  %v971 = vunpack.c.l.b16 %v895
  %v972 = vunpack.c.h.b16 %v895
  %v973 = vunpack.c.l.b16 %v896
  %v974 = vunpack.c.h.b16 %v896
  %v975 = vunpack.c.l.b16 %v897
  %v976 = vunpack.c.h.b16 %v897
  %v977 = vunpack.c.l.b16 %v898
  %v978 = vunpack.c.h.b16 %v898
  %v979 = vunpack.c.l.b16 %v899
  %v980 = vunpack.c.h.b16 %v899
  %v981 = vunpack.c.l.b16 %v900
  %v982 = vunpack.c.h.b16 %v900
  %v983 = vunpack.c.l.b16 %v901
  %v984 = vunpack.c.h.b16 %v901
  %v985 = vunpack.c.l.b16 %v902
  %v986 = vunpack.c.h.b16 %v902
  %v987 = vunpack.c.l.b16 %v903
  %v988 = vunpack.c.h.b16 %v903
  %v989 = vunpack.c.l.b16 %v904
  %v990 = vunpack.c.h.b16 %v904
  %v991 = vunpack.c.l.b16 %v905
  %v992 = vunpack.c.h.b16 %v905
  %v993 = vunpack.c.l.b16 %v906
  %v994 = vunpack.c.h.b16 %v906
  %v995 = vunpack.c.l.b16 %v907
  %v996 = vunpack.c.h.b16 %v907
  %v997 = vunpack.c.l.b16 %v908
  %v998 = vunpack.c.h.b16 %v908
  %v999 = vunpack.c.l.b16 %v909
  %v1000 = vunpack.c.h.b16 %v909
  %v1001 = vunpack.c.l.b16 %v910
  %v1002 = vunpack.c.h.b16 %v910
  %v1003 = vunpack.c.l.b16 %v911
  %v1004 = vunpack.c.h.b16 %v911
  %v1005 = vunpack.c.l.b16 %v912
  %v1006 = vunpack.c.h.b16 %v912
  %v1007 = vunpack.c.l.b16 %v913
  %v1008 = vunpack.c.h.b16 %v913
  %v1009 = vunpack.c.l.b16 %v914
  %v1010 = vunpack.c.h.b16 %v914
  %v1011 = vpack.c.b16 %v951, %v947
  %v1012 = vpack.c.b16 %v952, %v948
  %v1013 = vpack.c.b16 %v953, %v949
  %v1014 = vpack.c.b16 %v954, %v950
  %v1015 = vpack.c.b16 %v959, %v955
  %v1016 = vpack.c.b16 %v960, %v956
  %v1017 = vpack.c.b16 %v961, %v957
  %v1018 = vpack.c.b16 %v962, %v958
  %v1019 = vpack.c.b16 %v967, %v963
  %v1020 = vpack.c.b16 %v968, %v964
  %v1021 = vpack.c.b16 %v969, %v965
  %v1022 = vpack.c.b16 %v970, %v966
  %v1023 = vpack.c.b16 %v975, %v971
  %v1024 = vpack.c.b16 %v976, %v972
  %v1025 = vpack.c.b16 %v977, %v973
  %v1026 = vpack.c.b16 %v978, %v974
  %v1027 = vpack.c.b16 %v983, %v979
  %v1028 = vpack.c.b16 %v984, %v980
  %v1029 = vpack.c.b16 %v985, %v981
  %v1030 = vpack.c.b16 %v986, %v982
  %v1031 = vpack.c.b16 %v991, %v987
  %v1032 = vpack.c.b16 %v992, %v988
  %v1033 = vpack.c.b16 %v993, %v989
  %v1034 = vpack.c.b16 %v994, %v990
  %v1035 = vpack.c.b16 %v999, %v995
  %v1036 = vpack.c.b16 %v1000, %v996
  %v1037 = vpack.c.b16 %v1001, %v997
  %v1038 = vpack.c.b16 %v1002, %v998
  %v1039 = vpack.c.b16 %v1007, %v1003
  %v1040 = vpack.c.b16 %v1008, %v1004
  %v1041 = vpack.c.b16 %v1009, %v1005
  %v1042 = vpack.c.b16 %v1010, %v1006
  %1075 = vmatprep.subr.bf16.mxu0 %v1040
  %1076 = vmatpush1.bf16.msra.mxu0 %v1039
  %1077 = vmatprep.subr.bf16.mxu0 %v1036
  %1078 = vmatpush1.bf16.msra.mxu0 %v1035
  %1079 = vmatprep.subr.bf16.mxu0 %v1032
  %1080 = vmatpush1.bf16.msra.mxu0 %v1031
  %1081 = vmatprep.subr.bf16.mxu0 %v1028
  %1082 = vmatpush1.bf16.msra.mxu0 %v1027
  %1083 = vmatprep.subr.bf16.mxu0 %v1024
  %1084 = vmatpush1.bf16.msra.mxu0 %v1023
  %1085 = vmatprep.subr.bf16.mxu0 %v1020
  %1086 = vmatpush1.bf16.msra.mxu0 %v1019
  %1087 = vmatprep.subr.bf16.mxu0 %v1016
  %1088 = vmatpush1.bf16.msra.mxu0 %v1015
  %1089 = vmatprep.subr.bf16.mxu0 %v1012
  %1090 = vmatpush1.bf16.msra.mxu0 %v1011
  %1091 = vmatprep.subr.bf16.mxu0 0
  %1092 = vmatpush2.bf16.msra.mxu0 0
  %1093 = vmatprep.subr.bf16.mxu0 0
  %1094 = vmatpush2.bf16.msra.mxu0 0
  %1095 = vmatprep.subr.bf16.mxu0 0
  %1096 = vmatpush2.bf16.msra.mxu0 0
  %1097 = vmatprep.subr.bf16.mxu0 0
  %1098 = vmatpush2.bf16.msra.mxu0 0
  %1099 = vmatprep.subr.bf16.mxu0 0
  %1100 = vmatpush2.bf16.msra.mxu0 0
  %1101 = vmatprep.subr.bf16.mxu0 0
  %1102 = vmatpush2.bf16.msra.mxu0 0
  %1103 = vmatprep.subr.bf16.mxu0 0
  %1104 = vmatpush2.bf16.msra.mxu0 0
  %1105 = vmatprep.subr.bf16.mxu0 0
  %1106 = vmatpush2.bf16.msra.mxu0 0
  %1107 = vmatprep.mubr.bf16.mxu0 0
  %1108 = vmatmul.mubr.bf16.gmra.mxu0 0
  %v1109 = vpop.f32.mrf.mxu0
  %v1110 = vadd.f32 0.0, %v1109
  %v1111 = vpop.f32.mrf.mxu0
  %v1112 = vadd.f32 0.0, %v1111
  %v1113 = vpop.f32.mrf.mxu0
  %v1114 = vpop.f32.mrf.mxu0
  %1115 = vdwg.mxu0
  %1116 = vmatprep.subr.bf16.mxu0 %v1042
  %1117 = vmatpush1.bf16.msra.mxu0 %v1041
  %1118 = vmatprep.subr.bf16.mxu0 %v1038
  %1119 = vmatpush1.bf16.msra.mxu0 %v1037
  %1120 = vmatprep.subr.bf16.mxu0 %v1034
  %1121 = vmatpush1.bf16.msra.mxu0 %v1033
  %1122 = vmatprep.subr.bf16.mxu0 %v1030
  %1123 = vmatpush1.bf16.msra.mxu0 %v1029
  %1124 = vmatprep.subr.bf16.mxu0 %v1026
  %1125 = vmatpush1.bf16.msra.mxu0 %v1025
  %1126 = vmatprep.subr.bf16.mxu0 %v1022
  %1127 = vmatpush1.bf16.msra.mxu0 %v1021
  %1128 = vmatprep.subr.bf16.mxu0 %v1018
  %1129 = vmatpush1.bf16.msra.mxu0 %v1017
  %1130 = vmatprep.subr.bf16.mxu0 %v1014
  %1131 = vmatpush1.bf16.msra.mxu0 %v1013
  %1132 = vmatprep.subr.bf16.mxu0 0
  %1133 = vmatpush2.bf16.msra.mxu0 0
  %1134 = vmatprep.subr.bf16.mxu0 0
  %1135 = vmatpush2.bf16.msra.mxu0 0
  %1136 = vmatprep.subr.bf16.mxu0 0
  %1137 = vmatpush2.bf16.msra.mxu0 0
  %1138 = vmatprep.subr.bf16.mxu0 0
  %1139 = vmatpush2.bf16.msra.mxu0 0
  %1140 = vmatprep.subr.bf16.mxu0 0
  %1141 = vmatpush2.bf16.msra.mxu0 0
  %1142 = vmatprep.subr.bf16.mxu0 0
  %1143 = vmatpush2.bf16.msra.mxu0 0
  %1144 = vmatprep.subr.bf16.mxu0 0
  %1145 = vmatpush2.bf16.msra.mxu0 0
  %1146 = vmatprep.subr.bf16.mxu0 0
  %1147 = vmatpush2.bf16.msra.mxu0 0
  %1148 = vmatprep.mubr.bf16.mxu0 0
  %1149 = vmatmul.mubr.bf16.gmra.mxu0 0
  %v1150 = vpop.f32.mrf.mxu0
  %v1151 = vadd.f32 0.0, %v1150
  %v1152 = vpop.f32.mrf.mxu0
  %v1153 = vadd.f32 0.0, %v1152
  %v1154 = vpop.f32.mrf.mxu0
  %v1155 = vpop.f32.mrf.mxu0
  %1156 = vdwg.mxu0
  %v1157 = vadd.f32 %v879, %v1110
  %v1158 = vadd.f32 %v880, %v1112
  %v1159 = vadd.f32 %v881, %v1151
  %v1160 = vadd.f32 %v882, %v1153
  %v1161 = vxor.u32 %v1157, 2147483648
  %v1162 = vmul.f32 %v1161, 1.442695
  %v1163 = vpow.pop %v1162
  %v1164 = vadd.f32 %v1163, 1.0
  %v1165 = vrcp.pop %v1164
  %v1166 = vmul.f32 1.0, %v1165
  %v1167 = vxor.u32 %v1158, 2147483648
  %v1168 = vmul.f32 %v1167, 1.442695
  %v1169 = vpow.pop %v1168
  %v1170 = vadd.f32 %v1169, 1.0
  %v1171 = vrcp.pop %v1170
  %v1172 = vmul.f32 1.0, %v1171
  %v1173 = vtanh.pop %v1159
  %v1174 = vxor.u32 %v1160, 2147483648
  %v1175 = vmul.f32 %v1174, 1.442695
  %v1176 = vpow.pop %v1175
  %v1177 = vadd.f32 %v1176, 1.0
  %v1178 = vrcp.pop %v1177
  %v1179 = vmul.f32 1.0, %v1178
  %v1180 = vmul.f32 %v1172, 0.0
  %v1181 = vmul.f32 %v1166, %v1173
  %v1182 = vadd.f32 %v1180, %v1181
  %v1183 = vtanh.pop %v1182
  %v1184 = vmul.f32 %v1179, %v1183
  %1185 = vst [vmem:[#allocation6] sm:$0xff] %v1184
  %s1186 = scalar_lea.vmem [#allocation8], 56
  %1187 = vst [vmem:[%s1186] sm:$0xff] %v1184
  %s1188 = scalar_lea.vmem [#allocation2], 32
  %v1189 = vld [vmem:[%s1188] sm:$0xff]
  %v1190 = vld [vmem:[%s1188 + $0x8] sm:$0xff]
  %v1191 = vld [vmem:[%s1188 + $0x10] sm:$0xff]
  %v1192 = vld [vmem:[%s1188 + $0x18] sm:$0xff]
  %s1193 = scalar_lea.vmem [#allocation4], 192
  %v1194 = vld [vmem:[%s1193] sm:$0xff]
  %v1195 = vld [vmem:[%s1193 + $0x8] sm:$0xff]
  %v1196 = vld [vmem:[%s1193 + $0x10] sm:$0xff]
  %v1197 = vld [vmem:[%s1193 + $0x18] sm:$0xff]
  %v1198 = vadd.f32 %v1189, %v1194
  %v1199 = vadd.f32 %v1190, %v1195
  %v1200 = vadd.f32 %v1191, %v1196
  %v1201 = vadd.f32 %v1192, %v1197
  %v1202 = vpack.c.bf16 %v1184, %v1184
  %v1203 = vld [vmem:[%s5] sm:$0xff]
  %v1204 = vld [vmem:[%s5 + $0x8] sm:$0xff]
  %v1205 = vld [vmem:[%s5 + $0x10] sm:$0xff]
  %v1206 = vld [vmem:[%s5 + $0x18] sm:$0xff]
  %v1207 = vld [vmem:[%s5 + $0x20] sm:$0xff]
  %v1208 = vld [vmem:[%s5 + $0x28] sm:$0xff]
  %v1209 = vld [vmem:[%s5 + $0x30] sm:$0xff]
  %v1210 = vld [vmem:[%s5 + $0x38] sm:$0xff]
  %v1211 = vld [vmem:[%s5 + $0x40] sm:$0xff]
  %v1212 = vld [vmem:[%s5 + $0x48] sm:$0xff]
  %v1213 = vld [vmem:[%s5 + $0x50] sm:$0xff]
  %v1214 = vld [vmem:[%s5 + $0x58] sm:$0xff]
  %v1215 = vld [vmem:[%s5 + $0x60] sm:$0xff]
  %v1216 = vld [vmem:[%s5 + $0x68] sm:$0xff]
  %v1217 = vld [vmem:[%s5 + $0x70] sm:$0xff]
  %v1218 = vld [vmem:[%s5 + $0x78] sm:$0xff]
  %v1219 = vld [vmem:[%s5 + $0x80] sm:$0xff]
  %v1220 = vld [vmem:[%s5 + $0x88] sm:$0xff]
  %v1221 = vld [vmem:[%s5 + $0x90] sm:$0xff]
  %v1222 = vld [vmem:[%s5 + $0x98] sm:$0xff]
  %v1223 = vld [vmem:[%s5 + $0xa0] sm:$0xff]
  %v1224 = vld [vmem:[%s5 + $0xa8] sm:$0xff]
  %v1225 = vld [vmem:[%s5 + $0xb0] sm:$0xff]
  %v1226 = vld [vmem:[%s5 + $0xb8] sm:$0xff]
  %v1227 = vld [vmem:[%s5 + $0xc0] sm:$0xff]
  %v1228 = vld [vmem:[%s5 + $0xc8] sm:$0xff]
  %v1229 = vld [vmem:[%s5 + $0xd0] sm:$0xff]
  %v1230 = vld [vmem:[%s5 + $0xd8] sm:$0xff]
  %v1231 = vld [vmem:[%s5 + $0xe0] sm:$0xff]
  %v1232 = vld [vmem:[%s5 + $0xe8] sm:$0xff]
  %v1233 = vld [vmem:[%s5 + $0xf0] sm:$0xff]
  %v1234 = vld [vmem:[%s5 + $0xf8] sm:$0xff]
  %v1267 = vunpack.c.l.b16 %v1203
  %v1268 = vunpack.c.h.b16 %v1203
  %v1269 = vunpack.c.l.b16 %v1204
  %v1270 = vunpack.c.h.b16 %v1204
  %v1271 = vunpack.c.l.b16 %v1205
  %v1272 = vunpack.c.h.b16 %v1205
  %v1273 = vunpack.c.l.b16 %v1206
  %v1274 = vunpack.c.h.b16 %v1206
  %v1275 = vunpack.c.l.b16 %v1207
  %v1276 = vunpack.c.h.b16 %v1207
  %v1277 = vunpack.c.l.b16 %v1208
  %v1278 = vunpack.c.h.b16 %v1208
  %v1279 = vunpack.c.l.b16 %v1209
  %v1280 = vunpack.c.h.b16 %v1209
  %v1281 = vunpack.c.l.b16 %v1210
  %v1282 = vunpack.c.h.b16 %v1210
  %v1283 = vunpack.c.l.b16 %v1211
  %v1284 = vunpack.c.h.b16 %v1211
  %v1285 = vunpack.c.l.b16 %v1212
  %v1286 = vunpack.c.h.b16 %v1212
  %v1287 = vunpack.c.l.b16 %v1213
  %v1288 = vunpack.c.h.b16 %v1213
  %v1289 = vunpack.c.l.b16 %v1214
  %v1290 = vunpack.c.h.b16 %v1214
  %v1291 = vunpack.c.l.b16 %v1215
  %v1292 = vunpack.c.h.b16 %v1215
  %v1293 = vunpack.c.l.b16 %v1216
  %v1294 = vunpack.c.h.b16 %v1216
  %v1295 = vunpack.c.l.b16 %v1217
  %v1296 = vunpack.c.h.b16 %v1217
  %v1297 = vunpack.c.l.b16 %v1218
  %v1298 = vunpack.c.h.b16 %v1218
  %v1299 = vunpack.c.l.b16 %v1219
  %v1300 = vunpack.c.h.b16 %v1219
  %v1301 = vunpack.c.l.b16 %v1220
  %v1302 = vunpack.c.h.b16 %v1220
  %v1303 = vunpack.c.l.b16 %v1221
  %v1304 = vunpack.c.h.b16 %v1221
  %v1305 = vunpack.c.l.b16 %v1222
  %v1306 = vunpack.c.h.b16 %v1222
  %v1307 = vunpack.c.l.b16 %v1223
  %v1308 = vunpack.c.h.b16 %v1223
  %v1309 = vunpack.c.l.b16 %v1224
  %v1310 = vunpack.c.h.b16 %v1224
  %v1311 = vunpack.c.l.b16 %v1225
  %v1312 = vunpack.c.h.b16 %v1225
  %v1313 = vunpack.c.l.b16 %v1226
  %v1314 = vunpack.c.h.b16 %v1226
  %v1315 = vunpack.c.l.b16 %v1227
  %v1316 = vunpack.c.h.b16 %v1227
  %v1317 = vunpack.c.l.b16 %v1228
  %v1318 = vunpack.c.h.b16 %v1228
  %v1319 = vunpack.c.l.b16 %v1229
  %v1320 = vunpack.c.h.b16 %v1229
  %v1321 = vunpack.c.l.b16 %v1230
  %v1322 = vunpack.c.h.b16 %v1230
  %v1323 = vunpack.c.l.b16 %v1231
  %v1324 = vunpack.c.h.b16 %v1231
  %v1325 = vunpack.c.l.b16 %v1232
  %v1326 = vunpack.c.h.b16 %v1232
  %v1327 = vunpack.c.l.b16 %v1233
  %v1328 = vunpack.c.h.b16 %v1233
  %v1329 = vunpack.c.l.b16 %v1234
  %v1330 = vunpack.c.h.b16 %v1234
  %v1331 = vpack.c.b16 %v1271, %v1267
  %v1332 = vpack.c.b16 %v1272, %v1268
  %v1333 = vpack.c.b16 %v1273, %v1269
  %v1334 = vpack.c.b16 %v1274, %v1270
  %v1335 = vpack.c.b16 %v1279, %v1275
  %v1336 = vpack.c.b16 %v1280, %v1276
  %v1337 = vpack.c.b16 %v1281, %v1277
  %v1338 = vpack.c.b16 %v1282, %v1278
  %v1339 = vpack.c.b16 %v1287, %v1283
  %v1340 = vpack.c.b16 %v1288, %v1284
  %v1341 = vpack.c.b16 %v1289, %v1285
  %v1342 = vpack.c.b16 %v1290, %v1286
  %v1343 = vpack.c.b16 %v1295, %v1291
  %v1344 = vpack.c.b16 %v1296, %v1292
  %v1345 = vpack.c.b16 %v1297, %v1293
  %v1346 = vpack.c.b16 %v1298, %v1294
  %v1347 = vpack.c.b16 %v1303, %v1299
  %v1348 = vpack.c.b16 %v1304, %v1300
  %v1349 = vpack.c.b16 %v1305, %v1301
  %v1350 = vpack.c.b16 %v1306, %v1302
  %v1351 = vpack.c.b16 %v1311, %v1307
  %v1352 = vpack.c.b16 %v1312, %v1308
  %v1353 = vpack.c.b16 %v1313, %v1309
  %v1354 = vpack.c.b16 %v1314, %v1310
  %v1355 = vpack.c.b16 %v1319, %v1315
  %v1356 = vpack.c.b16 %v1320, %v1316
  %v1357 = vpack.c.b16 %v1321, %v1317
  %v1358 = vpack.c.b16 %v1322, %v1318
  %v1359 = vpack.c.b16 %v1327, %v1323
  %v1360 = vpack.c.b16 %v1328, %v1324
  %v1361 = vpack.c.b16 %v1329, %v1325
  %v1362 = vpack.c.b16 %v1330, %v1326
  %1395 = vmatprep.subr.bf16.mxu0 %v1360
  %1396 = vmatpush1.bf16.msra.mxu0 %v1359
  %1397 = vmatprep.subr.bf16.mxu0 %v1356
  %1398 = vmatpush1.bf16.msra.mxu0 %v1355
  %1399 = vmatprep.subr.bf16.mxu0 %v1352
  %1400 = vmatpush1.bf16.msra.mxu0 %v1351
  %1401 = vmatprep.subr.bf16.mxu0 %v1348
  %1402 = vmatpush1.bf16.msra.mxu0 %v1347
  %1403 = vmatprep.subr.bf16.mxu0 %v1344
  %1404 = vmatpush1.bf16.msra.mxu0 %v1343
  %1405 = vmatprep.subr.bf16.mxu0 %v1340
  %1406 = vmatpush1.bf16.msra.mxu0 %v1339
  %1407 = vmatprep.subr.bf16.mxu0 %v1336
  %1408 = vmatpush1.bf16.msra.mxu0 %v1335
  %1409 = vmatprep.subr.bf16.mxu0 %v1332
  %1410 = vmatpush1.bf16.msra.mxu0 %v1331
  %1411 = vmatprep.subr.bf16.mxu0 0
  %1412 = vmatpush2.bf16.msra.mxu0 0
  %1413 = vmatprep.subr.bf16.mxu0 0
  %1414 = vmatpush2.bf16.msra.mxu0 0
  %1415 = vmatprep.subr.bf16.mxu0 0
  %1416 = vmatpush2.bf16.msra.mxu0 0
  %1417 = vmatprep.subr.bf16.mxu0 0
  %1418 = vmatpush2.bf16.msra.mxu0 0
  %1419 = vmatprep.subr.bf16.mxu0 0
  %1420 = vmatpush2.bf16.msra.mxu0 0
  %1421 = vmatprep.subr.bf16.mxu0 0
  %1422 = vmatpush2.bf16.msra.mxu0 0
  %1423 = vmatprep.subr.bf16.mxu0 0
  %1424 = vmatpush2.bf16.msra.mxu0 0
  %1425 = vmatprep.subr.bf16.mxu0 0
  %1426 = vmatpush2.bf16.msra.mxu0 0
  %1427 = vmatprep.mubr.bf16.mxu0 0
  %1428 = vmatmul.mubr.bf16.gmra.mxu0 %v1202
  %v1429 = vpop.f32.mrf.mxu0
  %v1430 = vadd.f32 0.0, %v1429
  %v1431 = vpop.f32.mrf.mxu0
  %v1432 = vadd.f32 0.0, %v1431
  %v1433 = vpop.f32.mrf.mxu0
  %v1434 = vpop.f32.mrf.mxu0
  %1435 = vdwg.mxu0
  %1436 = vmatprep.subr.bf16.mxu0 %v1362
  %1437 = vmatpush1.bf16.msra.mxu0 %v1361
  %1438 = vmatprep.subr.bf16.mxu0 %v1358
  %1439 = vmatpush1.bf16.msra.mxu0 %v1357
  %1440 = vmatprep.subr.bf16.mxu0 %v1354
  %1441 = vmatpush1.bf16.msra.mxu0 %v1353
  %1442 = vmatprep.subr.bf16.mxu0 %v1350
  %1443 = vmatpush1.bf16.msra.mxu0 %v1349
  %1444 = vmatprep.subr.bf16.mxu0 %v1346
  %1445 = vmatpush1.bf16.msra.mxu0 %v1345
  %1446 = vmatprep.subr.bf16.mxu0 %v1342
  %1447 = vmatpush1.bf16.msra.mxu0 %v1341
  %1448 = vmatprep.subr.bf16.mxu0 %v1338
  %1449 = vmatpush1.bf16.msra.mxu0 %v1337
  %1450 = vmatprep.subr.bf16.mxu0 %v1334
  %1451 = vmatpush1.bf16.msra.mxu0 %v1333
  %1452 = vmatprep.subr.bf16.mxu0 0
  %1453 = vmatpush2.bf16.msra.mxu0 0
  %1454 = vmatprep.subr.bf16.mxu0 0
  %1455 = vmatpush2.bf16.msra.mxu0 0
  %1456 = vmatprep.subr.bf16.mxu0 0
  %1457 = vmatpush2.bf16.msra.mxu0 0
  %1458 = vmatprep.subr.bf16.mxu0 0
  %1459 = vmatpush2.bf16.msra.mxu0 0
  %1460 = vmatprep.subr.bf16.mxu0 0
  %1461 = vmatpush2.bf16.msra.mxu0 0
  %1462 = vmatprep.subr.bf16.mxu0 0
  %1463 = vmatpush2.bf16.msra.mxu0 0
  %1464 = vmatprep.subr.bf16.mxu0 0
  %1465 = vmatpush2.bf16.msra.mxu0 0
  %1466 = vmatprep.subr.bf16.mxu0 0
  %1467 = vmatpush2.bf16.msra.mxu0 0
  %1468 = vmatprep.mubr.bf16.mxu0 0
  %1469 = vmatmul.mubr.bf16.gmra.mxu0 %v1202
  %v1470 = vpop.f32.mrf.mxu0
  %v1471 = vadd.f32 0.0, %v1470
  %v1472 = vpop.f32.mrf.mxu0
  %v1473 = vadd.f32 0.0, %v1472
  %v1474 = vpop.f32.mrf.mxu0
  %v1475 = vpop.f32.mrf.mxu0
  %1476 = vdwg.mxu0
  %v1477 = vadd.f32 %v1198, %v1430
  %v1478 = vadd.f32 %v1199, %v1432
  %v1479 = vadd.f32 %v1200, %v1471
  %v1480 = vadd.f32 %v1201, %v1473
  %v1481 = vxor.u32 %v1477, 2147483648
  %v1482 = vmul.f32 %v1481, 1.442695
  %v1483 = vpow.pop %v1482
  %v1484 = vadd.f32 %v1483, 1.0
  %v1485 = vrcp.pop %v1484
  %v1486 = vmul.f32 1.0, %v1485
  %v1487 = vxor.u32 %v1478, 2147483648
  %v1488 = vmul.f32 %v1487, 1.442695
  %v1489 = vpow.pop %v1488
  %v1490 = vadd.f32 %v1489, 1.0
  %v1491 = vrcp.pop %v1490
  %v1492 = vmul.f32 1.0, %v1491
  %v1493 = vtanh.pop %v1479
  %v1494 = vxor.u32 %v1480, 2147483648
  %v1495 = vmul.f32 %v1494, 1.442695
  %v1496 = vpow.pop %v1495
  %v1497 = vadd.f32 %v1496, 1.0
  %v1498 = vrcp.pop %v1497
  %v1499 = vmul.f32 1.0, %v1498
  %v1500 = vmul.f32 %v1492, %v1182
  %v1501 = vmul.f32 %v1486, %v1493
  %v1502 = vadd.f32 %v1500, %v1501
  %v1503 = vtanh.pop %v1502
  %v1504 = vmul.f32 %v1499, %v1503
  %s1505 = scalar_lea.vmem [#allocation6], 8
  %1506 = vst [vmem:[%s1505] sm:$0xff] %v1504
  %s1507 = scalar_lea.vmem [#allocation8], 48
  %1508 = vst [vmem:[%s1507] sm:$0xff] %v1504
  %s1509 = scalar_lea.vmem [#allocation2], 64
  %v1510 = vld [vmem:[%s1509] sm:$0xff]
  %v1511 = vld [vmem:[%s1509 + $0x8] sm:$0xff]
  %v1512 = vld [vmem:[%s1509 + $0x10] sm:$0xff]
  %v1513 = vld [vmem:[%s1509 + $0x18] sm:$0xff]
  %s1514 = scalar_lea.vmem [#allocation4], 160
  %v1515 = vld [vmem:[%s1514] sm:$0xff]
  %v1516 = vld [vmem:[%s1514 + $0x8] sm:$0xff]
  %v1517 = vld [vmem:[%s1514 + $0x10] sm:$0xff]
  %v1518 = vld [vmem:[%s1514 + $0x18] sm:$0xff]
  %v1519 = vadd.f32 %v1510, %v1515
  %v1520 = vadd.f32 %v1511, %v1516
  %v1521 = vadd.f32 %v1512, %v1517
  %v1522 = vadd.f32 %v1513, %v1518
  %v1523 = vpack.c.bf16 %v1504, %v1504
  %v1524 = vld [vmem:[%s5] sm:$0xff]
  %v1525 = vld [vmem:[%s5 + $0x8] sm:$0xff]
  %v1526 = vld [vmem:[%s5 + $0x10] sm:$0xff]
  %v1527 = vld [vmem:[%s5 + $0x18] sm:$0xff]
  %v1528 = vld [vmem:[%s5 + $0x20] sm:$0xff]
  %v1529 = vld [vmem:[%s5 + $0x28] sm:$0xff]
  %v1530 = vld [vmem:[%s5 + $0x30] sm:$0xff]
  %v1531 = vld [vmem:[%s5 + $0x38] sm:$0xff]
  %v1532 = vld [vmem:[%s5 + $0x40] sm:$0xff]
  %v1533 = vld [vmem:[%s5 + $0x48] sm:$0xff]
  %v1534 = vld [vmem:[%s5 + $0x50] sm:$0xff]
  %v1535 = vld [vmem:[%s5 + $0x58] sm:$0xff]
  %v1536 = vld [vmem:[%s5 + $0x60] sm:$0xff]
  %v1537 = vld [vmem:[%s5 + $0x68] sm:$0xff]
  %v1538 = vld [vmem:[%s5 + $0x70] sm:$0xff]
  %v1539 = vld [vmem:[%s5 + $0x78] sm:$0xff]
  %v1540 = vld [vmem:[%s5 + $0x80] sm:$0xff]
  %v1541 = vld [vmem:[%s5 + $0x88] sm:$0xff]
  %v1542 = vld [vmem:[%s5 + $0x90] sm:$0xff]
  %v1543 = vld [vmem:[%s5 + $0x98] sm:$0xff]
  %v1544 = vld [vmem:[%s5 + $0xa0] sm:$0xff]
  %v1545 = vld [vmem:[%s5 + $0xa8] sm:$0xff]
  %v1546 = vld [vmem:[%s5 + $0xb0] sm:$0xff]
  %v1547 = vld [vmem:[%s5 + $0xb8] sm:$0xff]
  %v1548 = vld [vmem:[%s5 + $0xc0] sm:$0xff]
  %v1549 = vld [vmem:[%s5 + $0xc8] sm:$0xff]
  %v1550 = vld [vmem:[%s5 + $0xd0] sm:$0xff]
  %v1551 = vld [vmem:[%s5 + $0xd8] sm:$0xff]
  %v1552 = vld [vmem:[%s5 + $0xe0] sm:$0xff]
  %v1553 = vld [vmem:[%s5 + $0xe8] sm:$0xff]
  %v1554 = vld [vmem:[%s5 + $0xf0] sm:$0xff]
  %v1555 = vld [vmem:[%s5 + $0xf8] sm:$0xff]
  %v1588 = vunpack.c.l.b16 %v1524
  %v1589 = vunpack.c.h.b16 %v1524
  %v1590 = vunpack.c.l.b16 %v1525
  %v1591 = vunpack.c.h.b16 %v1525
  %v1592 = vunpack.c.l.b16 %v1526
  %v1593 = vunpack.c.h.b16 %v1526
  %v1594 = vunpack.c.l.b16 %v1527
  %v1595 = vunpack.c.h.b16 %v1527
  %v1596 = vunpack.c.l.b16 %v1528
  %v1597 = vunpack.c.h.b16 %v1528
  %v1598 = vunpack.c.l.b16 %v1529
  %v1599 = vunpack.c.h.b16 %v1529
  %v1600 = vunpack.c.l.b16 %v1530
  %v1601 = vunpack.c.h.b16 %v1530
  %v1602 = vunpack.c.l.b16 %v1531
  %v1603 = vunpack.c.h.b16 %v1531
  %v1604 = vunpack.c.l.b16 %v1532
  %v1605 = vunpack.c.h.b16 %v1532
  %v1606 = vunpack.c.l.b16 %v1533
  %v1607 = vunpack.c.h.b16 %v1533
  %v1608 = vunpack.c.l.b16 %v1534
  %v1609 = vunpack.c.h.b16 %v1534
  %v1610 = vunpack.c.l.b16 %v1535
  %v1611 = vunpack.c.h.b16 %v1535
  %v1612 = vunpack.c.l.b16 %v1536
  %v1613 = vunpack.c.h.b16 %v1536
  %v1614 = vunpack.c.l.b16 %v1537
  %v1615 = vunpack.c.h.b16 %v1537
  %v1616 = vunpack.c.l.b16 %v1538
  %v1617 = vunpack.c.h.b16 %v1538
  %v1618 = vunpack.c.l.b16 %v1539
  %v1619 = vunpack.c.h.b16 %v1539
  %v1620 = vunpack.c.l.b16 %v1540
  %v1621 = vunpack.c.h.b16 %v1540
  %v1622 = vunpack.c.l.b16 %v1541
  %v1623 = vunpack.c.h.b16 %v1541
  %v1624 = vunpack.c.l.b16 %v1542
  %v1625 = vunpack.c.h.b16 %v1542
  %v1626 = vunpack.c.l.b16 %v1543
  %v1627 = vunpack.c.h.b16 %v1543
  %v1628 = vunpack.c.l.b16 %v1544
  %v1629 = vunpack.c.h.b16 %v1544
  %v1630 = vunpack.c.l.b16 %v1545
  %v1631 = vunpack.c.h.b16 %v1545
  %v1632 = vunpack.c.l.b16 %v1546
  %v1633 = vunpack.c.h.b16 %v1546
  %v1634 = vunpack.c.l.b16 %v1547
  %v1635 = vunpack.c.h.b16 %v1547
  %v1636 = vunpack.c.l.b16 %v1548
  %v1637 = vunpack.c.h.b16 %v1548
  %v1638 = vunpack.c.l.b16 %v1549
  %v1639 = vunpack.c.h.b16 %v1549
  %v1640 = vunpack.c.l.b16 %v1550
  %v1641 = vunpack.c.h.b16 %v1550
  %v1642 = vunpack.c.l.b16 %v1551
  %v1643 = vunpack.c.h.b16 %v1551
  %v1644 = vunpack.c.l.b16 %v1552
  %v1645 = vunpack.c.h.b16 %v1552
  %v1646 = vunpack.c.l.b16 %v1553
  %v1647 = vunpack.c.h.b16 %v1553
  %v1648 = vunpack.c.l.b16 %v1554
  %v1649 = vunpack.c.h.b16 %v1554
  %v1650 = vunpack.c.l.b16 %v1555
  %v1651 = vunpack.c.h.b16 %v1555
  %v1652 = vpack.c.b16 %v1592, %v1588
  %v1653 = vpack.c.b16 %v1593, %v1589
  %v1654 = vpack.c.b16 %v1594, %v1590
  %v1655 = vpack.c.b16 %v1595, %v1591
  %v1656 = vpack.c.b16 %v1600, %v1596
  %v1657 = vpack.c.b16 %v1601, %v1597
  %v1658 = vpack.c.b16 %v1602, %v1598
  %v1659 = vpack.c.b16 %v1603, %v1599
  %v1660 = vpack.c.b16 %v1608, %v1604
  %v1661 = vpack.c.b16 %v1609, %v1605
  %v1662 = vpack.c.b16 %v1610, %v1606
  %v1663 = vpack.c.b16 %v1611, %v1607
  %v1664 = vpack.c.b16 %v1616, %v1612
  %v1665 = vpack.c.b16 %v1617, %v1613
  %v1666 = vpack.c.b16 %v1618, %v1614
  %v1667 = vpack.c.b16 %v1619, %v1615
  %v1668 = vpack.c.b16 %v1624, %v1620
  %v1669 = vpack.c.b16 %v1625, %v1621
  %v1670 = vpack.c.b16 %v1626, %v1622
  %v1671 = vpack.c.b16 %v1627, %v1623
  %v1672 = vpack.c.b16 %v1632, %v1628
  %v1673 = vpack.c.b16 %v1633, %v1629
  %v1674 = vpack.c.b16 %v1634, %v1630
  %v1675 = vpack.c.b16 %v1635, %v1631
  %v1676 = vpack.c.b16 %v1640, %v1636
  %v1677 = vpack.c.b16 %v1641, %v1637
  %v1678 = vpack.c.b16 %v1642, %v1638
  %v1679 = vpack.c.b16 %v1643, %v1639
  %v1680 = vpack.c.b16 %v1648, %v1644
  %v1681 = vpack.c.b16 %v1649, %v1645
  %v1682 = vpack.c.b16 %v1650, %v1646
  %v1683 = vpack.c.b16 %v1651, %v1647
  %1716 = vmatprep.subr.bf16.mxu0 %v1681
  %1717 = vmatpush1.bf16.msra.mxu0 %v1680
  %1718 = vmatprep.subr.bf16.mxu0 %v1677
  %1719 = vmatpush1.bf16.msra.mxu0 %v1676
  %1720 = vmatprep.subr.bf16.mxu0 %v1673
  %1721 = vmatpush1.bf16.msra.mxu0 %v1672
  %1722 = vmatprep.subr.bf16.mxu0 %v1669
  %1723 = vmatpush1.bf16.msra.mxu0 %v1668
  %1724 = vmatprep.subr.bf16.mxu0 %v1665
  %1725 = vmatpush1.bf16.msra.mxu0 %v1664
  %1726 = vmatprep.subr.bf16.mxu0 %v1661
  %1727 = vmatpush1.bf16.msra.mxu0 %v1660
  %1728 = vmatprep.subr.bf16.mxu0 %v1657
  %1729 = vmatpush1.bf16.msra.mxu0 %v1656
  %1730 = vmatprep.subr.bf16.mxu0 %v1653
  %1731 = vmatpush1.bf16.msra.mxu0 %v1652
  %1732 = vmatprep.subr.bf16.mxu0 0
  %1733 = vmatpush2.bf16.msra.mxu0 0
  %1734 = vmatprep.subr.bf16.mxu0 0
  %1735 = vmatpush2.bf16.msra.mxu0 0
  %1736 = vmatprep.subr.bf16.mxu0 0
  %1737 = vmatpush2.bf16.msra.mxu0 0
  %1738 = vmatprep.subr.bf16.mxu0 0
  %1739 = vmatpush2.bf16.msra.mxu0 0
  %1740 = vmatprep.subr.bf16.mxu0 0
  %1741 = vmatpush2.bf16.msra.mxu0 0
  %1742 = vmatprep.subr.bf16.mxu0 0
  %1743 = vmatpush2.bf16.msra.mxu0 0
  %1744 = vmatprep.subr.bf16.mxu0 0
  %1745 = vmatpush2.bf16.msra.mxu0 0
  %1746 = vmatprep.subr.bf16.mxu0 0
  %1747 = vmatpush2.bf16.msra.mxu0 0
  %1748 = vmatprep.mubr.bf16.mxu0 0
  %1749 = vmatmul.mubr.bf16.gmra.mxu0 %v1523
  %v1750 = vpop.f32.mrf.mxu0
  %v1751 = vadd.f32 0.0, %v1750
  %v1752 = vpop.f32.mrf.mxu0
  %v1753 = vadd.f32 0.0, %v1752
  %v1754 = vpop.f32.mrf.mxu0
  %v1755 = vpop.f32.mrf.mxu0
  %1756 = vdwg.mxu0
  %1757 = vmatprep.subr.bf16.mxu0 %v1683
  %1758 = vmatpush1.bf16.msra.mxu0 %v1682
  %1759 = vmatprep.subr.bf16.mxu0 %v1679
  %1760 = vmatpush1.bf16.msra.mxu0 %v1678
  %1761 = vmatprep.subr.bf16.mxu0 %v1675
  %1762 = vmatpush1.bf16.msra.mxu0 %v1674
  %1763 = vmatprep.subr.bf16.mxu0 %v1671
  %1764 = vmatpush1.bf16.msra.mxu0 %v1670
  %1765 = vmatprep.subr.bf16.mxu0 %v1667
  %1766 = vmatpush1.bf16.msra.mxu0 %v1666
  %1767 = vmatprep.subr.bf16.mxu0 %v1663
  %1768 = vmatpush1.bf16.msra.mxu0 %v1662
  %1769 = vmatprep.subr.bf16.mxu0 %v1659
  %1770 = vmatpush1.bf16.msra.mxu0 %v1658
  %1771 = vmatprep.subr.bf16.mxu0 %v1655
  %1772 = vmatpush1.bf16.msra.mxu0 %v1654
  %1773 = vmatprep.subr.bf16.mxu0 0
  %1774 = vmatpush2.bf16.msra.mxu0 0
  %1775 = vmatprep.subr.bf16.mxu0 0
  %1776 = vmatpush2.bf16.msra.mxu0 0
  %1777 = vmatprep.subr.bf16.mxu0 0
  %1778 = vmatpush2.bf16.msra.mxu0 0
  %1779 = vmatprep.subr.bf16.mxu0 0
  %1780 = vmatpush2.bf16.msra.mxu0 0
  %1781 = vmatprep.subr.bf16.mxu0 0
  %1782 = vmatpush2.bf16.msra.mxu0 0
  %1783 = vmatprep.subr.bf16.mxu0 0
  %1784 = vmatpush2.bf16.msra.mxu0 0
  %1785 = vmatprep.subr.bf16.mxu0 0
  %1786 = vmatpush2.bf16.msra.mxu0 0
  %1787 = vmatprep.subr.bf16.mxu0 0
  %1788 = vmatpush2.bf16.msra.mxu0 0
  %1789 = vmatprep.mubr.bf16.mxu0 0
  %1790 = vmatmul.mubr.bf16.gmra.mxu0 %v1523
  %v1791 = vpop.f32.mrf.mxu0
  %v1792 = vadd.f32 0.0, %v1791
  %v1793 = vpop.f32.mrf.mxu0
  %v1794 = vadd.f32 0.0, %v1793
  %v1795 = vpop.f32.mrf.mxu0
  %v1796 = vpop.f32.mrf.mxu0
  %1797 = vdwg.mxu0
  %v1798 = vadd.f32 %v1519, %v1751
  %v1799 = vadd.f32 %v1520, %v1753
  %v1800 = vadd.f32 %v1521, %v1792
  %v1801 = vadd.f32 %v1522, %v1794
  %v1802 = vxor.u32 %v1798, 2147483648
  %v1803 = vmul.f32 %v1802, 1.442695
  %v1804 = vpow.pop %v1803
  %v1805 = vadd.f32 %v1804, 1.0
  %v1806 = vrcp.pop %v1805
  %v1807 = vmul.f32 1.0, %v1806
  %v1808 = vxor.u32 %v1799, 2147483648
  %v1809 = vmul.f32 %v1808, 1.442695
  %v1810 = vpow.pop %v1809
  %v1811 = vadd.f32 %v1810, 1.0
  %v1812 = vrcp.pop %v1811
  %v1813 = vmul.f32 1.0, %v1812
  %v1814 = vtanh.pop %v1800
  %v1815 = vxor.u32 %v1801, 2147483648
  %v1816 = vmul.f32 %v1815, 1.442695
  %v1817 = vpow.pop %v1816
  %v1818 = vadd.f32 %v1817, 1.0
  %v1819 = vrcp.pop %v1818
  %v1820 = vmul.f32 1.0, %v1819
  %v1821 = vmul.f32 %v1813, %v1502
  %v1822 = vmul.f32 %v1807, %v1814
  %v1823 = vadd.f32 %v1821, %v1822
  %v1824 = vtanh.pop %v1823
  %v1825 = vmul.f32 %v1820, %v1824
  %s1826 = scalar_lea.vmem [#allocation6], 16
  %1827 = vst [vmem:[%s1826] sm:$0xff] %v1825
  %s1828 = scalar_lea.vmem [#allocation8], 40
  %1829 = vst [vmem:[%s1828] sm:$0xff] %v1825
  %s1830 = scalar_lea.vmem [#allocation2], 96
  %v1831 = vld [vmem:[%s1830] sm:$0xff]
  %v1832 = vld [vmem:[%s1830 + $0x8] sm:$0xff]
  %v1833 = vld [vmem:[%s1830 + $0x10] sm:$0xff]
  %v1834 = vld [vmem:[%s1830 + $0x18] sm:$0xff]
  %s1835 = scalar_lea.vmem [#allocation4], 128
  %v1836 = vld [vmem:[%s1835] sm:$0xff]
  %v1837 = vld [vmem:[%s1835 + $0x8] sm:$0xff]
  %v1838 = vld [vmem:[%s1835 + $0x10] sm:$0xff]
  %v1839 = vld [vmem:[%s1835 + $0x18] sm:$0xff]
  %v1840 = vadd.f32 %v1831, %v1836
  %v1841 = vadd.f32 %v1832, %v1837
  %v1842 = vadd.f32 %v1833, %v1838
  %v1843 = vadd.f32 %v1834, %v1839
  %v1844 = vpack.c.bf16 %v1825, %v1825
  %v1845 = vld [vmem:[%s5] sm:$0xff]
  %v1846 = vld [vmem:[%s5 + $0x8] sm:$0xff]
  %v1847 = vld [vmem:[%s5 + $0x10] sm:$0xff]
  %v1848 = vld [vmem:[%s5 + $0x18] sm:$0xff]
  %v1849 = vld [vmem:[%s5 + $0x20] sm:$0xff]
  %v1850 = vld [vmem:[%s5 + $0x28] sm:$0xff]
  %v1851 = vld [vmem:[%s5 + $0x30] sm:$0xff]
  %v1852 = vld [vmem:[%s5 + $0x38] sm:$0xff]
  %v1853 = vld [vmem:[%s5 + $0x40] sm:$0xff]
  %v1854 = vld [vmem:[%s5 + $0x48] sm:$0xff]
  %v1855 = vld [vmem:[%s5 + $0x50] sm:$0xff]
  %v1856 = vld [vmem:[%s5 + $0x58] sm:$0xff]
  %v1857 = vld [vmem:[%s5 + $0x60] sm:$0xff]
  %v1858 = vld [vmem:[%s5 + $0x68] sm:$0xff]
  %v1859 = vld [vmem:[%s5 + $0x70] sm:$0xff]
  %v1860 = vld [vmem:[%s5 + $0x78] sm:$0xff]
  %v1861 = vld [vmem:[%s5 + $0x80] sm:$0xff]
  %v1862 = vld [vmem:[%s5 + $0x88] sm:$0xff]
  %v1863 = vld [vmem:[%s5 + $0x90] sm:$0xff]
  %v1864 = vld [vmem:[%s5 + $0x98] sm:$0xff]
  %v1865 = vld [vmem:[%s5 + $0xa0] sm:$0xff]
  %v1866 = vld [vmem:[%s5 + $0xa8] sm:$0xff]
  %v1867 = vld [vmem:[%s5 + $0xb0] sm:$0xff]
  %v1868 = vld [vmem:[%s5 + $0xb8] sm:$0xff]
  %v1869 = vld [vmem:[%s5 + $0xc0] sm:$0xff]
  %v1870 = vld [vmem:[%s5 + $0xc8] sm:$0xff]
  %v1871 = vld [vmem:[%s5 + $0xd0] sm:$0xff]
  %v1872 = vld [vmem:[%s5 + $0xd8] sm:$0xff]
  %v1873 = vld [vmem:[%s5 + $0xe0] sm:$0xff]
  %v1874 = vld [vmem:[%s5 + $0xe8] sm:$0xff]
  %v1875 = vld [vmem:[%s5 + $0xf0] sm:$0xff]
  %v1876 = vld [vmem:[%s5 + $0xf8] sm:$0xff]
  %v1909 = vunpack.c.l.b16 %v1845
  %v1910 = vunpack.c.h.b16 %v1845
  %v1911 = vunpack.c.l.b16 %v1846
  %v1912 = vunpack.c.h.b16 %v1846
  %v1913 = vunpack.c.l.b16 %v1847
  %v1914 = vunpack.c.h.b16 %v1847
  %v1915 = vunpack.c.l.b16 %v1848
  %v1916 = vunpack.c.h.b16 %v1848
  %v1917 = vunpack.c.l.b16 %v1849
  %v1918 = vunpack.c.h.b16 %v1849
  %v1919 = vunpack.c.l.b16 %v1850
  %v1920 = vunpack.c.h.b16 %v1850
  %v1921 = vunpack.c.l.b16 %v1851
  %v1922 = vunpack.c.h.b16 %v1851
  %v1923 = vunpack.c.l.b16 %v1852
  %v1924 = vunpack.c.h.b16 %v1852
  %v1925 = vunpack.c.l.b16 %v1853
  %v1926 = vunpack.c.h.b16 %v1853
  %v1927 = vunpack.c.l.b16 %v1854
  %v1928 = vunpack.c.h.b16 %v1854
  %v1929 = vunpack.c.l.b16 %v1855
  %v1930 = vunpack.c.h.b16 %v1855
  %v1931 = vunpack.c.l.b16 %v1856
  %v1932 = vunpack.c.h.b16 %v1856
  %v1933 = vunpack.c.l.b16 %v1857
  %v1934 = vunpack.c.h.b16 %v1857
  %v1935 = vunpack.c.l.b16 %v1858
  %v1936 = vunpack.c.h.b16 %v1858
  %v1937 = vunpack.c.l.b16 %v1859
  %v1938 = vunpack.c.h.b16 %v1859
  %v1939 = vunpack.c.l.b16 %v1860
  %v1940 = vunpack.c.h.b16 %v1860
  %v1941 = vunpack.c.l.b16 %v1861
  %v1942 = vunpack.c.h.b16 %v1861
  %v1943 = vunpack.c.l.b16 %v1862
  %v1944 = vunpack.c.h.b16 %v1862
  %v1945 = vunpack.c.l.b16 %v1863
  %v1946 = vunpack.c.h.b16 %v1863
  %v1947 = vunpack.c.l.b16 %v1864
  %v1948 = vunpack.c.h.b16 %v1864
  %v1949 = vunpack.c.l.b16 %v1865
  %v1950 = vunpack.c.h.b16 %v1865
  %v1951 = vunpack.c.l.b16 %v1866
  %v1952 = vunpack.c.h.b16 %v1866
  %v1953 = vunpack.c.l.b16 %v1867
  %v1954 = vunpack.c.h.b16 %v1867
  %v1955 = vunpack.c.l.b16 %v1868
  %v1956 = vunpack.c.h.b16 %v1868
  %v1957 = vunpack.c.l.b16 %v1869
  %v1958 = vunpack.c.h.b16 %v1869
  %v1959 = vunpack.c.l.b16 %v1870
  %v1960 = vunpack.c.h.b16 %v1870
  %v1961 = vunpack.c.l.b16 %v1871
  %v1962 = vunpack.c.h.b16 %v1871
  %v1963 = vunpack.c.l.b16 %v1872
  %v1964 = vunpack.c.h.b16 %v1872
  %v1965 = vunpack.c.l.b16 %v1873
  %v1966 = vunpack.c.h.b16 %v1873
  %v1967 = vunpack.c.l.b16 %v1874
  %v1968 = vunpack.c.h.b16 %v1874
  %v1969 = vunpack.c.l.b16 %v1875
  %v1970 = vunpack.c.h.b16 %v1875
  %v1971 = vunpack.c.l.b16 %v1876
  %v1972 = vunpack.c.h.b16 %v1876
  %v1973 = vpack.c.b16 %v1913, %v1909
  %v1974 = vpack.c.b16 %v1914, %v1910
  %v1975 = vpack.c.b16 %v1915, %v1911
  %v1976 = vpack.c.b16 %v1916, %v1912
  %v1977 = vpack.c.b16 %v1921, %v1917
  %v1978 = vpack.c.b16 %v1922, %v1918
  %v1979 = vpack.c.b16 %v1923, %v1919
  %v1980 = vpack.c.b16 %v1924, %v1920
  %v1981 = vpack.c.b16 %v1929, %v1925
  %v1982 = vpack.c.b16 %v1930, %v1926
  %v1983 = vpack.c.b16 %v1931, %v1927
  %v1984 = vpack.c.b16 %v1932, %v1928
  %v1985 = vpack.c.b16 %v1937, %v1933
  %v1986 = vpack.c.b16 %v1938, %v1934
  %v1987 = vpack.c.b16 %v1939, %v1935
  %v1988 = vpack.c.b16 %v1940, %v1936
  %v1989 = vpack.c.b16 %v1945, %v1941
  %v1990 = vpack.c.b16 %v1946, %v1942
  %v1991 = vpack.c.b16 %v1947, %v1943
  %v1992 = vpack.c.b16 %v1948, %v1944
  %v1993 = vpack.c.b16 %v1953, %v1949
  %v1994 = vpack.c.b16 %v1954, %v1950
  %v1995 = vpack.c.b16 %v1955, %v1951
  %v1996 = vpack.c.b16 %v1956, %v1952
  %v1997 = vpack.c.b16 %v1961, %v1957
  %v1998 = vpack.c.b16 %v1962, %v1958
  %v1999 = vpack.c.b16 %v1963, %v1959
  %v2000 = vpack.c.b16 %v1964, %v1960
  %v2001 = vpack.c.b16 %v1969, %v1965
  %v2002 = vpack.c.b16 %v1970, %v1966
  %v2003 = vpack.c.b16 %v1971, %v1967
  %v2004 = vpack.c.b16 %v1972, %v1968
  %2037 = vmatprep.subr.bf16.mxu0 %v2002
  %2038 = vmatpush1.bf16.msra.mxu0 %v2001
  %2039 = vmatprep.subr.bf16.mxu0 %v1998
  %2040 = vmatpush1.bf16.msra.mxu0 %v1997
  %2041 = vmatprep.subr.bf16.mxu0 %v1994
  %2042 = vmatpush1.bf16.msra.mxu0 %v1993
  %2043 = vmatprep.subr.bf16.mxu0 %v1990
  %2044 = vmatpush1.bf16.msra.mxu0 %v1989
  %2045 = vmatprep.subr.bf16.mxu0 %v1986
  %2046 = vmatpush1.bf16.msra.mxu0 %v1985
  %2047 = vmatprep.subr.bf16.mxu0 %v1982
  %2048 = vmatpush1.bf16.msra.mxu0 %v1981
  %2049 = vmatprep.subr.bf16.mxu0 %v1978
  %2050 = vmatpush1.bf16.msra.mxu0 %v1977
  %2051 = vmatprep.subr.bf16.mxu0 %v1974
  %2052 = vmatpush1.bf16.msra.mxu0 %v1973
  %2053 = vmatprep.subr.bf16.mxu0 0
  %2054 = vmatpush2.bf16.msra.mxu0 0
  %2055 = vmatprep.subr.bf16.mxu0 0
  %2056 = vmatpush2.bf16.msra.mxu0 0
  %2057 = vmatprep.subr.bf16.mxu0 0
  %2058 = vmatpush2.bf16.msra.mxu0 0
  %2059 = vmatprep.subr.bf16.mxu0 0
  %2060 = vmatpush2.bf16.msra.mxu0 0
  %2061 = vmatprep.subr.bf16.mxu0 0
  %2062 = vmatpush2.bf16.msra.mxu0 0
  %2063 = vmatprep.subr.bf16.mxu0 0
  %2064 = vmatpush2.bf16.msra.mxu0 0
  %2065 = vmatprep.subr.bf16.mxu0 0
  %2066 = vmatpush2.bf16.msra.mxu0 0
  %2067 = vmatprep.subr.bf16.mxu0 0
  %2068 = vmatpush2.bf16.msra.mxu0 0
  %2069 = vmatprep.mubr.bf16.mxu0 0
  %2070 = vmatmul.mubr.bf16.gmra.mxu0 %v1844
  %v2071 = vpop.f32.mrf.mxu0
  %v2072 = vadd.f32 0.0, %v2071
  %v2073 = vpop.f32.mrf.mxu0
  %v2074 = vadd.f32 0.0, %v2073
  %v2075 = vpop.f32.mrf.mxu0
  %v2076 = vpop.f32.mrf.mxu0
  %2077 = vdwg.mxu0
  %2078 = vmatprep.subr.bf16.mxu0 %v2004
  %2079 = vmatpush1.bf16.msra.mxu0 %v2003
  %2080 = vmatprep.subr.bf16.mxu0 %v2000
  %2081 = vmatpush1.bf16.msra.mxu0 %v1999
  %2082 = vmatprep.subr.bf16.mxu0 %v1996
  %2083 = vmatpush1.bf16.msra.mxu0 %v1995
  %2084 = vmatprep.subr.bf16.mxu0 %v1992
  %2085 = vmatpush1.bf16.msra.mxu0 %v1991
  %2086 = vmatprep.subr.bf16.mxu0 %v1988
  %2087 = vmatpush1.bf16.msra.mxu0 %v1987
  %2088 = vmatprep.subr.bf16.mxu0 %v1984
  %2089 = vmatpush1.bf16.msra.mxu0 %v1983
  %2090 = vmatprep.subr.bf16.mxu0 %v1980
  %2091 = vmatpush1.bf16.msra.mxu0 %v1979
  %2092 = vmatprep.subr.bf16.mxu0 %v1976
  %2093 = vmatpush1.bf16.msra.mxu0 %v1975
  %2094 = vmatprep.subr.bf16.mxu0 0
  %2095 = vmatpush2.bf16.msra.mxu0 0
  %2096 = vmatprep.subr.bf16.mxu0 0
  %2097 = vmatpush2.bf16.msra.mxu0 0
  %2098 = vmatprep.subr.bf16.mxu0 0
  %2099 = vmatpush2.bf16.msra.mxu0 0
  %2100 = vmatprep.subr.bf16.mxu0 0
  %2101 = vmatpush2.bf16.msra.mxu0 0
  %2102 = vmatprep.subr.bf16.mxu0 0
  %2103 = vmatpush2.bf16.msra.mxu0 0
  %2104 = vmatprep.subr.bf16.mxu0 0
  %2105 = vmatpush2.bf16.msra.mxu0 0
  %2106 = vmatprep.subr.bf16.mxu0 0
  %2107 = vmatpush2.bf16.msra.mxu0 0
  %2108 = vmatprep.subr.bf16.mxu0 0
  %2109 = vmatpush2.bf16.msra.mxu0 0
  %2110 = vmatprep.mubr.bf16.mxu0 0
  %2111 = vmatmul.mubr.bf16.gmra.mxu0 %v1844
  %v2112 = vpop.f32.mrf.mxu0
  %v2113 = vadd.f32 0.0, %v2112
  %v2114 = vpop.f32.mrf.mxu0
  %v2115 = vadd.f32 0.0, %v2114
  %v2116 = vpop.f32.mrf.mxu0
  %v2117 = vpop.f32.mrf.mxu0
  %2118 = vdwg.mxu0
  %v2119 = vadd.f32 %v1840, %v2072
  %v2120 = vadd.f32 %v1841, %v2074
  %v2121 = vadd.f32 %v1842, %v2113
  %v2122 = vadd.f32 %v1843, %v2115
  %v2123 = vxor.u32 %v2119, 2147483648
  %v2124 = vmul.f32 %v2123, 1.442695
  %v2125 = vpow.pop %v2124
  %v2126 = vadd.f32 %v2125, 1.0
  %v2127 = vrcp.pop %v2126
  %v2128 = vmul.f32 1.0, %v2127
  %v2129 = vxor.u32 %v2120, 2147483648
  %v2130 = vmul.f32 %v2129, 1.442695
  %v2131 = vpow.pop %v2130
  %v2132 = vadd.f32 %v2131, 1.0
  %v2133 = vrcp.pop %v2132
  %v2134 = vmul.f32 1.0, %v2133
  %v2135 = vtanh.pop %v2121
  %v2136 = vxor.u32 %v2122, 2147483648
  %v2137 = vmul.f32 %v2136, 1.442695
  %v2138 = vpow.pop %v2137
  %v2139 = vadd.f32 %v2138, 1.0
  %v2140 = vrcp.pop %v2139
  %v2141 = vmul.f32 1.0, %v2140
  %v2142 = vmul.f32 %v2134, %v1823
  %v2143 = vmul.f32 %v2128, %v2135
  %v2144 = vadd.f32 %v2142, %v2143
  %v2145 = vtanh.pop %v2144
  %v2146 = vmul.f32 %v2141, %v2145
  %s2147 = scalar_lea.vmem [#allocation6], 24
  %2148 = vst [vmem:[%s2147] sm:$0xff] %v2146
  %s2149 = scalar_lea.vmem [#allocation8], 32
  %2150 = vst [vmem:[%s2149] sm:$0xff] %v2146
  %s2151 = scalar_lea.vmem [#allocation2], 128
  %v2152 = vld [vmem:[%s2151] sm:$0xff]
  %v2153 = vld [vmem:[%s2151 + $0x8] sm:$0xff]
  %v2154 = vld [vmem:[%s2151 + $0x10] sm:$0xff]
  %v2155 = vld [vmem:[%s2151 + $0x18] sm:$0xff]
  %s2156 = scalar_lea.vmem [#allocation4], 96
  %v2157 = vld [vmem:[%s2156] sm:$0xff]
  %v2158 = vld [vmem:[%s2156 + $0x8] sm:$0xff]
  %v2159 = vld [vmem:[%s2156 + $0x10] sm:$0xff]
  %v2160 = vld [vmem:[%s2156 + $0x18] sm:$0xff]
  %v2161 = vadd.f32 %v2152, %v2157
  %v2162 = vadd.f32 %v2153, %v2158
  %v2163 = vadd.f32 %v2154, %v2159
  %v2164 = vadd.f32 %v2155, %v2160
  %v2165 = vpack.c.bf16 %v2146, %v2146
  %v2166 = vld [vmem:[%s5] sm:$0xff]
  %v2167 = vld [vmem:[%s5 + $0x8] sm:$0xff]
  %v2168 = vld [vmem:[%s5 + $0x10] sm:$0xff]
  %v2169 = vld [vmem:[%s5 + $0x18] sm:$0xff]
  %v2170 = vld [vmem:[%s5 + $0x20] sm:$0xff]
  %v2171 = vld [vmem:[%s5 + $0x28] sm:$0xff]
  %v2172 = vld [vmem:[%s5 + $0x30] sm:$0xff]
  %v2173 = vld [vmem:[%s5 + $0x38] sm:$0xff]
  %v2174 = vld [vmem:[%s5 + $0x40] sm:$0xff]
  %v2175 = vld [vmem:[%s5 + $0x48] sm:$0xff]
  %v2176 = vld [vmem:[%s5 + $0x50] sm:$0xff]
  %v2177 = vld [vmem:[%s5 + $0x58] sm:$0xff]
  %v2178 = vld [vmem:[%s5 + $0x60] sm:$0xff]
  %v2179 = vld [vmem:[%s5 + $0x68] sm:$0xff]
  %v2180 = vld [vmem:[%s5 + $0x70] sm:$0xff]
  %v2181 = vld [vmem:[%s5 + $0x78] sm:$0xff]
  %v2182 = vld [vmem:[%s5 + $0x80] sm:$0xff]
  %v2183 = vld [vmem:[%s5 + $0x88] sm:$0xff]
  %v2184 = vld [vmem:[%s5 + $0x90] sm:$0xff]
  %v2185 = vld [vmem:[%s5 + $0x98] sm:$0xff]
  %v2186 = vld [vmem:[%s5 + $0xa0] sm:$0xff]
  %v2187 = vld [vmem:[%s5 + $0xa8] sm:$0xff]
  %v2188 = vld [vmem:[%s5 + $0xb0] sm:$0xff]
  %v2189 = vld [vmem:[%s5 + $0xb8] sm:$0xff]
  %v2190 = vld [vmem:[%s5 + $0xc0] sm:$0xff]
  %v2191 = vld [vmem:[%s5 + $0xc8] sm:$0xff]
  %v2192 = vld [vmem:[%s5 + $0xd0] sm:$0xff]
  %v2193 = vld [vmem:[%s5 + $0xd8] sm:$0xff]
  %v2194 = vld [vmem:[%s5 + $0xe0] sm:$0xff]
  %v2195 = vld [vmem:[%s5 + $0xe8] sm:$0xff]
  %v2196 = vld [vmem:[%s5 + $0xf0] sm:$0xff]
  %v2197 = vld [vmem:[%s5 + $0xf8] sm:$0xff]
  %v2230 = vunpack.c.l.b16 %v2166
  %v2231 = vunpack.c.h.b16 %v2166
  %v2232 = vunpack.c.l.b16 %v2167
  %v2233 = vunpack.c.h.b16 %v2167
  %v2234 = vunpack.c.l.b16 %v2168
  %v2235 = vunpack.c.h.b16 %v2168
  %v2236 = vunpack.c.l.b16 %v2169
  %v2237 = vunpack.c.h.b16 %v2169
  %v2238 = vunpack.c.l.b16 %v2170
  %v2239 = vunpack.c.h.b16 %v2170
  %v2240 = vunpack.c.l.b16 %v2171
  %v2241 = vunpack.c.h.b16 %v2171
  %v2242 = vunpack.c.l.b16 %v2172
  %v2243 = vunpack.c.h.b16 %v2172
  %v2244 = vunpack.c.l.b16 %v2173
  %v2245 = vunpack.c.h.b16 %v2173
  %v2246 = vunpack.c.l.b16 %v2174
  %v2247 = vunpack.c.h.b16 %v2174
  %v2248 = vunpack.c.l.b16 %v2175
  %v2249 = vunpack.c.h.b16 %v2175
  %v2250 = vunpack.c.l.b16 %v2176
  %v2251 = vunpack.c.h.b16 %v2176
  %v2252 = vunpack.c.l.b16 %v2177
  %v2253 = vunpack.c.h.b16 %v2177
  %v2254 = vunpack.c.l.b16 %v2178
  %v2255 = vunpack.c.h.b16 %v2178
  %v2256 = vunpack.c.l.b16 %v2179
  %v2257 = vunpack.c.h.b16 %v2179
  %v2258 = vunpack.c.l.b16 %v2180
  %v2259 = vunpack.c.h.b16 %v2180
  %v2260 = vunpack.c.l.b16 %v2181
  %v2261 = vunpack.c.h.b16 %v2181
  %v2262 = vunpack.c.l.b16 %v2182
  %v2263 = vunpack.c.h.b16 %v2182
  %v2264 = vunpack.c.l.b16 %v2183
  %v2265 = vunpack.c.h.b16 %v2183
  %v2266 = vunpack.c.l.b16 %v2184
  %v2267 = vunpack.c.h.b16 %v2184
  %v2268 = vunpack.c.l.b16 %v2185
  %v2269 = vunpack.c.h.b16 %v2185
  %v2270 = vunpack.c.l.b16 %v2186
  %v2271 = vunpack.c.h.b16 %v2186
  %v2272 = vunpack.c.l.b16 %v2187
  %v2273 = vunpack.c.h.b16 %v2187
  %v2274 = vunpack.c.l.b16 %v2188
  %v2275 = vunpack.c.h.b16 %v2188
  %v2276 = vunpack.c.l.b16 %v2189
  %v2277 = vunpack.c.h.b16 %v2189
  %v2278 = vunpack.c.l.b16 %v2190
  %v2279 = vunpack.c.h.b16 %v2190
  %v2280 = vunpack.c.l.b16 %v2191
  %v2281 = vunpack.c.h.b16 %v2191
  %v2282 = vunpack.c.l.b16 %v2192
  %v2283 = vunpack.c.h.b16 %v2192
  %v2284 = vunpack.c.l.b16 %v2193
  %v2285 = vunpack.c.h.b16 %v2193
  %v2286 = vunpack.c.l.b16 %v2194
  %v2287 = vunpack.c.h.b16 %v2194
  %v2288 = vunpack.c.l.b16 %v2195
  %v2289 = vunpack.c.h.b16 %v2195
  %v2290 = vunpack.c.l.b16 %v2196
  %v2291 = vunpack.c.h.b16 %v2196
  %v2292 = vunpack.c.l.b16 %v2197
  %v2293 = vunpack.c.h.b16 %v2197
  %v2294 = vpack.c.b16 %v2234, %v2230
  %v2295 = vpack.c.b16 %v2235, %v2231
  %v2296 = vpack.c.b16 %v2236, %v2232
  %v2297 = vpack.c.b16 %v2237, %v2233
  %v2298 = vpack.c.b16 %v2242, %v2238
  %v2299 = vpack.c.b16 %v2243, %v2239
  %v2300 = vpack.c.b16 %v2244, %v2240
  %v2301 = vpack.c.b16 %v2245, %v2241
  %v2302 = vpack.c.b16 %v2250, %v2246
  %v2303 = vpack.c.b16 %v2251, %v2247
  %v2304 = vpack.c.b16 %v2252, %v2248
  %v2305 = vpack.c.b16 %v2253, %v2249
  %v2306 = vpack.c.b16 %v2258, %v2254
  %v2307 = vpack.c.b16 %v2259, %v2255
  %v2308 = vpack.c.b16 %v2260, %v2256
  %v2309 = vpack.c.b16 %v2261, %v2257
  %v2310 = vpack.c.b16 %v2266, %v2262
  %v2311 = vpack.c.b16 %v2267, %v2263
  %v2312 = vpack.c.b16 %v2268, %v2264
  %v2313 = vpack.c.b16 %v2269, %v2265
  %v2314 = vpack.c.b16 %v2274, %v2270
  %v2315 = vpack.c.b16 %v2275, %v2271
  %v2316 = vpack.c.b16 %v2276, %v2272
  %v2317 = vpack.c.b16 %v2277, %v2273
  %v2318 = vpack.c.b16 %v2282, %v2278
  %v2319 = vpack.c.b16 %v2283, %v2279
  %v2320 = vpack.c.b16 %v2284, %v2280
  %v2321 = vpack.c.b16 %v2285, %v2281
  %v2322 = vpack.c.b16 %v2290, %v2286
  %v2323 = vpack.c.b16 %v2291, %v2287
  %v2324 = vpack.c.b16 %v2292, %v2288
  %v2325 = vpack.c.b16 %v2293, %v2289
  %2358 = vmatprep.subr.bf16.mxu0 %v2323
  %2359 = vmatpush1.bf16.msra.mxu0 %v2322
  %2360 = vmatprep.subr.bf16.mxu0 %v2319
  %2361 = vmatpush1.bf16.msra.mxu0 %v2318
  %2362 = vmatprep.subr.bf16.mxu0 %v2315
  %2363 = vmatpush1.bf16.msra.mxu0 %v2314
  %2364 = vmatprep.subr.bf16.mxu0 %v2311
  %2365 = vmatpush1.bf16.msra.mxu0 %v2310
  %2366 = vmatprep.subr.bf16.mxu0 %v2307
  %2367 = vmatpush1.bf16.msra.mxu0 %v2306
  %2368 = vmatprep.subr.bf16.mxu0 %v2303
  %2369 = vmatpush1.bf16.msra.mxu0 %v2302
  %2370 = vmatprep.subr.bf16.mxu0 %v2299
  %2371 = vmatpush1.bf16.msra.mxu0 %v2298
  %2372 = vmatprep.subr.bf16.mxu0 %v2295
  %2373 = vmatpush1.bf16.msra.mxu0 %v2294
  %2374 = vmatprep.subr.bf16.mxu0 0
  %2375 = vmatpush2.bf16.msra.mxu0 0
  %2376 = vmatprep.subr.bf16.mxu0 0
  %2377 = vmatpush2.bf16.msra.mxu0 0
  %2378 = vmatprep.subr.bf16.mxu0 0
  %2379 = vmatpush2.bf16.msra.mxu0 0
  %2380 = vmatprep.subr.bf16.mxu0 0
  %2381 = vmatpush2.bf16.msra.mxu0 0
  %2382 = vmatprep.subr.bf16.mxu0 0
  %2383 = vmatpush2.bf16.msra.mxu0 0
  %2384 = vmatprep.subr.bf16.mxu0 0
  %2385 = vmatpush2.bf16.msra.mxu0 0
  %2386 = vmatprep.subr.bf16.mxu0 0
  %2387 = vmatpush2.bf16.msra.mxu0 0
  %2388 = vmatprep.subr.bf16.mxu0 0
  %2389 = vmatpush2.bf16.msra.mxu0 0
  %2390 = vmatprep.mubr.bf16.mxu0 0
  %2391 = vmatmul.mubr.bf16.gmra.mxu0 %v2165
  %v2392 = vpop.f32.mrf.mxu0
  %v2393 = vadd.f32 0.0, %v2392
  %v2394 = vpop.f32.mrf.mxu0
  %v2395 = vadd.f32 0.0, %v2394
  %v2396 = vpop.f32.mrf.mxu0
  %v2397 = vpop.f32.mrf.mxu0
  %2398 = vdwg.mxu0
  %2399 = vmatprep.subr.bf16.mxu0 %v2325
  %2400 = vmatpush1.bf16.msra.mxu0 %v2324
  %2401 = vmatprep.subr.bf16.mxu0 %v2321
  %2402 = vmatpush1.bf16.msra.mxu0 %v2320
  %2403 = vmatprep.subr.bf16.mxu0 %v2317
  %2404 = vmatpush1.bf16.msra.mxu0 %v2316
  %2405 = vmatprep.subr.bf16.mxu0 %v2313
  %2406 = vmatpush1.bf16.msra.mxu0 %v2312
  %2407 = vmatprep.subr.bf16.mxu0 %v2309
  %2408 = vmatpush1.bf16.msra.mxu0 %v2308
  %2409 = vmatprep.subr.bf16.mxu0 %v2305
  %2410 = vmatpush1.bf16.msra.mxu0 %v2304
  %2411 = vmatprep.subr.bf16.mxu0 %v2301
  %2412 = vmatpush1.bf16.msra.mxu0 %v2300
  %2413 = vmatprep.subr.bf16.mxu0 %v2297
  %2414 = vmatpush1.bf16.msra.mxu0 %v2296
  %2415 = vmatprep.subr.bf16.mxu0 0
  %2416 = vmatpush2.bf16.msra.mxu0 0
  %2417 = vmatprep.subr.bf16.mxu0 0
  %2418 = vmatpush2.bf16.msra.mxu0 0
  %2419 = vmatprep.subr.bf16.mxu0 0
  %2420 = vmatpush2.bf16.msra.mxu0 0
  %2421 = vmatprep.subr.bf16.mxu0 0
  %2422 = vmatpush2.bf16.msra.mxu0 0
  %2423 = vmatprep.subr.bf16.mxu0 0
  %2424 = vmatpush2.bf16.msra.mxu0 0
  %2425 = vmatprep.subr.bf16.mxu0 0
  %2426 = vmatpush2.bf16.msra.mxu0 0
  %2427 = vmatprep.subr.bf16.mxu0 0
  %2428 = vmatpush2.bf16.msra.mxu0 0
  %2429 = vmatprep.subr.bf16.mxu0 0
  %2430 = vmatpush2.bf16.msra.mxu0 0
  %2431 = vmatprep.mubr.bf16.mxu0 0
  %2432 = vmatmul.mubr.bf16.gmra.mxu0 %v2165
  %v2433 = vpop.f32.mrf.mxu0
  %v2434 = vadd.f32 0.0, %v2433
  %v2435 = vpop.f32.mrf.mxu0
  %v2436 = vadd.f32 0.0, %v2435
  %v2437 = vpop.f32.mrf.mxu0
  %v2438 = vpop.f32.mrf.mxu0
  %2439 = vdwg.mxu0
  %v2440 = vadd.f32 %v2161, %v2393
  %v2441 = vadd.f32 %v2162, %v2395
  %v2442 = vadd.f32 %v2163, %v2434
  %v2443 = vadd.f32 %v2164, %v2436
  %v2444 = vxor.u32 %v2440, 2147483648
  %v2445 = vmul.f32 %v2444, 1.442695
  %v2446 = vpow.pop %v2445
  %v2447 = vadd.f32 %v2446, 1.0
  %v2448 = vrcp.pop %v2447
  %v2449 = vmul.f32 1.0, %v2448
  %v2450 = vxor.u32 %v2441, 2147483648
  %v2451 = vmul.f32 %v2450, 1.442695
  %v2452 = vpow.pop %v2451
  %v2453 = vadd.f32 %v2452, 1.0
  %v2454 = vrcp.pop %v2453
  %v2455 = vmul.f32 1.0, %v2454
  %v2456 = vtanh.pop %v2442
  %v2457 = vxor.u32 %v2443, 2147483648
  %v2458 = vmul.f32 %v2457, 1.442695
  %v2459 = vpow.pop %v2458
  %v2460 = vadd.f32 %v2459, 1.0
  %v2461 = vrcp.pop %v2460
  %v2462 = vmul.f32 1.0, %v2461
  %v2463 = vmul.f32 %v2455, %v2144
  %v2464 = vmul.f32 %v2449, %v2456
  %v2465 = vadd.f32 %v2463, %v2464
  %v2466 = vtanh.pop %v2465
  %v2467 = vmul.f32 %v2462, %v2466
  %s2468 = scalar_lea.vmem [#allocation6], 32
  %2469 = vst [vmem:[%s2468] sm:$0xff] %v2467
  %s2470 = scalar_lea.vmem [#allocation8], 24
  %2471 = vst [vmem:[%s2470] sm:$0xff] %v2467
  %s2472 = scalar_lea.vmem [#allocation2], 160
  %v2473 = vld [vmem:[%s2472] sm:$0xff]
  %v2474 = vld [vmem:[%s2472 + $0x8] sm:$0xff]
  %v2475 = vld [vmem:[%s2472 + $0x10] sm:$0xff]
  %v2476 = vld [vmem:[%s2472 + $0x18] sm:$0xff]
  %s2477 = scalar_lea.vmem [#allocation4], 64
  %v2478 = vld [vmem:[%s2477] sm:$0xff]
  %v2479 = vld [vmem:[%s2477 + $0x8] sm:$0xff]
  %v2480 = vld [vmem:[%s2477 + $0x10] sm:$0xff]
  %v2481 = vld [vmem:[%s2477 + $0x18] sm:$0xff]
  %v2482 = vadd.f32 %v2473, %v2478
  %v2483 = vadd.f32 %v2474, %v2479
  %v2484 = vadd.f32 %v2475, %v2480
  %v2485 = vadd.f32 %v2476, %v2481
  %v2486 = vpack.c.bf16 %v2467, %v2467
  %v2487 = vld [vmem:[%s5] sm:$0xff]
  %v2488 = vld [vmem:[%s5 + $0x8] sm:$0xff]
  %v2489 = vld [vmem:[%s5 + $0x10] sm:$0xff]
  %v2490 = vld [vmem:[%s5 + $0x18] sm:$0xff]
  %v2491 = vld [vmem:[%s5 + $0x20] sm:$0xff]
  %v2492 = vld [vmem:[%s5 + $0x28] sm:$0xff]
  %v2493 = vld [vmem:[%s5 + $0x30] sm:$0xff]
  %v2494 = vld [vmem:[%s5 + $0x38] sm:$0xff]
  %v2495 = vld [vmem:[%s5 + $0x40] sm:$0xff]
  %v2496 = vld [vmem:[%s5 + $0x48] sm:$0xff]
  %v2497 = vld [vmem:[%s5 + $0x50] sm:$0xff]
  %v2498 = vld [vmem:[%s5 + $0x58] sm:$0xff]
  %v2499 = vld [vmem:[%s5 + $0x60] sm:$0xff]
  %v2500 = vld [vmem:[%s5 + $0x68] sm:$0xff]
  %v2501 = vld [vmem:[%s5 + $0x70] sm:$0xff]
  %v2502 = vld [vmem:[%s5 + $0x78] sm:$0xff]
  %v2503 = vld [vmem:[%s5 + $0x80] sm:$0xff]
  %v2504 = vld [vmem:[%s5 + $0x88] sm:$0xff]
  %v2505 = vld [vmem:[%s5 + $0x90] sm:$0xff]
  %v2506 = vld [vmem:[%s5 + $0x98] sm:$0xff]
  %v2507 = vld [vmem:[%s5 + $0xa0] sm:$0xff]
  %v2508 = vld [vmem:[%s5 + $0xa8] sm:$0xff]
  %v2509 = vld [vmem:[%s5 + $0xb0] sm:$0xff]
  %v2510 = vld [vmem:[%s5 + $0xb8] sm:$0xff]
  %v2511 = vld [vmem:[%s5 + $0xc0] sm:$0xff]
  %v2512 = vld [vmem:[%s5 + $0xc8] sm:$0xff]
  %v2513 = vld [vmem:[%s5 + $0xd0] sm:$0xff]
  %v2514 = vld [vmem:[%s5 + $0xd8] sm:$0xff]
  %v2515 = vld [vmem:[%s5 + $0xe0] sm:$0xff]
  %v2516 = vld [vmem:[%s5 + $0xe8] sm:$0xff]
  %v2517 = vld [vmem:[%s5 + $0xf0] sm:$0xff]
  %v2518 = vld [vmem:[%s5 + $0xf8] sm:$0xff]
  %v2551 = vunpack.c.l.b16 %v2487
  %v2552 = vunpack.c.h.b16 %v2487
  %v2553 = vunpack.c.l.b16 %v2488
  %v2554 = vunpack.c.h.b16 %v2488
  %v2555 = vunpack.c.l.b16 %v2489
  %v2556 = vunpack.c.h.b16 %v2489
  %v2557 = vunpack.c.l.b16 %v2490
  %v2558 = vunpack.c.h.b16 %v2490
  %v2559 = vunpack.c.l.b16 %v2491
  %v2560 = vunpack.c.h.b16 %v2491
  %v2561 = vunpack.c.l.b16 %v2492
  %v2562 = vunpack.c.h.b16 %v2492
  %v2563 = vunpack.c.l.b16 %v2493
  %v2564 = vunpack.c.h.b16 %v2493
  %v2565 = vunpack.c.l.b16 %v2494
  %v2566 = vunpack.c.h.b16 %v2494
  %v2567 = vunpack.c.l.b16 %v2495
  %v2568 = vunpack.c.h.b16 %v2495
  %v2569 = vunpack.c.l.b16 %v2496
  %v2570 = vunpack.c.h.b16 %v2496
  %v2571 = vunpack.c.l.b16 %v2497
  %v2572 = vunpack.c.h.b16 %v2497
  %v2573 = vunpack.c.l.b16 %v2498
  %v2574 = vunpack.c.h.b16 %v2498
  %v2575 = vunpack.c.l.b16 %v2499
  %v2576 = vunpack.c.h.b16 %v2499
  %v2577 = vunpack.c.l.b16 %v2500
  %v2578 = vunpack.c.h.b16 %v2500
  %v2579 = vunpack.c.l.b16 %v2501
  %v2580 = vunpack.c.h.b16 %v2501
  %v2581 = vunpack.c.l.b16 %v2502
  %v2582 = vunpack.c.h.b16 %v2502
  %v2583 = vunpack.c.l.b16 %v2503
  %v2584 = vunpack.c.h.b16 %v2503
  %v2585 = vunpack.c.l.b16 %v2504
  %v2586 = vunpack.c.h.b16 %v2504
  %v2587 = vunpack.c.l.b16 %v2505
  %v2588 = vunpack.c.h.b16 %v2505
  %v2589 = vunpack.c.l.b16 %v2506
  %v2590 = vunpack.c.h.b16 %v2506
  %v2591 = vunpack.c.l.b16 %v2507
  %v2592 = vunpack.c.h.b16 %v2507
  %v2593 = vunpack.c.l.b16 %v2508
  %v2594 = vunpack.c.h.b16 %v2508
  %v2595 = vunpack.c.l.b16 %v2509
  %v2596 = vunpack.c.h.b16 %v2509
  %v2597 = vunpack.c.l.b16 %v2510
  %v2598 = vunpack.c.h.b16 %v2510
  %v2599 = vunpack.c.l.b16 %v2511
  %v2600 = vunpack.c.h.b16 %v2511
  %v2601 = vunpack.c.l.b16 %v2512
  %v2602 = vunpack.c.h.b16 %v2512
  %v2603 = vunpack.c.l.b16 %v2513
  %v2604 = vunpack.c.h.b16 %v2513
  %v2605 = vunpack.c.l.b16 %v2514
  %v2606 = vunpack.c.h.b16 %v2514
  %v2607 = vunpack.c.l.b16 %v2515
  %v2608 = vunpack.c.h.b16 %v2515
  %v2609 = vunpack.c.l.b16 %v2516
  %v2610 = vunpack.c.h.b16 %v2516
  %v2611 = vunpack.c.l.b16 %v2517
  %v2612 = vunpack.c.h.b16 %v2517
  %v2613 = vunpack.c.l.b16 %v2518
  %v2614 = vunpack.c.h.b16 %v2518
  %v2615 = vpack.c.b16 %v2555, %v2551
  %v2616 = vpack.c.b16 %v2556, %v2552
  %v2617 = vpack.c.b16 %v2557, %v2553
  %v2618 = vpack.c.b16 %v2558, %v2554
  %v2619 = vpack.c.b16 %v2563, %v2559
  %v2620 = vpack.c.b16 %v2564, %v2560
  %v2621 = vpack.c.b16 %v2565, %v2561
  %v2622 = vpack.c.b16 %v2566, %v2562
  %v2623 = vpack.c.b16 %v2571, %v2567
  %v2624 = vpack.c.b16 %v2572, %v2568
  %v2625 = vpack.c.b16 %v2573, %v2569
  %v2626 = vpack.c.b16 %v2574, %v2570
  %v2627 = vpack.c.b16 %v2579, %v2575
  %v2628 = vpack.c.b16 %v2580, %v2576
  %v2629 = vpack.c.b16 %v2581, %v2577
  %v2630 = vpack.c.b16 %v2582, %v2578
  %v2631 = vpack.c.b16 %v2587, %v2583
  %v2632 = vpack.c.b16 %v2588, %v2584
  %v2633 = vpack.c.b16 %v2589, %v2585
  %v2634 = vpack.c.b16 %v2590, %v2586
  %v2635 = vpack.c.b16 %v2595, %v2591
  %v2636 = vpack.c.b16 %v2596, %v2592
  %v2637 = vpack.c.b16 %v2597, %v2593
  %v2638 = vpack.c.b16 %v2598, %v2594
  %v2639 = vpack.c.b16 %v2603, %v2599
  %v2640 = vpack.c.b16 %v2604, %v2600
  %v2641 = vpack.c.b16 %v2605, %v2601
  %v2642 = vpack.c.b16 %v2606, %v2602
  %v2643 = vpack.c.b16 %v2611, %v2607
  %v2644 = vpack.c.b16 %v2612, %v2608
  %v2645 = vpack.c.b16 %v2613, %v2609
  %v2646 = vpack.c.b16 %v2614, %v2610
  %2679 = vmatprep.subr.bf16.mxu0 %v2644
  %2680 = vmatpush1.bf16.msra.mxu0 %v2643
  %2681 = vmatprep.subr.bf16.mxu0 %v2640
  %2682 = vmatpush1.bf16.msra.mxu0 %v2639
  %2683 = vmatprep.subr.bf16.mxu0 %v2636
  %2684 = vmatpush1.bf16.msra.mxu0 %v2635
  %2685 = vmatprep.subr.bf16.mxu0 %v2632
  %2686 = vmatpush1.bf16.msra.mxu0 %v2631
  %2687 = vmatprep.subr.bf16.mxu0 %v2628
  %2688 = vmatpush1.bf16.msra.mxu0 %v2627
  %2689 = vmatprep.subr.bf16.mxu0 %v2624
  %2690 = vmatpush1.bf16.msra.mxu0 %v2623
  %2691 = vmatprep.subr.bf16.mxu0 %v2620
  %2692 = vmatpush1.bf16.msra.mxu0 %v2619
  %2693 = vmatprep.subr.bf16.mxu0 %v2616
  %2694 = vmatpush1.bf16.msra.mxu0 %v2615
  %2695 = vmatprep.subr.bf16.mxu0 0
  %2696 = vmatpush2.bf16.msra.mxu0 0
  %2697 = vmatprep.subr.bf16.mxu0 0
  %2698 = vmatpush2.bf16.msra.mxu0 0
  %2699 = vmatprep.subr.bf16.mxu0 0
  %2700 = vmatpush2.bf16.msra.mxu0 0
  %2701 = vmatprep.subr.bf16.mxu0 0
  %2702 = vmatpush2.bf16.msra.mxu0 0
  %2703 = vmatprep.subr.bf16.mxu0 0
  %2704 = vmatpush2.bf16.msra.mxu0 0
  %2705 = vmatprep.subr.bf16.mxu0 0
  %2706 = vmatpush2.bf16.msra.mxu0 0
  %2707 = vmatprep.subr.bf16.mxu0 0
  %2708 = vmatpush2.bf16.msra.mxu0 0
  %2709 = vmatprep.subr.bf16.mxu0 0
  %2710 = vmatpush2.bf16.msra.mxu0 0
  %2711 = vmatprep.mubr.bf16.mxu0 0
  %2712 = vmatmul.mubr.bf16.gmra.mxu0 %v2486
  %v2713 = vpop.f32.mrf.mxu0
  %v2714 = vadd.f32 0.0, %v2713
  %v2715 = vpop.f32.mrf.mxu0
  %v2716 = vadd.f32 0.0, %v2715
  %v2717 = vpop.f32.mrf.mxu0
  %v2718 = vpop.f32.mrf.mxu0
  %2719 = vdwg.mxu0
  %2720 = vmatprep.subr.bf16.mxu0 %v2646
  %2721 = vmatpush1.bf16.msra.mxu0 %v2645
  %2722 = vmatprep.subr.bf16.mxu0 %v2642
  %2723 = vmatpush1.bf16.msra.mxu0 %v2641
  %2724 = vmatprep.subr.bf16.mxu0 %v2638
  %2725 = vmatpush1.bf16.msra.mxu0 %v2637
  %2726 = vmatprep.subr.bf16.mxu0 %v2634
  %2727 = vmatpush1.bf16.msra.mxu0 %v2633
  %2728 = vmatprep.subr.bf16.mxu0 %v2630
  %2729 = vmatpush1.bf16.msra.mxu0 %v2629
  %2730 = vmatprep.subr.bf16.mxu0 %v2626
  %2731 = vmatpush1.bf16.msra.mxu0 %v2625
  %2732 = vmatprep.subr.bf16.mxu0 %v2622
  %2733 = vmatpush1.bf16.msra.mxu0 %v2621
  %2734 = vmatprep.subr.bf16.mxu0 %v2618
  %2735 = vmatpush1.bf16.msra.mxu0 %v2617
  %2736 = vmatprep.subr.bf16.mxu0 0
  %2737 = vmatpush2.bf16.msra.mxu0 0
  %2738 = vmatprep.subr.bf16.mxu0 0
  %2739 = vmatpush2.bf16.msra.mxu0 0
  %2740 = vmatprep.subr.bf16.mxu0 0
  %2741 = vmatpush2.bf16.msra.mxu0 0
  %2742 = vmatprep.subr.bf16.mxu0 0
  %2743 = vmatpush2.bf16.msra.mxu0 0
  %2744 = vmatprep.subr.bf16.mxu0 0
  %2745 = vmatpush2.bf16.msra.mxu0 0
  %2746 = vmatprep.subr.bf16.mxu0 0
  %2747 = vmatpush2.bf16.msra.mxu0 0
  %2748 = vmatprep.subr.bf16.mxu0 0
  %2749 = vmatpush2.bf16.msra.mxu0 0
  %2750 = vmatprep.subr.bf16.mxu0 0
  %2751 = vmatpush2.bf16.msra.mxu0 0
  %2752 = vmatprep.mubr.bf16.mxu0 0
  %2753 = vmatmul.mubr.bf16.gmra.mxu0 %v2486
  %v2754 = vpop.f32.mrf.mxu0
  %v2755 = vadd.f32 0.0, %v2754
  %v2756 = vpop.f32.mrf.mxu0
  %v2757 = vadd.f32 0.0, %v2756
  %v2758 = vpop.f32.mrf.mxu0
  %v2759 = vpop.f32.mrf.mxu0
  %2760 = vdwg.mxu0
  %v2761 = vadd.f32 %v2482, %v2714
  %v2762 = vadd.f32 %v2483, %v2716
  %v2763 = vadd.f32 %v2484, %v2755
  %v2764 = vadd.f32 %v2485, %v2757
  %v2765 = vxor.u32 %v2761, 2147483648
  %v2766 = vmul.f32 %v2765, 1.442695
  %v2767 = vpow.pop %v2766
  %v2768 = vadd.f32 %v2767, 1.0
  %v2769 = vrcp.pop %v2768
  %v2770 = vmul.f32 1.0, %v2769
  %v2771 = vxor.u32 %v2762, 2147483648
  %v2772 = vmul.f32 %v2771, 1.442695
  %v2773 = vpow.pop %v2772
  %v2774 = vadd.f32 %v2773, 1.0
  %v2775 = vrcp.pop %v2774
  %v2776 = vmul.f32 1.0, %v2775
  %v2777 = vtanh.pop %v2763
  %v2778 = vxor.u32 %v2764, 2147483648
  %v2779 = vmul.f32 %v2778, 1.442695
  %v2780 = vpow.pop %v2779
  %v2781 = vadd.f32 %v2780, 1.0
  %v2782 = vrcp.pop %v2781
  %v2783 = vmul.f32 1.0, %v2782
  %v2784 = vmul.f32 %v2776, %v2465
  %v2785 = vmul.f32 %v2770, %v2777
  %v2786 = vadd.f32 %v2784, %v2785
  %v2787 = vtanh.pop %v2786
  %v2788 = vmul.f32 %v2783, %v2787
  %s2789 = scalar_lea.vmem [#allocation6], 40
  %2790 = vst [vmem:[%s2789] sm:$0xff] %v2788
  %s2791 = scalar_lea.vmem [#allocation8], 16
  %2792 = vst [vmem:[%s2791] sm:$0xff] %v2788
  %s2793 = scalar_lea.vmem [#allocation2], 192
  %v2794 = vld [vmem:[%s2793] sm:$0xff]
  %v2795 = vld [vmem:[%s2793 + $0x8] sm:$0xff]
  %v2796 = vld [vmem:[%s2793 + $0x10] sm:$0xff]
  %v2797 = vld [vmem:[%s2793 + $0x18] sm:$0xff]
  %s2798 = scalar_lea.vmem [#allocation4], 32
  %v2799 = vld [vmem:[%s2798] sm:$0xff]
  %v2800 = vld [vmem:[%s2798 + $0x8] sm:$0xff]
  %v2801 = vld [vmem:[%s2798 + $0x10] sm:$0xff]
  %v2802 = vld [vmem:[%s2798 + $0x18] sm:$0xff]
  %v2803 = vadd.f32 %v2794, %v2799
  %v2804 = vadd.f32 %v2795, %v2800
  %v2805 = vadd.f32 %v2796, %v2801
  %v2806 = vadd.f32 %v2797, %v2802
  %v2807 = vpack.c.bf16 %v2788, %v2788
  %v2808 = vld [vmem:[%s5] sm:$0xff]
  %v2809 = vld [vmem:[%s5 + $0x8] sm:$0xff]
  %v2810 = vld [vmem:[%s5 + $0x10] sm:$0xff]
  %v2811 = vld [vmem:[%s5 + $0x18] sm:$0xff]
  %v2812 = vld [vmem:[%s5 + $0x20] sm:$0xff]
  %v2813 = vld [vmem:[%s5 + $0x28] sm:$0xff]
  %v2814 = vld [vmem:[%s5 + $0x30] sm:$0xff]
  %v2815 = vld [vmem:[%s5 + $0x38] sm:$0xff]
  %v2816 = vld [vmem:[%s5 + $0x40] sm:$0xff]
  %v2817 = vld [vmem:[%s5 + $0x48] sm:$0xff]
  %v2818 = vld [vmem:[%s5 + $0x50] sm:$0xff]
  %v2819 = vld [vmem:[%s5 + $0x58] sm:$0xff]
  %v2820 = vld [vmem:[%s5 + $0x60] sm:$0xff]
  %v2821 = vld [vmem:[%s5 + $0x68] sm:$0xff]
  %v2822 = vld [vmem:[%s5 + $0x70] sm:$0xff]
  %v2823 = vld [vmem:[%s5 + $0x78] sm:$0xff]
  %v2824 = vld [vmem:[%s5 + $0x80] sm:$0xff]
  %v2825 = vld [vmem:[%s5 + $0x88] sm:$0xff]
  %v2826 = vld [vmem:[%s5 + $0x90] sm:$0xff]
  %v2827 = vld [vmem:[%s5 + $0x98] sm:$0xff]
  %v2828 = vld [vmem:[%s5 + $0xa0] sm:$0xff]
  %v2829 = vld [vmem:[%s5 + $0xa8] sm:$0xff]
  %v2830 = vld [vmem:[%s5 + $0xb0] sm:$0xff]
  %v2831 = vld [vmem:[%s5 + $0xb8] sm:$0xff]
  %v2832 = vld [vmem:[%s5 + $0xc0] sm:$0xff]
  %v2833 = vld [vmem:[%s5 + $0xc8] sm:$0xff]
  %v2834 = vld [vmem:[%s5 + $0xd0] sm:$0xff]
  %v2835 = vld [vmem:[%s5 + $0xd8] sm:$0xff]
  %v2836 = vld [vmem:[%s5 + $0xe0] sm:$0xff]
  %v2837 = vld [vmem:[%s5 + $0xe8] sm:$0xff]
  %v2838 = vld [vmem:[%s5 + $0xf0] sm:$0xff]
  %v2839 = vld [vmem:[%s5 + $0xf8] sm:$0xff]
  %v2872 = vunpack.c.l.b16 %v2808
  %v2873 = vunpack.c.h.b16 %v2808
  %v2874 = vunpack.c.l.b16 %v2809
  %v2875 = vunpack.c.h.b16 %v2809
  %v2876 = vunpack.c.l.b16 %v2810
  %v2877 = vunpack.c.h.b16 %v2810
  %v2878 = vunpack.c.l.b16 %v2811
  %v2879 = vunpack.c.h.b16 %v2811
  %v2880 = vunpack.c.l.b16 %v2812
  %v2881 = vunpack.c.h.b16 %v2812
  %v2882 = vunpack.c.l.b16 %v2813
  %v2883 = vunpack.c.h.b16 %v2813
  %v2884 = vunpack.c.l.b16 %v2814
  %v2885 = vunpack.c.h.b16 %v2814
  %v2886 = vunpack.c.l.b16 %v2815
  %v2887 = vunpack.c.h.b16 %v2815
  %v2888 = vunpack.c.l.b16 %v2816
  %v2889 = vunpack.c.h.b16 %v2816
  %v2890 = vunpack.c.l.b16 %v2817
  %v2891 = vunpack.c.h.b16 %v2817
  %v2892 = vunpack.c.l.b16 %v2818
  %v2893 = vunpack.c.h.b16 %v2818
  %v2894 = vunpack.c.l.b16 %v2819
  %v2895 = vunpack.c.h.b16 %v2819
  %v2896 = vunpack.c.l.b16 %v2820
  %v2897 = vunpack.c.h.b16 %v2820
  %v2898 = vunpack.c.l.b16 %v2821
  %v2899 = vunpack.c.h.b16 %v2821
  %v2900 = vunpack.c.l.b16 %v2822
  %v2901 = vunpack.c.h.b16 %v2822
  %v2902 = vunpack.c.l.b16 %v2823
  %v2903 = vunpack.c.h.b16 %v2823
  %v2904 = vunpack.c.l.b16 %v2824
  %v2905 = vunpack.c.h.b16 %v2824
  %v2906 = vunpack.c.l.b16 %v2825
  %v2907 = vunpack.c.h.b16 %v2825
  %v2908 = vunpack.c.l.b16 %v2826
  %v2909 = vunpack.c.h.b16 %v2826
  %v2910 = vunpack.c.l.b16 %v2827
  %v2911 = vunpack.c.h.b16 %v2827
  %v2912 = vunpack.c.l.b16 %v2828
  %v2913 = vunpack.c.h.b16 %v2828
  %v2914 = vunpack.c.l.b16 %v2829
  %v2915 = vunpack.c.h.b16 %v2829
  %v2916 = vunpack.c.l.b16 %v2830
  %v2917 = vunpack.c.h.b16 %v2830
  %v2918 = vunpack.c.l.b16 %v2831
  %v2919 = vunpack.c.h.b16 %v2831
  %v2920 = vunpack.c.l.b16 %v2832
  %v2921 = vunpack.c.h.b16 %v2832
  %v2922 = vunpack.c.l.b16 %v2833
  %v2923 = vunpack.c.h.b16 %v2833
  %v2924 = vunpack.c.l.b16 %v2834
  %v2925 = vunpack.c.h.b16 %v2834
  %v2926 = vunpack.c.l.b16 %v2835
  %v2927 = vunpack.c.h.b16 %v2835
  %v2928 = vunpack.c.l.b16 %v2836
  %v2929 = vunpack.c.h.b16 %v2836
  %v2930 = vunpack.c.l.b16 %v2837
  %v2931 = vunpack.c.h.b16 %v2837
  %v2932 = vunpack.c.l.b16 %v2838
  %v2933 = vunpack.c.h.b16 %v2838
  %v2934 = vunpack.c.l.b16 %v2839
  %v2935 = vunpack.c.h.b16 %v2839
  %v2936 = vpack.c.b16 %v2876, %v2872
  %v2937 = vpack.c.b16 %v2877, %v2873
  %v2938 = vpack.c.b16 %v2878, %v2874
  %v2939 = vpack.c.b16 %v2879, %v2875
  %v2940 = vpack.c.b16 %v2884, %v2880
  %v2941 = vpack.c.b16 %v2885, %v2881
  %v2942 = vpack.c.b16 %v2886, %v2882
  %v2943 = vpack.c.b16 %v2887, %v2883
  %v2944 = vpack.c.b16 %v2892, %v2888
  %v2945 = vpack.c.b16 %v2893, %v2889
  %v2946 = vpack.c.b16 %v2894, %v2890
  %v2947 = vpack.c.b16 %v2895, %v2891
  %v2948 = vpack.c.b16 %v2900, %v2896
  %v2949 = vpack.c.b16 %v2901, %v2897
  %v2950 = vpack.c.b16 %v2902, %v2898
  %v2951 = vpack.c.b16 %v2903, %v2899
  %v2952 = vpack.c.b16 %v2908, %v2904
  %v2953 = vpack.c.b16 %v2909, %v2905
  %v2954 = vpack.c.b16 %v2910, %v2906
  %v2955 = vpack.c.b16 %v2911, %v2907
  %v2956 = vpack.c.b16 %v2916, %v2912
  %v2957 = vpack.c.b16 %v2917, %v2913
  %v2958 = vpack.c.b16 %v2918, %v2914
  %v2959 = vpack.c.b16 %v2919, %v2915
  %v2960 = vpack.c.b16 %v2924, %v2920
  %v2961 = vpack.c.b16 %v2925, %v2921
  %v2962 = vpack.c.b16 %v2926, %v2922
  %v2963 = vpack.c.b16 %v2927, %v2923
  %v2964 = vpack.c.b16 %v2932, %v2928
  %v2965 = vpack.c.b16 %v2933, %v2929
  %v2966 = vpack.c.b16 %v2934, %v2930
  %v2967 = vpack.c.b16 %v2935, %v2931
  %3000 = vmatprep.subr.bf16.mxu0 %v2965
  %3001 = vmatpush1.bf16.msra.mxu0 %v2964
  %3002 = vmatprep.subr.bf16.mxu0 %v2961
  %3003 = vmatpush1.bf16.msra.mxu0 %v2960
  %3004 = vmatprep.subr.bf16.mxu0 %v2957
  %3005 = vmatpush1.bf16.msra.mxu0 %v2956
  %3006 = vmatprep.subr.bf16.mxu0 %v2953
  %3007 = vmatpush1.bf16.msra.mxu0 %v2952
  %3008 = vmatprep.subr.bf16.mxu0 %v2949
  %3009 = vmatpush1.bf16.msra.mxu0 %v2948
  %3010 = vmatprep.subr.bf16.mxu0 %v2945
  %3011 = vmatpush1.bf16.msra.mxu0 %v2944
  %3012 = vmatprep.subr.bf16.mxu0 %v2941
  %3013 = vmatpush1.bf16.msra.mxu0 %v2940
  %3014 = vmatprep.subr.bf16.mxu0 %v2937
  %3015 = vmatpush1.bf16.msra.mxu0 %v2936
  %3016 = vmatprep.subr.bf16.mxu0 0
  %3017 = vmatpush2.bf16.msra.mxu0 0
  %3018 = vmatprep.subr.bf16.mxu0 0
  %3019 = vmatpush2.bf16.msra.mxu0 0
  %3020 = vmatprep.subr.bf16.mxu0 0
  %3021 = vmatpush2.bf16.msra.mxu0 0
  %3022 = vmatprep.subr.bf16.mxu0 0
  %3023 = vmatpush2.bf16.msra.mxu0 0
  %3024 = vmatprep.subr.bf16.mxu0 0
  %3025 = vmatpush2.bf16.msra.mxu0 0
  %3026 = vmatprep.subr.bf16.mxu0 0
  %3027 = vmatpush2.bf16.msra.mxu0 0
  %3028 = vmatprep.subr.bf16.mxu0 0
  %3029 = vmatpush2.bf16.msra.mxu0 0
  %3030 = vmatprep.subr.bf16.mxu0 0
  %3031 = vmatpush2.bf16.msra.mxu0 0
  %3032 = vmatprep.mubr.bf16.mxu0 0
  %3033 = vmatmul.mubr.bf16.gmra.mxu0 %v2807
  %v3034 = vpop.f32.mrf.mxu0
  %v3035 = vadd.f32 0.0, %v3034
  %v3036 = vpop.f32.mrf.mxu0
  %v3037 = vadd.f32 0.0, %v3036
  %v3038 = vpop.f32.mrf.mxu0
  %v3039 = vpop.f32.mrf.mxu0
  %3040 = vdwg.mxu0
  %3041 = vmatprep.subr.bf16.mxu0 %v2967
  %3042 = vmatpush1.bf16.msra.mxu0 %v2966
  %3043 = vmatprep.subr.bf16.mxu0 %v2963
  %3044 = vmatpush1.bf16.msra.mxu0 %v2962
  %3045 = vmatprep.subr.bf16.mxu0 %v2959
  %3046 = vmatpush1.bf16.msra.mxu0 %v2958
  %3047 = vmatprep.subr.bf16.mxu0 %v2955
  %3048 = vmatpush1.bf16.msra.mxu0 %v2954
  %3049 = vmatprep.subr.bf16.mxu0 %v2951
  %3050 = vmatpush1.bf16.msra.mxu0 %v2950
  %3051 = vmatprep.subr.bf16.mxu0 %v2947
  %3052 = vmatpush1.bf16.msra.mxu0 %v2946
  %3053 = vmatprep.subr.bf16.mxu0 %v2943
  %3054 = vmatpush1.bf16.msra.mxu0 %v2942
  %3055 = vmatprep.subr.bf16.mxu0 %v2939
  %3056 = vmatpush1.bf16.msra.mxu0 %v2938
  %3057 = vmatprep.subr.bf16.mxu0 0
  %3058 = vmatpush2.bf16.msra.mxu0 0
  %3059 = vmatprep.subr.bf16.mxu0 0
  %3060 = vmatpush2.bf16.msra.mxu0 0
  %3061 = vmatprep.subr.bf16.mxu0 0
  %3062 = vmatpush2.bf16.msra.mxu0 0
  %3063 = vmatprep.subr.bf16.mxu0 0
  %3064 = vmatpush2.bf16.msra.mxu0 0
  %3065 = vmatprep.subr.bf16.mxu0 0
  %3066 = vmatpush2.bf16.msra.mxu0 0
  %3067 = vmatprep.subr.bf16.mxu0 0
  %3068 = vmatpush2.bf16.msra.mxu0 0
  %3069 = vmatprep.subr.bf16.mxu0 0
  %3070 = vmatpush2.bf16.msra.mxu0 0
  %3071 = vmatprep.subr.bf16.mxu0 0
  %3072 = vmatpush2.bf16.msra.mxu0 0
  %3073 = vmatprep.mubr.bf16.mxu0 0
  %3074 = vmatmul.mubr.bf16.gmra.mxu0 %v2807
  %v3075 = vpop.f32.mrf.mxu0
  %v3076 = vadd.f32 0.0, %v3075
  %v3077 = vpop.f32.mrf.mxu0
  %v3078 = vadd.f32 0.0, %v3077
  %v3079 = vpop.f32.mrf.mxu0
  %v3080 = vpop.f32.mrf.mxu0
  %3081 = vdwg.mxu0
  %v3082 = vadd.f32 %v2803, %v3035
  %v3083 = vadd.f32 %v2804, %v3037
  %v3084 = vadd.f32 %v2805, %v3076
  %v3085 = vadd.f32 %v2806, %v3078
  %v3086 = vxor.u32 %v3082, 2147483648
  %v3087 = vmul.f32 %v3086, 1.442695
  %v3088 = vpow.pop %v3087
  %v3089 = vadd.f32 %v3088, 1.0
  %v3090 = vrcp.pop %v3089
  %v3091 = vmul.f32 1.0, %v3090
  %v3092 = vxor.u32 %v3083, 2147483648
  %v3093 = vmul.f32 %v3092, 1.442695
  %v3094 = vpow.pop %v3093
  %v3095 = vadd.f32 %v3094, 1.0
  %v3096 = vrcp.pop %v3095
  %v3097 = vmul.f32 1.0, %v3096
  %v3098 = vtanh.pop %v3084
  %v3099 = vxor.u32 %v3085, 2147483648
  %v3100 = vmul.f32 %v3099, 1.442695
  %v3101 = vpow.pop %v3100
  %v3102 = vadd.f32 %v3101, 1.0
  %v3103 = vrcp.pop %v3102
  %v3104 = vmul.f32 1.0, %v3103
  %v3105 = vmul.f32 %v3097, %v2786
  %v3106 = vmul.f32 %v3091, %v3098
  %v3107 = vadd.f32 %v3105, %v3106
  %v3108 = vtanh.pop %v3107
  %v3109 = vmul.f32 %v3104, %v3108
  %s3110 = scalar_lea.vmem [#allocation6], 48
  %3111 = vst [vmem:[%s3110] sm:$0xff] %v3109
  %s3112 = scalar_lea.vmem [#allocation8], 8
  %3113 = vst [vmem:[%s3112] sm:$0xff] %v3109
  %s3114 = scalar_lea.vmem [#allocation2], 224
  %v3115 = vld [vmem:[%s3114] sm:$0xff]
  %v3116 = vld [vmem:[%s3114 + $0x8] sm:$0xff]
  %v3117 = vld [vmem:[%s3114 + $0x10] sm:$0xff]
  %v3118 = vld [vmem:[%s3114 + $0x18] sm:$0xff]
  %v3119 = vld [vmem:[#allocation4] sm:$0xff]
  %v3120 = vld [vmem:[#allocation4 + $0x8] sm:$0xff]
  %v3121 = vld [vmem:[#allocation4 + $0x10] sm:$0xff]
  %v3122 = vld [vmem:[#allocation4 + $0x18] sm:$0xff]
  %v3123 = vadd.f32 %v3115, %v3119
  %v3124 = vadd.f32 %v3116, %v3120
  %v3125 = vadd.f32 %v3117, %v3121
  %v3126 = vadd.f32 %v3118, %v3122
  %v3127 = vpack.c.bf16 %v3109, %v3109
  %v3128 = vld [vmem:[%s5] sm:$0xff]
  %v3129 = vld [vmem:[%s5 + $0x8] sm:$0xff]
  %v3130 = vld [vmem:[%s5 + $0x10] sm:$0xff]
  %v3131 = vld [vmem:[%s5 + $0x18] sm:$0xff]
  %v3132 = vld [vmem:[%s5 + $0x20] sm:$0xff]
  %v3133 = vld [vmem:[%s5 + $0x28] sm:$0xff]
  %v3134 = vld [vmem:[%s5 + $0x30] sm:$0xff]
  %v3135 = vld [vmem:[%s5 + $0x38] sm:$0xff]
  %v3136 = vld [vmem:[%s5 + $0x40] sm:$0xff]
  %v3137 = vld [vmem:[%s5 + $0x48] sm:$0xff]
  %v3138 = vld [vmem:[%s5 + $0x50] sm:$0xff]
  %v3139 = vld [vmem:[%s5 + $0x58] sm:$0xff]
  %v3140 = vld [vmem:[%s5 + $0x60] sm:$0xff]
  %v3141 = vld [vmem:[%s5 + $0x68] sm:$0xff]
  %v3142 = vld [vmem:[%s5 + $0x70] sm:$0xff]
  %v3143 = vld [vmem:[%s5 + $0x78] sm:$0xff]
  %v3144 = vld [vmem:[%s5 + $0x80] sm:$0xff]
  %v3145 = vld [vmem:[%s5 + $0x88] sm:$0xff]
  %v3146 = vld [vmem:[%s5 + $0x90] sm:$0xff]
  %v3147 = vld [vmem:[%s5 + $0x98] sm:$0xff]
  %v3148 = vld [vmem:[%s5 + $0xa0] sm:$0xff]
  %v3149 = vld [vmem:[%s5 + $0xa8] sm:$0xff]
  %v3150 = vld [vmem:[%s5 + $0xb0] sm:$0xff]
  %v3151 = vld [vmem:[%s5 + $0xb8] sm:$0xff]
  %v3152 = vld [vmem:[%s5 + $0xc0] sm:$0xff]
  %v3153 = vld [vmem:[%s5 + $0xc8] sm:$0xff]
  %v3154 = vld [vmem:[%s5 + $0xd0] sm:$0xff]
  %v3155 = vld [vmem:[%s5 + $0xd8] sm:$0xff]
  %v3156 = vld [vmem:[%s5 + $0xe0] sm:$0xff]
  %v3157 = vld [vmem:[%s5 + $0xe8] sm:$0xff]
  %v3158 = vld [vmem:[%s5 + $0xf0] sm:$0xff]
  %v3159 = vld [vmem:[%s5 + $0xf8] sm:$0xff]
  %v3192 = vunpack.c.l.b16 %v3128
  %v3193 = vunpack.c.h.b16 %v3128
  %v3194 = vunpack.c.l.b16 %v3129
  %v3195 = vunpack.c.h.b16 %v3129
  %v3196 = vunpack.c.l.b16 %v3130
  %v3197 = vunpack.c.h.b16 %v3130
  %v3198 = vunpack.c.l.b16 %v3131
  %v3199 = vunpack.c.h.b16 %v3131
  %v3200 = vunpack.c.l.b16 %v3132
  %v3201 = vunpack.c.h.b16 %v3132
  %v3202 = vunpack.c.l.b16 %v3133
  %v3203 = vunpack.c.h.b16 %v3133
  %v3204 = vunpack.c.l.b16 %v3134
  %v3205 = vunpack.c.h.b16 %v3134
  %v3206 = vunpack.c.l.b16 %v3135
  %v3207 = vunpack.c.h.b16 %v3135
  %v3208 = vunpack.c.l.b16 %v3136
  %v3209 = vunpack.c.h.b16 %v3136
  %v3210 = vunpack.c.l.b16 %v3137
  %v3211 = vunpack.c.h.b16 %v3137
  %v3212 = vunpack.c.l.b16 %v3138
  %v3213 = vunpack.c.h.b16 %v3138
  %v3214 = vunpack.c.l.b16 %v3139
  %v3215 = vunpack.c.h.b16 %v3139
  %v3216 = vunpack.c.l.b16 %v3140
  %v3217 = vunpack.c.h.b16 %v3140
  %v3218 = vunpack.c.l.b16 %v3141
  %v3219 = vunpack.c.h.b16 %v3141
  %v3220 = vunpack.c.l.b16 %v3142
  %v3221 = vunpack.c.h.b16 %v3142
  %v3222 = vunpack.c.l.b16 %v3143
  %v3223 = vunpack.c.h.b16 %v3143
  %v3224 = vunpack.c.l.b16 %v3144
  %v3225 = vunpack.c.h.b16 %v3144
  %v3226 = vunpack.c.l.b16 %v3145
  %v3227 = vunpack.c.h.b16 %v3145
  %v3228 = vunpack.c.l.b16 %v3146
  %v3229 = vunpack.c.h.b16 %v3146
  %v3230 = vunpack.c.l.b16 %v3147
  %v3231 = vunpack.c.h.b16 %v3147
  %v3232 = vunpack.c.l.b16 %v3148
  %v3233 = vunpack.c.h.b16 %v3148
  %v3234 = vunpack.c.l.b16 %v3149
  %v3235 = vunpack.c.h.b16 %v3149
  %v3236 = vunpack.c.l.b16 %v3150
  %v3237 = vunpack.c.h.b16 %v3150
  %v3238 = vunpack.c.l.b16 %v3151
  %v3239 = vunpack.c.h.b16 %v3151
  %v3240 = vunpack.c.l.b16 %v3152
  %v3241 = vunpack.c.h.b16 %v3152
  %v3242 = vunpack.c.l.b16 %v3153
  %v3243 = vunpack.c.h.b16 %v3153
  %v3244 = vunpack.c.l.b16 %v3154
  %v3245 = vunpack.c.h.b16 %v3154
  %v3246 = vunpack.c.l.b16 %v3155
  %v3247 = vunpack.c.h.b16 %v3155
  %v3248 = vunpack.c.l.b16 %v3156
  %v3249 = vunpack.c.h.b16 %v3156
  %v3250 = vunpack.c.l.b16 %v3157
  %v3251 = vunpack.c.h.b16 %v3157
  %v3252 = vunpack.c.l.b16 %v3158
  %v3253 = vunpack.c.h.b16 %v3158
  %v3254 = vunpack.c.l.b16 %v3159
  %v3255 = vunpack.c.h.b16 %v3159
  %v3256 = vpack.c.b16 %v3196, %v3192
  %v3257 = vpack.c.b16 %v3197, %v3193
  %v3258 = vpack.c.b16 %v3198, %v3194
  %v3259 = vpack.c.b16 %v3199, %v3195
  %v3260 = vpack.c.b16 %v3204, %v3200
  %v3261 = vpack.c.b16 %v3205, %v3201
  %v3262 = vpack.c.b16 %v3206, %v3202
  %v3263 = vpack.c.b16 %v3207, %v3203
  %v3264 = vpack.c.b16 %v3212, %v3208
  %v3265 = vpack.c.b16 %v3213, %v3209
  %v3266 = vpack.c.b16 %v3214, %v3210
  %v3267 = vpack.c.b16 %v3215, %v3211
  %v3268 = vpack.c.b16 %v3220, %v3216
  %v3269 = vpack.c.b16 %v3221, %v3217
  %v3270 = vpack.c.b16 %v3222, %v3218
  %v3271 = vpack.c.b16 %v3223, %v3219
  %v3272 = vpack.c.b16 %v3228, %v3224
  %v3273 = vpack.c.b16 %v3229, %v3225
  %v3274 = vpack.c.b16 %v3230, %v3226
  %v3275 = vpack.c.b16 %v3231, %v3227
  %v3276 = vpack.c.b16 %v3236, %v3232
  %v3277 = vpack.c.b16 %v3237, %v3233
  %v3278 = vpack.c.b16 %v3238, %v3234
  %v3279 = vpack.c.b16 %v3239, %v3235
  %v3280 = vpack.c.b16 %v3244, %v3240
  %v3281 = vpack.c.b16 %v3245, %v3241
  %v3282 = vpack.c.b16 %v3246, %v3242
  %v3283 = vpack.c.b16 %v3247, %v3243
  %v3284 = vpack.c.b16 %v3252, %v3248
  %v3285 = vpack.c.b16 %v3253, %v3249
  %v3286 = vpack.c.b16 %v3254, %v3250
  %v3287 = vpack.c.b16 %v3255, %v3251
  %3320 = vmatprep.subr.bf16.mxu0 %v3285
  %3321 = vmatpush1.bf16.msra.mxu0 %v3284
  %3322 = vmatprep.subr.bf16.mxu0 %v3281
  %3323 = vmatpush1.bf16.msra.mxu0 %v3280
  %3324 = vmatprep.subr.bf16.mxu0 %v3277
  %3325 = vmatpush1.bf16.msra.mxu0 %v3276
  %3326 = vmatprep.subr.bf16.mxu0 %v3273
  %3327 = vmatpush1.bf16.msra.mxu0 %v3272
  %3328 = vmatprep.subr.bf16.mxu0 %v3269
  %3329 = vmatpush1.bf16.msra.mxu0 %v3268
  %3330 = vmatprep.subr.bf16.mxu0 %v3265
  %3331 = vmatpush1.bf16.msra.mxu0 %v3264
  %3332 = vmatprep.subr.bf16.mxu0 %v3261
  %3333 = vmatpush1.bf16.msra.mxu0 %v3260
  %3334 = vmatprep.subr.bf16.mxu0 %v3257
  %3335 = vmatpush1.bf16.msra.mxu0 %v3256
  %3336 = vmatprep.subr.bf16.mxu0 0
  %3337 = vmatpush2.bf16.msra.mxu0 0
  %3338 = vmatprep.subr.bf16.mxu0 0
  %3339 = vmatpush2.bf16.msra.mxu0 0
  %3340 = vmatprep.subr.bf16.mxu0 0
  %3341 = vmatpush2.bf16.msra.mxu0 0
  %3342 = vmatprep.subr.bf16.mxu0 0
  %3343 = vmatpush2.bf16.msra.mxu0 0
  %3344 = vmatprep.subr.bf16.mxu0 0
  %3345 = vmatpush2.bf16.msra.mxu0 0
  %3346 = vmatprep.subr.bf16.mxu0 0
  %3347 = vmatpush2.bf16.msra.mxu0 0
  %3348 = vmatprep.subr.bf16.mxu0 0
  %3349 = vmatpush2.bf16.msra.mxu0 0
  %3350 = vmatprep.subr.bf16.mxu0 0
  %3351 = vmatpush2.bf16.msra.mxu0 0
  %3352 = vmatprep.mubr.bf16.mxu0 0
  %3353 = vmatmul.mubr.bf16.gmra.mxu0 %v3127
  %v3354 = vpop.f32.mrf.mxu0
  %v3355 = vadd.f32 0.0, %v3354
  %v3356 = vpop.f32.mrf.mxu0
  %v3357 = vadd.f32 0.0, %v3356
  %v3358 = vpop.f32.mrf.mxu0
  %v3359 = vpop.f32.mrf.mxu0
  %3360 = vdwg.mxu0
  %3361 = vmatprep.subr.bf16.mxu0 %v3287
  %3362 = vmatpush1.bf16.msra.mxu0 %v3286
  %3363 = vmatprep.subr.bf16.mxu0 %v3283
  %3364 = vmatpush1.bf16.msra.mxu0 %v3282
  %3365 = vmatprep.subr.bf16.mxu0 %v3279
  %3366 = vmatpush1.bf16.msra.mxu0 %v3278
  %3367 = vmatprep.subr.bf16.mxu0 %v3275
  %3368 = vmatpush1.bf16.msra.mxu0 %v3274
  %3369 = vmatprep.subr.bf16.mxu0 %v3271
  %3370 = vmatpush1.bf16.msra.mxu0 %v3270
  %3371 = vmatprep.subr.bf16.mxu0 %v3267
  %3372 = vmatpush1.bf16.msra.mxu0 %v3266
  %3373 = vmatprep.subr.bf16.mxu0 %v3263
  %3374 = vmatpush1.bf16.msra.mxu0 %v3262
  %3375 = vmatprep.subr.bf16.mxu0 %v3259
  %3376 = vmatpush1.bf16.msra.mxu0 %v3258
  %3377 = vmatprep.subr.bf16.mxu0 0
  %3378 = vmatpush2.bf16.msra.mxu0 0
  %3379 = vmatprep.subr.bf16.mxu0 0
  %3380 = vmatpush2.bf16.msra.mxu0 0
  %3381 = vmatprep.subr.bf16.mxu0 0
  %3382 = vmatpush2.bf16.msra.mxu0 0
  %3383 = vmatprep.subr.bf16.mxu0 0
  %3384 = vmatpush2.bf16.msra.mxu0 0
  %3385 = vmatprep.subr.bf16.mxu0 0
  %3386 = vmatpush2.bf16.msra.mxu0 0
  %3387 = vmatprep.subr.bf16.mxu0 0
  %3388 = vmatpush2.bf16.msra.mxu0 0
  %3389 = vmatprep.subr.bf16.mxu0 0
  %3390 = vmatpush2.bf16.msra.mxu0 0
  %3391 = vmatprep.subr.bf16.mxu0 0
  %3392 = vmatpush2.bf16.msra.mxu0 0
  %3393 = vmatprep.mubr.bf16.mxu0 0
  %3394 = vmatmul.mubr.bf16.gmra.mxu0 %v3127
  %v3395 = vpop.f32.mrf.mxu0
  %v3396 = vadd.f32 0.0, %v3395
  %v3397 = vpop.f32.mrf.mxu0
  %v3398 = vadd.f32 0.0, %v3397
  %v3399 = vpop.f32.mrf.mxu0
  %v3400 = vpop.f32.mrf.mxu0
  %3401 = vdwg.mxu0
  %v3402 = vadd.f32 %v3123, %v3355
  %v3403 = vadd.f32 %v3124, %v3357
  %v3404 = vadd.f32 %v3125, %v3396
  %v3405 = vadd.f32 %v3126, %v3398
  %v3406 = vxor.u32 %v3402, 2147483648
  %v3407 = vmul.f32 %v3406, 1.442695
  %v3408 = vpow.pop %v3407
  %v3409 = vadd.f32 %v3408, 1.0
  %v3410 = vrcp.pop %v3409
  %v3411 = vmul.f32 1.0, %v3410
  %v3412 = vxor.u32 %v3403, 2147483648
  %v3413 = vmul.f32 %v3412, 1.442695
  %v3414 = vpow.pop %v3413
  %v3415 = vadd.f32 %v3414, 1.0
  %v3416 = vrcp.pop %v3415
  %v3417 = vmul.f32 1.0, %v3416
  %v3418 = vtanh.pop %v3404
  %v3419 = vxor.u32 %v3405, 2147483648
  %v3420 = vmul.f32 %v3419, 1.442695
  %v3421 = vpow.pop %v3420
  %v3422 = vadd.f32 %v3421, 1.0
  %v3423 = vrcp.pop %v3422
  %v3424 = vmul.f32 1.0, %v3423
  %v3425 = vmul.f32 %v3417, %v3107
  %v3426 = vmul.f32 %v3411, %v3418
  %v3427 = vadd.f32 %v3425, %v3426
  %v3428 = vtanh.pop %v3427
  %v3429 = vmul.f32 %v3424, %v3428
  %s3430 = scalar_lea.vmem [#allocation6], 56
  %3431 = vst [vmem:[%s3430] sm:$0xff] %v3429
  %3432 = vst [vmem:[#allocation8] sm:$0xff] %v3429
  %v3433 = vld [vmem:[#allocation6] sm:$0xff]
  %v3434 = vld [vmem:[#allocation6 + $0x8] sm:$0xff]
  %v3435 = vld [vmem:[#allocation6 + $0x10] sm:$0xff]
  %v3436 = vld [vmem:[#allocation6 + $0x18] sm:$0xff]
  %v3437 = vld [vmem:[#allocation6 + $0x20] sm:$0xff]
  %v3438 = vld [vmem:[#allocation6 + $0x28] sm:$0xff]
  %v3439 = vld [vmem:[#allocation6 + $0x30] sm:$0xff]
  %v3440 = vld [vmem:[#allocation6 + $0x38] sm:$0xff]
  %v3441 = vpack.c.bf16 %v3434, %v3433
  %v3442 = vpack.c.bf16 %v3436, %v3435
  %v3443 = vpack.c.bf16 %v3438, %v3437
  %v3444 = vpack.c.bf16 %v3440, %v3439
  %v3445 = vld [vmem:[#allocation8] sm:$0xff]
  %v3446 = vld [vmem:[#allocation8 + $0x8] sm:$0xff]
  %v3447 = vld [vmem:[#allocation8 + $0x10] sm:$0xff]
  %v3448 = vld [vmem:[#allocation8 + $0x18] sm:$0xff]
  %v3449 = vld [vmem:[#allocation8 + $0x20] sm:$0xff]
  %v3450 = vld [vmem:[#allocation8 + $0x28] sm:$0xff]
  %v3451 = vld [vmem:[#allocation8 + $0x30] sm:$0xff]
  %v3452 = vld [vmem:[#allocation8 + $0x38] sm:$0xff]
  %v3453 = vpack.c.bf16 %v3446, %v3445
  %v3454 = vpack.c.bf16 %v3448, %v3447
  %v3455 = vpack.c.bf16 %v3450, %v3449
  %v3456 = vpack.c.bf16 %v3452, %v3451
  %v3457 = vld [vmem:[%s6] sm:$0xff]
  %v3458 = vld [vmem:[%s6 + $0x8] sm:$0xff]
  %v3459 = vld [vmem:[%s6 + $0x10] sm:$0xff]
  %v3460 = vld [vmem:[%s6 + $0x18] sm:$0xff]
  %v3461 = vld [vmem:[%s6 + $0x20] sm:$0xff]
  %v3462 = vld [vmem:[%s6 + $0x28] sm:$0xff]
  %v3463 = vld [vmem:[%s6 + $0x30] sm:$0xff]
  %v3464 = vld [vmem:[%s6 + $0x38] sm:$0xff]
  %v3465 = vld [vmem:[%s6 + $0x40] sm:$0xff]
  %v3466 = vld [vmem:[%s6 + $0x48] sm:$0xff]
  %v3467 = vld [vmem:[%s6 + $0x50] sm:$0xff]
  %v3468 = vld [vmem:[%s6 + $0x58] sm:$0xff]
  %v3469 = vld [vmem:[%s6 + $0x60] sm:$0xff]
  %v3470 = vld [vmem:[%s6 + $0x68] sm:$0xff]
  %v3471 = vld [vmem:[%s6 + $0x70] sm:$0xff]
  %v3472 = vld [vmem:[%s6 + $0x78] sm:$0xff]
  %v3473 = vld [vmem:[%s6 + $0x80] sm:$0xff]
  %v3474 = vld [vmem:[%s6 + $0x88] sm:$0xff]
  %v3475 = vld [vmem:[%s6 + $0x90] sm:$0xff]
  %v3476 = vld [vmem:[%s6 + $0x98] sm:$0xff]
  %v3477 = vld [vmem:[%s6 + $0xa0] sm:$0xff]
  %v3478 = vld [vmem:[%s6 + $0xa8] sm:$0xff]
  %v3479 = vld [vmem:[%s6 + $0xb0] sm:$0xff]
  %v3480 = vld [vmem:[%s6 + $0xb8] sm:$0xff]
  %v3481 = vld [vmem:[%s6 + $0xc0] sm:$0xff]
  %v3482 = vld [vmem:[%s6 + $0xc8] sm:$0xff]
  %v3483 = vld [vmem:[%s6 + $0xd0] sm:$0xff]
  %v3484 = vld [vmem:[%s6 + $0xd8] sm:$0xff]
  %v3485 = vld [vmem:[%s6 + $0xe0] sm:$0xff]
  %v3486 = vld [vmem:[%s6 + $0xe8] sm:$0xff]
  %v3487 = vld [vmem:[%s6 + $0xf0] sm:$0xff]
  %v3488 = vld [vmem:[%s6 + $0xf8] sm:$0xff]
  %v3489 = vld [vmem:[%s7] sm:$0xff]
  %v3490 = vld [vmem:[%s7 + $0x8] sm:$0xff]
  %v3491 = vld [vmem:[%s7 + $0x10] sm:$0xff]
  %v3492 = vld [vmem:[%s7 + $0x18] sm:$0xff]
  %v3493 = vld [vmem:[%s7 + $0x20] sm:$0xff]
  %v3494 = vld [vmem:[%s7 + $0x28] sm:$0xff]
  %v3495 = vld [vmem:[%s7 + $0x30] sm:$0xff]
  %v3496 = vld [vmem:[%s7 + $0x38] sm:$0xff]
  %v3497 = vld [vmem:[%s7 + $0x40] sm:$0xff]
  %v3498 = vld [vmem:[%s7 + $0x48] sm:$0xff]
  %v3499 = vld [vmem:[%s7 + $0x50] sm:$0xff]
  %v3500 = vld [vmem:[%s7 + $0x58] sm:$0xff]
  %v3501 = vld [vmem:[%s7 + $0x60] sm:$0xff]
  %v3502 = vld [vmem:[%s7 + $0x68] sm:$0xff]
  %v3503 = vld [vmem:[%s7 + $0x70] sm:$0xff]
  %v3504 = vld [vmem:[%s7 + $0x78] sm:$0xff]
  %v3505 = vld [vmem:[%s7 + $0x80] sm:$0xff]
  %v3506 = vld [vmem:[%s7 + $0x88] sm:$0xff]
  %v3507 = vld [vmem:[%s7 + $0x90] sm:$0xff]
  %v3508 = vld [vmem:[%s7 + $0x98] sm:$0xff]
  %v3509 = vld [vmem:[%s7 + $0xa0] sm:$0xff]
  %v3510 = vld [vmem:[%s7 + $0xa8] sm:$0xff]
  %v3511 = vld [vmem:[%s7 + $0xb0] sm:$0xff]
  %v3512 = vld [vmem:[%s7 + $0xb8] sm:$0xff]
  %v3513 = vld [vmem:[%s7 + $0xc0] sm:$0xff]
  %v3514 = vld [vmem:[%s7 + $0xc8] sm:$0xff]
  %v3515 = vld [vmem:[%s7 + $0xd0] sm:$0xff]
  %v3516 = vld [vmem:[%s7 + $0xd8] sm:$0xff]
  %v3517 = vld [vmem:[%s7 + $0xe0] sm:$0xff]
  %v3518 = vld [vmem:[%s7 + $0xe8] sm:$0xff]
  %v3519 = vld [vmem:[%s7 + $0xf0] sm:$0xff]
  %v3520 = vld [vmem:[%s7 + $0xf8] sm:$0xff]
  %v3553 = vunpack.c.l.b16 %v3489
  %v3554 = vunpack.c.h.b16 %v3489
  %v3555 = vunpack.c.l.b16 %v3490
  %v3556 = vunpack.c.h.b16 %v3490
  %v3557 = vunpack.c.l.b16 %v3491
  %v3558 = vunpack.c.h.b16 %v3491
  %v3559 = vunpack.c.l.b16 %v3492
  %v3560 = vunpack.c.h.b16 %v3492
  %v3561 = vunpack.c.l.b16 %v3493
  %v3562 = vunpack.c.h.b16 %v3493
  %v3563 = vunpack.c.l.b16 %v3494
  %v3564 = vunpack.c.h.b16 %v3494
  %v3565 = vunpack.c.l.b16 %v3495
  %v3566 = vunpack.c.h.b16 %v3495
  %v3567 = vunpack.c.l.b16 %v3496
  %v3568 = vunpack.c.h.b16 %v3496
  %v3569 = vunpack.c.l.b16 %v3497
  %v3570 = vunpack.c.h.b16 %v3497
  %v3571 = vunpack.c.l.b16 %v3498
  %v3572 = vunpack.c.h.b16 %v3498
  %v3573 = vunpack.c.l.b16 %v3499
  %v3574 = vunpack.c.h.b16 %v3499
  %v3575 = vunpack.c.l.b16 %v3500
  %v3576 = vunpack.c.h.b16 %v3500
  %v3577 = vunpack.c.l.b16 %v3501
  %v3578 = vunpack.c.h.b16 %v3501
  %v3579 = vunpack.c.l.b16 %v3502
  %v3580 = vunpack.c.h.b16 %v3502
  %v3581 = vunpack.c.l.b16 %v3503
  %v3582 = vunpack.c.h.b16 %v3503
  %v3583 = vunpack.c.l.b16 %v3504
  %v3584 = vunpack.c.h.b16 %v3504
  %v3585 = vunpack.c.l.b16 %v3505
  %v3586 = vunpack.c.h.b16 %v3505
  %v3587 = vunpack.c.l.b16 %v3506
  %v3588 = vunpack.c.h.b16 %v3506
  %v3589 = vunpack.c.l.b16 %v3507
  %v3590 = vunpack.c.h.b16 %v3507
  %v3591 = vunpack.c.l.b16 %v3508
  %v3592 = vunpack.c.h.b16 %v3508
  %v3593 = vunpack.c.l.b16 %v3509
  %v3594 = vunpack.c.h.b16 %v3509
  %v3595 = vunpack.c.l.b16 %v3510
  %v3596 = vunpack.c.h.b16 %v3510
  %v3597 = vunpack.c.l.b16 %v3511
  %v3598 = vunpack.c.h.b16 %v3511
  %v3599 = vunpack.c.l.b16 %v3512
  %v3600 = vunpack.c.h.b16 %v3512
  %v3601 = vunpack.c.l.b16 %v3513
  %v3602 = vunpack.c.h.b16 %v3513
  %v3603 = vunpack.c.l.b16 %v3514
  %v3604 = vunpack.c.h.b16 %v3514
  %v3605 = vunpack.c.l.b16 %v3515
  %v3606 = vunpack.c.h.b16 %v3515
  %v3607 = vunpack.c.l.b16 %v3516
  %v3608 = vunpack.c.h.b16 %v3516
  %v3609 = vunpack.c.l.b16 %v3517
  %v3610 = vunpack.c.h.b16 %v3517
  %v3611 = vunpack.c.l.b16 %v3518
  %v3612 = vunpack.c.h.b16 %v3518
  %v3613 = vunpack.c.l.b16 %v3519
  %v3614 = vunpack.c.h.b16 %v3519
  %v3615 = vunpack.c.l.b16 %v3520
  %v3616 = vunpack.c.h.b16 %v3520
  %v3617 = vpack.c.b16 %v3557, %v3553
  %v3618 = vpack.c.b16 %v3558, %v3554
  %v3619 = vpack.c.b16 %v3559, %v3555
  %v3620 = vpack.c.b16 %v3560, %v3556
  %v3621 = vpack.c.b16 %v3565, %v3561
  %v3622 = vpack.c.b16 %v3566, %v3562
  %v3623 = vpack.c.b16 %v3567, %v3563
  %v3624 = vpack.c.b16 %v3568, %v3564
  %v3625 = vpack.c.b16 %v3573, %v3569
  %v3626 = vpack.c.b16 %v3574, %v3570
  %v3627 = vpack.c.b16 %v3575, %v3571
  %v3628 = vpack.c.b16 %v3576, %v3572
  %v3629 = vpack.c.b16 %v3581, %v3577
  %v3630 = vpack.c.b16 %v3582, %v3578
  %v3631 = vpack.c.b16 %v3583, %v3579
  %v3632 = vpack.c.b16 %v3584, %v3580
  %v3633 = vpack.c.b16 %v3589, %v3585
  %v3634 = vpack.c.b16 %v3590, %v3586
  %v3635 = vpack.c.b16 %v3591, %v3587
  %v3636 = vpack.c.b16 %v3592, %v3588
  %v3637 = vpack.c.b16 %v3597, %v3593
  %v3638 = vpack.c.b16 %v3598, %v3594
  %v3639 = vpack.c.b16 %v3599, %v3595
  %v3640 = vpack.c.b16 %v3600, %v3596
  %v3641 = vpack.c.b16 %v3605, %v3601
  %v3642 = vpack.c.b16 %v3606, %v3602
  %v3643 = vpack.c.b16 %v3607, %v3603
  %v3644 = vpack.c.b16 %v3608, %v3604
  %v3645 = vpack.c.b16 %v3613, %v3609
  %v3646 = vpack.c.b16 %v3614, %v3610
  %v3647 = vpack.c.b16 %v3615, %v3611
  %v3648 = vpack.c.b16 %v3616, %v3612
  %3681 = vmatprep.subr.bf16.mxu0 %v3646
  %3682 = vmatpush1.bf16.msra.mxu0 %v3645
  %3683 = vmatprep.subr.bf16.mxu0 %v3642
  %3684 = vmatpush1.bf16.msra.mxu0 %v3641
  %3685 = vmatprep.subr.bf16.mxu0 %v3638
  %3686 = vmatpush1.bf16.msra.mxu0 %v3637
  %3687 = vmatprep.subr.bf16.mxu0 %v3634
  %3688 = vmatpush1.bf16.msra.mxu0 %v3633
  %3689 = vmatprep.subr.bf16.mxu0 %v3630
  %3690 = vmatpush1.bf16.msra.mxu0 %v3629
  %3691 = vmatprep.subr.bf16.mxu0 %v3626
  %3692 = vmatpush1.bf16.msra.mxu0 %v3625
  %3693 = vmatprep.subr.bf16.mxu0 %v3622
  %3694 = vmatpush1.bf16.msra.mxu0 %v3621
  %3695 = vmatprep.subr.bf16.mxu0 %v3618
  %3696 = vmatpush1.bf16.msra.mxu0 %v3617
  %3697 = vmatprep.subr.bf16.mxu0 0
  %3698 = vmatpush2.bf16.msra.mxu0 0
  %3699 = vmatprep.subr.bf16.mxu0 0
  %3700 = vmatpush2.bf16.msra.mxu0 0
  %3701 = vmatprep.subr.bf16.mxu0 0
  %3702 = vmatpush2.bf16.msra.mxu0 0
  %3703 = vmatprep.subr.bf16.mxu0 0
  %3704 = vmatpush2.bf16.msra.mxu0 0
  %3705 = vmatprep.subr.bf16.mxu0 0
  %3706 = vmatpush2.bf16.msra.mxu0 0
  %3707 = vmatprep.subr.bf16.mxu0 0
  %3708 = vmatpush2.bf16.msra.mxu0 0
  %3709 = vmatprep.subr.bf16.mxu0 0
  %3710 = vmatpush2.bf16.msra.mxu0 0
  %3711 = vmatprep.subr.bf16.mxu0 0
  %3712 = vmatpush2.bf16.msra.mxu0 0
  %3713 = vmatprep.mubr.bf16.mxu0 0
  %3714 = vmatmul.mubr.bf16.gmra.mxu0 %v3453
  %v3715 = vpop.f32.mrf.mxu0
  %v3716 = vadd.f32 0.0, %v3715
  %v3717 = vpop.f32.mrf.mxu0
  %v3718 = vadd.f32 0.0, %v3717
  %v3719 = vpop.f32.mrf.mxu0
  %v3720 = vadd.f32 0.0, %v3719
  %v3721 = vpop.f32.mrf.mxu0
  %v3722 = vadd.f32 0.0, %v3721
  %3723 = vmatprep.mubr.bf16.mxu0 0
  %3724 = vmatmul.mubr.bf16.gmra.mxu0 %v3454
  %v3725 = vpop.f32.mrf.mxu0
  %v3726 = vadd.f32 0.0, %v3725
  %v3727 = vpop.f32.mrf.mxu0
  %v3728 = vadd.f32 0.0, %v3727
  %v3729 = vpop.f32.mrf.mxu0
  %v3730 = vadd.f32 0.0, %v3729
  %v3731 = vpop.f32.mrf.mxu0
  %v3732 = vadd.f32 0.0, %v3731
  %3733 = vmatprep.mubr.bf16.mxu0 0
  %3734 = vmatmul.mubr.bf16.gmra.mxu0 %v3455
  %v3735 = vpop.f32.mrf.mxu0
  %v3736 = vadd.f32 0.0, %v3735
  %v3737 = vpop.f32.mrf.mxu0
  %v3738 = vadd.f32 0.0, %v3737
  %v3739 = vpop.f32.mrf.mxu0
  %v3740 = vadd.f32 0.0, %v3739
  %v3741 = vpop.f32.mrf.mxu0
  %v3742 = vadd.f32 0.0, %v3741
  %3743 = vmatprep.mubr.bf16.mxu0 0
  %3744 = vmatmul.mubr.bf16.gmra.mxu0 %v3456
  %v3745 = vpop.f32.mrf.mxu0
  %v3746 = vadd.f32 0.0, %v3745
  %v3747 = vpop.f32.mrf.mxu0
  %v3748 = vadd.f32 0.0, %v3747
  %v3749 = vpop.f32.mrf.mxu0
  %v3750 = vadd.f32 0.0, %v3749
  %v3751 = vpop.f32.mrf.mxu0
  %v3752 = vadd.f32 0.0, %v3751
  %3753 = vdwg.mxu0
  %3754 = vmatprep.subr.bf16.mxu0 %v3648
  %3755 = vmatpush1.bf16.msra.mxu0 %v3647
  %3756 = vmatprep.subr.bf16.mxu0 %v3644
  %3757 = vmatpush1.bf16.msra.mxu0 %v3643
  %3758 = vmatprep.subr.bf16.mxu0 %v3640
  %3759 = vmatpush1.bf16.msra.mxu0 %v3639
  %3760 = vmatprep.subr.bf16.mxu0 %v3636
  %3761 = vmatpush1.bf16.msra.mxu0 %v3635
  %3762 = vmatprep.subr.bf16.mxu0 %v3632
  %3763 = vmatpush1.bf16.msra.mxu0 %v3631
  %3764 = vmatprep.subr.bf16.mxu0 %v3628
  %3765 = vmatpush1.bf16.msra.mxu0 %v3627
  %3766 = vmatprep.subr.bf16.mxu0 %v3624
  %3767 = vmatpush1.bf16.msra.mxu0 %v3623
  %3768 = vmatprep.subr.bf16.mxu0 %v3620
  %3769 = vmatpush1.bf16.msra.mxu0 %v3619
  %3770 = vmatprep.subr.bf16.mxu0 0
  %3771 = vmatpush2.bf16.msra.mxu0 0
  %3772 = vmatprep.subr.bf16.mxu0 0
  %3773 = vmatpush2.bf16.msra.mxu0 0
  %3774 = vmatprep.subr.bf16.mxu0 0
  %3775 = vmatpush2.bf16.msra.mxu0 0
  %3776 = vmatprep.subr.bf16.mxu0 0
  %3777 = vmatpush2.bf16.msra.mxu0 0
  %3778 = vmatprep.subr.bf16.mxu0 0
  %3779 = vmatpush2.bf16.msra.mxu0 0
  %3780 = vmatprep.subr.bf16.mxu0 0
  %3781 = vmatpush2.bf16.msra.mxu0 0
  %3782 = vmatprep.subr.bf16.mxu0 0
  %3783 = vmatpush2.bf16.msra.mxu0 0
  %3784 = vmatprep.subr.bf16.mxu0 0
  %3785 = vmatpush2.bf16.msra.mxu0 0
  %3786 = vmatprep.mubr.bf16.mxu0 0
  %3787 = vmatmul.mubr.bf16.gmra.mxu0 %v3453
  %v3788 = vpop.f32.mrf.mxu0
  %v3789 = vadd.f32 0.0, %v3788
  %v3790 = vpop.f32.mrf.mxu0
  %v3791 = vadd.f32 0.0, %v3790
  %v3792 = vpop.f32.mrf.mxu0
  %v3793 = vadd.f32 0.0, %v3792
  %v3794 = vpop.f32.mrf.mxu0
  %v3795 = vadd.f32 0.0, %v3794
  %3796 = vmatprep.mubr.bf16.mxu0 0
  %3797 = vmatmul.mubr.bf16.gmra.mxu0 %v3454
  %v3798 = vpop.f32.mrf.mxu0
  %v3799 = vadd.f32 0.0, %v3798
  %v3800 = vpop.f32.mrf.mxu0
  %v3801 = vadd.f32 0.0, %v3800
  %v3802 = vpop.f32.mrf.mxu0
  %v3803 = vadd.f32 0.0, %v3802
  %v3804 = vpop.f32.mrf.mxu0
  %v3805 = vadd.f32 0.0, %v3804
  %3806 = vmatprep.mubr.bf16.mxu0 0
  %3807 = vmatmul.mubr.bf16.gmra.mxu0 %v3455
  %v3808 = vpop.f32.mrf.mxu0
  %v3809 = vadd.f32 0.0, %v3808
  %v3810 = vpop.f32.mrf.mxu0
  %v3811 = vadd.f32 0.0, %v3810
  %v3812 = vpop.f32.mrf.mxu0
  %v3813 = vadd.f32 0.0, %v3812
  %v3814 = vpop.f32.mrf.mxu0
  %v3815 = vadd.f32 0.0, %v3814
  %3816 = vmatprep.mubr.bf16.mxu0 0
  %3817 = vmatmul.mubr.bf16.gmra.mxu0 %v3456
  %v3818 = vpop.f32.mrf.mxu0
  %v3819 = vadd.f32 0.0, %v3818
  %v3820 = vpop.f32.mrf.mxu0
  %v3821 = vadd.f32 0.0, %v3820
  %v3822 = vpop.f32.mrf.mxu0
  %v3823 = vadd.f32 0.0, %v3822
  %v3824 = vpop.f32.mrf.mxu0
  %v3825 = vadd.f32 0.0, %v3824
  %3826 = vdwg.mxu0
  %v3859 = vunpack.c.l.b16 %v3457
  %v3860 = vunpack.c.h.b16 %v3457
  %v3861 = vunpack.c.l.b16 %v3458
  %v3862 = vunpack.c.h.b16 %v3458
  %v3863 = vunpack.c.l.b16 %v3459
  %v3864 = vunpack.c.h.b16 %v3459
  %v3865 = vunpack.c.l.b16 %v3460
  %v3866 = vunpack.c.h.b16 %v3460
  %v3867 = vunpack.c.l.b16 %v3461
  %v3868 = vunpack.c.h.b16 %v3461
  %v3869 = vunpack.c.l.b16 %v3462
  %v3870 = vunpack.c.h.b16 %v3462
  %v3871 = vunpack.c.l.b16 %v3463
  %v3872 = vunpack.c.h.b16 %v3463
  %v3873 = vunpack.c.l.b16 %v3464
  %v3874 = vunpack.c.h.b16 %v3464
  %v3875 = vunpack.c.l.b16 %v3465
  %v3876 = vunpack.c.h.b16 %v3465
  %v3877 = vunpack.c.l.b16 %v3466
  %v3878 = vunpack.c.h.b16 %v3466
  %v3879 = vunpack.c.l.b16 %v3467
  %v3880 = vunpack.c.h.b16 %v3467
  %v3881 = vunpack.c.l.b16 %v3468
  %v3882 = vunpack.c.h.b16 %v3468
  %v3883 = vunpack.c.l.b16 %v3469
  %v3884 = vunpack.c.h.b16 %v3469
  %v3885 = vunpack.c.l.b16 %v3470
  %v3886 = vunpack.c.h.b16 %v3470
  %v3887 = vunpack.c.l.b16 %v3471
  %v3888 = vunpack.c.h.b16 %v3471
  %v3889 = vunpack.c.l.b16 %v3472
  %v3890 = vunpack.c.h.b16 %v3472
  %v3891 = vunpack.c.l.b16 %v3473
  %v3892 = vunpack.c.h.b16 %v3473
  %v3893 = vunpack.c.l.b16 %v3474
  %v3894 = vunpack.c.h.b16 %v3474
  %v3895 = vunpack.c.l.b16 %v3475
  %v3896 = vunpack.c.h.b16 %v3475
  %v3897 = vunpack.c.l.b16 %v3476
  %v3898 = vunpack.c.h.b16 %v3476
  %v3899 = vunpack.c.l.b16 %v3477
  %v3900 = vunpack.c.h.b16 %v3477
  %v3901 = vunpack.c.l.b16 %v3478
  %v3902 = vunpack.c.h.b16 %v3478
  %v3903 = vunpack.c.l.b16 %v3479
  %v3904 = vunpack.c.h.b16 %v3479
  %v3905 = vunpack.c.l.b16 %v3480
  %v3906 = vunpack.c.h.b16 %v3480
  %v3907 = vunpack.c.l.b16 %v3481
  %v3908 = vunpack.c.h.b16 %v3481
  %v3909 = vunpack.c.l.b16 %v3482
  %v3910 = vunpack.c.h.b16 %v3482
  %v3911 = vunpack.c.l.b16 %v3483
  %v3912 = vunpack.c.h.b16 %v3483
  %v3913 = vunpack.c.l.b16 %v3484
  %v3914 = vunpack.c.h.b16 %v3484
  %v3915 = vunpack.c.l.b16 %v3485
  %v3916 = vunpack.c.h.b16 %v3485
  %v3917 = vunpack.c.l.b16 %v3486
  %v3918 = vunpack.c.h.b16 %v3486
  %v3919 = vunpack.c.l.b16 %v3487
  %v3920 = vunpack.c.h.b16 %v3487
  %v3921 = vunpack.c.l.b16 %v3488
  %v3922 = vunpack.c.h.b16 %v3488
  %v3923 = vpack.c.b16 %v3863, %v3859
  %v3924 = vpack.c.b16 %v3864, %v3860
  %v3925 = vpack.c.b16 %v3865, %v3861
  %v3926 = vpack.c.b16 %v3866, %v3862
  %v3927 = vpack.c.b16 %v3871, %v3867
  %v3928 = vpack.c.b16 %v3872, %v3868
  %v3929 = vpack.c.b16 %v3873, %v3869
  %v3930 = vpack.c.b16 %v3874, %v3870
  %v3931 = vpack.c.b16 %v3879, %v3875
  %v3932 = vpack.c.b16 %v3880, %v3876
  %v3933 = vpack.c.b16 %v3881, %v3877
  %v3934 = vpack.c.b16 %v3882, %v3878
  %v3935 = vpack.c.b16 %v3887, %v3883
  %v3936 = vpack.c.b16 %v3888, %v3884
  %v3937 = vpack.c.b16 %v3889, %v3885
  %v3938 = vpack.c.b16 %v3890, %v3886
  %v3939 = vpack.c.b16 %v3895, %v3891
  %v3940 = vpack.c.b16 %v3896, %v3892
  %v3941 = vpack.c.b16 %v3897, %v3893
  %v3942 = vpack.c.b16 %v3898, %v3894
  %v3943 = vpack.c.b16 %v3903, %v3899
  %v3944 = vpack.c.b16 %v3904, %v3900
  %v3945 = vpack.c.b16 %v3905, %v3901
  %v3946 = vpack.c.b16 %v3906, %v3902
  %v3947 = vpack.c.b16 %v3911, %v3907
  %v3948 = vpack.c.b16 %v3912, %v3908
  %v3949 = vpack.c.b16 %v3913, %v3909
  %v3950 = vpack.c.b16 %v3914, %v3910
  %v3951 = vpack.c.b16 %v3919, %v3915
  %v3952 = vpack.c.b16 %v3920, %v3916
  %v3953 = vpack.c.b16 %v3921, %v3917
  %v3954 = vpack.c.b16 %v3922, %v3918
  %3987 = vmatprep.subr.bf16.mxu0 %v3952
  %3988 = vmatpush1.bf16.msra.mxu0 %v3951
  %3989 = vmatprep.subr.bf16.mxu0 %v3948
  %3990 = vmatpush1.bf16.msra.mxu0 %v3947
  %3991 = vmatprep.subr.bf16.mxu0 %v3944
  %3992 = vmatpush1.bf16.msra.mxu0 %v3943
  %3993 = vmatprep.subr.bf16.mxu0 %v3940
  %3994 = vmatpush1.bf16.msra.mxu0 %v3939
  %3995 = vmatprep.subr.bf16.mxu0 %v3936
  %3996 = vmatpush1.bf16.msra.mxu0 %v3935
  %3997 = vmatprep.subr.bf16.mxu0 %v3932
  %3998 = vmatpush1.bf16.msra.mxu0 %v3931
  %3999 = vmatprep.subr.bf16.mxu0 %v3928
  %4000 = vmatpush1.bf16.msra.mxu0 %v3927
  %4001 = vmatprep.subr.bf16.mxu0 %v3924
  %4002 = vmatpush1.bf16.msra.mxu0 %v3923
  %4003 = vmatprep.subr.bf16.mxu0 0
  %4004 = vmatpush2.bf16.msra.mxu0 0
  %4005 = vmatprep.subr.bf16.mxu0 0
  %4006 = vmatpush2.bf16.msra.mxu0 0
  %4007 = vmatprep.subr.bf16.mxu0 0
  %4008 = vmatpush2.bf16.msra.mxu0 0
  %4009 = vmatprep.subr.bf16.mxu0 0
  %4010 = vmatpush2.bf16.msra.mxu0 0
  %4011 = vmatprep.subr.bf16.mxu0 0
  %4012 = vmatpush2.bf16.msra.mxu0 0
  %4013 = vmatprep.subr.bf16.mxu0 0
  %4014 = vmatpush2.bf16.msra.mxu0 0
  %4015 = vmatprep.subr.bf16.mxu0 0
  %4016 = vmatpush2.bf16.msra.mxu0 0
  %4017 = vmatprep.subr.bf16.mxu0 0
  %4018 = vmatpush2.bf16.msra.mxu0 0
  %4019 = vmatprep.mubr.bf16.mxu0 0
  %4020 = vmatmul.mubr.bf16.gmra.mxu0 %v3441
  %v4021 = vpop.f32.mrf.mxu0
  %v4022 = vadd.f32 %v3716, %v4021
  %v4023 = vpop.f32.mrf.mxu0
  %v4024 = vadd.f32 %v3718, %v4023
  %v4025 = vpop.f32.mrf.mxu0
  %v4026 = vadd.f32 %v3720, %v4025
  %v4027 = vpop.f32.mrf.mxu0
  %v4028 = vadd.f32 %v3722, %v4027
  %4029 = vmatprep.mubr.bf16.mxu0 0
  %4030 = vmatmul.mubr.bf16.gmra.mxu0 %v3442
  %v4031 = vpop.f32.mrf.mxu0
  %v4032 = vadd.f32 %v3726, %v4031
  %v4033 = vpop.f32.mrf.mxu0
  %v4034 = vadd.f32 %v3728, %v4033
  %v4035 = vpop.f32.mrf.mxu0
  %v4036 = vadd.f32 %v3730, %v4035
  %v4037 = vpop.f32.mrf.mxu0
  %v4038 = vadd.f32 %v3732, %v4037
  %4039 = vmatprep.mubr.bf16.mxu0 0
  %4040 = vmatmul.mubr.bf16.gmra.mxu0 %v3443
  %v4041 = vpop.f32.mrf.mxu0
  %v4042 = vadd.f32 %v3736, %v4041
  %v4043 = vpop.f32.mrf.mxu0
  %v4044 = vadd.f32 %v3738, %v4043
  %v4045 = vpop.f32.mrf.mxu0
  %v4046 = vadd.f32 %v3740, %v4045
  %v4047 = vpop.f32.mrf.mxu0
  %v4048 = vadd.f32 %v3742, %v4047
  %4049 = vmatprep.mubr.bf16.mxu0 0
  %4050 = vmatmul.mubr.bf16.gmra.mxu0 %v3444
  %v4051 = vpop.f32.mrf.mxu0
  %v4052 = vadd.f32 %v3746, %v4051
  %v4053 = vpop.f32.mrf.mxu0
  %v4054 = vadd.f32 %v3748, %v4053
  %v4055 = vpop.f32.mrf.mxu0
  %v4056 = vadd.f32 %v3750, %v4055
  %v4057 = vpop.f32.mrf.mxu0
  %v4058 = vadd.f32 %v3752, %v4057
  %4059 = vdwg.mxu0
  %4060 = vmatprep.subr.bf16.mxu0 %v3954
  %4061 = vmatpush1.bf16.msra.mxu0 %v3953
  %4062 = vmatprep.subr.bf16.mxu0 %v3950
  %4063 = vmatpush1.bf16.msra.mxu0 %v3949
  %4064 = vmatprep.subr.bf16.mxu0 %v3946
  %4065 = vmatpush1.bf16.msra.mxu0 %v3945
  %4066 = vmatprep.subr.bf16.mxu0 %v3942
  %4067 = vmatpush1.bf16.msra.mxu0 %v3941
  %4068 = vmatprep.subr.bf16.mxu0 %v3938
  %4069 = vmatpush1.bf16.msra.mxu0 %v3937
  %4070 = vmatprep.subr.bf16.mxu0 %v3934
  %4071 = vmatpush1.bf16.msra.mxu0 %v3933
  %4072 = vmatprep.subr.bf16.mxu0 %v3930
  %4073 = vmatpush1.bf16.msra.mxu0 %v3929
  %4074 = vmatprep.subr.bf16.mxu0 %v3926
  %4075 = vmatpush1.bf16.msra.mxu0 %v3925
  %4076 = vmatprep.subr.bf16.mxu0 0
  %4077 = vmatpush2.bf16.msra.mxu0 0
  %4078 = vmatprep.subr.bf16.mxu0 0
  %4079 = vmatpush2.bf16.msra.mxu0 0
  %4080 = vmatprep.subr.bf16.mxu0 0
  %4081 = vmatpush2.bf16.msra.mxu0 0
  %4082 = vmatprep.subr.bf16.mxu0 0
  %4083 = vmatpush2.bf16.msra.mxu0 0
  %4084 = vmatprep.subr.bf16.mxu0 0
  %4085 = vmatpush2.bf16.msra.mxu0 0
  %4086 = vmatprep.subr.bf16.mxu0 0
  %4087 = vmatpush2.bf16.msra.mxu0 0
  %4088 = vmatprep.subr.bf16.mxu0 0
  %4089 = vmatpush2.bf16.msra.mxu0 0
  %4090 = vmatprep.subr.bf16.mxu0 0
  %4091 = vmatpush2.bf16.msra.mxu0 0
  %4092 = vmatprep.mubr.bf16.mxu0 0
  %4093 = vmatmul.mubr.bf16.gmra.mxu0 %v3441
  %v4094 = vpop.f32.mrf.mxu0
  %v4095 = vadd.f32 %v3789, %v4094
  %v4096 = vpop.f32.mrf.mxu0
  %v4097 = vadd.f32 %v3791, %v4096
  %v4098 = vpop.f32.mrf.mxu0
  %v4099 = vadd.f32 %v3793, %v4098
  %v4100 = vpop.f32.mrf.mxu0
  %v4101 = vadd.f32 %v3795, %v4100
  %4102 = vmatprep.mubr.bf16.mxu0 0
  %4103 = vmatmul.mubr.bf16.gmra.mxu0 %v3442
  %v4104 = vpop.f32.mrf.mxu0
  %v4105 = vadd.f32 %v3799, %v4104
  %v4106 = vpop.f32.mrf.mxu0
  %v4107 = vadd.f32 %v3801, %v4106
  %v4108 = vpop.f32.mrf.mxu0
  %v4109 = vadd.f32 %v3803, %v4108
  %v4110 = vpop.f32.mrf.mxu0
  %v4111 = vadd.f32 %v3805, %v4110
  %4112 = vmatprep.mubr.bf16.mxu0 0
  %4113 = vmatmul.mubr.bf16.gmra.mxu0 %v3443
  %v4114 = vpop.f32.mrf.mxu0
  %v4115 = vadd.f32 %v3809, %v4114
  %v4116 = vpop.f32.mrf.mxu0
  %v4117 = vadd.f32 %v3811, %v4116
  %v4118 = vpop.f32.mrf.mxu0
  %v4119 = vadd.f32 %v3813, %v4118
  %v4120 = vpop.f32.mrf.mxu0
  %v4121 = vadd.f32 %v3815, %v4120
  %4122 = vmatprep.mubr.bf16.mxu0 0
  %4123 = vmatmul.mubr.bf16.gmra.mxu0 %v3444
  %v4124 = vpop.f32.mrf.mxu0
  %v4125 = vadd.f32 %v3819, %v4124
  %v4126 = vpop.f32.mrf.mxu0
  %v4127 = vadd.f32 %v3821, %v4126
  %v4128 = vpop.f32.mrf.mxu0
  %v4129 = vadd.f32 %v3823, %v4128
  %v4130 = vpop.f32.mrf.mxu0
  %v4131 = vadd.f32 %v3825, %v4130
  %4132 = vdwg.mxu0
  %v4133 = vld [vmem:[%s8] sm:$0xf]
  %v4135 = vlaneseq
  %v4136 = vshrl.u32 %v4135, 7
  %v4137 = vsub.s32 0, %v4136
  %v4138 = vrot.slane %v4133, %v4137
  %v4139 = vlaneseq
  %v4140 = vshrl.u32 %v4139, 7
  %v4141 = vsub.s32 1, %v4140
  %v4142 = vrot.slane %v4133, %v4141
  %v4143 = vlaneseq
  %v4144 = vshrl.u32 %v4143, 7
  %v4145 = vsub.s32 2, %v4144
  %v4146 = vrot.slane %v4133, %v4145
  %v4147 = vlaneseq
  %v4148 = vshrl.u32 %v4147, 7
  %v4149 = vsub.s32 3, %v4148
  %v4150 = vrot.slane %v4133, %v4149
  %v4155 = vadd.f32 %v4022, %v4138
  %v4156 = vadd.f32 %v4024, %v4142
  %v4157 = vadd.f32 %v4095, %v4146
  %v4158 = vadd.f32 %v4097, %v4150
  %v4159 = vadd.f32 %v4026, %v4138
  %v4160 = vadd.f32 %v4028, %v4142
  %v4161 = vadd.f32 %v4099, %v4146
  %v4162 = vadd.f32 %v4101, %v4150
  %v4163 = vadd.f32 %v4032, %v4138
  %v4164 = vadd.f32 %v4034, %v4142
  %v4165 = vadd.f32 %v4105, %v4146
  %v4166 = vadd.f32 %v4107, %v4150
  %v4167 = vadd.f32 %v4036, %v4138
  %v4168 = vadd.f32 %v4038, %v4142
  %v4169 = vadd.f32 %v4109, %v4146
  %v4170 = vadd.f32 %v4111, %v4150
  %v4171 = vadd.f32 %v4042, %v4138
  %v4172 = vadd.f32 %v4044, %v4142
  %v4173 = vadd.f32 %v4115, %v4146
  %v4174 = vadd.f32 %v4117, %v4150
  %v4175 = vadd.f32 %v4046, %v4138
  %v4176 = vadd.f32 %v4048, %v4142
  %v4177 = vadd.f32 %v4119, %v4146
  %v4178 = vadd.f32 %v4121, %v4150
  %v4179 = vadd.f32 %v4052, %v4138
  %v4180 = vadd.f32 %v4054, %v4142
  %v4181 = vadd.f32 %v4125, %v4146
  %v4182 = vadd.f32 %v4127, %v4150
  %v4183 = vadd.f32 %v4056, %v4138
  %v4184 = vadd.f32 %v4058, %v4142
  %v4185 = vadd.f32 %v4129, %v4146
  %v4186 = vadd.f32 %v4131, %v4150
  %4187 = vst [vmem:[#allocation3] sm:$0xff] %v4155
  %4188 = vst [vmem:[#allocation3 + $0x8] sm:$0xff] %v4156
  %4189 = vst [vmem:[#allocation3 + $0x10] sm:$0xff] %v4157
  %4190 = vst [vmem:[#allocation3 + $0x18] sm:$0xff] %v4158
  %4191 = vst [vmem:[#allocation3 + $0x20] sm:$0xff] %v4159
  %4192 = vst [vmem:[#allocation3 + $0x28] sm:$0xff] %v4160
  %4193 = vst [vmem:[#allocation3 + $0x30] sm:$0xff] %v4161
  %4194 = vst [vmem:[#allocation3 + $0x38] sm:$0xff] %v4162
  %4195 = vst [vmem:[#allocation3 + $0x40] sm:$0xff] %v4163
  %4196 = vst [vmem:[#allocation3 + $0x48] sm:$0xff] %v4164
  %4197 = vst [vmem:[#allocation3 + $0x50] sm:$0xff] %v4165
  %4198 = vst [vmem:[#allocation3 + $0x58] sm:$0xff] %v4166
  %4199 = vst [vmem:[#allocation3 + $0x60] sm:$0xff] %v4167
  %4200 = vst [vmem:[#allocation3 + $0x68] sm:$0xff] %v4168
  %4201 = vst [vmem:[#allocation3 + $0x70] sm:$0xff] %v4169
  %4202 = vst [vmem:[#allocation3 + $0x78] sm:$0xff] %v4170
  %4203 = vst [vmem:[#allocation3 + $0x80] sm:$0xff] %v4171
  %4204 = vst [vmem:[#allocation3 + $0x88] sm:$0xff] %v4172
  %4205 = vst [vmem:[#allocation3 + $0x90] sm:$0xff] %v4173
  %4206 = vst [vmem:[#allocation3 + $0x98] sm:$0xff] %v4174
  %4207 = vst [vmem:[#allocation3 + $0xa0] sm:$0xff] %v4175
  %4208 = vst [vmem:[#allocation3 + $0xa8] sm:$0xff] %v4176
  %4209 = vst [vmem:[#allocation3 + $0xb0] sm:$0xff] %v4177
  %4210 = vst [vmem:[#allocation3 + $0xb8] sm:$0xff] %v4178
  %4211 = vst [vmem:[#allocation3 + $0xc0] sm:$0xff] %v4179
  %4212 = vst [vmem:[#allocation3 + $0xc8] sm:$0xff] %v4180
  %4213 = vst [vmem:[#allocation3 + $0xd0] sm:$0xff] %v4181
  %4214 = vst [vmem:[#allocation3 + $0xd8] sm:$0xff] %v4182
  %4215 = vst [vmem:[#allocation3 + $0xe0] sm:$0xff] %v4183
  %4216 = vst [vmem:[#allocation3 + $0xe8] sm:$0xff] %v4184
  %4217 = vst [vmem:[#allocation3 + $0xf0] sm:$0xff] %v4185
  %4218 = vst [vmem:[#allocation3 + $0xf8] sm:$0xff] %v4186
  %v4219 = vld [vmem:[%s9] sm:$0xff]
  %v4220 = vld [vmem:[%s9 + $0x8] sm:$0xff]
  %v4221 = vld [vmem:[%s9 + $0x10] sm:$0xff]
  %v4222 = vld [vmem:[%s9 + $0x18] sm:$0xff]
  %v4223 = vld [vmem:[%s9 + $0x20] sm:$0xff]
  %v4224 = vld [vmem:[%s9 + $0x28] sm:$0xff]
  %v4225 = vld [vmem:[%s9 + $0x30] sm:$0xff]
  %v4226 = vld [vmem:[%s9 + $0x38] sm:$0xff]
  %v4227 = vld [vmem:[%s9 + $0x40] sm:$0xff]
  %v4228 = vld [vmem:[%s9 + $0x48] sm:$0xff]
  %v4229 = vld [vmem:[%s9 + $0x50] sm:$0xff]
  %v4230 = vld [vmem:[%s9 + $0x58] sm:$0xff]
  %v4231 = vld [vmem:[%s9 + $0x60] sm:$0xff]
  %v4232 = vld [vmem:[%s9 + $0x68] sm:$0xff]
  %v4233 = vld [vmem:[%s9 + $0x70] sm:$0xff]
  %v4234 = vld [vmem:[%s9 + $0x78] sm:$0xff]
  %v4235 = vld [vmem:[%s9 + $0x80] sm:$0xff]
  %v4236 = vld [vmem:[%s9 + $0x88] sm:$0xff]
  %v4237 = vld [vmem:[%s9 + $0x90] sm:$0xff]
  %v4238 = vld [vmem:[%s9 + $0x98] sm:$0xff]
  %v4239 = vld [vmem:[%s9 + $0xa0] sm:$0xff]
  %v4240 = vld [vmem:[%s9 + $0xa8] sm:$0xff]
  %v4241 = vld [vmem:[%s9 + $0xb0] sm:$0xff]
  %v4242 = vld [vmem:[%s9 + $0xb8] sm:$0xff]
  %v4243 = vld [vmem:[%s9 + $0xc0] sm:$0xff]
  %v4244 = vld [vmem:[%s9 + $0xc8] sm:$0xff]
  %v4245 = vld [vmem:[%s9 + $0xd0] sm:$0xff]
  %v4246 = vld [vmem:[%s9 + $0xd8] sm:$0xff]
  %v4247 = vld [vmem:[%s9 + $0xe0] sm:$0xff]
  %v4248 = vld [vmem:[%s9 + $0xe8] sm:$0xff]
  %v4249 = vld [vmem:[%s9 + $0xf0] sm:$0xff]
  %v4250 = vld [vmem:[%s9 + $0xf8] sm:$0xff]
  %v4251 = vld [vmem:[%s10] sm:$0xff]
  %v4252 = vld [vmem:[%s10 + $0x8] sm:$0xff]
  %v4253 = vld [vmem:[%s10 + $0x10] sm:$0xff]
  %v4254 = vld [vmem:[%s10 + $0x18] sm:$0xff]
  %v4255 = vld [vmem:[%s10 + $0x20] sm:$0xff]
  %v4256 = vld [vmem:[%s10 + $0x28] sm:$0xff]
  %v4257 = vld [vmem:[%s10 + $0x30] sm:$0xff]
  %v4258 = vld [vmem:[%s10 + $0x38] sm:$0xff]
  %v4259 = vld [vmem:[%s10 + $0x40] sm:$0xff]
  %v4260 = vld [vmem:[%s10 + $0x48] sm:$0xff]
  %v4261 = vld [vmem:[%s10 + $0x50] sm:$0xff]
  %v4262 = vld [vmem:[%s10 + $0x58] sm:$0xff]
  %v4263 = vld [vmem:[%s10 + $0x60] sm:$0xff]
  %v4264 = vld [vmem:[%s10 + $0x68] sm:$0xff]
  %v4265 = vld [vmem:[%s10 + $0x70] sm:$0xff]
  %v4266 = vld [vmem:[%s10 + $0x78] sm:$0xff]
  %v4267 = vld [vmem:[%s10 + $0x80] sm:$0xff]
  %v4268 = vld [vmem:[%s10 + $0x88] sm:$0xff]
  %v4269 = vld [vmem:[%s10 + $0x90] sm:$0xff]
  %v4270 = vld [vmem:[%s10 + $0x98] sm:$0xff]
  %v4271 = vld [vmem:[%s10 + $0xa0] sm:$0xff]
  %v4272 = vld [vmem:[%s10 + $0xa8] sm:$0xff]
  %v4273 = vld [vmem:[%s10 + $0xb0] sm:$0xff]
  %v4274 = vld [vmem:[%s10 + $0xb8] sm:$0xff]
  %v4275 = vld [vmem:[%s10 + $0xc0] sm:$0xff]
  %v4276 = vld [vmem:[%s10 + $0xc8] sm:$0xff]
  %v4277 = vld [vmem:[%s10 + $0xd0] sm:$0xff]
  %v4278 = vld [vmem:[%s10 + $0xd8] sm:$0xff]
  %v4279 = vld [vmem:[%s10 + $0xe0] sm:$0xff]
  %v4280 = vld [vmem:[%s10 + $0xe8] sm:$0xff]
  %v4281 = vld [vmem:[%s10 + $0xf0] sm:$0xff]
  %v4282 = vld [vmem:[%s10 + $0xf8] sm:$0xff]
  %v4315 = vunpack.c.l.b16 %v4251
  %v4316 = vunpack.c.h.b16 %v4251
  %v4317 = vunpack.c.l.b16 %v4252
  %v4318 = vunpack.c.h.b16 %v4252
  %v4319 = vunpack.c.l.b16 %v4253
  %v4320 = vunpack.c.h.b16 %v4253
  %v4321 = vunpack.c.l.b16 %v4254
  %v4322 = vunpack.c.h.b16 %v4254
  %v4323 = vunpack.c.l.b16 %v4255
  %v4324 = vunpack.c.h.b16 %v4255
  %v4325 = vunpack.c.l.b16 %v4256
  %v4326 = vunpack.c.h.b16 %v4256
  %v4327 = vunpack.c.l.b16 %v4257
  %v4328 = vunpack.c.h.b16 %v4257
  %v4329 = vunpack.c.l.b16 %v4258
  %v4330 = vunpack.c.h.b16 %v4258
  %v4331 = vunpack.c.l.b16 %v4259
  %v4332 = vunpack.c.h.b16 %v4259
  %v4333 = vunpack.c.l.b16 %v4260
  %v4334 = vunpack.c.h.b16 %v4260
  %v4335 = vunpack.c.l.b16 %v4261
  %v4336 = vunpack.c.h.b16 %v4261
  %v4337 = vunpack.c.l.b16 %v4262
  %v4338 = vunpack.c.h.b16 %v4262
  %v4339 = vunpack.c.l.b16 %v4263
  %v4340 = vunpack.c.h.b16 %v4263
  %v4341 = vunpack.c.l.b16 %v4264
  %v4342 = vunpack.c.h.b16 %v4264
  %v4343 = vunpack.c.l.b16 %v4265
  %v4344 = vunpack.c.h.b16 %v4265
  %v4345 = vunpack.c.l.b16 %v4266
  %v4346 = vunpack.c.h.b16 %v4266
  %v4347 = vunpack.c.l.b16 %v4267
  %v4348 = vunpack.c.h.b16 %v4267
  %v4349 = vunpack.c.l.b16 %v4268
  %v4350 = vunpack.c.h.b16 %v4268
  %v4351 = vunpack.c.l.b16 %v4269
  %v4352 = vunpack.c.h.b16 %v4269
  %v4353 = vunpack.c.l.b16 %v4270
  %v4354 = vunpack.c.h.b16 %v4270
  %v4355 = vunpack.c.l.b16 %v4271
  %v4356 = vunpack.c.h.b16 %v4271
  %v4357 = vunpack.c.l.b16 %v4272
  %v4358 = vunpack.c.h.b16 %v4272
  %v4359 = vunpack.c.l.b16 %v4273
  %v4360 = vunpack.c.h.b16 %v4273
  %v4361 = vunpack.c.l.b16 %v4274
  %v4362 = vunpack.c.h.b16 %v4274
  %v4363 = vunpack.c.l.b16 %v4275
  %v4364 = vunpack.c.h.b16 %v4275
  %v4365 = vunpack.c.l.b16 %v4276
  %v4366 = vunpack.c.h.b16 %v4276
  %v4367 = vunpack.c.l.b16 %v4277
  %v4368 = vunpack.c.h.b16 %v4277
  %v4369 = vunpack.c.l.b16 %v4278
  %v4370 = vunpack.c.h.b16 %v4278
  %v4371 = vunpack.c.l.b16 %v4279
  %v4372 = vunpack.c.h.b16 %v4279
  %v4373 = vunpack.c.l.b16 %v4280
  %v4374 = vunpack.c.h.b16 %v4280
  %v4375 = vunpack.c.l.b16 %v4281
  %v4376 = vunpack.c.h.b16 %v4281
  %v4377 = vunpack.c.l.b16 %v4282
  %v4378 = vunpack.c.h.b16 %v4282
  %v4379 = vpack.c.b16 %v4319, %v4315
  %v4380 = vpack.c.b16 %v4320, %v4316
  %v4381 = vpack.c.b16 %v4321, %v4317
  %v4382 = vpack.c.b16 %v4322, %v4318
  %v4383 = vpack.c.b16 %v4327, %v4323
  %v4384 = vpack.c.b16 %v4328, %v4324
  %v4385 = vpack.c.b16 %v4329, %v4325
  %v4386 = vpack.c.b16 %v4330, %v4326
  %v4387 = vpack.c.b16 %v4335, %v4331
  %v4388 = vpack.c.b16 %v4336, %v4332
  %v4389 = vpack.c.b16 %v4337, %v4333
  %v4390 = vpack.c.b16 %v4338, %v4334
  %v4391 = vpack.c.b16 %v4343, %v4339
  %v4392 = vpack.c.b16 %v4344, %v4340
  %v4393 = vpack.c.b16 %v4345, %v4341
  %v4394 = vpack.c.b16 %v4346, %v4342
  %v4395 = vpack.c.b16 %v4351, %v4347
  %v4396 = vpack.c.b16 %v4352, %v4348
  %v4397 = vpack.c.b16 %v4353, %v4349
  %v4398 = vpack.c.b16 %v4354, %v4350
  %v4399 = vpack.c.b16 %v4359, %v4355
  %v4400 = vpack.c.b16 %v4360, %v4356
  %v4401 = vpack.c.b16 %v4361, %v4357
  %v4402 = vpack.c.b16 %v4362, %v4358
  %v4403 = vpack.c.b16 %v4367, %v4363
  %v4404 = vpack.c.b16 %v4368, %v4364
  %v4405 = vpack.c.b16 %v4369, %v4365
  %v4406 = vpack.c.b16 %v4370, %v4366
  %v4407 = vpack.c.b16 %v4375, %v4371
  %v4408 = vpack.c.b16 %v4376, %v4372
  %v4409 = vpack.c.b16 %v4377, %v4373
  %v4410 = vpack.c.b16 %v4378, %v4374
  %4443 = vmatprep.subr.bf16.mxu0 %v4408
  %4444 = vmatpush1.bf16.msra.mxu0 %v4407
  %4445 = vmatprep.subr.bf16.mxu0 %v4404
  %4446 = vmatpush1.bf16.msra.mxu0 %v4403
  %4447 = vmatprep.subr.bf16.mxu0 %v4400
  %4448 = vmatpush1.bf16.msra.mxu0 %v4399
  %4449 = vmatprep.subr.bf16.mxu0 %v4396
  %4450 = vmatpush1.bf16.msra.mxu0 %v4395
  %4451 = vmatprep.subr.bf16.mxu0 %v4392
  %4452 = vmatpush1.bf16.msra.mxu0 %v4391
  %4453 = vmatprep.subr.bf16.mxu0 %v4388
  %4454 = vmatpush1.bf16.msra.mxu0 %v4387
  %4455 = vmatprep.subr.bf16.mxu0 %v4384
  %4456 = vmatpush1.bf16.msra.mxu0 %v4383
  %4457 = vmatprep.subr.bf16.mxu0 %v4380
  %4458 = vmatpush1.bf16.msra.mxu0 %v4379
  %4459 = vmatprep.subr.bf16.mxu0 0
  %4460 = vmatpush2.bf16.msra.mxu0 0
  %4461 = vmatprep.subr.bf16.mxu0 0
  %4462 = vmatpush2.bf16.msra.mxu0 0
  %4463 = vmatprep.subr.bf16.mxu0 0
  %4464 = vmatpush2.bf16.msra.mxu0 0
  %4465 = vmatprep.subr.bf16.mxu0 0
  %4466 = vmatpush2.bf16.msra.mxu0 0
  %4467 = vmatprep.subr.bf16.mxu0 0
  %4468 = vmatpush2.bf16.msra.mxu0 0
  %4469 = vmatprep.subr.bf16.mxu0 0
  %4470 = vmatpush2.bf16.msra.mxu0 0
  %4471 = vmatprep.subr.bf16.mxu0 0
  %4472 = vmatpush2.bf16.msra.mxu0 0
  %4473 = vmatprep.subr.bf16.mxu0 0
  %4474 = vmatpush2.bf16.msra.mxu0 0
  %4475 = vmatprep.mubr.bf16.mxu0 0
  %4476 = vmatmul.mubr.bf16.gmra.mxu0 %v3453
  %v4477 = vpop.f32.mrf.mxu0
  %v4478 = vadd.f32 0.0, %v4477
  %v4479 = vpop.f32.mrf.mxu0
  %v4480 = vadd.f32 0.0, %v4479
  %v4481 = vpop.f32.mrf.mxu0
  %v4482 = vadd.f32 0.0, %v4481
  %v4483 = vpop.f32.mrf.mxu0
  %v4484 = vadd.f32 0.0, %v4483
  %4485 = vmatprep.mubr.bf16.mxu0 0
  %4486 = vmatmul.mubr.bf16.gmra.mxu0 %v3454
  %v4487 = vpop.f32.mrf.mxu0
  %v4488 = vadd.f32 0.0, %v4487
  %v4489 = vpop.f32.mrf.mxu0
  %v4490 = vadd.f32 0.0, %v4489
  %v4491 = vpop.f32.mrf.mxu0
  %v4492 = vadd.f32 0.0, %v4491
  %v4493 = vpop.f32.mrf.mxu0
  %v4494 = vadd.f32 0.0, %v4493
  %4495 = vmatprep.mubr.bf16.mxu0 0
  %4496 = vmatmul.mubr.bf16.gmra.mxu0 %v3455
  %v4497 = vpop.f32.mrf.mxu0
  %v4498 = vadd.f32 0.0, %v4497
  %v4499 = vpop.f32.mrf.mxu0
  %v4500 = vadd.f32 0.0, %v4499
  %v4501 = vpop.f32.mrf.mxu0
  %v4502 = vadd.f32 0.0, %v4501
  %v4503 = vpop.f32.mrf.mxu0
  %v4504 = vadd.f32 0.0, %v4503
  %4505 = vmatprep.mubr.bf16.mxu0 0
  %4506 = vmatmul.mubr.bf16.gmra.mxu0 %v3456
  %v4507 = vpop.f32.mrf.mxu0
  %v4508 = vadd.f32 0.0, %v4507
  %v4509 = vpop.f32.mrf.mxu0
  %v4510 = vadd.f32 0.0, %v4509
  %v4511 = vpop.f32.mrf.mxu0
  %v4512 = vadd.f32 0.0, %v4511
  %v4513 = vpop.f32.mrf.mxu0
  %v4514 = vadd.f32 0.0, %v4513
  %4515 = vdwg.mxu0
  %4516 = vmatprep.subr.bf16.mxu0 %v4410
  %4517 = vmatpush1.bf16.msra.mxu0 %v4409
  %4518 = vmatprep.subr.bf16.mxu0 %v4406
  %4519 = vmatpush1.bf16.msra.mxu0 %v4405
  %4520 = vmatprep.subr.bf16.mxu0 %v4402
  %4521 = vmatpush1.bf16.msra.mxu0 %v4401
  %4522 = vmatprep.subr.bf16.mxu0 %v4398
  %4523 = vmatpush1.bf16.msra.mxu0 %v4397
  %4524 = vmatprep.subr.bf16.mxu0 %v4394
  %4525 = vmatpush1.bf16.msra.mxu0 %v4393
  %4526 = vmatprep.subr.bf16.mxu0 %v4390
  %4527 = vmatpush1.bf16.msra.mxu0 %v4389
  %4528 = vmatprep.subr.bf16.mxu0 %v4386
  %4529 = vmatpush1.bf16.msra.mxu0 %v4385
  %4530 = vmatprep.subr.bf16.mxu0 %v4382
  %4531 = vmatpush1.bf16.msra.mxu0 %v4381
  %4532 = vmatprep.subr.bf16.mxu0 0
  %4533 = vmatpush2.bf16.msra.mxu0 0
  %4534 = vmatprep.subr.bf16.mxu0 0
  %4535 = vmatpush2.bf16.msra.mxu0 0
  %4536 = vmatprep.subr.bf16.mxu0 0
  %4537 = vmatpush2.bf16.msra.mxu0 0
  %4538 = vmatprep.subr.bf16.mxu0 0
  %4539 = vmatpush2.bf16.msra.mxu0 0
  %4540 = vmatprep.subr.bf16.mxu0 0
  %4541 = vmatpush2.bf16.msra.mxu0 0
  %4542 = vmatprep.subr.bf16.mxu0 0
  %4543 = vmatpush2.bf16.msra.mxu0 0
  %4544 = vmatprep.subr.bf16.mxu0 0
  %4545 = vmatpush2.bf16.msra.mxu0 0
  %4546 = vmatprep.subr.bf16.mxu0 0
  %4547 = vmatpush2.bf16.msra.mxu0 0
  %4548 = vmatprep.mubr.bf16.mxu0 0
  %4549 = vmatmul.mubr.bf16.gmra.mxu0 %v3453
  %v4550 = vpop.f32.mrf.mxu0
  %v4551 = vadd.f32 0.0, %v4550
  %v4552 = vpop.f32.mrf.mxu0
  %v4553 = vadd.f32 0.0, %v4552
  %v4554 = vpop.f32.mrf.mxu0
  %v4555 = vadd.f32 0.0, %v4554
  %v4556 = vpop.f32.mrf.mxu0
  %v4557 = vadd.f32 0.0, %v4556
  %4558 = vmatprep.mubr.bf16.mxu0 0
  %4559 = vmatmul.mubr.bf16.gmra.mxu0 %v3454
  %v4560 = vpop.f32.mrf.mxu0
  %v4561 = vadd.f32 0.0, %v4560
  %v4562 = vpop.f32.mrf.mxu0
  %v4563 = vadd.f32 0.0, %v4562
  %v4564 = vpop.f32.mrf.mxu0
  %v4565 = vadd.f32 0.0, %v4564
  %v4566 = vpop.f32.mrf.mxu0
  %v4567 = vadd.f32 0.0, %v4566
  %4568 = vmatprep.mubr.bf16.mxu0 0
  %4569 = vmatmul.mubr.bf16.gmra.mxu0 %v3455
  %v4570 = vpop.f32.mrf.mxu0
  %v4571 = vadd.f32 0.0, %v4570
  %v4572 = vpop.f32.mrf.mxu0
  %v4573 = vadd.f32 0.0, %v4572
  %v4574 = vpop.f32.mrf.mxu0
  %v4575 = vadd.f32 0.0, %v4574
  %v4576 = vpop.f32.mrf.mxu0
  %v4577 = vadd.f32 0.0, %v4576
  %4578 = vmatprep.mubr.bf16.mxu0 0
  %4579 = vmatmul.mubr.bf16.gmra.mxu0 %v3456
  %v4580 = vpop.f32.mrf.mxu0
  %v4581 = vadd.f32 0.0, %v4580
  %v4582 = vpop.f32.mrf.mxu0
  %v4583 = vadd.f32 0.0, %v4582
  %v4584 = vpop.f32.mrf.mxu0
  %v4585 = vadd.f32 0.0, %v4584
  %v4586 = vpop.f32.mrf.mxu0
  %v4587 = vadd.f32 0.0, %v4586
  %4588 = vdwg.mxu0
  %v4621 = vunpack.c.l.b16 %v4219
  %v4622 = vunpack.c.h.b16 %v4219
  %v4623 = vunpack.c.l.b16 %v4220
  %v4624 = vunpack.c.h.b16 %v4220
  %v4625 = vunpack.c.l.b16 %v4221
  %v4626 = vunpack.c.h.b16 %v4221
  %v4627 = vunpack.c.l.b16 %v4222
  %v4628 = vunpack.c.h.b16 %v4222
  %v4629 = vunpack.c.l.b16 %v4223
  %v4630 = vunpack.c.h.b16 %v4223
  %v4631 = vunpack.c.l.b16 %v4224
  %v4632 = vunpack.c.h.b16 %v4224
  %v4633 = vunpack.c.l.b16 %v4225
  %v4634 = vunpack.c.h.b16 %v4225
  %v4635 = vunpack.c.l.b16 %v4226
  %v4636 = vunpack.c.h.b16 %v4226
  %v4637 = vunpack.c.l.b16 %v4227
  %v4638 = vunpack.c.h.b16 %v4227
  %v4639 = vunpack.c.l.b16 %v4228
  %v4640 = vunpack.c.h.b16 %v4228
  %v4641 = vunpack.c.l.b16 %v4229
  %v4642 = vunpack.c.h.b16 %v4229
  %v4643 = vunpack.c.l.b16 %v4230
  %v4644 = vunpack.c.h.b16 %v4230
  %v4645 = vunpack.c.l.b16 %v4231
  %v4646 = vunpack.c.h.b16 %v4231
  %v4647 = vunpack.c.l.b16 %v4232
  %v4648 = vunpack.c.h.b16 %v4232
  %v4649 = vunpack.c.l.b16 %v4233
  %v4650 = vunpack.c.h.b16 %v4233
  %v4651 = vunpack.c.l.b16 %v4234
  %v4652 = vunpack.c.h.b16 %v4234
  %v4653 = vunpack.c.l.b16 %v4235
  %v4654 = vunpack.c.h.b16 %v4235
  %v4655 = vunpack.c.l.b16 %v4236
  %v4656 = vunpack.c.h.b16 %v4236
  %v4657 = vunpack.c.l.b16 %v4237
  %v4658 = vunpack.c.h.b16 %v4237
  %v4659 = vunpack.c.l.b16 %v4238
  %v4660 = vunpack.c.h.b16 %v4238
  %v4661 = vunpack.c.l.b16 %v4239
  %v4662 = vunpack.c.h.b16 %v4239
  %v4663 = vunpack.c.l.b16 %v4240
  %v4664 = vunpack.c.h.b16 %v4240
  %v4665 = vunpack.c.l.b16 %v4241
  %v4666 = vunpack.c.h.b16 %v4241
  %v4667 = vunpack.c.l.b16 %v4242
  %v4668 = vunpack.c.h.b16 %v4242
  %v4669 = vunpack.c.l.b16 %v4243
  %v4670 = vunpack.c.h.b16 %v4243
  %v4671 = vunpack.c.l.b16 %v4244
  %v4672 = vunpack.c.h.b16 %v4244
  %v4673 = vunpack.c.l.b16 %v4245
  %v4674 = vunpack.c.h.b16 %v4245
  %v4675 = vunpack.c.l.b16 %v4246
  %v4676 = vunpack.c.h.b16 %v4246
  %v4677 = vunpack.c.l.b16 %v4247
  %v4678 = vunpack.c.h.b16 %v4247
  %v4679 = vunpack.c.l.b16 %v4248
  %v4680 = vunpack.c.h.b16 %v4248
  %v4681 = vunpack.c.l.b16 %v4249
  %v4682 = vunpack.c.h.b16 %v4249
  %v4683 = vunpack.c.l.b16 %v4250
  %v4684 = vunpack.c.h.b16 %v4250
  %v4685 = vpack.c.b16 %v4625, %v4621
  %v4686 = vpack.c.b16 %v4626, %v4622
  %v4687 = vpack.c.b16 %v4627, %v4623
  %v4688 = vpack.c.b16 %v4628, %v4624
  %v4689 = vpack.c.b16 %v4633, %v4629
  %v4690 = vpack.c.b16 %v4634, %v4630
  %v4691 = vpack.c.b16 %v4635, %v4631
  %v4692 = vpack.c.b16 %v4636, %v4632
  %v4693 = vpack.c.b16 %v4641, %v4637
  %v4694 = vpack.c.b16 %v4642, %v4638
  %v4695 = vpack.c.b16 %v4643, %v4639
  %v4696 = vpack.c.b16 %v4644, %v4640
  %v4697 = vpack.c.b16 %v4649, %v4645
  %v4698 = vpack.c.b16 %v4650, %v4646
  %v4699 = vpack.c.b16 %v4651, %v4647
  %v4700 = vpack.c.b16 %v4652, %v4648
  %v4701 = vpack.c.b16 %v4657, %v4653
  %v4702 = vpack.c.b16 %v4658, %v4654
  %v4703 = vpack.c.b16 %v4659, %v4655
  %v4704 = vpack.c.b16 %v4660, %v4656
  %v4705 = vpack.c.b16 %v4665, %v4661
  %v4706 = vpack.c.b16 %v4666, %v4662
  %v4707 = vpack.c.b16 %v4667, %v4663
  %v4708 = vpack.c.b16 %v4668, %v4664
  %v4709 = vpack.c.b16 %v4673, %v4669
  %v4710 = vpack.c.b16 %v4674, %v4670
  %v4711 = vpack.c.b16 %v4675, %v4671
  %v4712 = vpack.c.b16 %v4676, %v4672
  %v4713 = vpack.c.b16 %v4681, %v4677
  %v4714 = vpack.c.b16 %v4682, %v4678
  %v4715 = vpack.c.b16 %v4683, %v4679
  %v4716 = vpack.c.b16 %v4684, %v4680
  %4749 = vmatprep.subr.bf16.mxu0 %v4714
  %4750 = vmatpush1.bf16.msra.mxu0 %v4713
  %4751 = vmatprep.subr.bf16.mxu0 %v4710
  %4752 = vmatpush1.bf16.msra.mxu0 %v4709
  %4753 = vmatprep.subr.bf16.mxu0 %v4706
  %4754 = vmatpush1.bf16.msra.mxu0 %v4705
  %4755 = vmatprep.subr.bf16.mxu0 %v4702
  %4756 = vmatpush1.bf16.msra.mxu0 %v4701
  %4757 = vmatprep.subr.bf16.mxu0 %v4698
  %4758 = vmatpush1.bf16.msra.mxu0 %v4697
  %4759 = vmatprep.subr.bf16.mxu0 %v4694
  %4760 = vmatpush1.bf16.msra.mxu0 %v4693
  %4761 = vmatprep.subr.bf16.mxu0 %v4690
  %4762 = vmatpush1.bf16.msra.mxu0 %v4689
  %4763 = vmatprep.subr.bf16.mxu0 %v4686
  %4764 = vmatpush1.bf16.msra.mxu0 %v4685
  %4765 = vmatprep.subr.bf16.mxu0 0
  %4766 = vmatpush2.bf16.msra.mxu0 0
  %4767 = vmatprep.subr.bf16.mxu0 0
  %4768 = vmatpush2.bf16.msra.mxu0 0
  %4769 = vmatprep.subr.bf16.mxu0 0
  %4770 = vmatpush2.bf16.msra.mxu0 0
  %4771 = vmatprep.subr.bf16.mxu0 0
  %4772 = vmatpush2.bf16.msra.mxu0 0
  %4773 = vmatprep.subr.bf16.mxu0 0
  %4774 = vmatpush2.bf16.msra.mxu0 0
  %4775 = vmatprep.subr.bf16.mxu0 0
  %4776 = vmatpush2.bf16.msra.mxu0 0
  %4777 = vmatprep.subr.bf16.mxu0 0
  %4778 = vmatpush2.bf16.msra.mxu0 0
  %4779 = vmatprep.subr.bf16.mxu0 0
  %4780 = vmatpush2.bf16.msra.mxu0 0
  %4781 = vmatprep.mubr.bf16.mxu0 0
  %4782 = vmatmul.mubr.bf16.gmra.mxu0 %v3441
  %v4783 = vpop.f32.mrf.mxu0
  %v4784 = vadd.f32 %v4478, %v4783
  %v4785 = vpop.f32.mrf.mxu0
  %v4786 = vadd.f32 %v4480, %v4785
  %v4787 = vpop.f32.mrf.mxu0
  %v4788 = vadd.f32 %v4482, %v4787
  %v4789 = vpop.f32.mrf.mxu0
  %v4790 = vadd.f32 %v4484, %v4789
  %4791 = vmatprep.mubr.bf16.mxu0 0
  %4792 = vmatmul.mubr.bf16.gmra.mxu0 %v3442
  %v4793 = vpop.f32.mrf.mxu0
  %v4794 = vadd.f32 %v4488, %v4793
  %v4795 = vpop.f32.mrf.mxu0
  %v4796 = vadd.f32 %v4490, %v4795
  %v4797 = vpop.f32.mrf.mxu0
  %v4798 = vadd.f32 %v4492, %v4797
  %v4799 = vpop.f32.mrf.mxu0
  %v4800 = vadd.f32 %v4494, %v4799
  %4801 = vmatprep.mubr.bf16.mxu0 0
  %4802 = vmatmul.mubr.bf16.gmra.mxu0 %v3443
  %v4803 = vpop.f32.mrf.mxu0
  %v4804 = vadd.f32 %v4498, %v4803
  %v4805 = vpop.f32.mrf.mxu0
  %v4806 = vadd.f32 %v4500, %v4805
  %v4807 = vpop.f32.mrf.mxu0
  %v4808 = vadd.f32 %v4502, %v4807
  %v4809 = vpop.f32.mrf.mxu0
  %v4810 = vadd.f32 %v4504, %v4809
  %4811 = vmatprep.mubr.bf16.mxu0 0
  %4812 = vmatmul.mubr.bf16.gmra.mxu0 %v3444
  %v4813 = vpop.f32.mrf.mxu0
  %v4814 = vadd.f32 %v4508, %v4813
  %v4815 = vpop.f32.mrf.mxu0
  %v4816 = vadd.f32 %v4510, %v4815
  %v4817 = vpop.f32.mrf.mxu0
  %v4818 = vadd.f32 %v4512, %v4817
  %v4819 = vpop.f32.mrf.mxu0
  %v4820 = vadd.f32 %v4514, %v4819
  %4821 = vdwg.mxu0
  %4822 = vmatprep.subr.bf16.mxu0 %v4716
  %4823 = vmatpush1.bf16.msra.mxu0 %v4715
  %4824 = vmatprep.subr.bf16.mxu0 %v4712
  %4825 = vmatpush1.bf16.msra.mxu0 %v4711
  %4826 = vmatprep.subr.bf16.mxu0 %v4708
  %4827 = vmatpush1.bf16.msra.mxu0 %v4707
  %4828 = vmatprep.subr.bf16.mxu0 %v4704
  %4829 = vmatpush1.bf16.msra.mxu0 %v4703
  %4830 = vmatprep.subr.bf16.mxu0 %v4700
  %4831 = vmatpush1.bf16.msra.mxu0 %v4699
  %4832 = vmatprep.subr.bf16.mxu0 %v4696
  %4833 = vmatpush1.bf16.msra.mxu0 %v4695
  %4834 = vmatprep.subr.bf16.mxu0 %v4692
  %4835 = vmatpush1.bf16.msra.mxu0 %v4691
  %4836 = vmatprep.subr.bf16.mxu0 %v4688
  %4837 = vmatpush1.bf16.msra.mxu0 %v4687
  %4838 = vmatprep.subr.bf16.mxu0 0
  %4839 = vmatpush2.bf16.msra.mxu0 0
  %4840 = vmatprep.subr.bf16.mxu0 0
  %4841 = vmatpush2.bf16.msra.mxu0 0
  %4842 = vmatprep.subr.bf16.mxu0 0
  %4843 = vmatpush2.bf16.msra.mxu0 0
  %4844 = vmatprep.subr.bf16.mxu0 0
  %4845 = vmatpush2.bf16.msra.mxu0 0
  %4846 = vmatprep.subr.bf16.mxu0 0
  %4847 = vmatpush2.bf16.msra.mxu0 0
  %4848 = vmatprep.subr.bf16.mxu0 0
  %4849 = vmatpush2.bf16.msra.mxu0 0
  %4850 = vmatprep.subr.bf16.mxu0 0
  %4851 = vmatpush2.bf16.msra.mxu0 0
  %4852 = vmatprep.subr.bf16.mxu0 0
  %4853 = vmatpush2.bf16.msra.mxu0 0
  %4854 = vmatprep.mubr.bf16.mxu0 0
  %4855 = vmatmul.mubr.bf16.gmra.mxu0 %v3441
  %v4856 = vpop.f32.mrf.mxu0
  %v4857 = vadd.f32 %v4551, %v4856
  %v4858 = vpop.f32.mrf.mxu0
  %v4859 = vadd.f32 %v4553, %v4858
  %v4860 = vpop.f32.mrf.mxu0
  %v4861 = vadd.f32 %v4555, %v4860
  %v4862 = vpop.f32.mrf.mxu0
  %v4863 = vadd.f32 %v4557, %v4862
  %4864 = vmatprep.mubr.bf16.mxu0 0
  %4865 = vmatmul.mubr.bf16.gmra.mxu0 %v3442
  %v4866 = vpop.f32.mrf.mxu0
  %v4867 = vadd.f32 %v4561, %v4866
  %v4868 = vpop.f32.mrf.mxu0
  %v4869 = vadd.f32 %v4563, %v4868
  %v4870 = vpop.f32.mrf.mxu0
  %v4871 = vadd.f32 %v4565, %v4870
  %v4872 = vpop.f32.mrf.mxu0
  %v4873 = vadd.f32 %v4567, %v4872
  %4874 = vmatprep.mubr.bf16.mxu0 0
  %4875 = vmatmul.mubr.bf16.gmra.mxu0 %v3443
  %v4876 = vpop.f32.mrf.mxu0
  %v4877 = vadd.f32 %v4571, %v4876
  %v4878 = vpop.f32.mrf.mxu0
  %v4879 = vadd.f32 %v4573, %v4878
  %v4880 = vpop.f32.mrf.mxu0
  %v4881 = vadd.f32 %v4575, %v4880
  %v4882 = vpop.f32.mrf.mxu0
  %v4883 = vadd.f32 %v4577, %v4882
  %4884 = vmatprep.mubr.bf16.mxu0 0
  %4885 = vmatmul.mubr.bf16.gmra.mxu0 %v3444
  %v4886 = vpop.f32.mrf.mxu0
  %v4887 = vadd.f32 %v4581, %v4886
  %v4888 = vpop.f32.mrf.mxu0
  %v4889 = vadd.f32 %v4583, %v4888
  %v4890 = vpop.f32.mrf.mxu0
  %v4891 = vadd.f32 %v4585, %v4890
  %v4892 = vpop.f32.mrf.mxu0
  %v4893 = vadd.f32 %v4587, %v4892
  %4894 = vdwg.mxu0
  %v4895 = vld [vmem:[%s11] sm:$0xf]
  %v4897 = vlaneseq
  %v4898 = vshrl.u32 %v4897, 7
  %v4899 = vsub.s32 0, %v4898
  %v4900 = vrot.slane %v4895, %v4899
  %v4901 = vlaneseq
  %v4902 = vshrl.u32 %v4901, 7
  %v4903 = vsub.s32 1, %v4902
  %v4904 = vrot.slane %v4895, %v4903
  %v4905 = vlaneseq
  %v4906 = vshrl.u32 %v4905, 7
  %v4907 = vsub.s32 2, %v4906
  %v4908 = vrot.slane %v4895, %v4907
  %v4909 = vlaneseq
  %v4910 = vshrl.u32 %v4909, 7
  %v4911 = vsub.s32 3, %v4910
  %v4912 = vrot.slane %v4895, %v4911
  %v4917 = vadd.f32 %v4784, %v4900
  %v4918 = vadd.f32 %v4786, %v4904
  %v4919 = vadd.f32 %v4857, %v4908
  %v4920 = vadd.f32 %v4859, %v4912
  %v4921 = vadd.f32 %v4788, %v4900
  %v4922 = vadd.f32 %v4790, %v4904
  %v4923 = vadd.f32 %v4861, %v4908
  %v4924 = vadd.f32 %v4863, %v4912
  %v4925 = vadd.f32 %v4794, %v4900
  %v4926 = vadd.f32 %v4796, %v4904
  %v4927 = vadd.f32 %v4867, %v4908
  %v4928 = vadd.f32 %v4869, %v4912
  %v4929 = vadd.f32 %v4798, %v4900
  %v4930 = vadd.f32 %v4800, %v4904
  %v4931 = vadd.f32 %v4871, %v4908
  %v4932 = vadd.f32 %v4873, %v4912
  %v4933 = vadd.f32 %v4804, %v4900
  %v4934 = vadd.f32 %v4806, %v4904
  %v4935 = vadd.f32 %v4877, %v4908
  %v4936 = vadd.f32 %v4879, %v4912
  %v4937 = vadd.f32 %v4808, %v4900
  %v4938 = vadd.f32 %v4810, %v4904
  %v4939 = vadd.f32 %v4881, %v4908
  %v4940 = vadd.f32 %v4883, %v4912
  %v4941 = vadd.f32 %v4814, %v4900
  %v4942 = vadd.f32 %v4816, %v4904
  %v4943 = vadd.f32 %v4887, %v4908
  %v4944 = vadd.f32 %v4889, %v4912
  %v4945 = vadd.f32 %v4818, %v4900
  %v4946 = vadd.f32 %v4820, %v4904
  %v4947 = vadd.f32 %v4891, %v4908
  %v4948 = vadd.f32 %v4893, %v4912
  %4949 = vst [vmem:[#allocation5] sm:$0xff] %v4917
  %4950 = vst [vmem:[#allocation5 + $0x8] sm:$0xff] %v4918
  %4951 = vst [vmem:[#allocation5 + $0x10] sm:$0xff] %v4919
  %4952 = vst [vmem:[#allocation5 + $0x18] sm:$0xff] %v4920
  %4953 = vst [vmem:[#allocation5 + $0x20] sm:$0xff] %v4921
  %4954 = vst [vmem:[#allocation5 + $0x28] sm:$0xff] %v4922
  %4955 = vst [vmem:[#allocation5 + $0x30] sm:$0xff] %v4923
  %4956 = vst [vmem:[#allocation5 + $0x38] sm:$0xff] %v4924
  %4957 = vst [vmem:[#allocation5 + $0x40] sm:$0xff] %v4925
  %4958 = vst [vmem:[#allocation5 + $0x48] sm:$0xff] %v4926
  %4959 = vst [vmem:[#allocation5 + $0x50] sm:$0xff] %v4927
  %4960 = vst [vmem:[#allocation5 + $0x58] sm:$0xff] %v4928
  %4961 = vst [vmem:[#allocation5 + $0x60] sm:$0xff] %v4929
  %4962 = vst [vmem:[#allocation5 + $0x68] sm:$0xff] %v4930
  %4963 = vst [vmem:[#allocation5 + $0x70] sm:$0xff] %v4931
  %4964 = vst [vmem:[#allocation5 + $0x78] sm:$0xff] %v4932
  %4965 = vst [vmem:[#allocation5 + $0x80] sm:$0xff] %v4933
  %4966 = vst [vmem:[#allocation5 + $0x88] sm:$0xff] %v4934
  %4967 = vst [vmem:[#allocation5 + $0x90] sm:$0xff] %v4935
  %4968 = vst [vmem:[#allocation5 + $0x98] sm:$0xff] %v4936
  %4969 = vst [vmem:[#allocation5 + $0xa0] sm:$0xff] %v4937
  %4970 = vst [vmem:[#allocation5 + $0xa8] sm:$0xff] %v4938
  %4971 = vst [vmem:[#allocation5 + $0xb0] sm:$0xff] %v4939
  %4972 = vst [vmem:[#allocation5 + $0xb8] sm:$0xff] %v4940
  %4973 = vst [vmem:[#allocation5 + $0xc0] sm:$0xff] %v4941
  %4974 = vst [vmem:[#allocation5 + $0xc8] sm:$0xff] %v4942
  %4975 = vst [vmem:[#allocation5 + $0xd0] sm:$0xff] %v4943
  %4976 = vst [vmem:[#allocation5 + $0xd8] sm:$0xff] %v4944
  %4977 = vst [vmem:[#allocation5 + $0xe0] sm:$0xff] %v4945
  %4978 = vst [vmem:[#allocation5 + $0xe8] sm:$0xff] %v4946
  %4979 = vst [vmem:[#allocation5 + $0xf0] sm:$0xff] %v4947
  %4980 = vst [vmem:[#allocation5 + $0xf8] sm:$0xff] %v4948
  %v4981 = vld [vmem:[#allocation3] sm:$0xff]
  %v4982 = vld [vmem:[#allocation3 + $0x8] sm:$0xff]
  %v4983 = vld [vmem:[#allocation3 + $0x10] sm:$0xff]
  %v4984 = vld [vmem:[#allocation3 + $0x18] sm:$0xff]
  %s4985 = scalar_lea.vmem [#allocation5], 224
  %v4986 = vld [vmem:[%s4985] sm:$0xff]
  %v4987 = vld [vmem:[%s4985 + $0x8] sm:$0xff]
  %v4988 = vld [vmem:[%s4985 + $0x10] sm:$0xff]
  %v4989 = vld [vmem:[%s4985 + $0x18] sm:$0xff]
  %v4990 = vadd.f32 %v4981, %v4986
  %v4991 = vadd.f32 %v4982, %v4987
  %v4992 = vadd.f32 %v4983, %v4988
  %v4993 = vadd.f32 %v4984, %v4989
  %v4994 = vld [vmem:[%s12] sm:$0xff]
  %v4995 = vld [vmem:[%s12 + $0x8] sm:$0xff]
  %v4996 = vld [vmem:[%s12 + $0x10] sm:$0xff]
  %v4997 = vld [vmem:[%s12 + $0x18] sm:$0xff]
  %v4998 = vld [vmem:[%s12 + $0x20] sm:$0xff]
  %v4999 = vld [vmem:[%s12 + $0x28] sm:$0xff]
  %v5000 = vld [vmem:[%s12 + $0x30] sm:$0xff]
  %v5001 = vld [vmem:[%s12 + $0x38] sm:$0xff]
  %v5002 = vld [vmem:[%s12 + $0x40] sm:$0xff]
  %v5003 = vld [vmem:[%s12 + $0x48] sm:$0xff]
  %v5004 = vld [vmem:[%s12 + $0x50] sm:$0xff]
  %v5005 = vld [vmem:[%s12 + $0x58] sm:$0xff]
  %v5006 = vld [vmem:[%s12 + $0x60] sm:$0xff]
  %v5007 = vld [vmem:[%s12 + $0x68] sm:$0xff]
  %v5008 = vld [vmem:[%s12 + $0x70] sm:$0xff]
  %v5009 = vld [vmem:[%s12 + $0x78] sm:$0xff]
  %v5010 = vld [vmem:[%s12 + $0x80] sm:$0xff]
  %v5011 = vld [vmem:[%s12 + $0x88] sm:$0xff]
  %v5012 = vld [vmem:[%s12 + $0x90] sm:$0xff]
  %v5013 = vld [vmem:[%s12 + $0x98] sm:$0xff]
  %v5014 = vld [vmem:[%s12 + $0xa0] sm:$0xff]
  %v5015 = vld [vmem:[%s12 + $0xa8] sm:$0xff]
  %v5016 = vld [vmem:[%s12 + $0xb0] sm:$0xff]
  %v5017 = vld [vmem:[%s12 + $0xb8] sm:$0xff]
  %v5018 = vld [vmem:[%s12 + $0xc0] sm:$0xff]
  %v5019 = vld [vmem:[%s12 + $0xc8] sm:$0xff]
  %v5020 = vld [vmem:[%s12 + $0xd0] sm:$0xff]
  %v5021 = vld [vmem:[%s12 + $0xd8] sm:$0xff]
  %v5022 = vld [vmem:[%s12 + $0xe0] sm:$0xff]
  %v5023 = vld [vmem:[%s12 + $0xe8] sm:$0xff]
  %v5024 = vld [vmem:[%s12 + $0xf0] sm:$0xff]
  %v5025 = vld [vmem:[%s12 + $0xf8] sm:$0xff]
  %v5058 = vunpack.c.l.b16 %v4994
  %v5059 = vunpack.c.h.b16 %v4994
  %v5060 = vunpack.c.l.b16 %v4995
  %v5061 = vunpack.c.h.b16 %v4995
  %v5062 = vunpack.c.l.b16 %v4996
  %v5063 = vunpack.c.h.b16 %v4996
  %v5064 = vunpack.c.l.b16 %v4997
  %v5065 = vunpack.c.h.b16 %v4997
  %v5066 = vunpack.c.l.b16 %v4998
  %v5067 = vunpack.c.h.b16 %v4998
  %v5068 = vunpack.c.l.b16 %v4999
  %v5069 = vunpack.c.h.b16 %v4999
  %v5070 = vunpack.c.l.b16 %v5000
  %v5071 = vunpack.c.h.b16 %v5000
  %v5072 = vunpack.c.l.b16 %v5001
  %v5073 = vunpack.c.h.b16 %v5001
  %v5074 = vunpack.c.l.b16 %v5002
  %v5075 = vunpack.c.h.b16 %v5002
  %v5076 = vunpack.c.l.b16 %v5003
  %v5077 = vunpack.c.h.b16 %v5003
  %v5078 = vunpack.c.l.b16 %v5004
  %v5079 = vunpack.c.h.b16 %v5004
  %v5080 = vunpack.c.l.b16 %v5005
  %v5081 = vunpack.c.h.b16 %v5005
  %v5082 = vunpack.c.l.b16 %v5006
  %v5083 = vunpack.c.h.b16 %v5006
  %v5084 = vunpack.c.l.b16 %v5007
  %v5085 = vunpack.c.h.b16 %v5007
  %v5086 = vunpack.c.l.b16 %v5008
  %v5087 = vunpack.c.h.b16 %v5008
  %v5088 = vunpack.c.l.b16 %v5009
  %v5089 = vunpack.c.h.b16 %v5009
  %v5090 = vunpack.c.l.b16 %v5010
  %v5091 = vunpack.c.h.b16 %v5010
  %v5092 = vunpack.c.l.b16 %v5011
  %v5093 = vunpack.c.h.b16 %v5011
  %v5094 = vunpack.c.l.b16 %v5012
  %v5095 = vunpack.c.h.b16 %v5012
  %v5096 = vunpack.c.l.b16 %v5013
  %v5097 = vunpack.c.h.b16 %v5013
  %v5098 = vunpack.c.l.b16 %v5014
  %v5099 = vunpack.c.h.b16 %v5014
  %v5100 = vunpack.c.l.b16 %v5015
  %v5101 = vunpack.c.h.b16 %v5015
  %v5102 = vunpack.c.l.b16 %v5016
  %v5103 = vunpack.c.h.b16 %v5016
  %v5104 = vunpack.c.l.b16 %v5017
  %v5105 = vunpack.c.h.b16 %v5017
  %v5106 = vunpack.c.l.b16 %v5018
  %v5107 = vunpack.c.h.b16 %v5018
  %v5108 = vunpack.c.l.b16 %v5019
  %v5109 = vunpack.c.h.b16 %v5019
  %v5110 = vunpack.c.l.b16 %v5020
  %v5111 = vunpack.c.h.b16 %v5020
  %v5112 = vunpack.c.l.b16 %v5021
  %v5113 = vunpack.c.h.b16 %v5021
  %v5114 = vunpack.c.l.b16 %v5022
  %v5115 = vunpack.c.h.b16 %v5022
  %v5116 = vunpack.c.l.b16 %v5023
  %v5117 = vunpack.c.h.b16 %v5023
  %v5118 = vunpack.c.l.b16 %v5024
  %v5119 = vunpack.c.h.b16 %v5024
  %v5120 = vunpack.c.l.b16 %v5025
  %v5121 = vunpack.c.h.b16 %v5025
  %v5122 = vpack.c.b16 %v5062, %v5058
  %v5123 = vpack.c.b16 %v5063, %v5059
  %v5124 = vpack.c.b16 %v5064, %v5060
  %v5125 = vpack.c.b16 %v5065, %v5061
  %v5126 = vpack.c.b16 %v5070, %v5066
  %v5127 = vpack.c.b16 %v5071, %v5067
  %v5128 = vpack.c.b16 %v5072, %v5068
  %v5129 = vpack.c.b16 %v5073, %v5069
  %v5130 = vpack.c.b16 %v5078, %v5074
  %v5131 = vpack.c.b16 %v5079, %v5075
  %v5132 = vpack.c.b16 %v5080, %v5076
  %v5133 = vpack.c.b16 %v5081, %v5077
  %v5134 = vpack.c.b16 %v5086, %v5082
  %v5135 = vpack.c.b16 %v5087, %v5083
  %v5136 = vpack.c.b16 %v5088, %v5084
  %v5137 = vpack.c.b16 %v5089, %v5085
  %v5138 = vpack.c.b16 %v5094, %v5090
  %v5139 = vpack.c.b16 %v5095, %v5091
  %v5140 = vpack.c.b16 %v5096, %v5092
  %v5141 = vpack.c.b16 %v5097, %v5093
  %v5142 = vpack.c.b16 %v5102, %v5098
  %v5143 = vpack.c.b16 %v5103, %v5099
  %v5144 = vpack.c.b16 %v5104, %v5100
  %v5145 = vpack.c.b16 %v5105, %v5101
  %v5146 = vpack.c.b16 %v5110, %v5106
  %v5147 = vpack.c.b16 %v5111, %v5107
  %v5148 = vpack.c.b16 %v5112, %v5108
  %v5149 = vpack.c.b16 %v5113, %v5109
  %v5150 = vpack.c.b16 %v5118, %v5114
  %v5151 = vpack.c.b16 %v5119, %v5115
  %v5152 = vpack.c.b16 %v5120, %v5116
  %v5153 = vpack.c.b16 %v5121, %v5117
  %5186 = vmatprep.subr.bf16.mxu0 %v5151
  %5187 = vmatpush1.bf16.msra.mxu0 %v5150
  %5188 = vmatprep.subr.bf16.mxu0 %v5147
  %5189 = vmatpush1.bf16.msra.mxu0 %v5146
  %5190 = vmatprep.subr.bf16.mxu0 %v5143
  %5191 = vmatpush1.bf16.msra.mxu0 %v5142
  %5192 = vmatprep.subr.bf16.mxu0 %v5139
  %5193 = vmatpush1.bf16.msra.mxu0 %v5138
  %5194 = vmatprep.subr.bf16.mxu0 %v5135
  %5195 = vmatpush1.bf16.msra.mxu0 %v5134
  %5196 = vmatprep.subr.bf16.mxu0 %v5131
  %5197 = vmatpush1.bf16.msra.mxu0 %v5130
  %5198 = vmatprep.subr.bf16.mxu0 %v5127
  %5199 = vmatpush1.bf16.msra.mxu0 %v5126
  %5200 = vmatprep.subr.bf16.mxu0 %v5123
  %5201 = vmatpush1.bf16.msra.mxu0 %v5122
  %5202 = vmatprep.subr.bf16.mxu0 0
  %5203 = vmatpush2.bf16.msra.mxu0 0
  %5204 = vmatprep.subr.bf16.mxu0 0
  %5205 = vmatpush2.bf16.msra.mxu0 0
  %5206 = vmatprep.subr.bf16.mxu0 0
  %5207 = vmatpush2.bf16.msra.mxu0 0
  %5208 = vmatprep.subr.bf16.mxu0 0
  %5209 = vmatpush2.bf16.msra.mxu0 0
  %5210 = vmatprep.subr.bf16.mxu0 0
  %5211 = vmatpush2.bf16.msra.mxu0 0
  %5212 = vmatprep.subr.bf16.mxu0 0
  %5213 = vmatpush2.bf16.msra.mxu0 0
  %5214 = vmatprep.subr.bf16.mxu0 0
  %5215 = vmatpush2.bf16.msra.mxu0 0
  %5216 = vmatprep.subr.bf16.mxu0 0
  %5217 = vmatpush2.bf16.msra.mxu0 0
  %5218 = vmatprep.mubr.bf16.mxu0 0
  %5219 = vmatmul.mubr.bf16.gmra.mxu0 0
  %v5220 = vpop.f32.mrf.mxu0
  %v5221 = vadd.f32 0.0, %v5220
  %v5222 = vpop.f32.mrf.mxu0
  %v5223 = vadd.f32 0.0, %v5222
  %v5224 = vpop.f32.mrf.mxu0
  %v5225 = vpop.f32.mrf.mxu0
  %5226 = vdwg.mxu0
  %5227 = vmatprep.subr.bf16.mxu0 %v5153
  %5228 = vmatpush1.bf16.msra.mxu0 %v5152
  %5229 = vmatprep.subr.bf16.mxu0 %v5149
  %5230 = vmatpush1.bf16.msra.mxu0 %v5148
  %5231 = vmatprep.subr.bf16.mxu0 %v5145
  %5232 = vmatpush1.bf16.msra.mxu0 %v5144
  %5233 = vmatprep.subr.bf16.mxu0 %v5141
  %5234 = vmatpush1.bf16.msra.mxu0 %v5140
  %5235 = vmatprep.subr.bf16.mxu0 %v5137
  %5236 = vmatpush1.bf16.msra.mxu0 %v5136
  %5237 = vmatprep.subr.bf16.mxu0 %v5133
  %5238 = vmatpush1.bf16.msra.mxu0 %v5132
  %5239 = vmatprep.subr.bf16.mxu0 %v5129
  %5240 = vmatpush1.bf16.msra.mxu0 %v5128
  %5241 = vmatprep.subr.bf16.mxu0 %v5125
  %5242 = vmatpush1.bf16.msra.mxu0 %v5124
  %5243 = vmatprep.subr.bf16.mxu0 0
  %5244 = vmatpush2.bf16.msra.mxu0 0
  %5245 = vmatprep.subr.bf16.mxu0 0
  %5246 = vmatpush2.bf16.msra.mxu0 0
  %5247 = vmatprep.subr.bf16.mxu0 0
  %5248 = vmatpush2.bf16.msra.mxu0 0
  %5249 = vmatprep.subr.bf16.mxu0 0
  %5250 = vmatpush2.bf16.msra.mxu0 0
  %5251 = vmatprep.subr.bf16.mxu0 0
  %5252 = vmatpush2.bf16.msra.mxu0 0
  %5253 = vmatprep.subr.bf16.mxu0 0
  %5254 = vmatpush2.bf16.msra.mxu0 0
  %5255 = vmatprep.subr.bf16.mxu0 0
  %5256 = vmatpush2.bf16.msra.mxu0 0
  %5257 = vmatprep.subr.bf16.mxu0 0
  %5258 = vmatpush2.bf16.msra.mxu0 0
  %5259 = vmatprep.mubr.bf16.mxu0 0
  %5260 = vmatmul.mubr.bf16.gmra.mxu0 0
  %v5261 = vpop.f32.mrf.mxu0
  %v5262 = vadd.f32 0.0, %v5261
  %v5263 = vpop.f32.mrf.mxu0
  %v5264 = vadd.f32 0.0, %v5263
  %v5265 = vpop.f32.mrf.mxu0
  %v5266 = vpop.f32.mrf.mxu0
  %5267 = vdwg.mxu0
  %v5268 = vadd.f32 %v4990, %v5221
  %v5269 = vadd.f32 %v4991, %v5223
  %v5270 = vadd.f32 %v4992, %v5262
  %v5271 = vadd.f32 %v4993, %v5264
  %v5272 = vxor.u32 %v5268, 2147483648
  %v5273 = vmul.f32 %v5272, 1.442695
  %v5274 = vpow.pop %v5273
  %v5275 = vadd.f32 %v5274, 1.0
  %v5276 = vrcp.pop %v5275
  %v5277 = vmul.f32 1.0, %v5276
  %v5278 = vxor.u32 %v5269, 2147483648
  %v5279 = vmul.f32 %v5278, 1.442695
  %v5280 = vpow.pop %v5279
  %v5281 = vadd.f32 %v5280, 1.0
  %v5282 = vrcp.pop %v5281
  %v5283 = vmul.f32 1.0, %v5282
  %v5284 = vtanh.pop %v5270
  %v5285 = vxor.u32 %v5271, 2147483648
  %v5286 = vmul.f32 %v5285, 1.442695
  %v5287 = vpow.pop %v5286
  %v5288 = vadd.f32 %v5287, 1.0
  %v5289 = vrcp.pop %v5288
  %v5290 = vmul.f32 1.0, %v5289
  %v5291 = vmul.f32 %v5283, 0.0
  %v5292 = vmul.f32 %v5277, %v5284
  %v5293 = vadd.f32 %v5291, %v5292
  %v5294 = vtanh.pop %v5293
  %v5295 = vmul.f32 %v5290, %v5294
  %5296 = vst [vmem:[#allocation7] sm:$0xff] %v5295
  %s5297 = scalar_lea.vmem [#allocation9], 56
  %5298 = vst [vmem:[%s5297] sm:$0xff] %v5295
  %s5299 = scalar_lea.vmem [#allocation3], 32
  %v5300 = vld [vmem:[%s5299] sm:$0xff]
  %v5301 = vld [vmem:[%s5299 + $0x8] sm:$0xff]
  %v5302 = vld [vmem:[%s5299 + $0x10] sm:$0xff]
  %v5303 = vld [vmem:[%s5299 + $0x18] sm:$0xff]
  %s5304 = scalar_lea.vmem [#allocation5], 192
  %v5305 = vld [vmem:[%s5304] sm:$0xff]
  %v5306 = vld [vmem:[%s5304 + $0x8] sm:$0xff]
  %v5307 = vld [vmem:[%s5304 + $0x10] sm:$0xff]
  %v5308 = vld [vmem:[%s5304 + $0x18] sm:$0xff]
  %v5309 = vadd.f32 %v5300, %v5305
  %v5310 = vadd.f32 %v5301, %v5306
  %v5311 = vadd.f32 %v5302, %v5307
  %v5312 = vadd.f32 %v5303, %v5308
  %v5313 = vpack.c.bf16 %v5295, %v5295
  %v5314 = vld [vmem:[%s12] sm:$0xff]
  %v5315 = vld [vmem:[%s12 + $0x8] sm:$0xff]
  %v5316 = vld [vmem:[%s12 + $0x10] sm:$0xff]
  %v5317 = vld [vmem:[%s12 + $0x18] sm:$0xff]
  %v5318 = vld [vmem:[%s12 + $0x20] sm:$0xff]
  %v5319 = vld [vmem:[%s12 + $0x28] sm:$0xff]
  %v5320 = vld [vmem:[%s12 + $0x30] sm:$0xff]
  %v5321 = vld [vmem:[%s12 + $0x38] sm:$0xff]
  %v5322 = vld [vmem:[%s12 + $0x40] sm:$0xff]
  %v5323 = vld [vmem:[%s12 + $0x48] sm:$0xff]
  %v5324 = vld [vmem:[%s12 + $0x50] sm:$0xff]
  %v5325 = vld [vmem:[%s12 + $0x58] sm:$0xff]
  %v5326 = vld [vmem:[%s12 + $0x60] sm:$0xff]
  %v5327 = vld [vmem:[%s12 + $0x68] sm:$0xff]
  %v5328 = vld [vmem:[%s12 + $0x70] sm:$0xff]
  %v5329 = vld [vmem:[%s12 + $0x78] sm:$0xff]
  %v5330 = vld [vmem:[%s12 + $0x80] sm:$0xff]
  %v5331 = vld [vmem:[%s12 + $0x88] sm:$0xff]
  %v5332 = vld [vmem:[%s12 + $0x90] sm:$0xff]
  %v5333 = vld [vmem:[%s12 + $0x98] sm:$0xff]
  %v5334 = vld [vmem:[%s12 + $0xa0] sm:$0xff]
  %v5335 = vld [vmem:[%s12 + $0xa8] sm:$0xff]
  %v5336 = vld [vmem:[%s12 + $0xb0] sm:$0xff]
  %v5337 = vld [vmem:[%s12 + $0xb8] sm:$0xff]
  %v5338 = vld [vmem:[%s12 + $0xc0] sm:$0xff]
  %v5339 = vld [vmem:[%s12 + $0xc8] sm:$0xff]
  %v5340 = vld [vmem:[%s12 + $0xd0] sm:$0xff]
  %v5341 = vld [vmem:[%s12 + $0xd8] sm:$0xff]
  %v5342 = vld [vmem:[%s12 + $0xe0] sm:$0xff]
  %v5343 = vld [vmem:[%s12 + $0xe8] sm:$0xff]
  %v5344 = vld [vmem:[%s12 + $0xf0] sm:$0xff]
  %v5345 = vld [vmem:[%s12 + $0xf8] sm:$0xff]
  %v5378 = vunpack.c.l.b16 %v5314
  %v5379 = vunpack.c.h.b16 %v5314
  %v5380 = vunpack.c.l.b16 %v5315
  %v5381 = vunpack.c.h.b16 %v5315
  %v5382 = vunpack.c.l.b16 %v5316
  %v5383 = vunpack.c.h.b16 %v5316
  %v5384 = vunpack.c.l.b16 %v5317
  %v5385 = vunpack.c.h.b16 %v5317
  %v5386 = vunpack.c.l.b16 %v5318
  %v5387 = vunpack.c.h.b16 %v5318
  %v5388 = vunpack.c.l.b16 %v5319
  %v5389 = vunpack.c.h.b16 %v5319
  %v5390 = vunpack.c.l.b16 %v5320
  %v5391 = vunpack.c.h.b16 %v5320
  %v5392 = vunpack.c.l.b16 %v5321
  %v5393 = vunpack.c.h.b16 %v5321
  %v5394 = vunpack.c.l.b16 %v5322
  %v5395 = vunpack.c.h.b16 %v5322
  %v5396 = vunpack.c.l.b16 %v5323
  %v5397 = vunpack.c.h.b16 %v5323
  %v5398 = vunpack.c.l.b16 %v5324
  %v5399 = vunpack.c.h.b16 %v5324
  %v5400 = vunpack.c.l.b16 %v5325
  %v5401 = vunpack.c.h.b16 %v5325
  %v5402 = vunpack.c.l.b16 %v5326
  %v5403 = vunpack.c.h.b16 %v5326
  %v5404 = vunpack.c.l.b16 %v5327
  %v5405 = vunpack.c.h.b16 %v5327
  %v5406 = vunpack.c.l.b16 %v5328
  %v5407 = vunpack.c.h.b16 %v5328
  %v5408 = vunpack.c.l.b16 %v5329
  %v5409 = vunpack.c.h.b16 %v5329
  %v5410 = vunpack.c.l.b16 %v5330
  %v5411 = vunpack.c.h.b16 %v5330
  %v5412 = vunpack.c.l.b16 %v5331
  %v5413 = vunpack.c.h.b16 %v5331
  %v5414 = vunpack.c.l.b16 %v5332
  %v5415 = vunpack.c.h.b16 %v5332
  %v5416 = vunpack.c.l.b16 %v5333
  %v5417 = vunpack.c.h.b16 %v5333
  %v5418 = vunpack.c.l.b16 %v5334
  %v5419 = vunpack.c.h.b16 %v5334
  %v5420 = vunpack.c.l.b16 %v5335
  %v5421 = vunpack.c.h.b16 %v5335
  %v5422 = vunpack.c.l.b16 %v5336
  %v5423 = vunpack.c.h.b16 %v5336
  %v5424 = vunpack.c.l.b16 %v5337
  %v5425 = vunpack.c.h.b16 %v5337
  %v5426 = vunpack.c.l.b16 %v5338
  %v5427 = vunpack.c.h.b16 %v5338
  %v5428 = vunpack.c.l.b16 %v5339
  %v5429 = vunpack.c.h.b16 %v5339
  %v5430 = vunpack.c.l.b16 %v5340
  %v5431 = vunpack.c.h.b16 %v5340
  %v5432 = vunpack.c.l.b16 %v5341
  %v5433 = vunpack.c.h.b16 %v5341
  %v5434 = vunpack.c.l.b16 %v5342
  %v5435 = vunpack.c.h.b16 %v5342
  %v5436 = vunpack.c.l.b16 %v5343
  %v5437 = vunpack.c.h.b16 %v5343
  %v5438 = vunpack.c.l.b16 %v5344
  %v5439 = vunpack.c.h.b16 %v5344
  %v5440 = vunpack.c.l.b16 %v5345
  %v5441 = vunpack.c.h.b16 %v5345
  %v5442 = vpack.c.b16 %v5382, %v5378
  %v5443 = vpack.c.b16 %v5383, %v5379
  %v5444 = vpack.c.b16 %v5384, %v5380
  %v5445 = vpack.c.b16 %v5385, %v5381
  %v5446 = vpack.c.b16 %v5390, %v5386
  %v5447 = vpack.c.b16 %v5391, %v5387
  %v5448 = vpack.c.b16 %v5392, %v5388
  %v5449 = vpack.c.b16 %v5393, %v5389
  %v5450 = vpack.c.b16 %v5398, %v5394
  %v5451 = vpack.c.b16 %v5399, %v5395
  %v5452 = vpack.c.b16 %v5400, %v5396
  %v5453 = vpack.c.b16 %v5401, %v5397
  %v5454 = vpack.c.b16 %v5406, %v5402
  %v5455 = vpack.c.b16 %v5407, %v5403
  %v5456 = vpack.c.b16 %v5408, %v5404
  %v5457 = vpack.c.b16 %v5409, %v5405
  %v5458 = vpack.c.b16 %v5414, %v5410
  %v5459 = vpack.c.b16 %v5415, %v5411
  %v5460 = vpack.c.b16 %v5416, %v5412
  %v5461 = vpack.c.b16 %v5417, %v5413
  %v5462 = vpack.c.b16 %v5422, %v5418
  %v5463 = vpack.c.b16 %v5423, %v5419
  %v5464 = vpack.c.b16 %v5424, %v5420
  %v5465 = vpack.c.b16 %v5425, %v5421
  %v5466 = vpack.c.b16 %v5430, %v5426
  %v5467 = vpack.c.b16 %v5431, %v5427
  %v5468 = vpack.c.b16 %v5432, %v5428
  %v5469 = vpack.c.b16 %v5433, %v5429
  %v5470 = vpack.c.b16 %v5438, %v5434
  %v5471 = vpack.c.b16 %v5439, %v5435
  %v5472 = vpack.c.b16 %v5440, %v5436
  %v5473 = vpack.c.b16 %v5441, %v5437
  %5506 = vmatprep.subr.bf16.mxu0 %v5471
  %5507 = vmatpush1.bf16.msra.mxu0 %v5470
  %5508 = vmatprep.subr.bf16.mxu0 %v5467
  %5509 = vmatpush1.bf16.msra.mxu0 %v5466
  %5510 = vmatprep.subr.bf16.mxu0 %v5463
  %5511 = vmatpush1.bf16.msra.mxu0 %v5462
  %5512 = vmatprep.subr.bf16.mxu0 %v5459
  %5513 = vmatpush1.bf16.msra.mxu0 %v5458
  %5514 = vmatprep.subr.bf16.mxu0 %v5455
  %5515 = vmatpush1.bf16.msra.mxu0 %v5454
  %5516 = vmatprep.subr.bf16.mxu0 %v5451
  %5517 = vmatpush1.bf16.msra.mxu0 %v5450
  %5518 = vmatprep.subr.bf16.mxu0 %v5447
  %5519 = vmatpush1.bf16.msra.mxu0 %v5446
  %5520 = vmatprep.subr.bf16.mxu0 %v5443
  %5521 = vmatpush1.bf16.msra.mxu0 %v5442
  %5522 = vmatprep.subr.bf16.mxu0 0
  %5523 = vmatpush2.bf16.msra.mxu0 0
  %5524 = vmatprep.subr.bf16.mxu0 0
  %5525 = vmatpush2.bf16.msra.mxu0 0
  %5526 = vmatprep.subr.bf16.mxu0 0
  %5527 = vmatpush2.bf16.msra.mxu0 0
  %5528 = vmatprep.subr.bf16.mxu0 0
  %5529 = vmatpush2.bf16.msra.mxu0 0
  %5530 = vmatprep.subr.bf16.mxu0 0
  %5531 = vmatpush2.bf16.msra.mxu0 0
  %5532 = vmatprep.subr.bf16.mxu0 0
  %5533 = vmatpush2.bf16.msra.mxu0 0
  %5534 = vmatprep.subr.bf16.mxu0 0
  %5535 = vmatpush2.bf16.msra.mxu0 0
  %5536 = vmatprep.subr.bf16.mxu0 0
  %5537 = vmatpush2.bf16.msra.mxu0 0
  %5538 = vmatprep.mubr.bf16.mxu0 0
  %5539 = vmatmul.mubr.bf16.gmra.mxu0 %v5313
  %v5540 = vpop.f32.mrf.mxu0
  %v5541 = vadd.f32 0.0, %v5540
  %v5542 = vpop.f32.mrf.mxu0
  %v5543 = vadd.f32 0.0, %v5542
  %v5544 = vpop.f32.mrf.mxu0
  %v5545 = vpop.f32.mrf.mxu0
  %5546 = vdwg.mxu0
  %5547 = vmatprep.subr.bf16.mxu0 %v5473
  %5548 = vmatpush1.bf16.msra.mxu0 %v5472
  %5549 = vmatprep.subr.bf16.mxu0 %v5469
  %5550 = vmatpush1.bf16.msra.mxu0 %v5468
  %5551 = vmatprep.subr.bf16.mxu0 %v5465
  %5552 = vmatpush1.bf16.msra.mxu0 %v5464
  %5553 = vmatprep.subr.bf16.mxu0 %v5461
  %5554 = vmatpush1.bf16.msra.mxu0 %v5460
  %5555 = vmatprep.subr.bf16.mxu0 %v5457
  %5556 = vmatpush1.bf16.msra.mxu0 %v5456
  %5557 = vmatprep.subr.bf16.mxu0 %v5453
  %5558 = vmatpush1.bf16.msra.mxu0 %v5452
  %5559 = vmatprep.subr.bf16.mxu0 %v5449
  %5560 = vmatpush1.bf16.msra.mxu0 %v5448
  %5561 = vmatprep.subr.bf16.mxu0 %v5445
  %5562 = vmatpush1.bf16.msra.mxu0 %v5444
  %5563 = vmatprep.subr.bf16.mxu0 0
  %5564 = vmatpush2.bf16.msra.mxu0 0
  %5565 = vmatprep.subr.bf16.mxu0 0
  %5566 = vmatpush2.bf16.msra.mxu0 0
  %5567 = vmatprep.subr.bf16.mxu0 0
  %5568 = vmatpush2.bf16.msra.mxu0 0
  %5569 = vmatprep.subr.bf16.mxu0 0
  %5570 = vmatpush2.bf16.msra.mxu0 0
  %5571 = vmatprep.subr.bf16.mxu0 0
  %5572 = vmatpush2.bf16.msra.mxu0 0
  %5573 = vmatprep.subr.bf16.mxu0 0
  %5574 = vmatpush2.bf16.msra.mxu0 0
  %5575 = vmatprep.subr.bf16.mxu0 0
  %5576 = vmatpush2.bf16.msra.mxu0 0
  %5577 = vmatprep.subr.bf16.mxu0 0
  %5578 = vmatpush2.bf16.msra.mxu0 0
  %5579 = vmatprep.mubr.bf16.mxu0 0
  %5580 = vmatmul.mubr.bf16.gmra.mxu0 %v5313
  %v5581 = vpop.f32.mrf.mxu0
  %v5582 = vadd.f32 0.0, %v5581
  %v5583 = vpop.f32.mrf.mxu0
  %v5584 = vadd.f32 0.0, %v5583
  %v5585 = vpop.f32.mrf.mxu0
  %v5586 = vpop.f32.mrf.mxu0
  %5587 = vdwg.mxu0
  %v5588 = vadd.f32 %v5309, %v5541
  %v5589 = vadd.f32 %v5310, %v5543
  %v5590 = vadd.f32 %v5311, %v5582
  %v5591 = vadd.f32 %v5312, %v5584
  %v5592 = vxor.u32 %v5588, 2147483648
  %v5593 = vmul.f32 %v5592, 1.442695
  %v5594 = vpow.pop %v5593
  %v5595 = vadd.f32 %v5594, 1.0
  %v5596 = vrcp.pop %v5595
  %v5597 = vmul.f32 1.0, %v5596
  %v5598 = vxor.u32 %v5589, 2147483648
  %v5599 = vmul.f32 %v5598, 1.442695
  %v5600 = vpow.pop %v5599
  %v5601 = vadd.f32 %v5600, 1.0
  %v5602 = vrcp.pop %v5601
  %v5603 = vmul.f32 1.0, %v5602
  %v5604 = vtanh.pop %v5590
  %v5605 = vxor.u32 %v5591, 2147483648
  %v5606 = vmul.f32 %v5605, 1.442695
  %v5607 = vpow.pop %v5606
  %v5608 = vadd.f32 %v5607, 1.0
  %v5609 = vrcp.pop %v5608
  %v5610 = vmul.f32 1.0, %v5609
  %v5611 = vmul.f32 %v5603, %v5293
  %v5612 = vmul.f32 %v5597, %v5604
  %v5613 = vadd.f32 %v5611, %v5612
  %v5614 = vtanh.pop %v5613
  %v5615 = vmul.f32 %v5610, %v5614
  %s5616 = scalar_lea.vmem [#allocation7], 8
  %5617 = vst [vmem:[%s5616] sm:$0xff] %v5615
  %s5618 = scalar_lea.vmem [#allocation9], 48
  %5619 = vst [vmem:[%s5618] sm:$0xff] %v5615
  %s5620 = scalar_lea.vmem [#allocation3], 64
  %v5621 = vld [vmem:[%s5620] sm:$0xff]
  %v5622 = vld [vmem:[%s5620 + $0x8] sm:$0xff]
  %v5623 = vld [vmem:[%s5620 + $0x10] sm:$0xff]
  %v5624 = vld [vmem:[%s5620 + $0x18] sm:$0xff]
  %s5625 = scalar_lea.vmem [#allocation5], 160
  %v5626 = vld [vmem:[%s5625] sm:$0xff]
  %v5627 = vld [vmem:[%s5625 + $0x8] sm:$0xff]
  %v5628 = vld [vmem:[%s5625 + $0x10] sm:$0xff]
  %v5629 = vld [vmem:[%s5625 + $0x18] sm:$0xff]
  %v5630 = vadd.f32 %v5621, %v5626
  %v5631 = vadd.f32 %v5622, %v5627
  %v5632 = vadd.f32 %v5623, %v5628
  %v5633 = vadd.f32 %v5624, %v5629
  %v5634 = vpack.c.bf16 %v5615, %v5615
  %v5635 = vld [vmem:[%s12] sm:$0xff]
  %v5636 = vld [vmem:[%s12 + $0x8] sm:$0xff]
  %v5637 = vld [vmem:[%s12 + $0x10] sm:$0xff]
  %v5638 = vld [vmem:[%s12 + $0x18] sm:$0xff]
  %v5639 = vld [vmem:[%s12 + $0x20] sm:$0xff]
  %v5640 = vld [vmem:[%s12 + $0x28] sm:$0xff]
  %v5641 = vld [vmem:[%s12 + $0x30] sm:$0xff]
  %v5642 = vld [vmem:[%s12 + $0x38] sm:$0xff]
  %v5643 = vld [vmem:[%s12 + $0x40] sm:$0xff]
  %v5644 = vld [vmem:[%s12 + $0x48] sm:$0xff]
  %v5645 = vld [vmem:[%s12 + $0x50] sm:$0xff]
  %v5646 = vld [vmem:[%s12 + $0x58] sm:$0xff]
  %v5647 = vld [vmem:[%s12 + $0x60] sm:$0xff]
  %v5648 = vld [vmem:[%s12 + $0x68] sm:$0xff]
  %v5649 = vld [vmem:[%s12 + $0x70] sm:$0xff]
  %v5650 = vld [vmem:[%s12 + $0x78] sm:$0xff]
  %v5651 = vld [vmem:[%s12 + $0x80] sm:$0xff]
  %v5652 = vld [vmem:[%s12 + $0x88] sm:$0xff]
  %v5653 = vld [vmem:[%s12 + $0x90] sm:$0xff]
  %v5654 = vld [vmem:[%s12 + $0x98] sm:$0xff]
  %v5655 = vld [vmem:[%s12 + $0xa0] sm:$0xff]
  %v5656 = vld [vmem:[%s12 + $0xa8] sm:$0xff]
  %v5657 = vld [vmem:[%s12 + $0xb0] sm:$0xff]
  %v5658 = vld [vmem:[%s12 + $0xb8] sm:$0xff]
  %v5659 = vld [vmem:[%s12 + $0xc0] sm:$0xff]
  %v5660 = vld [vmem:[%s12 + $0xc8] sm:$0xff]
  %v5661 = vld [vmem:[%s12 + $0xd0] sm:$0xff]
  %v5662 = vld [vmem:[%s12 + $0xd8] sm:$0xff]
  %v5663 = vld [vmem:[%s12 + $0xe0] sm:$0xff]
  %v5664 = vld [vmem:[%s12 + $0xe8] sm:$0xff]
  %v5665 = vld [vmem:[%s12 + $0xf0] sm:$0xff]
  %v5666 = vld [vmem:[%s12 + $0xf8] sm:$0xff]
  %v5699 = vunpack.c.l.b16 %v5635
  %v5700 = vunpack.c.h.b16 %v5635
  %v5701 = vunpack.c.l.b16 %v5636
  %v5702 = vunpack.c.h.b16 %v5636
  %v5703 = vunpack.c.l.b16 %v5637
  %v5704 = vunpack.c.h.b16 %v5637
  %v5705 = vunpack.c.l.b16 %v5638
  %v5706 = vunpack.c.h.b16 %v5638
  %v5707 = vunpack.c.l.b16 %v5639
  %v5708 = vunpack.c.h.b16 %v5639
  %v5709 = vunpack.c.l.b16 %v5640
  %v5710 = vunpack.c.h.b16 %v5640
  %v5711 = vunpack.c.l.b16 %v5641
  %v5712 = vunpack.c.h.b16 %v5641
  %v5713 = vunpack.c.l.b16 %v5642
  %v5714 = vunpack.c.h.b16 %v5642
  %v5715 = vunpack.c.l.b16 %v5643
  %v5716 = vunpack.c.h.b16 %v5643
  %v5717 = vunpack.c.l.b16 %v5644
  %v5718 = vunpack.c.h.b16 %v5644
  %v5719 = vunpack.c.l.b16 %v5645
  %v5720 = vunpack.c.h.b16 %v5645
  %v5721 = vunpack.c.l.b16 %v5646
  %v5722 = vunpack.c.h.b16 %v5646
  %v5723 = vunpack.c.l.b16 %v5647
  %v5724 = vunpack.c.h.b16 %v5647
  %v5725 = vunpack.c.l.b16 %v5648
  %v5726 = vunpack.c.h.b16 %v5648
  %v5727 = vunpack.c.l.b16 %v5649
  %v5728 = vunpack.c.h.b16 %v5649
  %v5729 = vunpack.c.l.b16 %v5650
  %v5730 = vunpack.c.h.b16 %v5650
  %v5731 = vunpack.c.l.b16 %v5651
  %v5732 = vunpack.c.h.b16 %v5651
  %v5733 = vunpack.c.l.b16 %v5652
  %v5734 = vunpack.c.h.b16 %v5652
  %v5735 = vunpack.c.l.b16 %v5653
  %v5736 = vunpack.c.h.b16 %v5653
  %v5737 = vunpack.c.l.b16 %v5654
  %v5738 = vunpack.c.h.b16 %v5654
  %v5739 = vunpack.c.l.b16 %v5655
  %v5740 = vunpack.c.h.b16 %v5655
  %v5741 = vunpack.c.l.b16 %v5656
  %v5742 = vunpack.c.h.b16 %v5656
  %v5743 = vunpack.c.l.b16 %v5657
  %v5744 = vunpack.c.h.b16 %v5657
  %v5745 = vunpack.c.l.b16 %v5658
  %v5746 = vunpack.c.h.b16 %v5658
  %v5747 = vunpack.c.l.b16 %v5659
  %v5748 = vunpack.c.h.b16 %v5659
  %v5749 = vunpack.c.l.b16 %v5660
  %v5750 = vunpack.c.h.b16 %v5660
  %v5751 = vunpack.c.l.b16 %v5661
  %v5752 = vunpack.c.h.b16 %v5661
  %v5753 = vunpack.c.l.b16 %v5662
  %v5754 = vunpack.c.h.b16 %v5662
  %v5755 = vunpack.c.l.b16 %v5663
  %v5756 = vunpack.c.h.b16 %v5663
  %v5757 = vunpack.c.l.b16 %v5664
  %v5758 = vunpack.c.h.b16 %v5664
  %v5759 = vunpack.c.l.b16 %v5665
  %v5760 = vunpack.c.h.b16 %v5665
  %v5761 = vunpack.c.l.b16 %v5666
  %v5762 = vunpack.c.h.b16 %v5666
  %v5763 = vpack.c.b16 %v5703, %v5699
  %v5764 = vpack.c.b16 %v5704, %v5700
  %v5765 = vpack.c.b16 %v5705, %v5701
  %v5766 = vpack.c.b16 %v5706, %v5702
  %v5767 = vpack.c.b16 %v5711, %v5707
  %v5768 = vpack.c.b16 %v5712, %v5708
  %v5769 = vpack.c.b16 %v5713, %v5709
  %v5770 = vpack.c.b16 %v5714, %v5710
  %v5771 = vpack.c.b16 %v5719, %v5715
  %v5772 = vpack.c.b16 %v5720, %v5716
  %v5773 = vpack.c.b16 %v5721, %v5717
  %v5774 = vpack.c.b16 %v5722, %v5718
  %v5775 = vpack.c.b16 %v5727, %v5723
  %v5776 = vpack.c.b16 %v5728, %v5724
  %v5777 = vpack.c.b16 %v5729, %v5725
  %v5778 = vpack.c.b16 %v5730, %v5726
  %v5779 = vpack.c.b16 %v5735, %v5731
  %v5780 = vpack.c.b16 %v5736, %v5732
  %v5781 = vpack.c.b16 %v5737, %v5733
  %v5782 = vpack.c.b16 %v5738, %v5734
  %v5783 = vpack.c.b16 %v5743, %v5739
  %v5784 = vpack.c.b16 %v5744, %v5740
  %v5785 = vpack.c.b16 %v5745, %v5741
  %v5786 = vpack.c.b16 %v5746, %v5742
  %v5787 = vpack.c.b16 %v5751, %v5747
  %v5788 = vpack.c.b16 %v5752, %v5748
  %v5789 = vpack.c.b16 %v5753, %v5749
  %v5790 = vpack.c.b16 %v5754, %v5750
  %v5791 = vpack.c.b16 %v5759, %v5755
  %v5792 = vpack.c.b16 %v5760, %v5756
  %v5793 = vpack.c.b16 %v5761, %v5757
  %v5794 = vpack.c.b16 %v5762, %v5758
  %5827 = vmatprep.subr.bf16.mxu0 %v5792
  %5828 = vmatpush1.bf16.msra.mxu0 %v5791
  %5829 = vmatprep.subr.bf16.mxu0 %v5788
  %5830 = vmatpush1.bf16.msra.mxu0 %v5787
  %5831 = vmatprep.subr.bf16.mxu0 %v5784
  %5832 = vmatpush1.bf16.msra.mxu0 %v5783
  %5833 = vmatprep.subr.bf16.mxu0 %v5780
  %5834 = vmatpush1.bf16.msra.mxu0 %v5779
  %5835 = vmatprep.subr.bf16.mxu0 %v5776
  %5836 = vmatpush1.bf16.msra.mxu0 %v5775
  %5837 = vmatprep.subr.bf16.mxu0 %v5772
  %5838 = vmatpush1.bf16.msra.mxu0 %v5771
  %5839 = vmatprep.subr.bf16.mxu0 %v5768
  %5840 = vmatpush1.bf16.msra.mxu0 %v5767
  %5841 = vmatprep.subr.bf16.mxu0 %v5764
  %5842 = vmatpush1.bf16.msra.mxu0 %v5763
  %5843 = vmatprep.subr.bf16.mxu0 0
  %5844 = vmatpush2.bf16.msra.mxu0 0
  %5845 = vmatprep.subr.bf16.mxu0 0
  %5846 = vmatpush2.bf16.msra.mxu0 0
  %5847 = vmatprep.subr.bf16.mxu0 0
  %5848 = vmatpush2.bf16.msra.mxu0 0
  %5849 = vmatprep.subr.bf16.mxu0 0
  %5850 = vmatpush2.bf16.msra.mxu0 0
  %5851 = vmatprep.subr.bf16.mxu0 0
  %5852 = vmatpush2.bf16.msra.mxu0 0
  %5853 = vmatprep.subr.bf16.mxu0 0
  %5854 = vmatpush2.bf16.msra.mxu0 0
  %5855 = vmatprep.subr.bf16.mxu0 0
  %5856 = vmatpush2.bf16.msra.mxu0 0
  %5857 = vmatprep.subr.bf16.mxu0 0
  %5858 = vmatpush2.bf16.msra.mxu0 0
  %5859 = vmatprep.mubr.bf16.mxu0 0
  %5860 = vmatmul.mubr.bf16.gmra.mxu0 %v5634
  %v5861 = vpop.f32.mrf.mxu0
  %v5862 = vadd.f32 0.0, %v5861
  %v5863 = vpop.f32.mrf.mxu0
  %v5864 = vadd.f32 0.0, %v5863
  %v5865 = vpop.f32.mrf.mxu0
  %v5866 = vpop.f32.mrf.mxu0
  %5867 = vdwg.mxu0
  %5868 = vmatprep.subr.bf16.mxu0 %v5794
  %5869 = vmatpush1.bf16.msra.mxu0 %v5793
  %5870 = vmatprep.subr.bf16.mxu0 %v5790
  %5871 = vmatpush1.bf16.msra.mxu0 %v5789
  %5872 = vmatprep.subr.bf16.mxu0 %v5786
  %5873 = vmatpush1.bf16.msra.mxu0 %v5785
  %5874 = vmatprep.subr.bf16.mxu0 %v5782
  %5875 = vmatpush1.bf16.msra.mxu0 %v5781
  %5876 = vmatprep.subr.bf16.mxu0 %v5778
  %5877 = vmatpush1.bf16.msra.mxu0 %v5777
  %5878 = vmatprep.subr.bf16.mxu0 %v5774
  %5879 = vmatpush1.bf16.msra.mxu0 %v5773
  %5880 = vmatprep.subr.bf16.mxu0 %v5770
  %5881 = vmatpush1.bf16.msra.mxu0 %v5769
  %5882 = vmatprep.subr.bf16.mxu0 %v5766
  %5883 = vmatpush1.bf16.msra.mxu0 %v5765
  %5884 = vmatprep.subr.bf16.mxu0 0
  %5885 = vmatpush2.bf16.msra.mxu0 0
  %5886 = vmatprep.subr.bf16.mxu0 0
  %5887 = vmatpush2.bf16.msra.mxu0 0
  %5888 = vmatprep.subr.bf16.mxu0 0
  %5889 = vmatpush2.bf16.msra.mxu0 0
  %5890 = vmatprep.subr.bf16.mxu0 0
  %5891 = vmatpush2.bf16.msra.mxu0 0
  %5892 = vmatprep.subr.bf16.mxu0 0
  %5893 = vmatpush2.bf16.msra.mxu0 0
  %5894 = vmatprep.subr.bf16.mxu0 0
  %5895 = vmatpush2.bf16.msra.mxu0 0
  %5896 = vmatprep.subr.bf16.mxu0 0
  %5897 = vmatpush2.bf16.msra.mxu0 0
  %5898 = vmatprep.subr.bf16.mxu0 0
  %5899 = vmatpush2.bf16.msra.mxu0 0
  %5900 = vmatprep.mubr.bf16.mxu0 0
  %5901 = vmatmul.mubr.bf16.gmra.mxu0 %v5634
  %v5902 = vpop.f32.mrf.mxu0
  %v5903 = vadd.f32 0.0, %v5902
  %v5904 = vpop.f32.mrf.mxu0
  %v5905 = vadd.f32 0.0, %v5904
  %v5906 = vpop.f32.mrf.mxu0
  %v5907 = vpop.f32.mrf.mxu0
  %5908 = vdwg.mxu0
  %v5909 = vadd.f32 %v5630, %v5862
  %v5910 = vadd.f32 %v5631, %v5864
  %v5911 = vadd.f32 %v5632, %v5903
  %v5912 = vadd.f32 %v5633, %v5905
  %v5913 = vxor.u32 %v5909, 2147483648
  %v5914 = vmul.f32 %v5913, 1.442695
  %v5915 = vpow.pop %v5914
  %v5916 = vadd.f32 %v5915, 1.0
  %v5917 = vrcp.pop %v5916
  %v5918 = vmul.f32 1.0, %v5917
  %v5919 = vxor.u32 %v5910, 2147483648
  %v5920 = vmul.f32 %v5919, 1.442695
  %v5921 = vpow.pop %v5920
  %v5922 = vadd.f32 %v5921, 1.0
  %v5923 = vrcp.pop %v5922
  %v5924 = vmul.f32 1.0, %v5923
  %v5925 = vtanh.pop %v5911
  %v5926 = vxor.u32 %v5912, 2147483648
  %v5927 = vmul.f32 %v5926, 1.442695
  %v5928 = vpow.pop %v5927
  %v5929 = vadd.f32 %v5928, 1.0
  %v5930 = vrcp.pop %v5929
  %v5931 = vmul.f32 1.0, %v5930
  %v5932 = vmul.f32 %v5924, %v5613
  %v5933 = vmul.f32 %v5918, %v5925
  %v5934 = vadd.f32 %v5932, %v5933
  %v5935 = vtanh.pop %v5934
  %v5936 = vmul.f32 %v5931, %v5935
  %s5937 = scalar_lea.vmem [#allocation7], 16
  %5938 = vst [vmem:[%s5937] sm:$0xff] %v5936
  %s5939 = scalar_lea.vmem [#allocation9], 40
  %5940 = vst [vmem:[%s5939] sm:$0xff] %v5936
  %s5941 = scalar_lea.vmem [#allocation3], 96
  %v5942 = vld [vmem:[%s5941] sm:$0xff]
  %v5943 = vld [vmem:[%s5941 + $0x8] sm:$0xff]
  %v5944 = vld [vmem:[%s5941 + $0x10] sm:$0xff]
  %v5945 = vld [vmem:[%s5941 + $0x18] sm:$0xff]
  %s5946 = scalar_lea.vmem [#allocation5], 128
  %v5947 = vld [vmem:[%s5946] sm:$0xff]
  %v5948 = vld [vmem:[%s5946 + $0x8] sm:$0xff]
  %v5949 = vld [vmem:[%s5946 + $0x10] sm:$0xff]
  %v5950 = vld [vmem:[%s5946 + $0x18] sm:$0xff]
  %v5951 = vadd.f32 %v5942, %v5947
  %v5952 = vadd.f32 %v5943, %v5948
  %v5953 = vadd.f32 %v5944, %v5949
  %v5954 = vadd.f32 %v5945, %v5950
  %v5955 = vpack.c.bf16 %v5936, %v5936
  %v5956 = vld [vmem:[%s12] sm:$0xff]
  %v5957 = vld [vmem:[%s12 + $0x8] sm:$0xff]
  %v5958 = vld [vmem:[%s12 + $0x10] sm:$0xff]
  %v5959 = vld [vmem:[%s12 + $0x18] sm:$0xff]
  %v5960 = vld [vmem:[%s12 + $0x20] sm:$0xff]
  %v5961 = vld [vmem:[%s12 + $0x28] sm:$0xff]
  %v5962 = vld [vmem:[%s12 + $0x30] sm:$0xff]
  %v5963 = vld [vmem:[%s12 + $0x38] sm:$0xff]
  %v5964 = vld [vmem:[%s12 + $0x40] sm:$0xff]
  %v5965 = vld [vmem:[%s12 + $0x48] sm:$0xff]
  %v5966 = vld [vmem:[%s12 + $0x50] sm:$0xff]
  %v5967 = vld [vmem:[%s12 + $0x58] sm:$0xff]
  %v5968 = vld [vmem:[%s12 + $0x60] sm:$0xff]
  %v5969 = vld [vmem:[%s12 + $0x68] sm:$0xff]
  %v5970 = vld [vmem:[%s12 + $0x70] sm:$0xff]
  %v5971 = vld [vmem:[%s12 + $0x78] sm:$0xff]
  %v5972 = vld [vmem:[%s12 + $0x80] sm:$0xff]
  %v5973 = vld [vmem:[%s12 + $0x88] sm:$0xff]
  %v5974 = vld [vmem:[%s12 + $0x90] sm:$0xff]
  %v5975 = vld [vmem:[%s12 + $0x98] sm:$0xff]
  %v5976 = vld [vmem:[%s12 + $0xa0] sm:$0xff]
  %v5977 = vld [vmem:[%s12 + $0xa8] sm:$0xff]
  %v5978 = vld [vmem:[%s12 + $0xb0] sm:$0xff]
  %v5979 = vld [vmem:[%s12 + $0xb8] sm:$0xff]
  %v5980 = vld [vmem:[%s12 + $0xc0] sm:$0xff]
  %v5981 = vld [vmem:[%s12 + $0xc8] sm:$0xff]
  %v5982 = vld [vmem:[%s12 + $0xd0] sm:$0xff]
  %v5983 = vld [vmem:[%s12 + $0xd8] sm:$0xff]
  %v5984 = vld [vmem:[%s12 + $0xe0] sm:$0xff]
  %v5985 = vld [vmem:[%s12 + $0xe8] sm:$0xff]
  %v5986 = vld [vmem:[%s12 + $0xf0] sm:$0xff]
  %v5987 = vld [vmem:[%s12 + $0xf8] sm:$0xff]
  %v6020 = vunpack.c.l.b16 %v5956
  %v6021 = vunpack.c.h.b16 %v5956
  %v6022 = vunpack.c.l.b16 %v5957
  %v6023 = vunpack.c.h.b16 %v5957
  %v6024 = vunpack.c.l.b16 %v5958
  %v6025 = vunpack.c.h.b16 %v5958
  %v6026 = vunpack.c.l.b16 %v5959
  %v6027 = vunpack.c.h.b16 %v5959
  %v6028 = vunpack.c.l.b16 %v5960
  %v6029 = vunpack.c.h.b16 %v5960
  %v6030 = vunpack.c.l.b16 %v5961
  %v6031 = vunpack.c.h.b16 %v5961
  %v6032 = vunpack.c.l.b16 %v5962
  %v6033 = vunpack.c.h.b16 %v5962
  %v6034 = vunpack.c.l.b16 %v5963
  %v6035 = vunpack.c.h.b16 %v5963
  %v6036 = vunpack.c.l.b16 %v5964
  %v6037 = vunpack.c.h.b16 %v5964
  %v6038 = vunpack.c.l.b16 %v5965
  %v6039 = vunpack.c.h.b16 %v5965
  %v6040 = vunpack.c.l.b16 %v5966
  %v6041 = vunpack.c.h.b16 %v5966
  %v6042 = vunpack.c.l.b16 %v5967
  %v6043 = vunpack.c.h.b16 %v5967
  %v6044 = vunpack.c.l.b16 %v5968
  %v6045 = vunpack.c.h.b16 %v5968
  %v6046 = vunpack.c.l.b16 %v5969
  %v6047 = vunpack.c.h.b16 %v5969
  %v6048 = vunpack.c.l.b16 %v5970
  %v6049 = vunpack.c.h.b16 %v5970
  %v6050 = vunpack.c.l.b16 %v5971
  %v6051 = vunpack.c.h.b16 %v5971
  %v6052 = vunpack.c.l.b16 %v5972
  %v6053 = vunpack.c.h.b16 %v5972
  %v6054 = vunpack.c.l.b16 %v5973
  %v6055 = vunpack.c.h.b16 %v5973
  %v6056 = vunpack.c.l.b16 %v5974
  %v6057 = vunpack.c.h.b16 %v5974
  %v6058 = vunpack.c.l.b16 %v5975
  %v6059 = vunpack.c.h.b16 %v5975
  %v6060 = vunpack.c.l.b16 %v5976
  %v6061 = vunpack.c.h.b16 %v5976
  %v6062 = vunpack.c.l.b16 %v5977
  %v6063 = vunpack.c.h.b16 %v5977
  %v6064 = vunpack.c.l.b16 %v5978
  %v6065 = vunpack.c.h.b16 %v5978
  %v6066 = vunpack.c.l.b16 %v5979
  %v6067 = vunpack.c.h.b16 %v5979
  %v6068 = vunpack.c.l.b16 %v5980
  %v6069 = vunpack.c.h.b16 %v5980
  %v6070 = vunpack.c.l.b16 %v5981
  %v6071 = vunpack.c.h.b16 %v5981
  %v6072 = vunpack.c.l.b16 %v5982
  %v6073 = vunpack.c.h.b16 %v5982
  %v6074 = vunpack.c.l.b16 %v5983
  %v6075 = vunpack.c.h.b16 %v5983
  %v6076 = vunpack.c.l.b16 %v5984
  %v6077 = vunpack.c.h.b16 %v5984
  %v6078 = vunpack.c.l.b16 %v5985
  %v6079 = vunpack.c.h.b16 %v5985
  %v6080 = vunpack.c.l.b16 %v5986
  %v6081 = vunpack.c.h.b16 %v5986
  %v6082 = vunpack.c.l.b16 %v5987
  %v6083 = vunpack.c.h.b16 %v5987
  %v6084 = vpack.c.b16 %v6024, %v6020
  %v6085 = vpack.c.b16 %v6025, %v6021
  %v6086 = vpack.c.b16 %v6026, %v6022
  %v6087 = vpack.c.b16 %v6027, %v6023
  %v6088 = vpack.c.b16 %v6032, %v6028
  %v6089 = vpack.c.b16 %v6033, %v6029
  %v6090 = vpack.c.b16 %v6034, %v6030
  %v6091 = vpack.c.b16 %v6035, %v6031
  %v6092 = vpack.c.b16 %v6040, %v6036
  %v6093 = vpack.c.b16 %v6041, %v6037
  %v6094 = vpack.c.b16 %v6042, %v6038
  %v6095 = vpack.c.b16 %v6043, %v6039
  %v6096 = vpack.c.b16 %v6048, %v6044
  %v6097 = vpack.c.b16 %v6049, %v6045
  %v6098 = vpack.c.b16 %v6050, %v6046
  %v6099 = vpack.c.b16 %v6051, %v6047
  %v6100 = vpack.c.b16 %v6056, %v6052
  %v6101 = vpack.c.b16 %v6057, %v6053
  %v6102 = vpack.c.b16 %v6058, %v6054
  %v6103 = vpack.c.b16 %v6059, %v6055
  %v6104 = vpack.c.b16 %v6064, %v6060
  %v6105 = vpack.c.b16 %v6065, %v6061
  %v6106 = vpack.c.b16 %v6066, %v6062
  %v6107 = vpack.c.b16 %v6067, %v6063
  %v6108 = vpack.c.b16 %v6072, %v6068
  %v6109 = vpack.c.b16 %v6073, %v6069
  %v6110 = vpack.c.b16 %v6074, %v6070
  %v6111 = vpack.c.b16 %v6075, %v6071
  %v6112 = vpack.c.b16 %v6080, %v6076
  %v6113 = vpack.c.b16 %v6081, %v6077
  %v6114 = vpack.c.b16 %v6082, %v6078
  %v6115 = vpack.c.b16 %v6083, %v6079
  %6148 = vmatprep.subr.bf16.mxu0 %v6113
  %6149 = vmatpush1.bf16.msra.mxu0 %v6112
  %6150 = vmatprep.subr.bf16.mxu0 %v6109
  %6151 = vmatpush1.bf16.msra.mxu0 %v6108
  %6152 = vmatprep.subr.bf16.mxu0 %v6105
  %6153 = vmatpush1.bf16.msra.mxu0 %v6104
  %6154 = vmatprep.subr.bf16.mxu0 %v6101
  %6155 = vmatpush1.bf16.msra.mxu0 %v6100
  %6156 = vmatprep.subr.bf16.mxu0 %v6097
  %6157 = vmatpush1.bf16.msra.mxu0 %v6096
  %6158 = vmatprep.subr.bf16.mxu0 %v6093
  %6159 = vmatpush1.bf16.msra.mxu0 %v6092
  %6160 = vmatprep.subr.bf16.mxu0 %v6089
  %6161 = vmatpush1.bf16.msra.mxu0 %v6088
  %6162 = vmatprep.subr.bf16.mxu0 %v6085
  %6163 = vmatpush1.bf16.msra.mxu0 %v6084
  %6164 = vmatprep.subr.bf16.mxu0 0
  %6165 = vmatpush2.bf16.msra.mxu0 0
  %6166 = vmatprep.subr.bf16.mxu0 0
  %6167 = vmatpush2.bf16.msra.mxu0 0
  %6168 = vmatprep.subr.bf16.mxu0 0
  %6169 = vmatpush2.bf16.msra.mxu0 0
  %6170 = vmatprep.subr.bf16.mxu0 0
  %6171 = vmatpush2.bf16.msra.mxu0 0
  %6172 = vmatprep.subr.bf16.mxu0 0
  %6173 = vmatpush2.bf16.msra.mxu0 0
  %6174 = vmatprep.subr.bf16.mxu0 0
  %6175 = vmatpush2.bf16.msra.mxu0 0
  %6176 = vmatprep.subr.bf16.mxu0 0
  %6177 = vmatpush2.bf16.msra.mxu0 0
  %6178 = vmatprep.subr.bf16.mxu0 0
  %6179 = vmatpush2.bf16.msra.mxu0 0
  %6180 = vmatprep.mubr.bf16.mxu0 0
  %6181 = vmatmul.mubr.bf16.gmra.mxu0 %v5955
  %v6182 = vpop.f32.mrf.mxu0
  %v6183 = vadd.f32 0.0, %v6182
  %v6184 = vpop.f32.mrf.mxu0
  %v6185 = vadd.f32 0.0, %v6184
  %v6186 = vpop.f32.mrf.mxu0
  %v6187 = vpop.f32.mrf.mxu0
  %6188 = vdwg.mxu0
  %6189 = vmatprep.subr.bf16.mxu0 %v6115
  %6190 = vmatpush1.bf16.msra.mxu0 %v6114
  %6191 = vmatprep.subr.bf16.mxu0 %v6111
  %6192 = vmatpush1.bf16.msra.mxu0 %v6110
  %6193 = vmatprep.subr.bf16.mxu0 %v6107
  %6194 = vmatpush1.bf16.msra.mxu0 %v6106
  %6195 = vmatprep.subr.bf16.mxu0 %v6103
  %6196 = vmatpush1.bf16.msra.mxu0 %v6102
  %6197 = vmatprep.subr.bf16.mxu0 %v6099
  %6198 = vmatpush1.bf16.msra.mxu0 %v6098
  %6199 = vmatprep.subr.bf16.mxu0 %v6095
  %6200 = vmatpush1.bf16.msra.mxu0 %v6094
  %6201 = vmatprep.subr.bf16.mxu0 %v6091
  %6202 = vmatpush1.bf16.msra.mxu0 %v6090
  %6203 = vmatprep.subr.bf16.mxu0 %v6087
  %6204 = vmatpush1.bf16.msra.mxu0 %v6086
  %6205 = vmatprep.subr.bf16.mxu0 0
  %6206 = vmatpush2.bf16.msra.mxu0 0
  %6207 = vmatprep.subr.bf16.mxu0 0
  %6208 = vmatpush2.bf16.msra.mxu0 0
  %6209 = vmatprep.subr.bf16.mxu0 0
  %6210 = vmatpush2.bf16.msra.mxu0 0
  %6211 = vmatprep.subr.bf16.mxu0 0
  %6212 = vmatpush2.bf16.msra.mxu0 0
  %6213 = vmatprep.subr.bf16.mxu0 0
  %6214 = vmatpush2.bf16.msra.mxu0 0
  %6215 = vmatprep.subr.bf16.mxu0 0
  %6216 = vmatpush2.bf16.msra.mxu0 0
  %6217 = vmatprep.subr.bf16.mxu0 0
  %6218 = vmatpush2.bf16.msra.mxu0 0
  %6219 = vmatprep.subr.bf16.mxu0 0
  %6220 = vmatpush2.bf16.msra.mxu0 0
  %6221 = vmatprep.mubr.bf16.mxu0 0
  %6222 = vmatmul.mubr.bf16.gmra.mxu0 %v5955
  %v6223 = vpop.f32.mrf.mxu0
  %v6224 = vadd.f32 0.0, %v6223
  %v6225 = vpop.f32.mrf.mxu0
  %v6226 = vadd.f32 0.0, %v6225
  %v6227 = vpop.f32.mrf.mxu0
  %v6228 = vpop.f32.mrf.mxu0
  %6229 = vdwg.mxu0
  %v6230 = vadd.f32 %v5951, %v6183
  %v6231 = vadd.f32 %v5952, %v6185
  %v6232 = vadd.f32 %v5953, %v6224
  %v6233 = vadd.f32 %v5954, %v6226
  %v6234 = vxor.u32 %v6230, 2147483648
  %v6235 = vmul.f32 %v6234, 1.442695
  %v6236 = vpow.pop %v6235
  %v6237 = vadd.f32 %v6236, 1.0
  %v6238 = vrcp.pop %v6237
  %v6239 = vmul.f32 1.0, %v6238
  %v6240 = vxor.u32 %v6231, 2147483648
  %v6241 = vmul.f32 %v6240, 1.442695
  %v6242 = vpow.pop %v6241
  %v6243 = vadd.f32 %v6242, 1.0
  %v6244 = vrcp.pop %v6243
  %v6245 = vmul.f32 1.0, %v6244
  %v6246 = vtanh.pop %v6232
  %v6247 = vxor.u32 %v6233, 2147483648
  %v6248 = vmul.f32 %v6247, 1.442695
  %v6249 = vpow.pop %v6248
  %v6250 = vadd.f32 %v6249, 1.0
  %v6251 = vrcp.pop %v6250
  %v6252 = vmul.f32 1.0, %v6251
  %v6253 = vmul.f32 %v6245, %v5934
  %v6254 = vmul.f32 %v6239, %v6246
  %v6255 = vadd.f32 %v6253, %v6254
  %v6256 = vtanh.pop %v6255
  %v6257 = vmul.f32 %v6252, %v6256
  %s6258 = scalar_lea.vmem [#allocation7], 24
  %6259 = vst [vmem:[%s6258] sm:$0xff] %v6257
  %s6260 = scalar_lea.vmem [#allocation9], 32
  %6261 = vst [vmem:[%s6260] sm:$0xff] %v6257
  %s6262 = scalar_lea.vmem [#allocation3], 128
  %v6263 = vld [vmem:[%s6262] sm:$0xff]
  %v6264 = vld [vmem:[%s6262 + $0x8] sm:$0xff]
  %v6265 = vld [vmem:[%s6262 + $0x10] sm:$0xff]
  %v6266 = vld [vmem:[%s6262 + $0x18] sm:$0xff]
  %s6267 = scalar_lea.vmem [#allocation5], 96
  %v6268 = vld [vmem:[%s6267] sm:$0xff]
  %v6269 = vld [vmem:[%s6267 + $0x8] sm:$0xff]
  %v6270 = vld [vmem:[%s6267 + $0x10] sm:$0xff]
  %v6271 = vld [vmem:[%s6267 + $0x18] sm:$0xff]
  %v6272 = vadd.f32 %v6263, %v6268
  %v6273 = vadd.f32 %v6264, %v6269
  %v6274 = vadd.f32 %v6265, %v6270
  %v6275 = vadd.f32 %v6266, %v6271
  %v6276 = vpack.c.bf16 %v6257, %v6257
  %v6277 = vld [vmem:[%s12] sm:$0xff]
  %v6278 = vld [vmem:[%s12 + $0x8] sm:$0xff]
  %v6279 = vld [vmem:[%s12 + $0x10] sm:$0xff]
  %v6280 = vld [vmem:[%s12 + $0x18] sm:$0xff]
  %v6281 = vld [vmem:[%s12 + $0x20] sm:$0xff]
  %v6282 = vld [vmem:[%s12 + $0x28] sm:$0xff]
  %v6283 = vld [vmem:[%s12 + $0x30] sm:$0xff]
  %v6284 = vld [vmem:[%s12 + $0x38] sm:$0xff]
  %v6285 = vld [vmem:[%s12 + $0x40] sm:$0xff]
  %v6286 = vld [vmem:[%s12 + $0x48] sm:$0xff]
  %v6287 = vld [vmem:[%s12 + $0x50] sm:$0xff]
  %v6288 = vld [vmem:[%s12 + $0x58] sm:$0xff]
  %v6289 = vld [vmem:[%s12 + $0x60] sm:$0xff]
  %v6290 = vld [vmem:[%s12 + $0x68] sm:$0xff]
  %v6291 = vld [vmem:[%s12 + $0x70] sm:$0xff]
  %v6292 = vld [vmem:[%s12 + $0x78] sm:$0xff]
  %v6293 = vld [vmem:[%s12 + $0x80] sm:$0xff]
  %v6294 = vld [vmem:[%s12 + $0x88] sm:$0xff]
  %v6295 = vld [vmem:[%s12 + $0x90] sm:$0xff]
  %v6296 = vld [vmem:[%s12 + $0x98] sm:$0xff]
  %v6297 = vld [vmem:[%s12 + $0xa0] sm:$0xff]
  %v6298 = vld [vmem:[%s12 + $0xa8] sm:$0xff]
  %v6299 = vld [vmem:[%s12 + $0xb0] sm:$0xff]
  %v6300 = vld [vmem:[%s12 + $0xb8] sm:$0xff]
  %v6301 = vld [vmem:[%s12 + $0xc0] sm:$0xff]
  %v6302 = vld [vmem:[%s12 + $0xc8] sm:$0xff]
  %v6303 = vld [vmem:[%s12 + $0xd0] sm:$0xff]
  %v6304 = vld [vmem:[%s12 + $0xd8] sm:$0xff]
  %v6305 = vld [vmem:[%s12 + $0xe0] sm:$0xff]
  %v6306 = vld [vmem:[%s12 + $0xe8] sm:$0xff]
  %v6307 = vld [vmem:[%s12 + $0xf0] sm:$0xff]
  %v6308 = vld [vmem:[%s12 + $0xf8] sm:$0xff]
  %v6341 = vunpack.c.l.b16 %v6277
  %v6342 = vunpack.c.h.b16 %v6277
  %v6343 = vunpack.c.l.b16 %v6278
  %v6344 = vunpack.c.h.b16 %v6278
  %v6345 = vunpack.c.l.b16 %v6279
  %v6346 = vunpack.c.h.b16 %v6279
  %v6347 = vunpack.c.l.b16 %v6280
  %v6348 = vunpack.c.h.b16 %v6280
  %v6349 = vunpack.c.l.b16 %v6281
  %v6350 = vunpack.c.h.b16 %v6281
  %v6351 = vunpack.c.l.b16 %v6282
  %v6352 = vunpack.c.h.b16 %v6282
  %v6353 = vunpack.c.l.b16 %v6283
  %v6354 = vunpack.c.h.b16 %v6283
  %v6355 = vunpack.c.l.b16 %v6284
  %v6356 = vunpack.c.h.b16 %v6284
  %v6357 = vunpack.c.l.b16 %v6285
  %v6358 = vunpack.c.h.b16 %v6285
  %v6359 = vunpack.c.l.b16 %v6286
  %v6360 = vunpack.c.h.b16 %v6286
  %v6361 = vunpack.c.l.b16 %v6287
  %v6362 = vunpack.c.h.b16 %v6287
  %v6363 = vunpack.c.l.b16 %v6288
  %v6364 = vunpack.c.h.b16 %v6288
  %v6365 = vunpack.c.l.b16 %v6289
  %v6366 = vunpack.c.h.b16 %v6289
  %v6367 = vunpack.c.l.b16 %v6290
  %v6368 = vunpack.c.h.b16 %v6290
  %v6369 = vunpack.c.l.b16 %v6291
  %v6370 = vunpack.c.h.b16 %v6291
  %v6371 = vunpack.c.l.b16 %v6292
  %v6372 = vunpack.c.h.b16 %v6292
  %v6373 = vunpack.c.l.b16 %v6293
  %v6374 = vunpack.c.h.b16 %v6293
  %v6375 = vunpack.c.l.b16 %v6294
  %v6376 = vunpack.c.h.b16 %v6294
  %v6377 = vunpack.c.l.b16 %v6295
  %v6378 = vunpack.c.h.b16 %v6295
  %v6379 = vunpack.c.l.b16 %v6296
  %v6380 = vunpack.c.h.b16 %v6296
  %v6381 = vunpack.c.l.b16 %v6297
  %v6382 = vunpack.c.h.b16 %v6297
  %v6383 = vunpack.c.l.b16 %v6298
  %v6384 = vunpack.c.h.b16 %v6298
  %v6385 = vunpack.c.l.b16 %v6299
  %v6386 = vunpack.c.h.b16 %v6299
  %v6387 = vunpack.c.l.b16 %v6300
  %v6388 = vunpack.c.h.b16 %v6300
  %v6389 = vunpack.c.l.b16 %v6301
  %v6390 = vunpack.c.h.b16 %v6301
  %v6391 = vunpack.c.l.b16 %v6302
  %v6392 = vunpack.c.h.b16 %v6302
  %v6393 = vunpack.c.l.b16 %v6303
  %v6394 = vunpack.c.h.b16 %v6303
  %v6395 = vunpack.c.l.b16 %v6304
  %v6396 = vunpack.c.h.b16 %v6304
  %v6397 = vunpack.c.l.b16 %v6305
  %v6398 = vunpack.c.h.b16 %v6305
  %v6399 = vunpack.c.l.b16 %v6306
  %v6400 = vunpack.c.h.b16 %v6306
  %v6401 = vunpack.c.l.b16 %v6307
  %v6402 = vunpack.c.h.b16 %v6307
  %v6403 = vunpack.c.l.b16 %v6308
  %v6404 = vunpack.c.h.b16 %v6308
  %v6405 = vpack.c.b16 %v6345, %v6341
  %v6406 = vpack.c.b16 %v6346, %v6342
  %v6407 = vpack.c.b16 %v6347, %v6343
  %v6408 = vpack.c.b16 %v6348, %v6344
  %v6409 = vpack.c.b16 %v6353, %v6349
  %v6410 = vpack.c.b16 %v6354, %v6350
  %v6411 = vpack.c.b16 %v6355, %v6351
  %v6412 = vpack.c.b16 %v6356, %v6352
  %v6413 = vpack.c.b16 %v6361, %v6357
  %v6414 = vpack.c.b16 %v6362, %v6358
  %v6415 = vpack.c.b16 %v6363, %v6359
  %v6416 = vpack.c.b16 %v6364, %v6360
  %v6417 = vpack.c.b16 %v6369, %v6365
  %v6418 = vpack.c.b16 %v6370, %v6366
  %v6419 = vpack.c.b16 %v6371, %v6367
  %v6420 = vpack.c.b16 %v6372, %v6368
  %v6421 = vpack.c.b16 %v6377, %v6373
  %v6422 = vpack.c.b16 %v6378, %v6374
  %v6423 = vpack.c.b16 %v6379, %v6375
  %v6424 = vpack.c.b16 %v6380, %v6376
  %v6425 = vpack.c.b16 %v6385, %v6381
  %v6426 = vpack.c.b16 %v6386, %v6382
  %v6427 = vpack.c.b16 %v6387, %v6383
  %v6428 = vpack.c.b16 %v6388, %v6384
  %v6429 = vpack.c.b16 %v6393, %v6389
  %v6430 = vpack.c.b16 %v6394, %v6390
  %v6431 = vpack.c.b16 %v6395, %v6391
  %v6432 = vpack.c.b16 %v6396, %v6392
  %v6433 = vpack.c.b16 %v6401, %v6397
  %v6434 = vpack.c.b16 %v6402, %v6398
  %v6435 = vpack.c.b16 %v6403, %v6399
  %v6436 = vpack.c.b16 %v6404, %v6400
  %6469 = vmatprep.subr.bf16.mxu0 %v6434
  %6470 = vmatpush1.bf16.msra.mxu0 %v6433
  %6471 = vmatprep.subr.bf16.mxu0 %v6430
  %6472 = vmatpush1.bf16.msra.mxu0 %v6429
  %6473 = vmatprep.subr.bf16.mxu0 %v6426
  %6474 = vmatpush1.bf16.msra.mxu0 %v6425
  %6475 = vmatprep.subr.bf16.mxu0 %v6422
  %6476 = vmatpush1.bf16.msra.mxu0 %v6421
  %6477 = vmatprep.subr.bf16.mxu0 %v6418
  %6478 = vmatpush1.bf16.msra.mxu0 %v6417
  %6479 = vmatprep.subr.bf16.mxu0 %v6414
  %6480 = vmatpush1.bf16.msra.mxu0 %v6413
  %6481 = vmatprep.subr.bf16.mxu0 %v6410
  %6482 = vmatpush1.bf16.msra.mxu0 %v6409
  %6483 = vmatprep.subr.bf16.mxu0 %v6406
  %6484 = vmatpush1.bf16.msra.mxu0 %v6405
  %6485 = vmatprep.subr.bf16.mxu0 0
  %6486 = vmatpush2.bf16.msra.mxu0 0
  %6487 = vmatprep.subr.bf16.mxu0 0
  %6488 = vmatpush2.bf16.msra.mxu0 0
  %6489 = vmatprep.subr.bf16.mxu0 0
  %6490 = vmatpush2.bf16.msra.mxu0 0
  %6491 = vmatprep.subr.bf16.mxu0 0
  %6492 = vmatpush2.bf16.msra.mxu0 0
  %6493 = vmatprep.subr.bf16.mxu0 0
  %6494 = vmatpush2.bf16.msra.mxu0 0
  %6495 = vmatprep.subr.bf16.mxu0 0
  %6496 = vmatpush2.bf16.msra.mxu0 0
  %6497 = vmatprep.subr.bf16.mxu0 0
  %6498 = vmatpush2.bf16.msra.mxu0 0
  %6499 = vmatprep.subr.bf16.mxu0 0
  %6500 = vmatpush2.bf16.msra.mxu0 0
  %6501 = vmatprep.mubr.bf16.mxu0 0
  %6502 = vmatmul.mubr.bf16.gmra.mxu0 %v6276
  %v6503 = vpop.f32.mrf.mxu0
  %v6504 = vadd.f32 0.0, %v6503
  %v6505 = vpop.f32.mrf.mxu0
  %v6506 = vadd.f32 0.0, %v6505
  %v6507 = vpop.f32.mrf.mxu0
  %v6508 = vpop.f32.mrf.mxu0
  %6509 = vdwg.mxu0
  %6510 = vmatprep.subr.bf16.mxu0 %v6436
  %6511 = vmatpush1.bf16.msra.mxu0 %v6435
  %6512 = vmatprep.subr.bf16.mxu0 %v6432
  %6513 = vmatpush1.bf16.msra.mxu0 %v6431
  %6514 = vmatprep.subr.bf16.mxu0 %v6428
  %6515 = vmatpush1.bf16.msra.mxu0 %v6427
  %6516 = vmatprep.subr.bf16.mxu0 %v6424
  %6517 = vmatpush1.bf16.msra.mxu0 %v6423
  %6518 = vmatprep.subr.bf16.mxu0 %v6420
  %6519 = vmatpush1.bf16.msra.mxu0 %v6419
  %6520 = vmatprep.subr.bf16.mxu0 %v6416
  %6521 = vmatpush1.bf16.msra.mxu0 %v6415
  %6522 = vmatprep.subr.bf16.mxu0 %v6412
  %6523 = vmatpush1.bf16.msra.mxu0 %v6411
  %6524 = vmatprep.subr.bf16.mxu0 %v6408
  %6525 = vmatpush1.bf16.msra.mxu0 %v6407
  %6526 = vmatprep.subr.bf16.mxu0 0
  %6527 = vmatpush2.bf16.msra.mxu0 0
  %6528 = vmatprep.subr.bf16.mxu0 0
  %6529 = vmatpush2.bf16.msra.mxu0 0
  %6530 = vmatprep.subr.bf16.mxu0 0
  %6531 = vmatpush2.bf16.msra.mxu0 0
  %6532 = vmatprep.subr.bf16.mxu0 0
  %6533 = vmatpush2.bf16.msra.mxu0 0
  %6534 = vmatprep.subr.bf16.mxu0 0
  %6535 = vmatpush2.bf16.msra.mxu0 0
  %6536 = vmatprep.subr.bf16.mxu0 0
  %6537 = vmatpush2.bf16.msra.mxu0 0
  %6538 = vmatprep.subr.bf16.mxu0 0
  %6539 = vmatpush2.bf16.msra.mxu0 0
  %6540 = vmatprep.subr.bf16.mxu0 0
  %6541 = vmatpush2.bf16.msra.mxu0 0
  %6542 = vmatprep.mubr.bf16.mxu0 0
  %6543 = vmatmul.mubr.bf16.gmra.mxu0 %v6276
  %v6544 = vpop.f32.mrf.mxu0
  %v6545 = vadd.f32 0.0, %v6544
  %v6546 = vpop.f32.mrf.mxu0
  %v6547 = vadd.f32 0.0, %v6546
  %v6548 = vpop.f32.mrf.mxu0
  %v6549 = vpop.f32.mrf.mxu0
  %6550 = vdwg.mxu0
  %v6551 = vadd.f32 %v6272, %v6504
  %v6552 = vadd.f32 %v6273, %v6506
  %v6553 = vadd.f32 %v6274, %v6545
  %v6554 = vadd.f32 %v6275, %v6547
  %v6555 = vxor.u32 %v6551, 2147483648
  %v6556 = vmul.f32 %v6555, 1.442695
  %v6557 = vpow.pop %v6556
  %v6558 = vadd.f32 %v6557, 1.0
  %v6559 = vrcp.pop %v6558
  %v6560 = vmul.f32 1.0, %v6559
  %v6561 = vxor.u32 %v6552, 2147483648
  %v6562 = vmul.f32 %v6561, 1.442695
  %v6563 = vpow.pop %v6562
  %v6564 = vadd.f32 %v6563, 1.0
  %v6565 = vrcp.pop %v6564
  %v6566 = vmul.f32 1.0, %v6565
  %v6567 = vtanh.pop %v6553
  %v6568 = vxor.u32 %v6554, 2147483648
  %v6569 = vmul.f32 %v6568, 1.442695
  %v6570 = vpow.pop %v6569
  %v6571 = vadd.f32 %v6570, 1.0
  %v6572 = vrcp.pop %v6571
  %v6573 = vmul.f32 1.0, %v6572
  %v6574 = vmul.f32 %v6566, %v6255
  %v6575 = vmul.f32 %v6560, %v6567
  %v6576 = vadd.f32 %v6574, %v6575
  %v6577 = vtanh.pop %v6576
  %v6578 = vmul.f32 %v6573, %v6577
  %s6579 = scalar_lea.vmem [#allocation7], 32
  %6580 = vst [vmem:[%s6579] sm:$0xff] %v6578
  %s6581 = scalar_lea.vmem [#allocation9], 24
  %6582 = vst [vmem:[%s6581] sm:$0xff] %v6578
  %s6583 = scalar_lea.vmem [#allocation3], 160
  %v6584 = vld [vmem:[%s6583] sm:$0xff]
  %v6585 = vld [vmem:[%s6583 + $0x8] sm:$0xff]
  %v6586 = vld [vmem:[%s6583 + $0x10] sm:$0xff]
  %v6587 = vld [vmem:[%s6583 + $0x18] sm:$0xff]
  %s6588 = scalar_lea.vmem [#allocation5], 64
  %v6589 = vld [vmem:[%s6588] sm:$0xff]
  %v6590 = vld [vmem:[%s6588 + $0x8] sm:$0xff]
  %v6591 = vld [vmem:[%s6588 + $0x10] sm:$0xff]
  %v6592 = vld [vmem:[%s6588 + $0x18] sm:$0xff]
  %v6593 = vadd.f32 %v6584, %v6589
  %v6594 = vadd.f32 %v6585, %v6590
  %v6595 = vadd.f32 %v6586, %v6591
  %v6596 = vadd.f32 %v6587, %v6592
  %v6597 = vpack.c.bf16 %v6578, %v6578
  %v6598 = vld [vmem:[%s12] sm:$0xff]
  %v6599 = vld [vmem:[%s12 + $0x8] sm:$0xff]
  %v6600 = vld [vmem:[%s12 + $0x10] sm:$0xff]
  %v6601 = vld [vmem:[%s12 + $0x18] sm:$0xff]
  %v6602 = vld [vmem:[%s12 + $0x20] sm:$0xff]
  %v6603 = vld [vmem:[%s12 + $0x28] sm:$0xff]
  %v6604 = vld [vmem:[%s12 + $0x30] sm:$0xff]
  %v6605 = vld [vmem:[%s12 + $0x38] sm:$0xff]
  %v6606 = vld [vmem:[%s12 + $0x40] sm:$0xff]
  %v6607 = vld [vmem:[%s12 + $0x48] sm:$0xff]
  %v6608 = vld [vmem:[%s12 + $0x50] sm:$0xff]
  %v6609 = vld [vmem:[%s12 + $0x58] sm:$0xff]
  %v6610 = vld [vmem:[%s12 + $0x60] sm:$0xff]
  %v6611 = vld [vmem:[%s12 + $0x68] sm:$0xff]
  %v6612 = vld [vmem:[%s12 + $0x70] sm:$0xff]
  %v6613 = vld [vmem:[%s12 + $0x78] sm:$0xff]
  %v6614 = vld [vmem:[%s12 + $0x80] sm:$0xff]
  %v6615 = vld [vmem:[%s12 + $0x88] sm:$0xff]
  %v6616 = vld [vmem:[%s12 + $0x90] sm:$0xff]
  %v6617 = vld [vmem:[%s12 + $0x98] sm:$0xff]
  %v6618 = vld [vmem:[%s12 + $0xa0] sm:$0xff]
  %v6619 = vld [vmem:[%s12 + $0xa8] sm:$0xff]
  %v6620 = vld [vmem:[%s12 + $0xb0] sm:$0xff]
  %v6621 = vld [vmem:[%s12 + $0xb8] sm:$0xff]
  %v6622 = vld [vmem:[%s12 + $0xc0] sm:$0xff]
  %v6623 = vld [vmem:[%s12 + $0xc8] sm:$0xff]
  %v6624 = vld [vmem:[%s12 + $0xd0] sm:$0xff]
  %v6625 = vld [vmem:[%s12 + $0xd8] sm:$0xff]
  %v6626 = vld [vmem:[%s12 + $0xe0] sm:$0xff]
  %v6627 = vld [vmem:[%s12 + $0xe8] sm:$0xff]
  %v6628 = vld [vmem:[%s12 + $0xf0] sm:$0xff]
  %v6629 = vld [vmem:[%s12 + $0xf8] sm:$0xff]
  %v6662 = vunpack.c.l.b16 %v6598
  %v6663 = vunpack.c.h.b16 %v6598
  %v6664 = vunpack.c.l.b16 %v6599
  %v6665 = vunpack.c.h.b16 %v6599
  %v6666 = vunpack.c.l.b16 %v6600
  %v6667 = vunpack.c.h.b16 %v6600
  %v6668 = vunpack.c.l.b16 %v6601
  %v6669 = vunpack.c.h.b16 %v6601
  %v6670 = vunpack.c.l.b16 %v6602
  %v6671 = vunpack.c.h.b16 %v6602
  %v6672 = vunpack.c.l.b16 %v6603
  %v6673 = vunpack.c.h.b16 %v6603
  %v6674 = vunpack.c.l.b16 %v6604
  %v6675 = vunpack.c.h.b16 %v6604
  %v6676 = vunpack.c.l.b16 %v6605
  %v6677 = vunpack.c.h.b16 %v6605
  %v6678 = vunpack.c.l.b16 %v6606
  %v6679 = vunpack.c.h.b16 %v6606
  %v6680 = vunpack.c.l.b16 %v6607
  %v6681 = vunpack.c.h.b16 %v6607
  %v6682 = vunpack.c.l.b16 %v6608
  %v6683 = vunpack.c.h.b16 %v6608
  %v6684 = vunpack.c.l.b16 %v6609
  %v6685 = vunpack.c.h.b16 %v6609
  %v6686 = vunpack.c.l.b16 %v6610
  %v6687 = vunpack.c.h.b16 %v6610
  %v6688 = vunpack.c.l.b16 %v6611
  %v6689 = vunpack.c.h.b16 %v6611
  %v6690 = vunpack.c.l.b16 %v6612
  %v6691 = vunpack.c.h.b16 %v6612
  %v6692 = vunpack.c.l.b16 %v6613
  %v6693 = vunpack.c.h.b16 %v6613
  %v6694 = vunpack.c.l.b16 %v6614
  %v6695 = vunpack.c.h.b16 %v6614
  %v6696 = vunpack.c.l.b16 %v6615
  %v6697 = vunpack.c.h.b16 %v6615
  %v6698 = vunpack.c.l.b16 %v6616
  %v6699 = vunpack.c.h.b16 %v6616
  %v6700 = vunpack.c.l.b16 %v6617
  %v6701 = vunpack.c.h.b16 %v6617
  %v6702 = vunpack.c.l.b16 %v6618
  %v6703 = vunpack.c.h.b16 %v6618
  %v6704 = vunpack.c.l.b16 %v6619
  %v6705 = vunpack.c.h.b16 %v6619
  %v6706 = vunpack.c.l.b16 %v6620
  %v6707 = vunpack.c.h.b16 %v6620
  %v6708 = vunpack.c.l.b16 %v6621
  %v6709 = vunpack.c.h.b16 %v6621
  %v6710 = vunpack.c.l.b16 %v6622
  %v6711 = vunpack.c.h.b16 %v6622
  %v6712 = vunpack.c.l.b16 %v6623
  %v6713 = vunpack.c.h.b16 %v6623
  %v6714 = vunpack.c.l.b16 %v6624
  %v6715 = vunpack.c.h.b16 %v6624
  %v6716 = vunpack.c.l.b16 %v6625
  %v6717 = vunpack.c.h.b16 %v6625
  %v6718 = vunpack.c.l.b16 %v6626
  %v6719 = vunpack.c.h.b16 %v6626
  %v6720 = vunpack.c.l.b16 %v6627
  %v6721 = vunpack.c.h.b16 %v6627
  %v6722 = vunpack.c.l.b16 %v6628
  %v6723 = vunpack.c.h.b16 %v6628
  %v6724 = vunpack.c.l.b16 %v6629
  %v6725 = vunpack.c.h.b16 %v6629
  %v6726 = vpack.c.b16 %v6666, %v6662
  %v6727 = vpack.c.b16 %v6667, %v6663
  %v6728 = vpack.c.b16 %v6668, %v6664
  %v6729 = vpack.c.b16 %v6669, %v6665
  %v6730 = vpack.c.b16 %v6674, %v6670
  %v6731 = vpack.c.b16 %v6675, %v6671
  %v6732 = vpack.c.b16 %v6676, %v6672
  %v6733 = vpack.c.b16 %v6677, %v6673
  %v6734 = vpack.c.b16 %v6682, %v6678
  %v6735 = vpack.c.b16 %v6683, %v6679
  %v6736 = vpack.c.b16 %v6684, %v6680
  %v6737 = vpack.c.b16 %v6685, %v6681
  %v6738 = vpack.c.b16 %v6690, %v6686
  %v6739 = vpack.c.b16 %v6691, %v6687
  %v6740 = vpack.c.b16 %v6692, %v6688
  %v6741 = vpack.c.b16 %v6693, %v6689
  %v6742 = vpack.c.b16 %v6698, %v6694
  %v6743 = vpack.c.b16 %v6699, %v6695
  %v6744 = vpack.c.b16 %v6700, %v6696
  %v6745 = vpack.c.b16 %v6701, %v6697
  %v6746 = vpack.c.b16 %v6706, %v6702
  %v6747 = vpack.c.b16 %v6707, %v6703
  %v6748 = vpack.c.b16 %v6708, %v6704
  %v6749 = vpack.c.b16 %v6709, %v6705
  %v6750 = vpack.c.b16 %v6714, %v6710
  %v6751 = vpack.c.b16 %v6715, %v6711
  %v6752 = vpack.c.b16 %v6716, %v6712
  %v6753 = vpack.c.b16 %v6717, %v6713
  %v6754 = vpack.c.b16 %v6722, %v6718
  %v6755 = vpack.c.b16 %v6723, %v6719
  %v6756 = vpack.c.b16 %v6724, %v6720
  %v6757 = vpack.c.b16 %v6725, %v6721
  %6790 = vmatprep.subr.bf16.mxu0 %v6755
  %6791 = vmatpush1.bf16.msra.mxu0 %v6754
  %6792 = vmatprep.subr.bf16.mxu0 %v6751
  %6793 = vmatpush1.bf16.msra.mxu0 %v6750
  %6794 = vmatprep.subr.bf16.mxu0 %v6747
  %6795 = vmatpush1.bf16.msra.mxu0 %v6746
  %6796 = vmatprep.subr.bf16.mxu0 %v6743
  %6797 = vmatpush1.bf16.msra.mxu0 %v6742
  %6798 = vmatprep.subr.bf16.mxu0 %v6739
  %6799 = vmatpush1.bf16.msra.mxu0 %v6738
  %6800 = vmatprep.subr.bf16.mxu0 %v6735
  %6801 = vmatpush1.bf16.msra.mxu0 %v6734
  %6802 = vmatprep.subr.bf16.mxu0 %v6731
  %6803 = vmatpush1.bf16.msra.mxu0 %v6730
  %6804 = vmatprep.subr.bf16.mxu0 %v6727
  %6805 = vmatpush1.bf16.msra.mxu0 %v6726
  %6806 = vmatprep.subr.bf16.mxu0 0
  %6807 = vmatpush2.bf16.msra.mxu0 0
  %6808 = vmatprep.subr.bf16.mxu0 0
  %6809 = vmatpush2.bf16.msra.mxu0 0
  %6810 = vmatprep.subr.bf16.mxu0 0
  %6811 = vmatpush2.bf16.msra.mxu0 0
  %6812 = vmatprep.subr.bf16.mxu0 0
  %6813 = vmatpush2.bf16.msra.mxu0 0
  %6814 = vmatprep.subr.bf16.mxu0 0
  %6815 = vmatpush2.bf16.msra.mxu0 0
  %6816 = vmatprep.subr.bf16.mxu0 0
  %6817 = vmatpush2.bf16.msra.mxu0 0
  %6818 = vmatprep.subr.bf16.mxu0 0
  %6819 = vmatpush2.bf16.msra.mxu0 0
  %6820 = vmatprep.subr.bf16.mxu0 0
  %6821 = vmatpush2.bf16.msra.mxu0 0
  %6822 = vmatprep.mubr.bf16.mxu0 0
  %6823 = vmatmul.mubr.bf16.gmra.mxu0 %v6597
  %v6824 = vpop.f32.mrf.mxu0
  %v6825 = vadd.f32 0.0, %v6824
  %v6826 = vpop.f32.mrf.mxu0
  %v6827 = vadd.f32 0.0, %v6826
  %v6828 = vpop.f32.mrf.mxu0
  %v6829 = vpop.f32.mrf.mxu0
  %6830 = vdwg.mxu0
  %6831 = vmatprep.subr.bf16.mxu0 %v6757
  %6832 = vmatpush1.bf16.msra.mxu0 %v6756
  %6833 = vmatprep.subr.bf16.mxu0 %v6753
  %6834 = vmatpush1.bf16.msra.mxu0 %v6752
  %6835 = vmatprep.subr.bf16.mxu0 %v6749
  %6836 = vmatpush1.bf16.msra.mxu0 %v6748
  %6837 = vmatprep.subr.bf16.mxu0 %v6745
  %6838 = vmatpush1.bf16.msra.mxu0 %v6744
  %6839 = vmatprep.subr.bf16.mxu0 %v6741
  %6840 = vmatpush1.bf16.msra.mxu0 %v6740
  %6841 = vmatprep.subr.bf16.mxu0 %v6737
  %6842 = vmatpush1.bf16.msra.mxu0 %v6736
  %6843 = vmatprep.subr.bf16.mxu0 %v6733
  %6844 = vmatpush1.bf16.msra.mxu0 %v6732
  %6845 = vmatprep.subr.bf16.mxu0 %v6729
  %6846 = vmatpush1.bf16.msra.mxu0 %v6728
  %6847 = vmatprep.subr.bf16.mxu0 0
  %6848 = vmatpush2.bf16.msra.mxu0 0
  %6849 = vmatprep.subr.bf16.mxu0 0
  %6850 = vmatpush2.bf16.msra.mxu0 0
  %6851 = vmatprep.subr.bf16.mxu0 0
  %6852 = vmatpush2.bf16.msra.mxu0 0
  %6853 = vmatprep.subr.bf16.mxu0 0
  %6854 = vmatpush2.bf16.msra.mxu0 0
  %6855 = vmatprep.subr.bf16.mxu0 0
  %6856 = vmatpush2.bf16.msra.mxu0 0
  %6857 = vmatprep.subr.bf16.mxu0 0
  %6858 = vmatpush2.bf16.msra.mxu0 0
  %6859 = vmatprep.subr.bf16.mxu0 0
  %6860 = vmatpush2.bf16.msra.mxu0 0
  %6861 = vmatprep.subr.bf16.mxu0 0
  %6862 = vmatpush2.bf16.msra.mxu0 0
  %6863 = vmatprep.mubr.bf16.mxu0 0
  %6864 = vmatmul.mubr.bf16.gmra.mxu0 %v6597
  %v6865 = vpop.f32.mrf.mxu0
  %v6866 = vadd.f32 0.0, %v6865
  %v6867 = vpop.f32.mrf.mxu0
  %v6868 = vadd.f32 0.0, %v6867
  %v6869 = vpop.f32.mrf.mxu0
  %v6870 = vpop.f32.mrf.mxu0
  %6871 = vdwg.mxu0
  %v6872 = vadd.f32 %v6593, %v6825
  %v6873 = vadd.f32 %v6594, %v6827
  %v6874 = vadd.f32 %v6595, %v6866
  %v6875 = vadd.f32 %v6596, %v6868
  %v6876 = vxor.u32 %v6872, 2147483648
  %v6877 = vmul.f32 %v6876, 1.442695
  %v6878 = vpow.pop %v6877
  %v6879 = vadd.f32 %v6878, 1.0
  %v6880 = vrcp.pop %v6879
  %v6881 = vmul.f32 1.0, %v6880
  %v6882 = vxor.u32 %v6873, 2147483648
  %v6883 = vmul.f32 %v6882, 1.442695
  %v6884 = vpow.pop %v6883
  %v6885 = vadd.f32 %v6884, 1.0
  %v6886 = vrcp.pop %v6885
  %v6887 = vmul.f32 1.0, %v6886
  %v6888 = vtanh.pop %v6874
  %v6889 = vxor.u32 %v6875, 2147483648
  %v6890 = vmul.f32 %v6889, 1.442695
  %v6891 = vpow.pop %v6890
  %v6892 = vadd.f32 %v6891, 1.0
  %v6893 = vrcp.pop %v6892
  %v6894 = vmul.f32 1.0, %v6893
  %v6895 = vmul.f32 %v6887, %v6576
  %v6896 = vmul.f32 %v6881, %v6888
  %v6897 = vadd.f32 %v6895, %v6896
  %v6898 = vtanh.pop %v6897
  %v6899 = vmul.f32 %v6894, %v6898
  %s6900 = scalar_lea.vmem [#allocation7], 40
  %6901 = vst [vmem:[%s6900] sm:$0xff] %v6899
  %s6902 = scalar_lea.vmem [#allocation9], 16
  %6903 = vst [vmem:[%s6902] sm:$0xff] %v6899
  %s6904 = scalar_lea.vmem [#allocation3], 192
  %v6905 = vld [vmem:[%s6904] sm:$0xff]
  %v6906 = vld [vmem:[%s6904 + $0x8] sm:$0xff]
  %v6907 = vld [vmem:[%s6904 + $0x10] sm:$0xff]
  %v6908 = vld [vmem:[%s6904 + $0x18] sm:$0xff]
  %s6909 = scalar_lea.vmem [#allocation5], 32
  %v6910 = vld [vmem:[%s6909] sm:$0xff]
  %v6911 = vld [vmem:[%s6909 + $0x8] sm:$0xff]
  %v6912 = vld [vmem:[%s6909 + $0x10] sm:$0xff]
  %v6913 = vld [vmem:[%s6909 + $0x18] sm:$0xff]
  %v6914 = vadd.f32 %v6905, %v6910
  %v6915 = vadd.f32 %v6906, %v6911
  %v6916 = vadd.f32 %v6907, %v6912
  %v6917 = vadd.f32 %v6908, %v6913
  %v6918 = vpack.c.bf16 %v6899, %v6899
  %v6919 = vld [vmem:[%s12] sm:$0xff]
  %v6920 = vld [vmem:[%s12 + $0x8] sm:$0xff]
  %v6921 = vld [vmem:[%s12 + $0x10] sm:$0xff]
  %v6922 = vld [vmem:[%s12 + $0x18] sm:$0xff]
  %v6923 = vld [vmem:[%s12 + $0x20] sm:$0xff]
  %v6924 = vld [vmem:[%s12 + $0x28] sm:$0xff]
  %v6925 = vld [vmem:[%s12 + $0x30] sm:$0xff]
  %v6926 = vld [vmem:[%s12 + $0x38] sm:$0xff]
  %v6927 = vld [vmem:[%s12 + $0x40] sm:$0xff]
  %v6928 = vld [vmem:[%s12 + $0x48] sm:$0xff]
  %v6929 = vld [vmem:[%s12 + $0x50] sm:$0xff]
  %v6930 = vld [vmem:[%s12 + $0x58] sm:$0xff]
  %v6931 = vld [vmem:[%s12 + $0x60] sm:$0xff]
  %v6932 = vld [vmem:[%s12 + $0x68] sm:$0xff]
  %v6933 = vld [vmem:[%s12 + $0x70] sm:$0xff]
  %v6934 = vld [vmem:[%s12 + $0x78] sm:$0xff]
  %v6935 = vld [vmem:[%s12 + $0x80] sm:$0xff]
  %v6936 = vld [vmem:[%s12 + $0x88] sm:$0xff]
  %v6937 = vld [vmem:[%s12 + $0x90] sm:$0xff]
  %v6938 = vld [vmem:[%s12 + $0x98] sm:$0xff]
  %v6939 = vld [vmem:[%s12 + $0xa0] sm:$0xff]
  %v6940 = vld [vmem:[%s12 + $0xa8] sm:$0xff]
  %v6941 = vld [vmem:[%s12 + $0xb0] sm:$0xff]
  %v6942 = vld [vmem:[%s12 + $0xb8] sm:$0xff]
  %v6943 = vld [vmem:[%s12 + $0xc0] sm:$0xff]
  %v6944 = vld [vmem:[%s12 + $0xc8] sm:$0xff]
  %v6945 = vld [vmem:[%s12 + $0xd0] sm:$0xff]
  %v6946 = vld [vmem:[%s12 + $0xd8] sm:$0xff]
  %v6947 = vld [vmem:[%s12 + $0xe0] sm:$0xff]
  %v6948 = vld [vmem:[%s12 + $0xe8] sm:$0xff]
  %v6949 = vld [vmem:[%s12 + $0xf0] sm:$0xff]
  %v6950 = vld [vmem:[%s12 + $0xf8] sm:$0xff]
  %v6983 = vunpack.c.l.b16 %v6919
  %v6984 = vunpack.c.h.b16 %v6919
  %v6985 = vunpack.c.l.b16 %v6920
  %v6986 = vunpack.c.h.b16 %v6920
  %v6987 = vunpack.c.l.b16 %v6921
  %v6988 = vunpack.c.h.b16 %v6921
  %v6989 = vunpack.c.l.b16 %v6922
  %v6990 = vunpack.c.h.b16 %v6922
  %v6991 = vunpack.c.l.b16 %v6923
  %v6992 = vunpack.c.h.b16 %v6923
  %v6993 = vunpack.c.l.b16 %v6924
  %v6994 = vunpack.c.h.b16 %v6924
  %v6995 = vunpack.c.l.b16 %v6925
  %v6996 = vunpack.c.h.b16 %v6925
  %v6997 = vunpack.c.l.b16 %v6926
  %v6998 = vunpack.c.h.b16 %v6926
  %v6999 = vunpack.c.l.b16 %v6927
  %v7000 = vunpack.c.h.b16 %v6927
  %v7001 = vunpack.c.l.b16 %v6928
  %v7002 = vunpack.c.h.b16 %v6928
  %v7003 = vunpack.c.l.b16 %v6929
  %v7004 = vunpack.c.h.b16 %v6929
  %v7005 = vunpack.c.l.b16 %v6930
  %v7006 = vunpack.c.h.b16 %v6930
  %v7007 = vunpack.c.l.b16 %v6931
  %v7008 = vunpack.c.h.b16 %v6931
  %v7009 = vunpack.c.l.b16 %v6932
  %v7010 = vunpack.c.h.b16 %v6932
  %v7011 = vunpack.c.l.b16 %v6933
  %v7012 = vunpack.c.h.b16 %v6933
  %v7013 = vunpack.c.l.b16 %v6934
  %v7014 = vunpack.c.h.b16 %v6934
  %v7015 = vunpack.c.l.b16 %v6935
  %v7016 = vunpack.c.h.b16 %v6935
  %v7017 = vunpack.c.l.b16 %v6936
  %v7018 = vunpack.c.h.b16 %v6936
  %v7019 = vunpack.c.l.b16 %v6937
  %v7020 = vunpack.c.h.b16 %v6937
  %v7021 = vunpack.c.l.b16 %v6938
  %v7022 = vunpack.c.h.b16 %v6938
  %v7023 = vunpack.c.l.b16 %v6939
  %v7024 = vunpack.c.h.b16 %v6939
  %v7025 = vunpack.c.l.b16 %v6940
  %v7026 = vunpack.c.h.b16 %v6940
  %v7027 = vunpack.c.l.b16 %v6941
  %v7028 = vunpack.c.h.b16 %v6941
  %v7029 = vunpack.c.l.b16 %v6942
  %v7030 = vunpack.c.h.b16 %v6942
  %v7031 = vunpack.c.l.b16 %v6943
  %v7032 = vunpack.c.h.b16 %v6943
  %v7033 = vunpack.c.l.b16 %v6944
  %v7034 = vunpack.c.h.b16 %v6944
  %v7035 = vunpack.c.l.b16 %v6945
  %v7036 = vunpack.c.h.b16 %v6945
  %v7037 = vunpack.c.l.b16 %v6946
  %v7038 = vunpack.c.h.b16 %v6946
  %v7039 = vunpack.c.l.b16 %v6947
  %v7040 = vunpack.c.h.b16 %v6947
  %v7041 = vunpack.c.l.b16 %v6948
  %v7042 = vunpack.c.h.b16 %v6948
  %v7043 = vunpack.c.l.b16 %v6949
  %v7044 = vunpack.c.h.b16 %v6949
  %v7045 = vunpack.c.l.b16 %v6950
  %v7046 = vunpack.c.h.b16 %v6950
  %v7047 = vpack.c.b16 %v6987, %v6983
  %v7048 = vpack.c.b16 %v6988, %v6984
  %v7049 = vpack.c.b16 %v6989, %v6985
  %v7050 = vpack.c.b16 %v6990, %v6986
  %v7051 = vpack.c.b16 %v6995, %v6991
  %v7052 = vpack.c.b16 %v6996, %v6992
  %v7053 = vpack.c.b16 %v6997, %v6993
  %v7054 = vpack.c.b16 %v6998, %v6994
  %v7055 = vpack.c.b16 %v7003, %v6999
  %v7056 = vpack.c.b16 %v7004, %v7000
  %v7057 = vpack.c.b16 %v7005, %v7001
  %v7058 = vpack.c.b16 %v7006, %v7002
  %v7059 = vpack.c.b16 %v7011, %v7007
  %v7060 = vpack.c.b16 %v7012, %v7008
  %v7061 = vpack.c.b16 %v7013, %v7009
  %v7062 = vpack.c.b16 %v7014, %v7010
  %v7063 = vpack.c.b16 %v7019, %v7015
  %v7064 = vpack.c.b16 %v7020, %v7016
  %v7065 = vpack.c.b16 %v7021, %v7017
  %v7066 = vpack.c.b16 %v7022, %v7018
  %v7067 = vpack.c.b16 %v7027, %v7023
  %v7068 = vpack.c.b16 %v7028, %v7024
  %v7069 = vpack.c.b16 %v7029, %v7025
  %v7070 = vpack.c.b16 %v7030, %v7026
  %v7071 = vpack.c.b16 %v7035, %v7031
  %v7072 = vpack.c.b16 %v7036, %v7032
  %v7073 = vpack.c.b16 %v7037, %v7033
  %v7074 = vpack.c.b16 %v7038, %v7034
  %v7075 = vpack.c.b16 %v7043, %v7039
  %v7076 = vpack.c.b16 %v7044, %v7040
  %v7077 = vpack.c.b16 %v7045, %v7041
  %v7078 = vpack.c.b16 %v7046, %v7042
  %7111 = vmatprep.subr.bf16.mxu0 %v7076
  %7112 = vmatpush1.bf16.msra.mxu0 %v7075
  %7113 = vmatprep.subr.bf16.mxu0 %v7072
  %7114 = vmatpush1.bf16.msra.mxu0 %v7071
  %7115 = vmatprep.subr.bf16.mxu0 %v7068
  %7116 = vmatpush1.bf16.msra.mxu0 %v7067
  %7117 = vmatprep.subr.bf16.mxu0 %v7064
  %7118 = vmatpush1.bf16.msra.mxu0 %v7063
  %7119 = vmatprep.subr.bf16.mxu0 %v7060
  %7120 = vmatpush1.bf16.msra.mxu0 %v7059
  %7121 = vmatprep.subr.bf16.mxu0 %v7056
  %7122 = vmatpush1.bf16.msra.mxu0 %v7055
  %7123 = vmatprep.subr.bf16.mxu0 %v7052
  %7124 = vmatpush1.bf16.msra.mxu0 %v7051
  %7125 = vmatprep.subr.bf16.mxu0 %v7048
  %7126 = vmatpush1.bf16.msra.mxu0 %v7047
  %7127 = vmatprep.subr.bf16.mxu0 0
  %7128 = vmatpush2.bf16.msra.mxu0 0
  %7129 = vmatprep.subr.bf16.mxu0 0
  %7130 = vmatpush2.bf16.msra.mxu0 0
  %7131 = vmatprep.subr.bf16.mxu0 0
  %7132 = vmatpush2.bf16.msra.mxu0 0
  %7133 = vmatprep.subr.bf16.mxu0 0
  %7134 = vmatpush2.bf16.msra.mxu0 0
  %7135 = vmatprep.subr.bf16.mxu0 0
  %7136 = vmatpush2.bf16.msra.mxu0 0
  %7137 = vmatprep.subr.bf16.mxu0 0
  %7138 = vmatpush2.bf16.msra.mxu0 0
  %7139 = vmatprep.subr.bf16.mxu0 0
  %7140 = vmatpush2.bf16.msra.mxu0 0
  %7141 = vmatprep.subr.bf16.mxu0 0
  %7142 = vmatpush2.bf16.msra.mxu0 0
  %7143 = vmatprep.mubr.bf16.mxu0 0
  %7144 = vmatmul.mubr.bf16.gmra.mxu0 %v6918
  %v7145 = vpop.f32.mrf.mxu0
  %v7146 = vadd.f32 0.0, %v7145
  %v7147 = vpop.f32.mrf.mxu0
  %v7148 = vadd.f32 0.0, %v7147
  %v7149 = vpop.f32.mrf.mxu0
  %v7150 = vpop.f32.mrf.mxu0
  %7151 = vdwg.mxu0
  %7152 = vmatprep.subr.bf16.mxu0 %v7078
  %7153 = vmatpush1.bf16.msra.mxu0 %v7077
  %7154 = vmatprep.subr.bf16.mxu0 %v7074
  %7155 = vmatpush1.bf16.msra.mxu0 %v7073
  %7156 = vmatprep.subr.bf16.mxu0 %v7070
  %7157 = vmatpush1.bf16.msra.mxu0 %v7069
  %7158 = vmatprep.subr.bf16.mxu0 %v7066
  %7159 = vmatpush1.bf16.msra.mxu0 %v7065
  %7160 = vmatprep.subr.bf16.mxu0 %v7062
  %7161 = vmatpush1.bf16.msra.mxu0 %v7061
  %7162 = vmatprep.subr.bf16.mxu0 %v7058
  %7163 = vmatpush1.bf16.msra.mxu0 %v7057
  %7164 = vmatprep.subr.bf16.mxu0 %v7054
  %7165 = vmatpush1.bf16.msra.mxu0 %v7053
  %7166 = vmatprep.subr.bf16.mxu0 %v7050
  %7167 = vmatpush1.bf16.msra.mxu0 %v7049
  %7168 = vmatprep.subr.bf16.mxu0 0
  %7169 = vmatpush2.bf16.msra.mxu0 0
  %7170 = vmatprep.subr.bf16.mxu0 0
  %7171 = vmatpush2.bf16.msra.mxu0 0
  %7172 = vmatprep.subr.bf16.mxu0 0
  %7173 = vmatpush2.bf16.msra.mxu0 0
  %7174 = vmatprep.subr.bf16.mxu0 0
  %7175 = vmatpush2.bf16.msra.mxu0 0
  %7176 = vmatprep.subr.bf16.mxu0 0
  %7177 = vmatpush2.bf16.msra.mxu0 0
  %7178 = vmatprep.subr.bf16.mxu0 0
  %7179 = vmatpush2.bf16.msra.mxu0 0
  %7180 = vmatprep.subr.bf16.mxu0 0
  %7181 = vmatpush2.bf16.msra.mxu0 0
  %7182 = vmatprep.subr.bf16.mxu0 0
  %7183 = vmatpush2.bf16.msra.mxu0 0
  %7184 = vmatprep.mubr.bf16.mxu0 0
  %7185 = vmatmul.mubr.bf16.gmra.mxu0 %v6918
  %v7186 = vpop.f32.mrf.mxu0
  %v7187 = vadd.f32 0.0, %v7186
  %v7188 = vpop.f32.mrf.mxu0
  %v7189 = vadd.f32 0.0, %v7188
  %v7190 = vpop.f32.mrf.mxu0
  %v7191 = vpop.f32.mrf.mxu0
  %7192 = vdwg.mxu0
  %v7193 = vadd.f32 %v6914, %v7146
  %v7194 = vadd.f32 %v6915, %v7148
  %v7195 = vadd.f32 %v6916, %v7187
  %v7196 = vadd.f32 %v6917, %v7189
  %v7197 = vxor.u32 %v7193, 2147483648
  %v7198 = vmul.f32 %v7197, 1.442695
  %v7199 = vpow.pop %v7198
  %v7200 = vadd.f32 %v7199, 1.0
  %v7201 = vrcp.pop %v7200
  %v7202 = vmul.f32 1.0, %v7201
  %v7203 = vxor.u32 %v7194, 2147483648
  %v7204 = vmul.f32 %v7203, 1.442695
  %v7205 = vpow.pop %v7204
  %v7206 = vadd.f32 %v7205, 1.0
  %v7207 = vrcp.pop %v7206
  %v7208 = vmul.f32 1.0, %v7207
  %v7209 = vtanh.pop %v7195
  %v7210 = vxor.u32 %v7196, 2147483648
  %v7211 = vmul.f32 %v7210, 1.442695
  %v7212 = vpow.pop %v7211
  %v7213 = vadd.f32 %v7212, 1.0
  %v7214 = vrcp.pop %v7213
  %v7215 = vmul.f32 1.0, %v7214
  %v7216 = vmul.f32 %v7208, %v6897
  %v7217 = vmul.f32 %v7202, %v7209
  %v7218 = vadd.f32 %v7216, %v7217
  %v7219 = vtanh.pop %v7218
  %v7220 = vmul.f32 %v7215, %v7219
  %s7221 = scalar_lea.vmem [#allocation7], 48
  %7222 = vst [vmem:[%s7221] sm:$0xff] %v7220
  %s7223 = scalar_lea.vmem [#allocation9], 8
  %7224 = vst [vmem:[%s7223] sm:$0xff] %v7220
  %s7225 = scalar_lea.vmem [#allocation3], 224
  %v7226 = vld [vmem:[%s7225] sm:$0xff]
  %v7227 = vld [vmem:[%s7225 + $0x8] sm:$0xff]
  %v7228 = vld [vmem:[%s7225 + $0x10] sm:$0xff]
  %v7229 = vld [vmem:[%s7225 + $0x18] sm:$0xff]
  %v7230 = vld [vmem:[#allocation5] sm:$0xff]
  %v7231 = vld [vmem:[#allocation5 + $0x8] sm:$0xff]
  %v7232 = vld [vmem:[#allocation5 + $0x10] sm:$0xff]
  %v7233 = vld [vmem:[#allocation5 + $0x18] sm:$0xff]
  %v7234 = vadd.f32 %v7226, %v7230
  %v7235 = vadd.f32 %v7227, %v7231
  %v7236 = vadd.f32 %v7228, %v7232
  %v7237 = vadd.f32 %v7229, %v7233
  %v7238 = vpack.c.bf16 %v7220, %v7220
  %v7239 = vld [vmem:[%s12] sm:$0xff]
  %v7240 = vld [vmem:[%s12 + $0x8] sm:$0xff]
  %v7241 = vld [vmem:[%s12 + $0x10] sm:$0xff]
  %v7242 = vld [vmem:[%s12 + $0x18] sm:$0xff]
  %v7243 = vld [vmem:[%s12 + $0x20] sm:$0xff]
  %v7244 = vld [vmem:[%s12 + $0x28] sm:$0xff]
  %v7245 = vld [vmem:[%s12 + $0x30] sm:$0xff]
  %v7246 = vld [vmem:[%s12 + $0x38] sm:$0xff]
  %v7247 = vld [vmem:[%s12 + $0x40] sm:$0xff]
  %v7248 = vld [vmem:[%s12 + $0x48] sm:$0xff]
  %v7249 = vld [vmem:[%s12 + $0x50] sm:$0xff]
  %v7250 = vld [vmem:[%s12 + $0x58] sm:$0xff]
  %v7251 = vld [vmem:[%s12 + $0x60] sm:$0xff]
  %v7252 = vld [vmem:[%s12 + $0x68] sm:$0xff]
  %v7253 = vld [vmem:[%s12 + $0x70] sm:$0xff]
  %v7254 = vld [vmem:[%s12 + $0x78] sm:$0xff]
  %v7255 = vld [vmem:[%s12 + $0x80] sm:$0xff]
  %v7256 = vld [vmem:[%s12 + $0x88] sm:$0xff]
  %v7257 = vld [vmem:[%s12 + $0x90] sm:$0xff]
  %v7258 = vld [vmem:[%s12 + $0x98] sm:$0xff]
  %v7259 = vld [vmem:[%s12 + $0xa0] sm:$0xff]
  %v7260 = vld [vmem:[%s12 + $0xa8] sm:$0xff]
  %v7261 = vld [vmem:[%s12 + $0xb0] sm:$0xff]
  %v7262 = vld [vmem:[%s12 + $0xb8] sm:$0xff]
  %v7263 = vld [vmem:[%s12 + $0xc0] sm:$0xff]
  %v7264 = vld [vmem:[%s12 + $0xc8] sm:$0xff]
  %v7265 = vld [vmem:[%s12 + $0xd0] sm:$0xff]
  %v7266 = vld [vmem:[%s12 + $0xd8] sm:$0xff]
  %v7267 = vld [vmem:[%s12 + $0xe0] sm:$0xff]
  %v7268 = vld [vmem:[%s12 + $0xe8] sm:$0xff]
  %v7269 = vld [vmem:[%s12 + $0xf0] sm:$0xff]
  %v7270 = vld [vmem:[%s12 + $0xf8] sm:$0xff]
  %v7303 = vunpack.c.l.b16 %v7239
  %v7304 = vunpack.c.h.b16 %v7239
  %v7305 = vunpack.c.l.b16 %v7240
  %v7306 = vunpack.c.h.b16 %v7240
  %v7307 = vunpack.c.l.b16 %v7241
  %v7308 = vunpack.c.h.b16 %v7241
  %v7309 = vunpack.c.l.b16 %v7242
  %v7310 = vunpack.c.h.b16 %v7242
  %v7311 = vunpack.c.l.b16 %v7243
  %v7312 = vunpack.c.h.b16 %v7243
  %v7313 = vunpack.c.l.b16 %v7244
  %v7314 = vunpack.c.h.b16 %v7244
  %v7315 = vunpack.c.l.b16 %v7245
  %v7316 = vunpack.c.h.b16 %v7245
  %v7317 = vunpack.c.l.b16 %v7246
  %v7318 = vunpack.c.h.b16 %v7246
  %v7319 = vunpack.c.l.b16 %v7247
  %v7320 = vunpack.c.h.b16 %v7247
  %v7321 = vunpack.c.l.b16 %v7248
  %v7322 = vunpack.c.h.b16 %v7248
  %v7323 = vunpack.c.l.b16 %v7249
  %v7324 = vunpack.c.h.b16 %v7249
  %v7325 = vunpack.c.l.b16 %v7250
  %v7326 = vunpack.c.h.b16 %v7250
  %v7327 = vunpack.c.l.b16 %v7251
  %v7328 = vunpack.c.h.b16 %v7251
  %v7329 = vunpack.c.l.b16 %v7252
  %v7330 = vunpack.c.h.b16 %v7252
  %v7331 = vunpack.c.l.b16 %v7253
  %v7332 = vunpack.c.h.b16 %v7253
  %v7333 = vunpack.c.l.b16 %v7254
  %v7334 = vunpack.c.h.b16 %v7254
  %v7335 = vunpack.c.l.b16 %v7255
  %v7336 = vunpack.c.h.b16 %v7255
  %v7337 = vunpack.c.l.b16 %v7256
  %v7338 = vunpack.c.h.b16 %v7256
  %v7339 = vunpack.c.l.b16 %v7257
  %v7340 = vunpack.c.h.b16 %v7257
  %v7341 = vunpack.c.l.b16 %v7258
  %v7342 = vunpack.c.h.b16 %v7258
  %v7343 = vunpack.c.l.b16 %v7259
  %v7344 = vunpack.c.h.b16 %v7259
  %v7345 = vunpack.c.l.b16 %v7260
  %v7346 = vunpack.c.h.b16 %v7260
  %v7347 = vunpack.c.l.b16 %v7261
  %v7348 = vunpack.c.h.b16 %v7261
  %v7349 = vunpack.c.l.b16 %v7262
  %v7350 = vunpack.c.h.b16 %v7262
  %v7351 = vunpack.c.l.b16 %v7263
  %v7352 = vunpack.c.h.b16 %v7263
  %v7353 = vunpack.c.l.b16 %v7264
  %v7354 = vunpack.c.h.b16 %v7264
  %v7355 = vunpack.c.l.b16 %v7265
  %v7356 = vunpack.c.h.b16 %v7265
  %v7357 = vunpack.c.l.b16 %v7266
  %v7358 = vunpack.c.h.b16 %v7266
  %v7359 = vunpack.c.l.b16 %v7267
  %v7360 = vunpack.c.h.b16 %v7267
  %v7361 = vunpack.c.l.b16 %v7268
  %v7362 = vunpack.c.h.b16 %v7268
  %v7363 = vunpack.c.l.b16 %v7269
  %v7364 = vunpack.c.h.b16 %v7269
  %v7365 = vunpack.c.l.b16 %v7270
  %v7366 = vunpack.c.h.b16 %v7270
  %v7367 = vpack.c.b16 %v7307, %v7303
  %v7368 = vpack.c.b16 %v7308, %v7304
  %v7369 = vpack.c.b16 %v7309, %v7305
  %v7370 = vpack.c.b16 %v7310, %v7306
  %v7371 = vpack.c.b16 %v7315, %v7311
  %v7372 = vpack.c.b16 %v7316, %v7312
  %v7373 = vpack.c.b16 %v7317, %v7313
  %v7374 = vpack.c.b16 %v7318, %v7314
  %v7375 = vpack.c.b16 %v7323, %v7319
  %v7376 = vpack.c.b16 %v7324, %v7320
  %v7377 = vpack.c.b16 %v7325, %v7321
  %v7378 = vpack.c.b16 %v7326, %v7322
  %v7379 = vpack.c.b16 %v7331, %v7327
  %v7380 = vpack.c.b16 %v7332, %v7328
  %v7381 = vpack.c.b16 %v7333, %v7329
  %v7382 = vpack.c.b16 %v7334, %v7330
  %v7383 = vpack.c.b16 %v7339, %v7335
  %v7384 = vpack.c.b16 %v7340, %v7336
  %v7385 = vpack.c.b16 %v7341, %v7337
  %v7386 = vpack.c.b16 %v7342, %v7338
  %v7387 = vpack.c.b16 %v7347, %v7343
  %v7388 = vpack.c.b16 %v7348, %v7344
  %v7389 = vpack.c.b16 %v7349, %v7345
  %v7390 = vpack.c.b16 %v7350, %v7346
  %v7391 = vpack.c.b16 %v7355, %v7351
  %v7392 = vpack.c.b16 %v7356, %v7352
  %v7393 = vpack.c.b16 %v7357, %v7353
  %v7394 = vpack.c.b16 %v7358, %v7354
  %v7395 = vpack.c.b16 %v7363, %v7359
  %v7396 = vpack.c.b16 %v7364, %v7360
  %v7397 = vpack.c.b16 %v7365, %v7361
  %v7398 = vpack.c.b16 %v7366, %v7362
  %7431 = vmatprep.subr.bf16.mxu0 %v7396
  %7432 = vmatpush1.bf16.msra.mxu0 %v7395
  %7433 = vmatprep.subr.bf16.mxu0 %v7392
  %7434 = vmatpush1.bf16.msra.mxu0 %v7391
  %7435 = vmatprep.subr.bf16.mxu0 %v7388
  %7436 = vmatpush1.bf16.msra.mxu0 %v7387
  %7437 = vmatprep.subr.bf16.mxu0 %v7384
  %7438 = vmatpush1.bf16.msra.mxu0 %v7383
  %7439 = vmatprep.subr.bf16.mxu0 %v7380
  %7440 = vmatpush1.bf16.msra.mxu0 %v7379
  %7441 = vmatprep.subr.bf16.mxu0 %v7376
  %7442 = vmatpush1.bf16.msra.mxu0 %v7375
  %7443 = vmatprep.subr.bf16.mxu0 %v7372
  %7444 = vmatpush1.bf16.msra.mxu0 %v7371
  %7445 = vmatprep.subr.bf16.mxu0 %v7368
  %7446 = vmatpush1.bf16.msra.mxu0 %v7367
  %7447 = vmatprep.subr.bf16.mxu0 0
  %7448 = vmatpush2.bf16.msra.mxu0 0
  %7449 = vmatprep.subr.bf16.mxu0 0
  %7450 = vmatpush2.bf16.msra.mxu0 0
  %7451 = vmatprep.subr.bf16.mxu0 0
  %7452 = vmatpush2.bf16.msra.mxu0 0
  %7453 = vmatprep.subr.bf16.mxu0 0
  %7454 = vmatpush2.bf16.msra.mxu0 0
  %7455 = vmatprep.subr.bf16.mxu0 0
  %7456 = vmatpush2.bf16.msra.mxu0 0
  %7457 = vmatprep.subr.bf16.mxu0 0
  %7458 = vmatpush2.bf16.msra.mxu0 0
  %7459 = vmatprep.subr.bf16.mxu0 0
  %7460 = vmatpush2.bf16.msra.mxu0 0
  %7461 = vmatprep.subr.bf16.mxu0 0
  %7462 = vmatpush2.bf16.msra.mxu0 0
  %7463 = vmatprep.mubr.bf16.mxu0 0
  %7464 = vmatmul.mubr.bf16.gmra.mxu0 %v7238
  %v7465 = vpop.f32.mrf.mxu0
  %v7466 = vadd.f32 0.0, %v7465
  %v7467 = vpop.f32.mrf.mxu0
  %v7468 = vadd.f32 0.0, %v7467
  %v7469 = vpop.f32.mrf.mxu0
  %v7470 = vpop.f32.mrf.mxu0
  %7471 = vdwg.mxu0
  %7472 = vmatprep.subr.bf16.mxu0 %v7398
  %7473 = vmatpush1.bf16.msra.mxu0 %v7397
  %7474 = vmatprep.subr.bf16.mxu0 %v7394
  %7475 = vmatpush1.bf16.msra.mxu0 %v7393
  %7476 = vmatprep.subr.bf16.mxu0 %v7390
  %7477 = vmatpush1.bf16.msra.mxu0 %v7389
  %7478 = vmatprep.subr.bf16.mxu0 %v7386
  %7479 = vmatpush1.bf16.msra.mxu0 %v7385
  %7480 = vmatprep.subr.bf16.mxu0 %v7382
  %7481 = vmatpush1.bf16.msra.mxu0 %v7381
  %7482 = vmatprep.subr.bf16.mxu0 %v7378
  %7483 = vmatpush1.bf16.msra.mxu0 %v7377
  %7484 = vmatprep.subr.bf16.mxu0 %v7374
  %7485 = vmatpush1.bf16.msra.mxu0 %v7373
  %7486 = vmatprep.subr.bf16.mxu0 %v7370
  %7487 = vmatpush1.bf16.msra.mxu0 %v7369
  %7488 = vmatprep.subr.bf16.mxu0 0
  %7489 = vmatpush2.bf16.msra.mxu0 0
  %7490 = vmatprep.subr.bf16.mxu0 0
  %7491 = vmatpush2.bf16.msra.mxu0 0
  %7492 = vmatprep.subr.bf16.mxu0 0
  %7493 = vmatpush2.bf16.msra.mxu0 0
  %7494 = vmatprep.subr.bf16.mxu0 0
  %7495 = vmatpush2.bf16.msra.mxu0 0
  %7496 = vmatprep.subr.bf16.mxu0 0
  %7497 = vmatpush2.bf16.msra.mxu0 0
  %7498 = vmatprep.subr.bf16.mxu0 0
  %7499 = vmatpush2.bf16.msra.mxu0 0
  %7500 = vmatprep.subr.bf16.mxu0 0
  %7501 = vmatpush2.bf16.msra.mxu0 0
  %7502 = vmatprep.subr.bf16.mxu0 0
  %7503 = vmatpush2.bf16.msra.mxu0 0
  %7504 = vmatprep.mubr.bf16.mxu0 0
  %7505 = vmatmul.mubr.bf16.gmra.mxu0 %v7238
  %v7506 = vpop.f32.mrf.mxu0
  %v7507 = vadd.f32 0.0, %v7506
  %v7508 = vpop.f32.mrf.mxu0
  %v7509 = vadd.f32 0.0, %v7508
  %v7510 = vpop.f32.mrf.mxu0
  %v7511 = vpop.f32.mrf.mxu0
  %7512 = vdwg.mxu0
  %v7513 = vadd.f32 %v7234, %v7466
  %v7514 = vadd.f32 %v7235, %v7468
  %v7515 = vadd.f32 %v7236, %v7507
  %v7516 = vadd.f32 %v7237, %v7509
  %v7517 = vxor.u32 %v7513, 2147483648
  %v7518 = vmul.f32 %v7517, 1.442695
  %v7519 = vpow.pop %v7518
  %v7520 = vadd.f32 %v7519, 1.0
  %v7521 = vrcp.pop %v7520
  %v7522 = vmul.f32 1.0, %v7521
  %v7523 = vxor.u32 %v7514, 2147483648
  %v7524 = vmul.f32 %v7523, 1.442695
  %v7525 = vpow.pop %v7524
  %v7526 = vadd.f32 %v7525, 1.0
  %v7527 = vrcp.pop %v7526
  %v7528 = vmul.f32 1.0, %v7527
  %v7529 = vtanh.pop %v7515
  %v7530 = vxor.u32 %v7516, 2147483648
  %v7531 = vmul.f32 %v7530, 1.442695
  %v7532 = vpow.pop %v7531
  %v7533 = vadd.f32 %v7532, 1.0
  %v7534 = vrcp.pop %v7533
  %v7535 = vmul.f32 1.0, %v7534
  %v7536 = vmul.f32 %v7528, %v7218
  %v7537 = vmul.f32 %v7522, %v7529
  %v7538 = vadd.f32 %v7536, %v7537
  %v7539 = vtanh.pop %v7538
  %v7540 = vmul.f32 %v7535, %v7539
  %s7541 = scalar_lea.vmem [#allocation7], 56
  %7542 = vst [vmem:[%s7541] sm:$0xff] %v7540
  %7543 = vst [vmem:[#allocation9] sm:$0xff] %v7540
  %v7544 = vld [vmem:[#allocation7] sm:$0xff]
  %v7545 = vld [vmem:[#allocation7 + $0x8] sm:$0xff]
  %v7546 = vld [vmem:[#allocation7 + $0x10] sm:$0xff]
  %v7547 = vld [vmem:[#allocation7 + $0x18] sm:$0xff]
  %v7548 = vld [vmem:[#allocation7 + $0x20] sm:$0xff]
  %v7549 = vld [vmem:[#allocation7 + $0x28] sm:$0xff]
  %v7550 = vld [vmem:[#allocation7 + $0x30] sm:$0xff]
  %v7551 = vld [vmem:[#allocation7 + $0x38] sm:$0xff]
  %v7552 = vpack.c.bf16 %v7545, %v7544
  %v7553 = vpack.c.bf16 %v7547, %v7546
  %v7554 = vpack.c.bf16 %v7549, %v7548
  %v7555 = vpack.c.bf16 %v7551, %v7550
  %v7556 = vld [vmem:[#allocation9] sm:$0xff]
  %v7557 = vld [vmem:[#allocation9 + $0x8] sm:$0xff]
  %v7558 = vld [vmem:[#allocation9 + $0x10] sm:$0xff]
  %v7559 = vld [vmem:[#allocation9 + $0x18] sm:$0xff]
  %v7560 = vld [vmem:[#allocation9 + $0x20] sm:$0xff]
  %v7561 = vld [vmem:[#allocation9 + $0x28] sm:$0xff]
  %v7562 = vld [vmem:[#allocation9 + $0x30] sm:$0xff]
  %v7563 = vld [vmem:[#allocation9 + $0x38] sm:$0xff]
  %v7564 = vpack.c.bf16 %v7557, %v7556
  %v7565 = vpack.c.bf16 %v7559, %v7558
  %v7566 = vpack.c.bf16 %v7561, %v7560
  %v7567 = vpack.c.bf16 %v7563, %v7562
  %v7568 = vld [vmem:[%s13] sm:$0xf]
  %v7569 = vld [vmem:[%s13 + $0x4] sm:$0xf]
  %v7570 = vld [vmem:[%s13 + $0x8] sm:$0xf]
  %v7571 = vld [vmem:[%s13 + $0xc] sm:$0xf]
  %v7572 = vld [vmem:[%s13 + $0x10] sm:$0xf]
  %v7573 = vld [vmem:[%s13 + $0x14] sm:$0xf]
  %v7574 = vld [vmem:[%s13 + $0x18] sm:$0xf]
  %v7575 = vld [vmem:[%s13 + $0x1c] sm:$0xf]
  %v7576 = vld [vmem:[%s13 + $0x20] sm:$0xf]
  %v7577 = vld [vmem:[%s13 + $0x24] sm:$0xf]
  %v7578 = vld [vmem:[%s13 + $0x28] sm:$0xf]
  %v7579 = vld [vmem:[%s13 + $0x2c] sm:$0xf]
  %v7580 = vld [vmem:[%s13 + $0x30] sm:$0xf]
  %v7581 = vld [vmem:[%s13 + $0x34] sm:$0xf]
  %v7582 = vld [vmem:[%s13 + $0x38] sm:$0xf]
  %v7583 = vld [vmem:[%s13 + $0x3c] sm:$0xf]
  %v7584 = vld [vmem:[%s14] sm:$0xf]
  %v7585 = vld [vmem:[%s14 + $0x4] sm:$0xf]
  %v7586 = vld [vmem:[%s14 + $0x8] sm:$0xf]
  %v7587 = vld [vmem:[%s14 + $0xc] sm:$0xf]
  %v7588 = vld [vmem:[%s14 + $0x10] sm:$0xf]
  %v7589 = vld [vmem:[%s14 + $0x14] sm:$0xf]
  %v7590 = vld [vmem:[%s14 + $0x18] sm:$0xf]
  %v7591 = vld [vmem:[%s14 + $0x1c] sm:$0xf]
  %v7592 = vld [vmem:[%s14 + $0x20] sm:$0xf]
  %v7593 = vld [vmem:[%s14 + $0x24] sm:$0xf]
  %v7594 = vld [vmem:[%s14 + $0x28] sm:$0xf]
  %v7595 = vld [vmem:[%s14 + $0x2c] sm:$0xf]
  %v7596 = vld [vmem:[%s14 + $0x30] sm:$0xf]
  %v7597 = vld [vmem:[%s14 + $0x34] sm:$0xf]
  %v7598 = vld [vmem:[%s14 + $0x38] sm:$0xf]
  %v7599 = vld [vmem:[%s14 + $0x3c] sm:$0xf]
  %v7616 = vunpack.c.l.b16 %v7584
  %v7617 = vunpack.c.l.b16 %v7585
  %v7618 = vunpack.c.l.b16 %v7586
  %v7619 = vunpack.c.l.b16 %v7587
  %v7620 = vunpack.c.l.b16 %v7588
  %v7621 = vunpack.c.l.b16 %v7589
  %v7622 = vunpack.c.l.b16 %v7590
  %v7623 = vunpack.c.l.b16 %v7591
  %v7624 = vunpack.c.l.b16 %v7592
  %v7625 = vunpack.c.l.b16 %v7593
  %v7626 = vunpack.c.l.b16 %v7594
  %v7627 = vunpack.c.l.b16 %v7595
  %v7628 = vunpack.c.l.b16 %v7596
  %v7629 = vunpack.c.l.b16 %v7597
  %v7630 = vunpack.c.l.b16 %v7598
  %v7631 = vunpack.c.l.b16 %v7599
  %v7632 = vpack.c.b16 %v7617, %v7616
  %v7633 = vpack.c.b16 %v7619, %v7618
  %v7634 = vpack.c.b16 %v7621, %v7620
  %v7635 = vpack.c.b16 %v7623, %v7622
  %v7636 = vpack.c.b16 %v7625, %v7624
  %v7637 = vpack.c.b16 %v7627, %v7626
  %v7638 = vpack.c.b16 %v7629, %v7628
  %v7639 = vpack.c.b16 %v7631, %v7630
  %7648 = vmatprep.subr.bf16.mxu0 0
  %7649 = vmatpush1.bf16.msra.mxu0 %v7639
  %7650 = vmatprep.subr.bf16.mxu0 0
  %7651 = vmatpush1.bf16.msra.mxu0 %v7638
  %7652 = vmatprep.subr.bf16.mxu0 0
  %7653 = vmatpush1.bf16.msra.mxu0 %v7637
  %7654 = vmatprep.subr.bf16.mxu0 0
  %7655 = vmatpush1.bf16.msra.mxu0 %v7636
  %7656 = vmatprep.subr.bf16.mxu0 0
  %7657 = vmatpush1.bf16.msra.mxu0 %v7635
  %7658 = vmatprep.subr.bf16.mxu0 0
  %7659 = vmatpush1.bf16.msra.mxu0 %v7634
  %7660 = vmatprep.subr.bf16.mxu0 0
  %7661 = vmatpush1.bf16.msra.mxu0 %v7633
  %7662 = vmatprep.subr.bf16.mxu0 0
  %7663 = vmatpush1.bf16.msra.mxu0 %v7632
  %7664 = vmatprep.subr.bf16.mxu0 0
  %7665 = vmatpush2.bf16.msra.mxu0 0
  %7666 = vmatprep.subr.bf16.mxu0 0
  %7667 = vmatpush2.bf16.msra.mxu0 0
  %7668 = vmatprep.subr.bf16.mxu0 0
  %7669 = vmatpush2.bf16.msra.mxu0 0
  %7670 = vmatprep.subr.bf16.mxu0 0
  %7671 = vmatpush2.bf16.msra.mxu0 0
  %7672 = vmatprep.subr.bf16.mxu0 0
  %7673 = vmatpush2.bf16.msra.mxu0 0
  %7674 = vmatprep.subr.bf16.mxu0 0
  %7675 = vmatpush2.bf16.msra.mxu0 0
  %7676 = vmatprep.subr.bf16.mxu0 0
  %7677 = vmatpush2.bf16.msra.mxu0 0
  %7678 = vmatprep.subr.bf16.mxu0 0
  %7679 = vmatpush2.bf16.msra.mxu0 0
  %7680 = vmatprep.mubr.bf16.mxu0 0
  %7681 = vmatmul.mubr.bf16.gmra.mxu0 %v7564
  %v7682 = vpop.f32.mrf.mxu0
  %v7683 = vadd.f32 0.0, %v7682
  %v7684 = vpop.f32.mrf.mxu0
  %v7685 = vpop.f32.mrf.mxu0
  %v7686 = vadd.f32 0.0, %v7685
  %v7687 = vpop.f32.mrf.mxu0
  %7688 = vmatprep.mubr.bf16.mxu0 0
  %7689 = vmatmul.mubr.bf16.gmra.mxu0 %v7565
  %v7690 = vpop.f32.mrf.mxu0
  %v7691 = vadd.f32 0.0, %v7690
  %v7692 = vpop.f32.mrf.mxu0
  %v7693 = vpop.f32.mrf.mxu0
  %v7694 = vadd.f32 0.0, %v7693
  %v7695 = vpop.f32.mrf.mxu0
  %7696 = vmatprep.mubr.bf16.mxu0 0
  %7697 = vmatmul.mubr.bf16.gmra.mxu0 %v7566
  %v7698 = vpop.f32.mrf.mxu0
  %v7699 = vadd.f32 0.0, %v7698
  %v7700 = vpop.f32.mrf.mxu0
  %v7701 = vpop.f32.mrf.mxu0
  %v7702 = vadd.f32 0.0, %v7701
  %v7703 = vpop.f32.mrf.mxu0
  %7704 = vmatprep.mubr.bf16.mxu0 0
  %7705 = vmatmul.mubr.bf16.gmra.mxu0 %v7567
  %v7706 = vpop.f32.mrf.mxu0
  %v7707 = vadd.f32 0.0, %v7706
  %v7708 = vpop.f32.mrf.mxu0
  %v7709 = vpop.f32.mrf.mxu0
  %v7710 = vadd.f32 0.0, %v7709
  %v7711 = vpop.f32.mrf.mxu0
  %7712 = vdwg.mxu0
  %v7729 = vunpack.c.l.b16 %v7568
  %v7730 = vunpack.c.l.b16 %v7569
  %v7731 = vunpack.c.l.b16 %v7570
  %v7732 = vunpack.c.l.b16 %v7571
  %v7733 = vunpack.c.l.b16 %v7572
  %v7734 = vunpack.c.l.b16 %v7573
  %v7735 = vunpack.c.l.b16 %v7574
  %v7736 = vunpack.c.l.b16 %v7575
  %v7737 = vunpack.c.l.b16 %v7576
  %v7738 = vunpack.c.l.b16 %v7577
  %v7739 = vunpack.c.l.b16 %v7578
  %v7740 = vunpack.c.l.b16 %v7579
  %v7741 = vunpack.c.l.b16 %v7580
  %v7742 = vunpack.c.l.b16 %v7581
  %v7743 = vunpack.c.l.b16 %v7582
  %v7744 = vunpack.c.l.b16 %v7583
  %v7745 = vpack.c.b16 %v7730, %v7729
  %v7746 = vpack.c.b16 %v7732, %v7731
  %v7747 = vpack.c.b16 %v7734, %v7733
  %v7748 = vpack.c.b16 %v7736, %v7735
  %v7749 = vpack.c.b16 %v7738, %v7737
  %v7750 = vpack.c.b16 %v7740, %v7739
  %v7751 = vpack.c.b16 %v7742, %v7741
  %v7752 = vpack.c.b16 %v7744, %v7743
  %7761 = vmatprep.subr.bf16.mxu0 0
  %7762 = vmatpush1.bf16.msra.mxu0 %v7752
  %7763 = vmatprep.subr.bf16.mxu0 0
  %7764 = vmatpush1.bf16.msra.mxu0 %v7751
  %7765 = vmatprep.subr.bf16.mxu0 0
  %7766 = vmatpush1.bf16.msra.mxu0 %v7750
  %7767 = vmatprep.subr.bf16.mxu0 0
  %7768 = vmatpush1.bf16.msra.mxu0 %v7749
  %7769 = vmatprep.subr.bf16.mxu0 0
  %7770 = vmatpush1.bf16.msra.mxu0 %v7748
  %7771 = vmatprep.subr.bf16.mxu0 0
  %7772 = vmatpush1.bf16.msra.mxu0 %v7747
  %7773 = vmatprep.subr.bf16.mxu0 0
  %7774 = vmatpush1.bf16.msra.mxu0 %v7746
  %7775 = vmatprep.subr.bf16.mxu0 0
  %7776 = vmatpush1.bf16.msra.mxu0 %v7745
  %7777 = vmatprep.subr.bf16.mxu0 0
  %7778 = vmatpush2.bf16.msra.mxu0 0
  %7779 = vmatprep.subr.bf16.mxu0 0
  %7780 = vmatpush2.bf16.msra.mxu0 0
  %7781 = vmatprep.subr.bf16.mxu0 0
  %7782 = vmatpush2.bf16.msra.mxu0 0
  %7783 = vmatprep.subr.bf16.mxu0 0
  %7784 = vmatpush2.bf16.msra.mxu0 0
  %7785 = vmatprep.subr.bf16.mxu0 0
  %7786 = vmatpush2.bf16.msra.mxu0 0
  %7787 = vmatprep.subr.bf16.mxu0 0
  %7788 = vmatpush2.bf16.msra.mxu0 0
  %7789 = vmatprep.subr.bf16.mxu0 0
  %7790 = vmatpush2.bf16.msra.mxu0 0
  %7791 = vmatprep.subr.bf16.mxu0 0
  %7792 = vmatpush2.bf16.msra.mxu0 0
  %7793 = vmatprep.mubr.bf16.mxu0 0
  %7794 = vmatmul.mubr.bf16.gmra.mxu0 %v7552
  %v7795 = vpop.f32.mrf.mxu0
  %v7796 = vadd.f32 %v7683, %v7795
  %v7797 = vpop.f32.mrf.mxu0
  %v7798 = vpop.f32.mrf.mxu0
  %v7799 = vadd.f32 %v7686, %v7798
  %v7800 = vpop.f32.mrf.mxu0
  %7801 = vmatprep.mubr.bf16.mxu0 0
  %7802 = vmatmul.mubr.bf16.gmra.mxu0 %v7553
  %v7803 = vpop.f32.mrf.mxu0
  %v7804 = vadd.f32 %v7691, %v7803
  %v7805 = vpop.f32.mrf.mxu0
  %v7806 = vpop.f32.mrf.mxu0
  %v7807 = vadd.f32 %v7694, %v7806
  %v7808 = vpop.f32.mrf.mxu0
  %7809 = vmatprep.mubr.bf16.mxu0 0
  %7810 = vmatmul.mubr.bf16.gmra.mxu0 %v7554
  %v7811 = vpop.f32.mrf.mxu0
  %v7812 = vadd.f32 %v7699, %v7811
  %v7813 = vpop.f32.mrf.mxu0
  %v7814 = vpop.f32.mrf.mxu0
  %v7815 = vadd.f32 %v7702, %v7814
  %v7816 = vpop.f32.mrf.mxu0
  %7817 = vmatprep.mubr.bf16.mxu0 0
  %7818 = vmatmul.mubr.bf16.gmra.mxu0 %v7555
  %v7819 = vpop.f32.mrf.mxu0
  %v7820 = vadd.f32 %v7707, %v7819
  %v7821 = vpop.f32.mrf.mxu0
  %v7822 = vpop.f32.mrf.mxu0
  %v7823 = vadd.f32 %v7710, %v7822
  %v7824 = vpop.f32.mrf.mxu0
  %7825 = vdwg.mxu0
  %v7826 = vld [vmem:[%s15] sm:$0x1]
  %v7828 = vlaneseq
  %v7829 = vshrl.u32 %v7828, 7
  %v7830 = vsub.s32 0, %v7829
  %v7831 = vrot.slane %v7826, %v7830
  %v7833 = vadd.f32 %v7796, %v7831
  %v7834 = vadd.f32 %v7799, %v7831
  %v7835 = vadd.f32 %v7804, %v7831
  %v7836 = vadd.f32 %v7807, %v7831
  %v7837 = vadd.f32 %v7812, %v7831
  %v7838 = vadd.f32 %v7815, %v7831
  %v7839 = vadd.f32 %v7820, %v7831
  %v7840 = vadd.f32 %v7823, %v7831
  %7841 = vmax.xlane.f32.xlu0 %v7833
  %v7842 = vpop.xlane.xlu0 %7841
  %7843 = vmax.xlane.f32.xlu0 %v7834
  %v7844 = vpop.xlane.xlu0 %7843
  %7845 = vmax.xlane.f32.xlu0 %v7835
  %v7846 = vpop.xlane.xlu0 %7845
  %7847 = vmax.xlane.f32.xlu0 %v7836
  %v7848 = vpop.xlane.xlu0 %7847
  %7849 = vmax.xlane.f32.xlu0 %v7837
  %v7850 = vpop.xlane.xlu0 %7849
  %7851 = vmax.xlane.f32.xlu0 %v7838
  %v7852 = vpop.xlane.xlu0 %7851
  %7853 = vmax.xlane.f32.xlu0 %v7839
  %v7854 = vpop.xlane.xlu0 %7853
  %7855 = vmax.xlane.f32.xlu0 %v7840
  %v7856 = vpop.xlane.xlu0 %7855
  %v7857 = vsub.f32 %v7833, %v7842
  %v7858 = vsub.f32 %v7834, %v7844
  %v7859 = vsub.f32 %v7835, %v7846
  %v7860 = vsub.f32 %v7836, %v7848
  %v7861 = vsub.f32 %v7837, %v7850
  %v7862 = vsub.f32 %v7838, %v7852
  %v7863 = vsub.f32 %v7839, %v7854
  %v7864 = vsub.f32 %v7840, %v7856
  %v7865 = vmul.f32 %v7857, 1.442695
  %v7866 = vpow.pop %v7865
  %v7867 = vmul.f32 %v7858, 1.442695
  %v7868 = vpow.pop %v7867
  %v7869 = vmul.f32 %v7859, 1.442695
  %v7870 = vpow.pop %v7869
  %v7871 = vmul.f32 %v7860, 1.442695
  %v7872 = vpow.pop %v7871
  %v7873 = vmul.f32 %v7861, 1.442695
  %v7874 = vpow.pop %v7873
  %v7875 = vmul.f32 %v7862, 1.442695
  %v7876 = vpow.pop %v7875
  %v7877 = vmul.f32 %v7863, 1.442695
  %v7878 = vpow.pop %v7877
  %v7879 = vmul.f32 %v7864, 1.442695
  %v7880 = vpow.pop %v7879
  %7881 = vadd.xlane.f32.xlu0 %v7866
  %v7882 = vpop.xlane.xlu0 %7881
  %7883 = vadd.xlane.f32.xlu0 %v7868
  %v7884 = vpop.xlane.xlu0 %7883
  %7885 = vadd.xlane.f32.xlu0 %v7870
  %v7886 = vpop.xlane.xlu0 %7885
  %7887 = vadd.xlane.f32.xlu0 %v7872
  %v7888 = vpop.xlane.xlu0 %7887
  %7889 = vadd.xlane.f32.xlu0 %v7874
  %v7890 = vpop.xlane.xlu0 %7889
  %7891 = vadd.xlane.f32.xlu0 %v7876
  %v7892 = vpop.xlane.xlu0 %7891
  %7893 = vadd.xlane.f32.xlu0 %v7878
  %v7894 = vpop.xlane.xlu0 %7893
  %7895 = vadd.xlane.f32.xlu0 %v7880
  %v7896 = vpop.xlane.xlu0 %7895
  %v7897 = vrcp.pop %v7882
  %v7898 = vmul.f32 %v7866, %v7897
  %v7899 = vrcp.pop %v7884
  %v7900 = vmul.f32 %v7868, %v7899
  %v7901 = vrcp.pop %v7886
  %v7902 = vmul.f32 %v7870, %v7901
  %v7903 = vrcp.pop %v7888
  %v7904 = vmul.f32 %v7872, %v7903
  %v7905 = vrcp.pop %v7890
  %v7906 = vmul.f32 %v7874, %v7905
  %v7907 = vrcp.pop %v7892
  %v7908 = vmul.f32 %v7876, %v7907
  %v7909 = vrcp.pop %v7894
  %v7910 = vmul.f32 %v7878, %v7909
  %v7911 = vrcp.pop %v7896
  %v7912 = vmul.f32 %v7880, %v7911
  %7913 = vst [vmem:[%s16] sm:$0xff] %v7898
  %7914 = vst [vmem:[%s16 + $0x8] sm:$0xff] %v7900
  %7915 = vst [vmem:[%s16 + $0x10] sm:$0xff] %v7902
  %7916 = vst [vmem:[%s16 + $0x18] sm:$0xff] %v7904
  %7917 = vst [vmem:[%s16 + $0x20] sm:$0xff] %v7906
  %7918 = vst [vmem:[%s16 + $0x28] sm:$0xff] %v7908
  %7919 = vst [vmem:[%s16 + $0x30] sm:$0xff] %v7910
  %7920 = vst [vmem:[%s16 + $0x38] sm:$0xff] %v7912
  // Predicated region
  $region66: #{model_forward.1} parent=0 // pred_check
    _
  $region67: #{model_forward.1} parent=0 // pred_check_branch
    %7922 = sbr.rel (0) target = $region69
  $region68: #{model_forward.1} parent=0 // pred_region
    _
  $region69: #{model_forward.1} parent=0 // pred_fallthru
    _
  // Predicated region
  $region70: #{model_forward.1} parent=0 // pred_check
    _
  $region71: #{model_forward.1} parent=0 // pred_check_branch
    %7924 = sbr.rel (0) target = $region73
  $region72: #{model_forward.1} parent=0 // pred_region
    _
  $region73: #{model_forward.1} parent=0 // pred_fallthru
    _

</llo_original>
